<compile_context>
chip_gen: v5e
topology: v5e:2x2
jax: 0.10.0
libtpu: 0.0.40
codegen_flags: <defaults>
</compile_context>

<pallas_src>
import jax
import jax.numpy as jnp
from jax.experimental import pallas as pl
from jax.experimental.pallas import tpu as pltpu


def _round_up(x, m):
    return (x + m - 1) // m * m


# ---------------------------------------------------------------------------
# Fused kernel: the whole CDR3Decoder forward as a chain of MXU matmuls.
# Runs on one (TB, z_dims) batch tile per grid step; weights are VMEM-resident.
# ---------------------------------------------------------------------------
def _cdr3_decoder_kernel(x_ref, w1_ref, b1_ref,
                         m1_ref, c1_ref, m2_ref, c2_ref, m3_ref, c3_ref,
                         w2d_ref, b2d_ref, wdd_ref, o_ref):
    bf16, f32 = jnp.bfloat16, jnp.float32

    # LinearBlock1: Linear(z_dims, 256) + ReLU  (dropout == identity at eval).
    h = jnp.dot(x_ref[...].astype(bf16), w1_ref[...],
                preferred_element_type=f32) + b1_ref[...]
    h = jnp.maximum(h, 0.0).astype(bf16)        # (TB, 256) == view(-1,16,4,4) flattened

    # ConvTransposeBlocks as dense operators (BatchNorm folded in), ReLU after each.
    # Bias/shift add in f32, carry activation in bf16 (next dot consumes bf16).
    for m_ref, c_ref in ((m1_ref, c1_ref), (m2_ref, c2_ref), (m3_ref, c3_ref)):
        h = jnp.dot(h, m_ref[...], preferred_element_type=f32) + c_ref[...]
        h = jnp.maximum(h, 0.0).astype(bf16)
    # h: (TB, max_len*aa_dims) bf16; token t lives in lanes [t*aa_dims, (t+1)*aa_dims).

    # LinearBlock2: per-token Linear(aa_dims, aa_dims) + ReLU via an all-token
    # block-diagonal weight -> no repack / row reorder needed.
    t = jnp.dot(h, w2d_ref[...], preferred_element_type=f32) + b2d_ref[...]
    t = jnp.maximum(t, 0.0).astype(bf16)

    # decoder: Linear(aa_dims, aa_size, bias=False); per-token output zero-padded
    # to aa_pad columns so the stored width is lane-dense (multiple of 128).
    o_ref[...] = jnp.dot(t, wdd_ref[...], preferred_element_type=f32)


def cdr3_decoder_forward(x, ops, *, tb=512):
    """Run the fused batch-tiled Pallas kernel; strip batch/column padding."""
    B, z_dims = x.shape
    aa_dims, aa_size, max_len = ops["aa_dims"], ops["aa_size"], ops["max_len"]
    aa_pad = ops["aa_pad"]
    out_w = max_len * aa_pad

    TB = min(tb, _round_up(B, 8))               # batch tile (sublane-aligned)
    Bp = _round_up(B, TB)
    if Bp != B:
        x = jnp.pad(x, ((0, Bp - B), (0, 0)))

    weights = (ops["w1"], ops["b1"],
               ops["m1"], ops["c1"], ops["m2"], ops["c2"], ops["m3"], ops["c3"],
               ops["w2d"], ops["b2d"], ops["wdd"])
    in_specs = [pl.BlockSpec((TB, z_dims), lambda i: (i, 0))]
    # Constant index_map -> each weight is DMA'd once and stays resident in VMEM.
    in_specs += [pl.BlockSpec(w.shape, lambda i: (0, 0)) for w in weights]
    out_spec = pl.BlockSpec((TB, out_w), lambda i: (i, 0))

    out = pl.pallas_call(
        _cdr3_decoder_kernel,
        out_shape=jax.ShapeDtypeStruct((Bp, out_w), jnp.float32),
        grid=(Bp // TB,),
        in_specs=in_specs,
        out_specs=out_spec,
        compiler_params=pltpu.CompilerParams(
            dimension_semantics=("parallel",),       # shards batch tiles on v7x 2xTC
            vmem_limit_bytes=48 * 1024 * 1024),
    )(x, *weights)

    # Batch-major already; just drop batch padding and per-token column padding.
    return out.reshape(Bp, max_len, aa_pad)[:B, :, :aa_size]


# ---------------------------------------------------------------------------
# Host-side (one-time) preparation of the kernel's matmul operands.
# ---------------------------------------------------------------------------
def _convtranspose_matrix(w, H, W, stride, padding):
    """Dense M with flatten(ConvTranspose2d(x; w, stride, padding, bias=False))
       == flatten(x) @ M for x of shape (Cin, H, W), PyTorch NCHW row-major."""
    Cin, Cout, KH, KW = w.shape
    Ho = (H - 1) * stride - 2 * padding + KH
    Wo = (W - 1) * stride - 2 * padding + KW
    sh = (Cin, H, W, Cout, KH, KW)
    ci = jnp.arange(Cin).reshape(Cin, 1, 1, 1, 1, 1)
    ih = jnp.arange(H).reshape(1, H, 1, 1, 1, 1)
    iw = jnp.arange(W).reshape(1, 1, W, 1, 1, 1)
    co = jnp.arange(Cout).reshape(1, 1, 1, Cout, 1, 1)
    kh = jnp.arange(KH).reshape(1, 1, 1, 1, KH, 1)
    kw = jnp.arange(KW).reshape(1, 1, 1, 1, 1, KW)
    oi = ih * stride - padding + kh            # output row:  i = ih*s - p + kh
    oj = iw * stride - padding + kw            # output col:  j = iw*s - p + kw
    valid = (oi >= 0) & (oi < Ho) & (oj >= 0) & (oj < Wo)
    rows = jnp.broadcast_to(ci * (H * W) + ih * W + iw, sh).reshape(-1)
    cols = jnp.broadcast_to(jnp.where(valid, co * (Ho * Wo) + oi * Wo + oj, 0),
                            sh).reshape(-1)
    vals = jnp.broadcast_to(jnp.where(valid, w[ci, co, kh, kw], 0.0),
                            sh).reshape(-1)
    m = jnp.zeros((Cin * H * W, Cout * Ho * Wo), jnp.float32
                  ).at[rows, cols].add(vals)
    return m, Ho, Wo


def _block_diag_repeat(a, n):
    r, c = a.shape
    out = jnp.zeros((n * r, n * c), a.dtype)
    for i in range(n):
        out = out.at[i * r:(i + 1) * r, i * c:(i + 1) * c].set(a)
    return out


def build_kernel_operands(params, *, reshape1, max_len, aa_dims, aa_size):
    bf16 = jnp.bfloat16
    ops = {"aa_dims": aa_dims, "aa_size": aa_size, "max_len": max_len,
           "w1": params["w1"].astype(bf16), "b1": params["b1"]}
    C, H, W = reshape1
    ms, cs = [], []
    for layer in params["convs"]:
        w = layer["w"]                                        # (Cin, Cout, K, K)
        m, Ho, Wo = _convtranspose_matrix(w, H, W, layer["stride"], layer["padding"])
        col_scale = jnp.repeat(layer["scale"], Ho * Wo)       # fold BatchNorm2d (eval)
        col_shift = jnp.repeat(layer["shift"], Ho * Wo)
        ms.append((m * col_scale[None, :]).astype(bf16))
        cs.append(col_shift[None, :].astype(jnp.float32))
        C, H, W = w.shape[1], Ho, Wo
    assert len(ms) == 3, "fused kernel is specialised to 3 ConvTransposeBlocks"
    assert C * H * W == max_len * aa_dims, (C, H, W, max_len, aa_dims)
    ops.update(m1=ms[0], c1=cs[0], m2=ms[1], c2=cs[1], m3=ms[2], c3=cs[2])

    # All-token block-diagonal weights for LinearBlock2 / decoder (no in-kernel repack).
    ops["w2d"] = _block_diag_repeat(params["w2"], max_len).astype(bf16)
    ops["b2d"] = jnp.tile(params["b2"], (1, max_len)).astype(jnp.float32)
    # Pad the decoder's per-token output so max_len*aa_pad is a multiple of 128
    # (lane-dense output stores); padded columns are exactly zero.
    aa_pad = _round_up(aa_size, 8)
    while (max_len * aa_pad) % 128 != 0:
        aa_pad += 8
    wd_pad = jnp.zeros((aa_dims, aa_pad), jnp.float32).at[:, :aa_size].set(params["wd"])
    ops["wdd"] = _block_diag_repeat(wd_pad, max_len).astype(bf16)
    ops["aa_pad"] = aa_pad
    return ops


# ---------------------------------------------------------------------------
# Deterministic synthetic parameters (shapes per the module __init__).
# ---------------------------------------------------------------------------
def init_params(key, *, z_dims, aa_size, aa_dims, conv_transpose_configs):
    ks = iter(jax.random.split(key, 5 + 5 * len(conv_transpose_configs)))
    nrm = lambda k, shape, s: s * jax.random.normal(k, shape, jnp.float32)
    p = {
        "w1": nrm(next(ks), (z_dims, 256), (2.0 / z_dims) ** 0.5),
        "b1": nrm(next(ks), (1, 256), 0.02),
        "w2": nrm(next(ks), (aa_dims, aa_dims), (2.0 / aa_dims) ** 0.5),
        "b2": nrm(next(ks), (1, aa_dims), 0.02),
        "wd": nrm(next(ks), (aa_dims, aa_size), (1.0 / aa_dims) ** 0.5),
        "convs": [],
    }
    for cfg in conv_transpose_configs:
        cp = cfg["conv_transpose_params"]
        cin, cout, ksz = cp["in_channels"], cp["out_channels"], cp["kernel_size"]
        w = nrm(next(ks), (cin, cout, ksz, ksz), (2.0 / (cin * ksz)) ** 0.5)
        gamma = 1.0 + nrm(next(ks), (cout,), 0.1)
        beta = nrm(next(ks), (cout,), 0.05)
        rmean = nrm(next(ks), (cout,), 0.05)
        rvar = 1.0 + 0.2 * jax.random.uniform(next(ks), (cout,), jnp.float32)
        scale = gamma / jnp.sqrt(rvar + 1e-5)                 # BatchNorm2d eval affine
        shift = beta - rmean * scale
        p["convs"].append({"w": w, "scale": scale, "shift": shift,
                           "stride": cp.get("stride", 1),
                           "padding": cp.get("padding", 0)})
    return p


# ---------------------------------------------------------------------------
# Independent pure-JAX reference (uses lax conv with lhs_dilation, f32).
# ---------------------------------------------------------------------------
def reference_forward(x, params, *, max_len, aa_dims):
    B = x.shape[0]
    h = jnp.maximum(x @ params["w1"] + params["b1"], 0.0)     # LinearBlock1 (dropout=id)
    h = h.reshape(B, 16, 4, 4)                                # x.view(-1, 16, 4, 4)
    for layer in params["convs"]:
        w, s, pd = layer["w"], layer["stride"], layer["padding"]
        K = w.shape[2]
        wf = jnp.flip(w, (2, 3)).transpose(1, 0, 2, 3)        # (Cout, Cin, K, K)
        h = jax.lax.conv_general_dilated(                      # == ConvTranspose2d
            h, wf, window_strides=(1, 1),
            padding=[(K - 1 - pd, K - 1 - pd)] * 2,
            lhs_dilation=(s, s),
            dimension_numbers=("NCHW", "OIHW", "NCHW"))
        h = h * layer["scale"].reshape(1, -1, 1, 1) + layer["shift"].reshape(1, -1, 1, 1)
        h = jnp.maximum(h, 0.0)
    h = h.reshape(B, max_len, aa_dims)                        # x.view(-1, max_len, aa_dims)
    h = jnp.maximum(h @ params["w2"] + params["b2"], 0.0)     # LinearBlock2 (dropout=id)
    return h @ params["wd"]                                   # decoder (bias=False)


if __name__ == "__main__":
    B = 2
    Z_DIMS, AA_SIZE, AA_DIMS = 32, 21, 64
    # max_len chosen so the conv-transpose output volume (1*32*32) matches
    # max_len * aa_dims, as required by the module's view(-1, max_len, aa_dims).
    MAX_LEN = 16
    conv_transpose_configs = [
        {"conv_transpose_params": {"in_channels": 16, "out_channels": 8,
                                   "kernel_size": 4, "stride": 2, "padding": 1}},
        {"conv_transpose_params": {"in_channels": 8, "out_channels": 4,
                                   "kernel_size": 4, "stride": 2, "padding": 1}},
        {"conv_transpose_params": {"in_channels": 4, "out_channels": 1,
                                   "kernel_size": 4, "stride": 2, "padding": 1}},
    ]

    key = jax.random.PRNGKey(0)
    kx, kp = jax.random.split(key)
    x = jax.random.normal(kx, (B, Z_DIMS), jnp.float32)
    params = init_params(kp, z_dims=Z_DIMS, aa_size=AA_SIZE, aa_dims=AA_DIMS,
                         conv_transpose_configs=conv_transpose_configs)
    ops = build_kernel_operands(params, reshape1=(16, 4, 4), max_len=MAX_LEN,
                                aa_dims=AA_DIMS, aa_size=AA_SIZE)

    out = cdr3_decoder_forward(x, ops)
    out = jax.block_until_ready(out)

    ref = reference_forward(x, params, max_len=MAX_LEN, aa_dims=AA_DIMS)
    assert out.shape == ref.shape == (B, MAX_LEN, AA_SIZE), out.shape
    err = float(jnp.max(jnp.abs(out - ref)))
    assert err < 5e-2, f"max abs err {err}"      # bf16 MXU operands vs f32 reference
    print("KERNEL_OK")
</pallas_src>

<mosaic_0001>
module attributes {stable_mosaic.version = 11 : i64} {
  func.func @_cdr3_decoder_kernel(%arg0: i32, %arg1: memref<8x32xf32, #tpu.memory_space<vmem>>, %arg2: memref<32x256xbf16, #tpu.memory_space<vmem>>, %arg3: memref<1x256xf32, #tpu.memory_space<vmem>>, %arg4: memref<256x512xbf16, #tpu.memory_space<vmem>>, %arg5: memref<1x512xf32, #tpu.memory_space<vmem>>, %arg6: memref<512x1024xbf16, #tpu.memory_space<vmem>>, %arg7: memref<1x1024xf32, #tpu.memory_space<vmem>>, %arg8: memref<1024x1024xbf16, #tpu.memory_space<vmem>>, %arg9: memref<1x1024xf32, #tpu.memory_space<vmem>>, %arg10: memref<1024x1024xbf16, #tpu.memory_space<vmem>>, %arg11: memref<1x1024xf32, #tpu.memory_space<vmem>>, %arg12: memref<1024x384xbf16, #tpu.memory_space<vmem>>, %arg13: memref<8x384xf32, #tpu.memory_space<vmem>>) attributes {dimension_semantics = [#tpu.dimension_semantics<parallel>], iteration_bounds = array<i64: 1>, scalar_prefetch = 0 : i64, scratch_operands = 0 : i64, tpu.core_type = #tpu.core_type<tc>, window_params = [{transform_indices = @transform_0, window_bounds = array<i64: 8, 32>}, {pipeline_mode = #tpu.pipeline_mode<synchronous>, transform_indices = @transform_1, window_bounds = array<i64: 32, 256>}, {pipeline_mode = #tpu.pipeline_mode<synchronous>, transform_indices = @transform_2, window_bounds = array<i64: 1, 256>}, {pipeline_mode = #tpu.pipeline_mode<synchronous>, transform_indices = @transform_3, window_bounds = array<i64: 256, 512>}, {pipeline_mode = #tpu.pipeline_mode<synchronous>, transform_indices = @transform_4, window_bounds = array<i64: 1, 512>}, {pipeline_mode = #tpu.pipeline_mode<synchronous>, transform_indices = @transform_5, window_bounds = array<i64: 512, 1024>}, {pipeline_mode = #tpu.pipeline_mode<synchronous>, transform_indices = @transform_6, window_bounds = array<i64: 1, 1024>}, {pipeline_mode = #tpu.pipeline_mode<synchronous>, transform_indices = @transform_7, window_bounds = array<i64: 1024, 1024>}, {pipeline_mode = #tpu.pipeline_mode<synchronous>, transform_indices = @transform_8, window_bounds = array<i64: 1, 1024>}, {pipeline_mode = #tpu.pipeline_mode<synchronous>, transform_indices = @transform_9, window_bounds = array<i64: 1024, 1024>}, {pipeline_mode = #tpu.pipeline_mode<synchronous>, transform_indices = @transform_10, window_bounds = array<i64: 1, 1024>}, {pipeline_mode = #tpu.pipeline_mode<synchronous>, transform_indices = @transform_11, window_bounds = array<i64: 1024, 384>}, {transform_indices = @transform_12, window_bounds = array<i64: 8, 384>}]} {
    %c0 = arith.constant 0 : index
    %c0_0 = arith.constant 0 : index
    %0 = vector.load %arg1[%c0, %c0_0] : memref<8x32xf32, #tpu.memory_space<vmem>>, vector<8x32xf32>
    %1 = arith.truncf %0 : vector<8x32xf32> to vector<8x32xbf16>
    %c0_1 = arith.constant 0 : index
    %c0_2 = arith.constant 0 : index
    %2 = vector.load %arg2[%c0_1, %c0_2] : memref<32x256xbf16, #tpu.memory_space<vmem>>, vector<32x256xbf16>
    %cst = arith.constant dense<0.000000e+00> : vector<8x256xf32>
    %3 = tpu.matmul %1, %2, %cst {dimension_numbers = #tpu.dot_dimension_numbers<[1], [0], [0], [1], [0, 0, 1, 1], [], []>} : vector<8x32xbf16>, vector<32x256xbf16>, vector<8x256xf32> -> vector<8x256xf32>
    %c0_3 = arith.constant 0 : index
    %c0_4 = arith.constant 0 : index
    %4 = vector.load %arg3[%c0_3, %c0_4] : memref<1x256xf32, #tpu.memory_space<vmem>>, vector<1x256xf32>
    %5 = vector.broadcast %4 : vector<1x256xf32> to vector<8x256xf32>
    %6 = arith.addf %3, %5 : vector<8x256xf32>
    %cst_5 = arith.constant 0.000000e+00 : f32
    %7 = vector.broadcast %cst_5 : f32 to vector<8x256xf32>
    %8 = arith.maximumf %6, %7 : vector<8x256xf32>
    %9 = arith.truncf %8 : vector<8x256xf32> to vector<8x256xbf16>
    %c0_6 = arith.constant 0 : index
    %c0_7 = arith.constant 0 : index
    %10 = vector.load %arg4[%c0_6, %c0_7] : memref<256x512xbf16, #tpu.memory_space<vmem>>, vector<256x512xbf16>
    %cst_8 = arith.constant dense<0.000000e+00> : vector<8x512xf32>
    %11 = tpu.matmul %9, %10, %cst_8 {dimension_numbers = #tpu.dot_dimension_numbers<[1], [0], [0], [1], [0, 0, 1, 1], [], []>} : vector<8x256xbf16>, vector<256x512xbf16>, vector<8x512xf32> -> vector<8x512xf32>
    %c0_9 = arith.constant 0 : index
    %c0_10 = arith.constant 0 : index
    %12 = vector.load %arg5[%c0_9, %c0_10] : memref<1x512xf32, #tpu.memory_space<vmem>>, vector<1x512xf32>
    %13 = vector.broadcast %12 : vector<1x512xf32> to vector<8x512xf32>
    %14 = arith.addf %11, %13 : vector<8x512xf32>
    %cst_11 = arith.constant 0.000000e+00 : f32
    %15 = vector.broadcast %cst_11 : f32 to vector<8x512xf32>
    %16 = arith.maximumf %14, %15 : vector<8x512xf32>
    %17 = arith.truncf %16 : vector<8x512xf32> to vector<8x512xbf16>
    %c0_12 = arith.constant 0 : index
    %c0_13 = arith.constant 0 : index
    %18 = vector.load %arg6[%c0_12, %c0_13] : memref<512x1024xbf16, #tpu.memory_space<vmem>>, vector<512x1024xbf16>
    %cst_14 = arith.constant dense<0.000000e+00> : vector<8x1024xf32>
    %19 = tpu.matmul %17, %18, %cst_14 {dimension_numbers = #tpu.dot_dimension_numbers<[1], [0], [0], [1], [0, 0, 1, 1], [], []>} : vector<8x512xbf16>, vector<512x1024xbf16>, vector<8x1024xf32> -> vector<8x1024xf32>
    %c0_15 = arith.constant 0 : index
    %c0_16 = arith.constant 0 : index
    %20 = vector.load %arg7[%c0_15, %c0_16] : memref<1x1024xf32, #tpu.memory_space<vmem>>, vector<1x1024xf32>
    %21 = vector.broadcast %20 : vector<1x1024xf32> to vector<8x1024xf32>
    %22 = arith.addf %19, %21 : vector<8x1024xf32>
    %cst_17 = arith.constant 0.000000e+00 : f32
    %23 = vector.broadcast %cst_17 : f32 to vector<8x1024xf32>
    %24 = arith.maximumf %22, %23 : vector<8x1024xf32>
    %25 = arith.truncf %24 : vector<8x1024xf32> to vector<8x1024xbf16>
    %c0_18 = arith.constant 0 : index
    %c0_19 = arith.constant 0 : index
    %26 = vector.load %arg8[%c0_18, %c0_19] : memref<1024x1024xbf16, #tpu.memory_space<vmem>>, vector<1024x1024xbf16>
    %cst_20 = arith.constant dense<0.000000e+00> : vector<8x1024xf32>
    %27 = tpu.matmul %25, %26, %cst_20 {dimension_numbers = #tpu.dot_dimension_numbers<[1], [0], [0], [1], [0, 0, 1, 1], [], []>} : vector<8x1024xbf16>, vector<1024x1024xbf16>, vector<8x1024xf32> -> vector<8x1024xf32>
    %c0_21 = arith.constant 0 : index
    %c0_22 = arith.constant 0 : index
    %28 = vector.load %arg9[%c0_21, %c0_22] : memref<1x1024xf32, #tpu.memory_space<vmem>>, vector<1x1024xf32>
    %29 = vector.broadcast %28 : vector<1x1024xf32> to vector<8x1024xf32>
    %30 = arith.addf %27, %29 : vector<8x1024xf32>
    %cst_23 = arith.constant 0.000000e+00 : f32
    %31 = vector.broadcast %cst_23 : f32 to vector<8x1024xf32>
    %32 = arith.maximumf %30, %31 : vector<8x1024xf32>
    %33 = arith.truncf %32 : vector<8x1024xf32> to vector<8x1024xbf16>
    %c0_24 = arith.constant 0 : index
    %c0_25 = arith.constant 0 : index
    %34 = vector.load %arg10[%c0_24, %c0_25] : memref<1024x1024xbf16, #tpu.memory_space<vmem>>, vector<1024x1024xbf16>
    %cst_26 = arith.constant dense<0.000000e+00> : vector<8x1024xf32>
    %35 = tpu.matmul %33, %34, %cst_26 {dimension_numbers = #tpu.dot_dimension_numbers<[1], [0], [0], [1], [0, 0, 1, 1], [], []>} : vector<8x1024xbf16>, vector<1024x1024xbf16>, vector<8x1024xf32> -> vector<8x1024xf32>
    %c0_27 = arith.constant 0 : index
    %c0_28 = arith.constant 0 : index
    %36 = vector.load %arg11[%c0_27, %c0_28] : memref<1x1024xf32, #tpu.memory_space<vmem>>, vector<1x1024xf32>
    %37 = vector.broadcast %36 : vector<1x1024xf32> to vector<8x1024xf32>
    %38 = arith.addf %35, %37 : vector<8x1024xf32>
    %cst_29 = arith.constant 0.000000e+00 : f32
    %39 = vector.broadcast %cst_29 : f32 to vector<8x1024xf32>
    %40 = arith.maximumf %38, %39 : vector<8x1024xf32>
    %41 = arith.truncf %40 : vector<8x1024xf32> to vector<8x1024xbf16>
    %c0_30 = arith.constant 0 : index
    %c0_31 = arith.constant 0 : index
    %42 = vector.load %arg12[%c0_30, %c0_31] : memref<1024x384xbf16, #tpu.memory_space<vmem>>, vector<1024x384xbf16>
    %cst_32 = arith.constant dense<0.000000e+00> : vector<8x384xf32>
    %43 = tpu.matmul %41, %42, %cst_32 {dimension_numbers = #tpu.dot_dimension_numbers<[1], [0], [0], [1], [0, 0, 1, 1], [], []>} : vector<8x1024xbf16>, vector<1024x384xbf16>, vector<8x384xf32> -> vector<8x384xf32>
    %c0_33 = arith.constant 0 : index
    %c0_34 = arith.constant 0 : index
    %44 = vector.load %arg13[%c0_33, %c0_34] : memref<8x384xf32, #tpu.memory_space<vmem>>, vector<8x384xf32>
    tpu.vector_store %arg13[%c0_33, %c0_34], %43 {strides = array<i32>} : memref<8x384xf32, #tpu.memory_space<vmem>>, vector<8x384xf32>,
    return
  }
  func.func @transform_0(%arg0: i32) -> (i32, i32) {
    %c0_i32 = arith.constant 0 : i32
    %c0_i32_0 = arith.constant 0 : i32
    return %arg0, %c0_i32 : i32, i32
  }
  func.func @transform_1(%arg0: i32) -> (i32, i32) {
    %c0_i32 = arith.constant 0 : i32
    %c0_i32_0 = arith.constant 0 : i32
    %c0_i32_1 = arith.constant 0 : i32
    return %c0_i32, %c0_i32_0 : i32, i32
  }
  func.func @transform_2(%arg0: i32) -> (i32, i32) {
    %c0_i32 = arith.constant 0 : i32
    %c0_i32_0 = arith.constant 0 : i32
    %c0_i32_1 = arith.constant 0 : i32
    return %c0_i32, %c0_i32_0 : i32, i32
  }
  func.func @transform_3(%arg0: i32) -> (i32, i32) {
    %c0_i32 = arith.constant 0 : i32
    %c0_i32_0 = arith.constant 0 : i32
    %c0_i32_1 = arith.constant 0 : i32
    return %c0_i32, %c0_i32_0 : i32, i32
  }
  func.func @transform_4(%arg0: i32) -> (i32, i32) {
    %c0_i32 = arith.constant 0 : i32
    %c0_i32_0 = arith.constant 0 : i32
    %c0_i32_1 = arith.constant 0 : i32
    return %c0_i32, %c0_i32_0 : i32, i32
  }
  func.func @transform_5(%arg0: i32) -> (i32, i32) {
    %c0_i32 = arith.constant 0 : i32
    %c0_i32_0 = arith.constant 0 : i32
    %c0_i32_1 = arith.constant 0 : i32
    return %c0_i32, %c0_i32_0 : i32, i32
  }
  func.func @transform_6(%arg0: i32) -> (i32, i32) {
    %c0_i32 = arith.constant 0 : i32
    %c0_i32_0 = arith.constant 0 : i32
    %c0_i32_1 = arith.constant 0 : i32
    return %c0_i32, %c0_i32_0 : i32, i32
  }
  func.func @transform_7(%arg0: i32) -> (i32, i32) {
    %c0_i32 = arith.constant 0 : i32
    %c0_i32_0 = arith.constant 0 : i32
    %c0_i32_1 = arith.constant 0 : i32
    return %c0_i32, %c0_i32_0 : i32, i32
  }
  func.func @transform_8(%arg0: i32) -> (i32, i32) {
    %c0_i32 = arith.constant 0 : i32
    %c0_i32_0 = arith.constant 0 : i32
    %c0_i32_1 = arith.constant 0 : i32
    return %c0_i32, %c0_i32_0 : i32, i32
  }
  func.func @transform_9(%arg0: i32) -> (i32, i32) {
    %c0_i32 = arith.constant 0 : i32
    %c0_i32_0 = arith.constant 0 : i32
    %c0_i32_1 = arith.constant 0 : i32
    return %c0_i32, %c0_i32_0 : i32, i32
  }
  func.func @transform_10(%arg0: i32) -> (i32, i32) {
    %c0_i32 = arith.constant 0 : i32
    %c0_i32_0 = arith.constant 0 : i32
    %c0_i32_1 = arith.constant 0 : i32
    return %c0_i32, %c0_i32_0 : i32, i32
  }
  func.func @transform_11(%arg0: i32) -> (i32, i32) {
    %c0_i32 = arith.constant 0 : i32
    %c0_i32_0 = arith.constant 0 : i32
    %c0_i32_1 = arith.constant 0 : i32
    return %c0_i32, %c0_i32_0 : i32, i32
  }
  func.func @transform_12(%arg0: i32) -> (i32, i32) {
    %c0_i32 = arith.constant 0 : i32
    %c0_i32_0 = arith.constant 0 : i32
    return %arg0, %c0_i32 : i32, i32
  }
}

</mosaic_0001>

<llo_original>
// kernel: tpu_custom_call.1
$region0: #{tpu_custom_call.1}
  #allocation0 [shape = 'u32[]', space=smem, size = 0x4, offset = 0x4, fixed_abs, tag = 'smem constant byte address 0x4 - core index']
  #allocation1 [shape = 'u32[72,128]{1,0:T(1,128)}', space=vmem, size = 0x9000, scoped, tag = 'internal scratch']
  %s0 = inlined_call_operand.hbm [shape: f32[8,32], index: 0, kind: input, shape index: {}]
  %s1 = inlined_call_operand.hbm [shape: bf16[32,256], index: 1, kind: input, shape index: {}]
  %s2 = inlined_call_operand.hbm [shape: f32[1,256], index: 2, kind: input, shape index: {}]
  %s3 = inlined_call_operand.hbm [shape: bf16[256,512], index: 3, kind: input, shape index: {}]
  %s4 = inlined_call_operand.hbm [shape: f32[1,512], index: 4, kind: input, shape index: {}]
  %s5 = inlined_call_operand.hbm [shape: bf16[512,1024], index: 5, kind: input, shape index: {}]
  %s6 = inlined_call_operand.hbm [shape: f32[1,1024], index: 6, kind: input, shape index: {}]
  %s7 = inlined_call_operand.hbm [shape: bf16[1024,1024], index: 7, kind: input, shape index: {}]
  %s8 = inlined_call_operand.hbm [shape: f32[1,1024], index: 8, kind: input, shape index: {}]
  %s9 = inlined_call_operand.hbm [shape: bf16[1024,1024], index: 9, kind: input, shape index: {}]
  %s10 = inlined_call_operand.hbm [shape: f32[1,1024], index: 10, kind: input, shape index: {}]
  %s11 = inlined_call_operand.hbm [shape: bf16[1024,384], index: 11, kind: input, shape index: {}]
  %s12 = inlined_call_operand.hbm [shape: f32[8,384], index: 12, kind: output, shape index: {}]
  %s13 = sld [smem:[#allocation0]]
  $region106: #{tpu_custom_call.1} parent=0
    _
  %s15 = ssub.s32 1, %s13
  %s16 = scalar_select 0, %s15, %s13
  $region1: #{tpu_custom_call.1} parent=0
    #allocation2 [shape = 'u8[4096]{0}', space=vmem, size = 0x1000, scoped, tag = 'input window, operand 0, single buffered']
    #allocation3 [shape = 's32[1]{0}', space=sflag, size = 0x4, scoped, tag = 'scoped memory for tpu_custom_call.1']
    #allocation4 [shape = 's32[1]{0}', space=sflag, size = 0x4, scoped, tag = 'scoped memory for tpu_custom_call.1']
    #allocation5 [shape = 'u8[16384]{0}', space=vmem, size = 0x4000, scoped, tag = 'input window, operand 1, single buffered']
    #allocation6 [shape = 's32[1]{0}', space=sflag, size = 0x4, scoped, tag = 'scoped memory for tpu_custom_call.1']
    #allocation7 [shape = 'u8[1024]{0}', space=vmem, size = 0x400, scoped, tag = 'input window, operand 2, single buffered']
    #allocation8 [shape = 'u8[262144]{0}', space=vmem, size = 0x40000, scoped, tag = 'input window, operand 3, single buffered']
    #allocation9 [shape = 's32[1]{0}', space=sflag, size = 0x4, scoped, tag = 'scoped memory for tpu_custom_call.1']
    #allocation10 [shape = 'u8[2048]{0}', space=vmem, size = 0x800, scoped, tag = 'input window, operand 4, single buffered']
    #allocation11 [shape = 'u8[1048576]{0}', space=vmem, size = 0x100000, scoped, tag = 'input window, operand 5, single buffered']
    #allocation12 [shape = 's32[1]{0}', space=sflag, size = 0x4, scoped, tag = 'scoped memory for tpu_custom_call.1']
    #allocation13 [shape = 'u8[4096]{0}', space=vmem, size = 0x1000, scoped, tag = 'input window, operand 6, single buffered']
    #allocation14 [shape = 'u8[2097152]{0}', space=vmem, size = 0x200000, scoped, tag = 'input window, operand 7, single buffered']
    #allocation15 [shape = 's32[1]{0}', space=sflag, size = 0x4, scoped, tag = 'scoped memory for tpu_custom_call.1']
    #allocation16 [shape = 'u8[4096]{0}', space=vmem, size = 0x1000, scoped, tag = 'input window, operand 8, single buffered']
    #allocation17 [shape = 'u8[2097152]{0}', space=vmem, size = 0x200000, scoped, tag = 'input window, operand 9, single buffered']
    #allocation18 [shape = 's32[1]{0}', space=sflag, size = 0x4, scoped, tag = 'scoped memory for tpu_custom_call.1']
    #allocation19 [shape = 'u8[4096]{0}', space=vmem, size = 0x1000, scoped, tag = 'input window, operand 10, single buffered']
    #allocation20 [shape = 'u8[786432]{0}', space=vmem, size = 0xc0000, scoped, tag = 'input window, operand 11, single buffered']
    #allocation21 [shape = 's32[1]{0}', space=sflag, size = 0x4, scoped, tag = 'scoped memory for tpu_custom_call.1']
    #allocation22 [shape = 'u8[12288]{0}', space=vmem, size = 0x3000, scoped, tag = 'output window, operand 0, single buffered']
    %17 = vsyncpa [#allocation3], 0
    %18 = vsyncpa [#allocation6], 0
    %19 = vsyncpa [#allocation9], 0
    %20 = vsyncpa [#allocation12], 0
    %21 = vsyncpa [#allocation15], 0
    %22 = vsyncpa [#allocation18], 0
    %23 = vsyncpa [#allocation21], 0
    %24 = vsyncpa [#allocation4], 0
    // Predicated region
    $region2: #{tpu_custom_call.1} parent=1 // pred_check
      _
    $region3: #{tpu_custom_call.1} parent=1 // pred_check_branch
      %26 = sbr.rel (0) target = $region5
    $region4: #{tpu_custom_call.1} parent=1 // pred_region
      %28 = vsyncadd [#allocation3], 0
      %s30 = sshll.u32 %s0, 4
      %s31 = int_to_ptr.hbm [resolvable:$true] %s30
      %s32 = sshll.u32 [#allocation2], 4
      %s33 = int_to_ptr.vmem [resolvable:$true] %s32
      %35 = dma.hbm_to_vmem [thread:$0]  %s31, 128, %s33, [#allocation3]
    $region5: #{tpu_custom_call.1} parent=1 // pred_fallthru
      _
    // Predicated region
    $region6: #{tpu_custom_call.1} parent=1 // pred_check
      _
    $region7: #{tpu_custom_call.1} parent=1 // pred_check_branch
      %37 = sbr.rel (0) target = $region9
    $region8: #{tpu_custom_call.1} parent=1 // pred_region
      %39 = vsyncadd [#allocation6], 0
      %s40 = sshll.u32 %s1, 4
      %s41 = int_to_ptr.hbm [resolvable:$true] %s40
      %s42 = sshll.u32 [#allocation5], 4
      %s43 = int_to_ptr.vmem [resolvable:$true] %s42
      %48 = dma.hbm_to_vmem [thread:$0]  %s41, 512, %s43, [#allocation6], 128, 128, 8
    $region9: #{tpu_custom_call.1} parent=1 // pred_fallthru
      _
    // Predicated region
    $region10: #{tpu_custom_call.1} parent=1 // pred_check
      _
    $region11: #{tpu_custom_call.1} parent=1 // pred_check_branch
      %50 = sbr.rel (0) target = $region13
    $region12: #{tpu_custom_call.1} parent=1 // pred_region
      %52 = vsyncadd [#allocation6], 0
      %s54 = sshll.u32 %s2, 4
      %s55 = int_to_ptr.hbm [resolvable:$true] %s54
      %s56 = sshll.u32 [#allocation7], 4
      %s57 = int_to_ptr.vmem [resolvable:$true] %s56
      %59 = dma.hbm_to_vmem [thread:$0]  %s55, 32, %s57, [#allocation6]
    $region13: #{tpu_custom_call.1} parent=1 // pred_fallthru
      _
    // Predicated region
    $region14: #{tpu_custom_call.1} parent=1 // pred_check
      _
    $region15: #{tpu_custom_call.1} parent=1 // pred_check_branch
      %61 = sbr.rel (0) target = $region17
    $region16: #{tpu_custom_call.1} parent=1 // pred_region
      %63 = vsyncadd [#allocation9], 0
      %s64 = sshll.u32 %s3, 4
      %s65 = int_to_ptr.hbm [resolvable:$true] %s64
      %s66 = sshll.u32 [#allocation8], 4
      %s67 = int_to_ptr.vmem [resolvable:$true] %s66
      %72 = dma.hbm_to_vmem [thread:$0]  %s65, 8192, %s67, [#allocation9], 256, 256, 16
    $region17: #{tpu_custom_call.1} parent=1 // pred_fallthru
      _
    // Predicated region
    $region18: #{tpu_custom_call.1} parent=1 // pred_check
      _
    $region19: #{tpu_custom_call.1} parent=1 // pred_check_branch
      %74 = sbr.rel (0) target = $region21
    $region20: #{tpu_custom_call.1} parent=1 // pred_region
      %76 = vsyncadd [#allocation9], 0
      %s78 = sshll.u32 %s4, 4
      %s79 = int_to_ptr.hbm [resolvable:$true] %s78
      %s80 = sshll.u32 [#allocation10], 4
      %s81 = int_to_ptr.vmem [resolvable:$true] %s80
      %83 = dma.hbm_to_vmem [thread:$0]  %s79, 64, %s81, [#allocation9]
    $region21: #{tpu_custom_call.1} parent=1 // pred_fallthru
      _
    // Predicated region
    $region22: #{tpu_custom_call.1} parent=1 // pred_check
      _
    $region23: #{tpu_custom_call.1} parent=1 // pred_check_branch
      %85 = sbr.rel (0) target = $region25
    $region24: #{tpu_custom_call.1} parent=1 // pred_region
      %87 = vsyncadd [#allocation12], 0
      %s88 = sshll.u32 %s5, 4
      %s89 = int_to_ptr.hbm [resolvable:$true] %s88
      %s90 = sshll.u32 [#allocation11], 4
      %s91 = int_to_ptr.vmem [resolvable:$true] %s90
      %96 = dma.hbm_to_vmem [thread:$0]  %s89, 32768, %s91, [#allocation12], 512, 512, 32
    $region25: #{tpu_custom_call.1} parent=1 // pred_fallthru
      _
    // Predicated region
    $region26: #{tpu_custom_call.1} parent=1 // pred_check
      _
    $region27: #{tpu_custom_call.1} parent=1 // pred_check_branch
      %98 = sbr.rel (0) target = $region29
    $region28: #{tpu_custom_call.1} parent=1 // pred_region
      %100 = vsyncadd [#allocation12], 0
      %s102 = sshll.u32 %s6, 4
      %s103 = int_to_ptr.hbm [resolvable:$true] %s102
      %s104 = sshll.u32 [#allocation13], 4
      %s105 = int_to_ptr.vmem [resolvable:$true] %s104
      %107 = dma.hbm_to_vmem [thread:$0]  %s103, 128, %s105, [#allocation12]
    $region29: #{tpu_custom_call.1} parent=1 // pred_fallthru
      _
    // Predicated region
    $region30: #{tpu_custom_call.1} parent=1 // pred_check
      _
    $region31: #{tpu_custom_call.1} parent=1 // pred_check_branch
      %109 = sbr.rel (0) target = $region33
    $region32: #{tpu_custom_call.1} parent=1 // pred_region
      %111 = vsyncadd [#allocation15], 0
      %s112 = sshll.u32 %s7, 4
      %s113 = int_to_ptr.hbm [resolvable:$true] %s112
      %s114 = sshll.u32 [#allocation14], 4
      %s115 = int_to_ptr.vmem [resolvable:$true] %s114
      %120 = dma.hbm_to_vmem [thread:$0]  %s113, 65536, %s115, [#allocation15], 512, 512, 32
    $region33: #{tpu_custom_call.1} parent=1 // pred_fallthru
      _
    // Predicated region
    $region34: #{tpu_custom_call.1} parent=1 // pred_check
      _
    $region35: #{tpu_custom_call.1} parent=1 // pred_check_branch
      %122 = sbr.rel (0) target = $region37
    $region36: #{tpu_custom_call.1} parent=1 // pred_region
      %124 = vsyncadd [#allocation15], 0
      %s126 = sshll.u32 %s8, 4
      %s127 = int_to_ptr.hbm [resolvable:$true] %s126
      %s128 = sshll.u32 [#allocation16], 4
      %s129 = int_to_ptr.vmem [resolvable:$true] %s128
      %131 = dma.hbm_to_vmem [thread:$0]  %s127, 128, %s129, [#allocation15]
    $region37: #{tpu_custom_call.1} parent=1 // pred_fallthru
      _
    // Predicated region
    $region38: #{tpu_custom_call.1} parent=1 // pred_check
      _
    $region39: #{tpu_custom_call.1} parent=1 // pred_check_branch
      %133 = sbr.rel (0) target = $region41
    $region40: #{tpu_custom_call.1} parent=1 // pred_region
      %135 = vsyncadd [#allocation18], 0
      %s136 = sshll.u32 %s9, 4
      %s137 = int_to_ptr.hbm [resolvable:$true] %s136
      %s138 = sshll.u32 [#allocation17], 4
      %s139 = int_to_ptr.vmem [resolvable:$true] %s138
      %144 = dma.hbm_to_vmem [thread:$0]  %s137, 65536, %s139, [#allocation18], 512, 512, 32
    $region41: #{tpu_custom_call.1} parent=1 // pred_fallthru
      _
    // Predicated region
    $region42: #{tpu_custom_call.1} parent=1 // pred_check
      _
    $region43: #{tpu_custom_call.1} parent=1 // pred_check_branch
      %146 = sbr.rel (0) target = $region45
    $region44: #{tpu_custom_call.1} parent=1 // pred_region
      %148 = vsyncadd [#allocation18], 0
      %s150 = sshll.u32 %s10, 4
      %s151 = int_to_ptr.hbm [resolvable:$true] %s150
      %s152 = sshll.u32 [#allocation19], 4
      %s153 = int_to_ptr.vmem [resolvable:$true] %s152
      %155 = dma.hbm_to_vmem [thread:$0]  %s151, 128, %s153, [#allocation18]
    $region45: #{tpu_custom_call.1} parent=1 // pred_fallthru
      _
    // Predicated region
    $region46: #{tpu_custom_call.1} parent=1 // pred_check
      _
    $region47: #{tpu_custom_call.1} parent=1 // pred_check_branch
      %157 = sbr.rel (0) target = $region49
    $region48: #{tpu_custom_call.1} parent=1 // pred_region
      %159 = vsyncadd [#allocation21], 0
      %s160 = sshll.u32 %s11, 4
      %s161 = int_to_ptr.hbm [resolvable:$true] %s160
      %s162 = sshll.u32 [#allocation20], 4
      %s163 = int_to_ptr.vmem [resolvable:$true] %s162
      %168 = dma.hbm_to_vmem [thread:$0]  %s161, 24576, %s163, [#allocation21], 192, 192, 12
    $region49: #{tpu_custom_call.1} parent=1 // pred_fallthru
      _
    // Predicated region
    $region50: #{tpu_custom_call.1} parent=1 // pred_check
      _
    $region51: #{tpu_custom_call.1} parent=1 // pred_check_branch
      %170 = sbr.rel (0) target = $region53
    $region52: #{tpu_custom_call.1} parent=1 // pred_region
      %172 = dma.done [#allocation3], 128
    $region53: #{tpu_custom_call.1} parent=1 // pred_fallthru
      _
    // Predicated region
    $region54: #{tpu_custom_call.1} parent=1 // pred_check
      _
    $region55: #{tpu_custom_call.1} parent=1 // pred_check_branch
      %174 = sbr.rel (0) target = $region57
    $region56: #{tpu_custom_call.1} parent=1 // pred_region
      %176 = dma.done [#allocation6], 512
    $region57: #{tpu_custom_call.1} parent=1 // pred_fallthru
      _
    // Predicated region
    $region58: #{tpu_custom_call.1} parent=1 // pred_check
      _
    $region59: #{tpu_custom_call.1} parent=1 // pred_check_branch
      %178 = sbr.rel (0) target = $region61
    $region60: #{tpu_custom_call.1} parent=1 // pred_region
      %180 = dma.done [#allocation6], 32
    $region61: #{tpu_custom_call.1} parent=1 // pred_fallthru
      _
    // Predicated region
    $region62: #{tpu_custom_call.1} parent=1 // pred_check
      _
    $region63: #{tpu_custom_call.1} parent=1 // pred_check_branch
      %182 = sbr.rel (0) target = $region65
    $region64: #{tpu_custom_call.1} parent=1 // pred_region
      %184 = dma.done [#allocation9], 8192
    $region65: #{tpu_custom_call.1} parent=1 // pred_fallthru
      _
    // Predicated region
    $region66: #{tpu_custom_call.1} parent=1 // pred_check
      _
    $region67: #{tpu_custom_call.1} parent=1 // pred_check_branch
      %186 = sbr.rel (0) target = $region69
    $region68: #{tpu_custom_call.1} parent=1 // pred_region
      %188 = dma.done [#allocation9], 64
    $region69: #{tpu_custom_call.1} parent=1 // pred_fallthru
      _
    // Predicated region
    $region70: #{tpu_custom_call.1} parent=1 // pred_check
      _
    $region71: #{tpu_custom_call.1} parent=1 // pred_check_branch
      %190 = sbr.rel (0) target = $region73
    $region72: #{tpu_custom_call.1} parent=1 // pred_region
      %192 = dma.done [#allocation12], 32768
    $region73: #{tpu_custom_call.1} parent=1 // pred_fallthru
      _
    // Predicated region
    $region74: #{tpu_custom_call.1} parent=1 // pred_check
      _
    $region75: #{tpu_custom_call.1} parent=1 // pred_check_branch
      %194 = sbr.rel (0) target = $region77
    $region76: #{tpu_custom_call.1} parent=1 // pred_region
      %196 = dma.done [#allocation12], 128
    $region77: #{tpu_custom_call.1} parent=1 // pred_fallthru
      _
    // Predicated region
    $region78: #{tpu_custom_call.1} parent=1 // pred_check
      _
    $region79: #{tpu_custom_call.1} parent=1 // pred_check_branch
      %198 = sbr.rel (0) target = $region81
    $region80: #{tpu_custom_call.1} parent=1 // pred_region
      %200 = dma.done [#allocation15], 65536
    $region81: #{tpu_custom_call.1} parent=1 // pred_fallthru
      _
    // Predicated region
    $region82: #{tpu_custom_call.1} parent=1 // pred_check
      _
    $region83: #{tpu_custom_call.1} parent=1 // pred_check_branch
      %202 = sbr.rel (0) target = $region85
    $region84: #{tpu_custom_call.1} parent=1 // pred_region
      %204 = dma.done [#allocation15], 128
    $region85: #{tpu_custom_call.1} parent=1 // pred_fallthru
      _
    // Predicated region
    $region86: #{tpu_custom_call.1} parent=1 // pred_check
      _
    $region87: #{tpu_custom_call.1} parent=1 // pred_check_branch
      %206 = sbr.rel (0) target = $region89
    $region88: #{tpu_custom_call.1} parent=1 // pred_region
      %208 = dma.done [#allocation18], 65536
    $region89: #{tpu_custom_call.1} parent=1 // pred_fallthru
      _
    // Predicated region
    $region90: #{tpu_custom_call.1} parent=1 // pred_check
      _
    $region91: #{tpu_custom_call.1} parent=1 // pred_check_branch
      %210 = sbr.rel (0) target = $region93
    $region92: #{tpu_custom_call.1} parent=1 // pred_region
      %212 = dma.done [#allocation18], 128
    $region93: #{tpu_custom_call.1} parent=1 // pred_fallthru
      _
    // Predicated region
    $region94: #{tpu_custom_call.1} parent=1 // pred_check
      _
    $region95: #{tpu_custom_call.1} parent=1 // pred_check_branch
      %214 = sbr.rel (0) target = $region97
    $region96: #{tpu_custom_call.1} parent=1 // pred_region
      %216 = dma.done [#allocation21], 24576
    $region97: #{tpu_custom_call.1} parent=1 // pred_fallthru
      _
    %v218 = vld [vmem:[#allocation2] sm:$0xff]
    %v219 = vpack.c.bf16 %v218, %v218
    %v220 = vld [vmem:[#allocation5] sm:$0xff]
    %v221 = vld [vmem:[#allocation5 + $0x8] sm:$0xff]
    %v222 = vld [vmem:[#allocation5 + $0x10] sm:$0xff]
    %v223 = vld [vmem:[#allocation5 + $0x18] sm:$0xff]
    %v224 = vld [vmem:[#allocation7] sm:$0x3]
    %v226 = vperm.slane %v224, 0
    %v227 = vperm.slane %v224, 1
    %v234 = vunpack.c.l.b16 %v220
    %v235 = vunpack.c.h.b16 %v220
    %v236 = vunpack.c.l.b16 %v221
    %v237 = vunpack.c.h.b16 %v221
    %v238 = vunpack.c.l.b16 %v222
    %v239 = vunpack.c.h.b16 %v222
    %v240 = vunpack.c.l.b16 %v223
    %v241 = vunpack.c.h.b16 %v223
    %v242 = vpack.c.b16 %v236, %v234
    %v243 = vpack.c.b16 %v237, %v235
    %v244 = vpack.c.b16 %v240, %v238
    %v245 = vpack.c.b16 %v241, %v239
    %vm250 = vcmask 261120
    %v252 = vsel %vm250, %v219, 0
    %254 = vmatpush.bf16.msra.mxu0 0
    %255 = vmatpush.bf16.msra.mxu0 0
    %256 = vmatpush.bf16.msra.mxu0 0
    %257 = vmatpush.bf16.msra.mxu0 0
    %258 = vmatpush.bf16.msra.mxu0 0
    %259 = vmatpush.bf16.msra.mxu0 0
    %260 = vmatpush.bf16.msra.mxu0 %v244
    %261 = vmatpush.bf16.msra.mxu0 %v242
    %262 = vmatmul.bf16.gmra.mxu0 %v252
    %v263 = vpop.f32.mrf.mxu0
    %v264 = vadd.f32 %v226, %v263
    %v265 = vpop.f32.mrf.mxu0
    %266 = vdwg.mxu0
    %267 = vmatpush.bf16.msra.mxu0 0
    %268 = vmatpush.bf16.msra.mxu0 0
    %269 = vmatpush.bf16.msra.mxu0 0
    %270 = vmatpush.bf16.msra.mxu0 0
    %271 = vmatpush.bf16.msra.mxu0 0
    %272 = vmatpush.bf16.msra.mxu0 0
    %273 = vmatpush.bf16.msra.mxu0 %v245
    %274 = vmatpush.bf16.msra.mxu0 %v243
    %275 = vmatmul.bf16.gmra.mxu0 %v252
    %v276 = vpop.f32.mrf.mxu0
    %v277 = vadd.f32 %v227, %v276
    %v278 = vpop.f32.mrf.mxu0
    %279 = vdwg.mxu0
    %v280 = vmax.f32 %v264, 0.0
    %v281 = vmax.f32 %v277, 0.0
    %v282 = vpack.c.bf16 %v280, %v280
    %v283 = vpack.c.bf16 %v281, %v281
    %v284 = vld [vmem:[#allocation8] sm:$0xff]
    %v285 = vld [vmem:[#allocation8 + $0x8] sm:$0xff]
    %v286 = vld [vmem:[#allocation8 + $0x10] sm:$0xff]
    %v287 = vld [vmem:[#allocation8 + $0x18] sm:$0xff]
    %v288 = vld [vmem:[#allocation8 + $0x20] sm:$0xff]
    %v289 = vld [vmem:[#allocation8 + $0x28] sm:$0xff]
    %v290 = vld [vmem:[#allocation8 + $0x30] sm:$0xff]
    %v291 = vld [vmem:[#allocation8 + $0x38] sm:$0xff]
    %v292 = vld [vmem:[#allocation8 + $0x40] sm:$0xff]
    %v293 = vld [vmem:[#allocation8 + $0x48] sm:$0xff]
    %v294 = vld [vmem:[#allocation8 + $0x50] sm:$0xff]
    %v295 = vld [vmem:[#allocation8 + $0x58] sm:$0xff]
    %v296 = vld [vmem:[#allocation8 + $0x60] sm:$0xff]
    %v297 = vld [vmem:[#allocation8 + $0x68] sm:$0xff]
    %v298 = vld [vmem:[#allocation8 + $0x70] sm:$0xff]
    %v299 = vld [vmem:[#allocation8 + $0x78] sm:$0xff]
    %v300 = vld [vmem:[#allocation8 + $0x80] sm:$0xff]
    %v301 = vld [vmem:[#allocation8 + $0x88] sm:$0xff]
    %v302 = vld [vmem:[#allocation8 + $0x90] sm:$0xff]
    %v303 = vld [vmem:[#allocation8 + $0x98] sm:$0xff]
    %v304 = vld [vmem:[#allocation8 + $0xa0] sm:$0xff]
    %v305 = vld [vmem:[#allocation8 + $0xa8] sm:$0xff]
    %v306 = vld [vmem:[#allocation8 + $0xb0] sm:$0xff]
    %v307 = vld [vmem:[#allocation8 + $0xb8] sm:$0xff]
    %v308 = vld [vmem:[#allocation8 + $0xc0] sm:$0xff]
    %v309 = vld [vmem:[#allocation8 + $0xc8] sm:$0xff]
    %v310 = vld [vmem:[#allocation8 + $0xd0] sm:$0xff]
    %v311 = vld [vmem:[#allocation8 + $0xd8] sm:$0xff]
    %v312 = vld [vmem:[#allocation8 + $0xe0] sm:$0xff]
    %v313 = vld [vmem:[#allocation8 + $0xe8] sm:$0xff]
    %v314 = vld [vmem:[#allocation8 + $0xf0] sm:$0xff]
    %v315 = vld [vmem:[#allocation8 + $0xf8] sm:$0xff]
    %v316 = vld [vmem:[#allocation8 + $0x100] sm:$0xff]
    %v317 = vld [vmem:[#allocation8 + $0x108] sm:$0xff]
    %v318 = vld [vmem:[#allocation8 + $0x110] sm:$0xff]
    %v319 = vld [vmem:[#allocation8 + $0x118] sm:$0xff]
    %v320 = vld [vmem:[#allocation8 + $0x120] sm:$0xff]
    %v321 = vld [vmem:[#allocation8 + $0x128] sm:$0xff]
    %v322 = vld [vmem:[#allocation8 + $0x130] sm:$0xff]
    %v323 = vld [vmem:[#allocation8 + $0x138] sm:$0xff]
    %v324 = vld [vmem:[#allocation8 + $0x140] sm:$0xff]
    %v325 = vld [vmem:[#allocation8 + $0x148] sm:$0xff]
    %v326 = vld [vmem:[#allocation8 + $0x150] sm:$0xff]
    %v327 = vld [vmem:[#allocation8 + $0x158] sm:$0xff]
    %v328 = vld [vmem:[#allocation8 + $0x160] sm:$0xff]
    %v329 = vld [vmem:[#allocation8 + $0x168] sm:$0xff]
    %v330 = vld [vmem:[#allocation8 + $0x170] sm:$0xff]
    %v331 = vld [vmem:[#allocation8 + $0x178] sm:$0xff]
    %v332 = vld [vmem:[#allocation8 + $0x180] sm:$0xff]
    %v333 = vld [vmem:[#allocation8 + $0x188] sm:$0xff]
    %v334 = vld [vmem:[#allocation8 + $0x190] sm:$0xff]
    %v335 = vld [vmem:[#allocation8 + $0x198] sm:$0xff]
    %v336 = vld [vmem:[#allocation8 + $0x1a0] sm:$0xff]
    %v337 = vld [vmem:[#allocation8 + $0x1a8] sm:$0xff]
    %v338 = vld [vmem:[#allocation8 + $0x1b0] sm:$0xff]
    %v339 = vld [vmem:[#allocation8 + $0x1b8] sm:$0xff]
    %v340 = vld [vmem:[#allocation8 + $0x1c0] sm:$0xff]
    %v341 = vld [vmem:[#allocation8 + $0x1c8] sm:$0xff]
    %v342 = vld [vmem:[#allocation8 + $0x1d0] sm:$0xff]
    %v343 = vld [vmem:[#allocation8 + $0x1d8] sm:$0xff]
    %v344 = vld [vmem:[#allocation8 + $0x1e0] sm:$0xff]
    %v345 = vld [vmem:[#allocation8 + $0x1e8] sm:$0xff]
    %v346 = vld [vmem:[#allocation8 + $0x1f0] sm:$0xff]
    %v347 = vld [vmem:[#allocation8 + $0x1f8] sm:$0xff]
    %v348 = vld [vmem:[#allocation10] sm:$0xf]
    %v350 = vperm.slane %v348, 0
    %v351 = vperm.slane %v348, 1
    %v352 = vperm.slane %v348, 2
    %v353 = vperm.slane %v348, 3
    %v422 = vunpack.c.l.b16 %v284
    %v423 = vunpack.c.h.b16 %v284
    %v424 = vunpack.c.l.b16 %v285
    %v425 = vunpack.c.h.b16 %v285
    %v426 = vunpack.c.l.b16 %v286
    %v427 = vunpack.c.h.b16 %v286
    %v428 = vunpack.c.l.b16 %v287
    %v429 = vunpack.c.h.b16 %v287
    %v430 = vunpack.c.l.b16 %v288
    %v431 = vunpack.c.h.b16 %v288
    %v432 = vunpack.c.l.b16 %v289
    %v433 = vunpack.c.h.b16 %v289
    %v434 = vunpack.c.l.b16 %v290
    %v435 = vunpack.c.h.b16 %v290
    %v436 = vunpack.c.l.b16 %v291
    %v437 = vunpack.c.h.b16 %v291
    %v438 = vunpack.c.l.b16 %v292
    %v439 = vunpack.c.h.b16 %v292
    %v440 = vunpack.c.l.b16 %v293
    %v441 = vunpack.c.h.b16 %v293
    %v442 = vunpack.c.l.b16 %v294
    %v443 = vunpack.c.h.b16 %v294
    %v444 = vunpack.c.l.b16 %v295
    %v445 = vunpack.c.h.b16 %v295
    %v446 = vunpack.c.l.b16 %v296
    %v447 = vunpack.c.h.b16 %v296
    %v448 = vunpack.c.l.b16 %v297
    %v449 = vunpack.c.h.b16 %v297
    %v450 = vunpack.c.l.b16 %v298
    %v451 = vunpack.c.h.b16 %v298
    %v452 = vunpack.c.l.b16 %v299
    %v453 = vunpack.c.h.b16 %v299
    %v454 = vunpack.c.l.b16 %v300
    %v455 = vunpack.c.h.b16 %v300
    %v456 = vunpack.c.l.b16 %v301
    %v457 = vunpack.c.h.b16 %v301
    %v458 = vunpack.c.l.b16 %v302
    %v459 = vunpack.c.h.b16 %v302
    %v460 = vunpack.c.l.b16 %v303
    %v461 = vunpack.c.h.b16 %v303
    %v462 = vunpack.c.l.b16 %v304
    %v463 = vunpack.c.h.b16 %v304
    %v464 = vunpack.c.l.b16 %v305
    %v465 = vunpack.c.h.b16 %v305
    %v466 = vunpack.c.l.b16 %v306
    %v467 = vunpack.c.h.b16 %v306
    %v468 = vunpack.c.l.b16 %v307
    %v469 = vunpack.c.h.b16 %v307
    %v470 = vunpack.c.l.b16 %v308
    %v471 = vunpack.c.h.b16 %v308
    %v472 = vunpack.c.l.b16 %v309
    %v473 = vunpack.c.h.b16 %v309
    %v474 = vunpack.c.l.b16 %v310
    %v475 = vunpack.c.h.b16 %v310
    %v476 = vunpack.c.l.b16 %v311
    %v477 = vunpack.c.h.b16 %v311
    %v478 = vunpack.c.l.b16 %v312
    %v479 = vunpack.c.h.b16 %v312
    %v480 = vunpack.c.l.b16 %v313
    %v481 = vunpack.c.h.b16 %v313
    %v482 = vunpack.c.l.b16 %v314
    %v483 = vunpack.c.h.b16 %v314
    %v484 = vunpack.c.l.b16 %v315
    %v485 = vunpack.c.h.b16 %v315
    %v486 = vunpack.c.l.b16 %v316
    %v487 = vunpack.c.h.b16 %v316
    %v488 = vunpack.c.l.b16 %v317
    %v489 = vunpack.c.h.b16 %v317
    %v490 = vunpack.c.l.b16 %v318
    %v491 = vunpack.c.h.b16 %v318
    %v492 = vunpack.c.l.b16 %v319
    %v493 = vunpack.c.h.b16 %v319
    %v494 = vunpack.c.l.b16 %v320
    %v495 = vunpack.c.h.b16 %v320
    %v496 = vunpack.c.l.b16 %v321
    %v497 = vunpack.c.h.b16 %v321
    %v498 = vunpack.c.l.b16 %v322
    %v499 = vunpack.c.h.b16 %v322
    %v500 = vunpack.c.l.b16 %v323
    %v501 = vunpack.c.h.b16 %v323
    %v502 = vunpack.c.l.b16 %v324
    %v503 = vunpack.c.h.b16 %v324
    %v504 = vunpack.c.l.b16 %v325
    %v505 = vunpack.c.h.b16 %v325
    %v506 = vunpack.c.l.b16 %v326
    %v507 = vunpack.c.h.b16 %v326
    %v508 = vunpack.c.l.b16 %v327
    %v509 = vunpack.c.h.b16 %v327
    %v510 = vunpack.c.l.b16 %v328
    %v511 = vunpack.c.h.b16 %v328
    %v512 = vunpack.c.l.b16 %v329
    %v513 = vunpack.c.h.b16 %v329
    %v514 = vunpack.c.l.b16 %v330
    %v515 = vunpack.c.h.b16 %v330
    %v516 = vunpack.c.l.b16 %v331
    %v517 = vunpack.c.h.b16 %v331
    %v518 = vunpack.c.l.b16 %v332
    %v519 = vunpack.c.h.b16 %v332
    %v520 = vunpack.c.l.b16 %v333
    %v521 = vunpack.c.h.b16 %v333
    %v522 = vunpack.c.l.b16 %v334
    %v523 = vunpack.c.h.b16 %v334
    %v524 = vunpack.c.l.b16 %v335
    %v525 = vunpack.c.h.b16 %v335
    %v526 = vunpack.c.l.b16 %v336
    %v527 = vunpack.c.h.b16 %v336
    %v528 = vunpack.c.l.b16 %v337
    %v529 = vunpack.c.h.b16 %v337
    %v530 = vunpack.c.l.b16 %v338
    %v531 = vunpack.c.h.b16 %v338
    %v532 = vunpack.c.l.b16 %v339
    %v533 = vunpack.c.h.b16 %v339
    %v534 = vunpack.c.l.b16 %v340
    %v535 = vunpack.c.h.b16 %v340
    %v536 = vunpack.c.l.b16 %v341
    %v537 = vunpack.c.h.b16 %v341
    %v538 = vunpack.c.l.b16 %v342
    %v539 = vunpack.c.h.b16 %v342
    %v540 = vunpack.c.l.b16 %v343
    %v541 = vunpack.c.h.b16 %v343
    %v542 = vunpack.c.l.b16 %v344
    %v543 = vunpack.c.h.b16 %v344
    %v544 = vunpack.c.l.b16 %v345
    %v545 = vunpack.c.h.b16 %v345
    %v546 = vunpack.c.l.b16 %v346
    %v547 = vunpack.c.h.b16 %v346
    %v548 = vunpack.c.l.b16 %v347
    %v549 = vunpack.c.h.b16 %v347
    %v550 = vpack.c.b16 %v426, %v422
    %v551 = vpack.c.b16 %v427, %v423
    %v552 = vpack.c.b16 %v428, %v424
    %v553 = vpack.c.b16 %v429, %v425
    %v554 = vpack.c.b16 %v434, %v430
    %v555 = vpack.c.b16 %v435, %v431
    %v556 = vpack.c.b16 %v436, %v432
    %v557 = vpack.c.b16 %v437, %v433
    %v558 = vpack.c.b16 %v442, %v438
    %v559 = vpack.c.b16 %v443, %v439
    %v560 = vpack.c.b16 %v444, %v440
    %v561 = vpack.c.b16 %v445, %v441
    %v562 = vpack.c.b16 %v450, %v446
    %v563 = vpack.c.b16 %v451, %v447
    %v564 = vpack.c.b16 %v452, %v448
    %v565 = vpack.c.b16 %v453, %v449
    %v566 = vpack.c.b16 %v458, %v454
    %v567 = vpack.c.b16 %v459, %v455
    %v568 = vpack.c.b16 %v460, %v456
    %v569 = vpack.c.b16 %v461, %v457
    %v570 = vpack.c.b16 %v466, %v462
    %v571 = vpack.c.b16 %v467, %v463
    %v572 = vpack.c.b16 %v468, %v464
    %v573 = vpack.c.b16 %v469, %v465
    %v574 = vpack.c.b16 %v474, %v470
    %v575 = vpack.c.b16 %v475, %v471
    %v576 = vpack.c.b16 %v476, %v472
    %v577 = vpack.c.b16 %v477, %v473
    %v578 = vpack.c.b16 %v482, %v478
    %v579 = vpack.c.b16 %v483, %v479
    %v580 = vpack.c.b16 %v484, %v480
    %v581 = vpack.c.b16 %v485, %v481
    %v582 = vpack.c.b16 %v490, %v486
    %v583 = vpack.c.b16 %v491, %v487
    %v584 = vpack.c.b16 %v492, %v488
    %v585 = vpack.c.b16 %v493, %v489
    %v586 = vpack.c.b16 %v498, %v494
    %v587 = vpack.c.b16 %v499, %v495
    %v588 = vpack.c.b16 %v500, %v496
    %v589 = vpack.c.b16 %v501, %v497
    %v590 = vpack.c.b16 %v506, %v502
    %v591 = vpack.c.b16 %v507, %v503
    %v592 = vpack.c.b16 %v508, %v504
    %v593 = vpack.c.b16 %v509, %v505
    %v594 = vpack.c.b16 %v514, %v510
    %v595 = vpack.c.b16 %v515, %v511
    %v596 = vpack.c.b16 %v516, %v512
    %v597 = vpack.c.b16 %v517, %v513
    %v598 = vpack.c.b16 %v522, %v518
    %v599 = vpack.c.b16 %v523, %v519
    %v600 = vpack.c.b16 %v524, %v520
    %v601 = vpack.c.b16 %v525, %v521
    %v602 = vpack.c.b16 %v530, %v526
    %v603 = vpack.c.b16 %v531, %v527
    %v604 = vpack.c.b16 %v532, %v528
    %v605 = vpack.c.b16 %v533, %v529
    %v606 = vpack.c.b16 %v538, %v534
    %v607 = vpack.c.b16 %v539, %v535
    %v608 = vpack.c.b16 %v540, %v536
    %v609 = vpack.c.b16 %v541, %v537
    %v610 = vpack.c.b16 %v546, %v542
    %v611 = vpack.c.b16 %v547, %v543
    %v612 = vpack.c.b16 %v548, %v544
    %v613 = vpack.c.b16 %v549, %v545
    %678 = vmatpush.bf16.msra.mxu0 %v578
    %679 = vmatpush.bf16.msra.mxu0 %v574
    %680 = vmatpush.bf16.msra.mxu0 %v570
    %681 = vmatpush.bf16.msra.mxu0 %v566
    %682 = vmatpush.bf16.msra.mxu0 %v562
    %683 = vmatpush.bf16.msra.mxu0 %v558
    %684 = vmatpush.bf16.msra.mxu0 %v554
    %685 = vmatpush.bf16.msra.mxu0 %v550
    %686 = vmatmul.bf16.gmra.mxu0 %v282
    %v687 = vpop.f32.mrf.mxu0
    %v688 = vadd.f32 %v350, %v687
    %v689 = vpop.f32.mrf.mxu0
    %690 = vdwg.mxu0
    %691 = vmatpush.bf16.msra.mxu0 %v610
    %692 = vmatpush.bf16.msra.mxu0 %v606
    %693 = vmatpush.bf16.msra.mxu0 %v602
    %694 = vmatpush.bf16.msra.mxu0 %v598
    %695 = vmatpush.bf16.msra.mxu0 %v594
    %696 = vmatpush.bf16.msra.mxu0 %v590
    %697 = vmatpush.bf16.msra.mxu0 %v586
    %698 = vmatpush.bf16.msra.mxu0 %v582
    %699 = vmatmul.bf16.gmra.mxu0 %v283
    %v700 = vpop.f32.mrf.mxu0
    %v701 = vadd.f32 %v688, %v700
    %v702 = vpop.f32.mrf.mxu0
    %703 = vdwg.mxu0
    %704 = vmatpush.bf16.msra.mxu0 %v579
    %705 = vmatpush.bf16.msra.mxu0 %v575
    %706 = vmatpush.bf16.msra.mxu0 %v571
    %707 = vmatpush.bf16.msra.mxu0 %v567
    %708 = vmatpush.bf16.msra.mxu0 %v563
    %709 = vmatpush.bf16.msra.mxu0 %v559
    %710 = vmatpush.bf16.msra.mxu0 %v555
    %711 = vmatpush.bf16.msra.mxu0 %v551
    %712 = vmatmul.bf16.gmra.mxu0 %v282
    %v713 = vpop.f32.mrf.mxu0
    %v714 = vadd.f32 %v351, %v713
    %v715 = vpop.f32.mrf.mxu0
    %716 = vdwg.mxu0
    %717 = vmatpush.bf16.msra.mxu0 %v611
    %718 = vmatpush.bf16.msra.mxu0 %v607
    %719 = vmatpush.bf16.msra.mxu0 %v603
    %720 = vmatpush.bf16.msra.mxu0 %v599
    %721 = vmatpush.bf16.msra.mxu0 %v595
    %722 = vmatpush.bf16.msra.mxu0 %v591
    %723 = vmatpush.bf16.msra.mxu0 %v587
    %724 = vmatpush.bf16.msra.mxu0 %v583
    %725 = vmatmul.bf16.gmra.mxu0 %v283
    %v726 = vpop.f32.mrf.mxu0
    %v727 = vadd.f32 %v714, %v726
    %v728 = vpop.f32.mrf.mxu0
    %729 = vdwg.mxu0
    %730 = vmatpush.bf16.msra.mxu0 %v580
    %731 = vmatpush.bf16.msra.mxu0 %v576
    %732 = vmatpush.bf16.msra.mxu0 %v572
    %733 = vmatpush.bf16.msra.mxu0 %v568
    %734 = vmatpush.bf16.msra.mxu0 %v564
    %735 = vmatpush.bf16.msra.mxu0 %v560
    %736 = vmatpush.bf16.msra.mxu0 %v556
    %737 = vmatpush.bf16.msra.mxu0 %v552
    %738 = vmatmul.bf16.gmra.mxu0 %v282
    %v739 = vpop.f32.mrf.mxu0
    %v740 = vadd.f32 %v352, %v739
    %v741 = vpop.f32.mrf.mxu0
    %742 = vdwg.mxu0
    %743 = vmatpush.bf16.msra.mxu0 %v612
    %744 = vmatpush.bf16.msra.mxu0 %v608
    %745 = vmatpush.bf16.msra.mxu0 %v604
    %746 = vmatpush.bf16.msra.mxu0 %v600
    %747 = vmatpush.bf16.msra.mxu0 %v596
    %748 = vmatpush.bf16.msra.mxu0 %v592
    %749 = vmatpush.bf16.msra.mxu0 %v588
    %750 = vmatpush.bf16.msra.mxu0 %v584
    %751 = vmatmul.bf16.gmra.mxu0 %v283
    %v752 = vpop.f32.mrf.mxu0
    %v753 = vadd.f32 %v740, %v752
    %v754 = vpop.f32.mrf.mxu0
    %755 = vdwg.mxu0
    %756 = vmatpush.bf16.msra.mxu0 %v581
    %757 = vmatpush.bf16.msra.mxu0 %v577
    %758 = vmatpush.bf16.msra.mxu0 %v573
    %759 = vmatpush.bf16.msra.mxu0 %v569
    %760 = vmatpush.bf16.msra.mxu0 %v565
    %761 = vmatpush.bf16.msra.mxu0 %v561
    %762 = vmatpush.bf16.msra.mxu0 %v557
    %763 = vmatpush.bf16.msra.mxu0 %v553
    %764 = vmatmul.bf16.gmra.mxu0 %v282
    %v765 = vpop.f32.mrf.mxu0
    %v766 = vadd.f32 %v353, %v765
    %v767 = vpop.f32.mrf.mxu0
    %768 = vdwg.mxu0
    %769 = vmatpush.bf16.msra.mxu0 %v613
    %770 = vmatpush.bf16.msra.mxu0 %v609
    %771 = vmatpush.bf16.msra.mxu0 %v605
    %772 = vmatpush.bf16.msra.mxu0 %v601
    %773 = vmatpush.bf16.msra.mxu0 %v597
    %774 = vmatpush.bf16.msra.mxu0 %v593
    %775 = vmatpush.bf16.msra.mxu0 %v589
    %776 = vmatpush.bf16.msra.mxu0 %v585
    %777 = vmatmul.bf16.gmra.mxu0 %v283
    %v778 = vpop.f32.mrf.mxu0
    %v779 = vadd.f32 %v766, %v778
    %v780 = vpop.f32.mrf.mxu0
    %781 = vdwg.mxu0
    %v782 = vmax.f32 %v701, 0.0
    %v783 = vmax.f32 %v727, 0.0
    %v784 = vmax.f32 %v753, 0.0
    %v785 = vmax.f32 %v779, 0.0
    %v786 = vpack.c.bf16 %v782, %v782
    %v787 = vpack.c.bf16 %v783, %v783
    %v788 = vpack.c.bf16 %v784, %v784
    %v789 = vpack.c.bf16 %v785, %v785
    %v790 = vld [vmem:[#allocation11] sm:$0xff]
    %v791 = vld [vmem:[#allocation11 + $0x8] sm:$0xff]
    %v792 = vld [vmem:[#allocation11 + $0x10] sm:$0xff]
    %v793 = vld [vmem:[#allocation11 + $0x18] sm:$0xff]
    %v794 = vld [vmem:[#allocation11 + $0x20] sm:$0xff]
    %v795 = vld [vmem:[#allocation11 + $0x28] sm:$0xff]
    %v796 = vld [vmem:[#allocation11 + $0x30] sm:$0xff]
    %v797 = vld [vmem:[#allocation11 + $0x38] sm:$0xff]
    %v798 = vld [vmem:[#allocation11 + $0x40] sm:$0xff]
    %v799 = vld [vmem:[#allocation11 + $0x48] sm:$0xff]
    %v800 = vld [vmem:[#allocation11 + $0x50] sm:$0xff]
    %v801 = vld [vmem:[#allocation11 + $0x58] sm:$0xff]
    %v802 = vld [vmem:[#allocation11 + $0x60] sm:$0xff]
    %v803 = vld [vmem:[#allocation11 + $0x68] sm:$0xff]
    %v804 = vld [vmem:[#allocation11 + $0x70] sm:$0xff]
    %v805 = vld [vmem:[#allocation11 + $0x78] sm:$0xff]
    %v806 = vld [vmem:[#allocation11 + $0x80] sm:$0xff]
    %v807 = vld [vmem:[#allocation11 + $0x88] sm:$0xff]
    %v808 = vld [vmem:[#allocation11 + $0x90] sm:$0xff]
    %v809 = vld [vmem:[#allocation11 + $0x98] sm:$0xff]
    %v810 = vld [vmem:[#allocation11 + $0xa0] sm:$0xff]
    %v811 = vld [vmem:[#allocation11 + $0xa8] sm:$0xff]
    %v812 = vld [vmem:[#allocation11 + $0xb0] sm:$0xff]
    %v813 = vld [vmem:[#allocation11 + $0xb8] sm:$0xff]
    %v814 = vld [vmem:[#allocation11 + $0xc0] sm:$0xff]
    %v815 = vld [vmem:[#allocation11 + $0xc8] sm:$0xff]
    %v816 = vld [vmem:[#allocation11 + $0xd0] sm:$0xff]
    %v817 = vld [vmem:[#allocation11 + $0xd8] sm:$0xff]
    %v818 = vld [vmem:[#allocation11 + $0xe0] sm:$0xff]
    %v819 = vld [vmem:[#allocation11 + $0xe8] sm:$0xff]
    %v820 = vld [vmem:[#allocation11 + $0xf0] sm:$0xff]
    %v821 = vld [vmem:[#allocation11 + $0xf8] sm:$0xff]
    %v822 = vld [vmem:[#allocation11 + $0x100] sm:$0xff]
    %v823 = vld [vmem:[#allocation11 + $0x108] sm:$0xff]
    %v824 = vld [vmem:[#allocation11 + $0x110] sm:$0xff]
    %v825 = vld [vmem:[#allocation11 + $0x118] sm:$0xff]
    %v826 = vld [vmem:[#allocation11 + $0x120] sm:$0xff]
    %v827 = vld [vmem:[#allocation11 + $0x128] sm:$0xff]
    %v828 = vld [vmem:[#allocation11 + $0x130] sm:$0xff]
    %v829 = vld [vmem:[#allocation11 + $0x138] sm:$0xff]
    %v830 = vld [vmem:[#allocation11 + $0x140] sm:$0xff]
    %v831 = vld [vmem:[#allocation11 + $0x148] sm:$0xff]
    %v832 = vld [vmem:[#allocation11 + $0x150] sm:$0xff]
    %v833 = vld [vmem:[#allocation11 + $0x158] sm:$0xff]
    %v834 = vld [vmem:[#allocation11 + $0x160] sm:$0xff]
    %v835 = vld [vmem:[#allocation11 + $0x168] sm:$0xff]
    %v836 = vld [vmem:[#allocation11 + $0x170] sm:$0xff]
    %v837 = vld [vmem:[#allocation11 + $0x178] sm:$0xff]
    %v838 = vld [vmem:[#allocation11 + $0x180] sm:$0xff]
    %v839 = vld [vmem:[#allocation11 + $0x188] sm:$0xff]
    %v840 = vld [vmem:[#allocation11 + $0x190] sm:$0xff]
    %v841 = vld [vmem:[#allocation11 + $0x198] sm:$0xff]
    %v842 = vld [vmem:[#allocation11 + $0x1a0] sm:$0xff]
    %v843 = vld [vmem:[#allocation11 + $0x1a8] sm:$0xff]
    %v844 = vld [vmem:[#allocation11 + $0x1b0] sm:$0xff]
    %v845 = vld [vmem:[#allocation11 + $0x1b8] sm:$0xff]
    %v846 = vld [vmem:[#allocation11 + $0x1c0] sm:$0xff]
    %v847 = vld [vmem:[#allocation11 + $0x1c8] sm:$0xff]
    %v848 = vld [vmem:[#allocation11 + $0x1d0] sm:$0xff]
    %v849 = vld [vmem:[#allocation11 + $0x1d8] sm:$0xff]
    %v850 = vld [vmem:[#allocation11 + $0x1e0] sm:$0xff]
    %v851 = vld [vmem:[#allocation11 + $0x1e8] sm:$0xff]
    %v852 = vld [vmem:[#allocation11 + $0x1f0] sm:$0xff]
    %v853 = vld [vmem:[#allocation11 + $0x1f8] sm:$0xff]
    %v854 = vld [vmem:[#allocation11 + $0x200] sm:$0xff]
    %v855 = vld [vmem:[#allocation11 + $0x208] sm:$0xff]
    %v856 = vld [vmem:[#allocation11 + $0x210] sm:$0xff]
    %v857 = vld [vmem:[#allocation11 + $0x218] sm:$0xff]
    %v858 = vld [vmem:[#allocation11 + $0x220] sm:$0xff]
    %v859 = vld [vmem:[#allocation11 + $0x228] sm:$0xff]
    %v860 = vld [vmem:[#allocation11 + $0x230] sm:$0xff]
    %v861 = vld [vmem:[#allocation11 + $0x238] sm:$0xff]
    %v862 = vld [vmem:[#allocation11 + $0x240] sm:$0xff]
    %v863 = vld [vmem:[#allocation11 + $0x248] sm:$0xff]
    %v864 = vld [vmem:[#allocation11 + $0x250] sm:$0xff]
    %v865 = vld [vmem:[#allocation11 + $0x258] sm:$0xff]
    %v866 = vld [vmem:[#allocation11 + $0x260] sm:$0xff]
    %v867 = vld [vmem:[#allocation11 + $0x268] sm:$0xff]
    %v868 = vld [vmem:[#allocation11 + $0x270] sm:$0xff]
    %v869 = vld [vmem:[#allocation11 + $0x278] sm:$0xff]
    %v870 = vld [vmem:[#allocation11 + $0x280] sm:$0xff]
    %v871 = vld [vmem:[#allocation11 + $0x288] sm:$0xff]
    %v872 = vld [vmem:[#allocation11 + $0x290] sm:$0xff]
    %v873 = vld [vmem:[#allocation11 + $0x298] sm:$0xff]
    %v874 = vld [vmem:[#allocation11 + $0x2a0] sm:$0xff]
    %v875 = vld [vmem:[#allocation11 + $0x2a8] sm:$0xff]
    %v876 = vld [vmem:[#allocation11 + $0x2b0] sm:$0xff]
    %v877 = vld [vmem:[#allocation11 + $0x2b8] sm:$0xff]
    %v878 = vld [vmem:[#allocation11 + $0x2c0] sm:$0xff]
    %v879 = vld [vmem:[#allocation11 + $0x2c8] sm:$0xff]
    %v880 = vld [vmem:[#allocation11 + $0x2d0] sm:$0xff]
    %v881 = vld [vmem:[#allocation11 + $0x2d8] sm:$0xff]
    %v882 = vld [vmem:[#allocation11 + $0x2e0] sm:$0xff]
    %v883 = vld [vmem:[#allocation11 + $0x2e8] sm:$0xff]
    %v884 = vld [vmem:[#allocation11 + $0x2f0] sm:$0xff]
    %v885 = vld [vmem:[#allocation11 + $0x2f8] sm:$0xff]
    %v886 = vld [vmem:[#allocation11 + $0x300] sm:$0xff]
    %v887 = vld [vmem:[#allocation11 + $0x308] sm:$0xff]
    %v888 = vld [vmem:[#allocation11 + $0x310] sm:$0xff]
    %v889 = vld [vmem:[#allocation11 + $0x318] sm:$0xff]
    %v890 = vld [vmem:[#allocation11 + $0x320] sm:$0xff]
    %v891 = vld [vmem:[#allocation11 + $0x328] sm:$0xff]
    %v892 = vld [vmem:[#allocation11 + $0x330] sm:$0xff]
    %v893 = vld [vmem:[#allocation11 + $0x338] sm:$0xff]
    %v894 = vld [vmem:[#allocation11 + $0x340] sm:$0xff]
    %v895 = vld [vmem:[#allocation11 + $0x348] sm:$0xff]
    %v896 = vld [vmem:[#allocation11 + $0x350] sm:$0xff]
    %v897 = vld [vmem:[#allocation11 + $0x358] sm:$0xff]
    %v898 = vld [vmem:[#allocation11 + $0x360] sm:$0xff]
    %v899 = vld [vmem:[#allocation11 + $0x368] sm:$0xff]
    %v900 = vld [vmem:[#allocation11 + $0x370] sm:$0xff]
    %v901 = vld [vmem:[#allocation11 + $0x378] sm:$0xff]
    %v902 = vld [vmem:[#allocation11 + $0x380] sm:$0xff]
    %v903 = vld [vmem:[#allocation11 + $0x388] sm:$0xff]
    %v904 = vld [vmem:[#allocation11 + $0x390] sm:$0xff]
    %v905 = vld [vmem:[#allocation11 + $0x398] sm:$0xff]
    %v906 = vld [vmem:[#allocation11 + $0x3a0] sm:$0xff]
    %v907 = vld [vmem:[#allocation11 + $0x3a8] sm:$0xff]
    %v908 = vld [vmem:[#allocation11 + $0x3b0] sm:$0xff]
    %v909 = vld [vmem:[#allocation11 + $0x3b8] sm:$0xff]
    %v910 = vld [vmem:[#allocation11 + $0x3c0] sm:$0xff]
    %v911 = vld [vmem:[#allocation11 + $0x3c8] sm:$0xff]
    %v912 = vld [vmem:[#allocation11 + $0x3d0] sm:$0xff]
    %v913 = vld [vmem:[#allocation11 + $0x3d8] sm:$0xff]
    %v914 = vld [vmem:[#allocation11 + $0x3e0] sm:$0xff]
    %v915 = vld [vmem:[#allocation11 + $0x3e8] sm:$0xff]
    %v916 = vld [vmem:[#allocation11 + $0x3f0] sm:$0xff]
    %v917 = vld [vmem:[#allocation11 + $0x3f8] sm:$0xff]
    %v918 = vld [vmem:[#allocation11 + $0x400] sm:$0xff]
    %v919 = vld [vmem:[#allocation11 + $0x408] sm:$0xff]
    %v920 = vld [vmem:[#allocation11 + $0x410] sm:$0xff]
    %v921 = vld [vmem:[#allocation11 + $0x418] sm:$0xff]
    %v922 = vld [vmem:[#allocation11 + $0x420] sm:$0xff]
    %v923 = vld [vmem:[#allocation11 + $0x428] sm:$0xff]
    %v924 = vld [vmem:[#allocation11 + $0x430] sm:$0xff]
    %v925 = vld [vmem:[#allocation11 + $0x438] sm:$0xff]
    %v926 = vld [vmem:[#allocation11 + $0x440] sm:$0xff]
    %v927 = vld [vmem:[#allocation11 + $0x448] sm:$0xff]
    %v928 = vld [vmem:[#allocation11 + $0x450] sm:$0xff]
    %v929 = vld [vmem:[#allocation11 + $0x458] sm:$0xff]
    %v930 = vld [vmem:[#allocation11 + $0x460] sm:$0xff]
    %v931 = vld [vmem:[#allocation11 + $0x468] sm:$0xff]
    %v932 = vld [vmem:[#allocation11 + $0x470] sm:$0xff]
    %v933 = vld [vmem:[#allocation11 + $0x478] sm:$0xff]
    %v934 = vld [vmem:[#allocation11 + $0x480] sm:$0xff]
    %v935 = vld [vmem:[#allocation11 + $0x488] sm:$0xff]
    %v936 = vld [vmem:[#allocation11 + $0x490] sm:$0xff]
    %v937 = vld [vmem:[#allocation11 + $0x498] sm:$0xff]
    %v938 = vld [vmem:[#allocation11 + $0x4a0] sm:$0xff]
    %v939 = vld [vmem:[#allocation11 + $0x4a8] sm:$0xff]
    %v940 = vld [vmem:[#allocation11 + $0x4b0] sm:$0xff]
    %v941 = vld [vmem:[#allocation11 + $0x4b8] sm:$0xff]
    %v942 = vld [vmem:[#allocation11 + $0x4c0] sm:$0xff]
    %v943 = vld [vmem:[#allocation11 + $0x4c8] sm:$0xff]
    %v944 = vld [vmem:[#allocation11 + $0x4d0] sm:$0xff]
    %v945 = vld [vmem:[#allocation11 + $0x4d8] sm:$0xff]
    %v946 = vld [vmem:[#allocation11 + $0x4e0] sm:$0xff]
    %v947 = vld [vmem:[#allocation11 + $0x4e8] sm:$0xff]
    %v948 = vld [vmem:[#allocation11 + $0x4f0] sm:$0xff]
    %v949 = vld [vmem:[#allocation11 + $0x4f8] sm:$0xff]
    %v950 = vld [vmem:[#allocation11 + $0x500] sm:$0xff]
    %v951 = vld [vmem:[#allocation11 + $0x508] sm:$0xff]
    %v952 = vld [vmem:[#allocation11 + $0x510] sm:$0xff]
    %v953 = vld [vmem:[#allocation11 + $0x518] sm:$0xff]
    %v954 = vld [vmem:[#allocation11 + $0x520] sm:$0xff]
    %v955 = vld [vmem:[#allocation11 + $0x528] sm:$0xff]
    %v956 = vld [vmem:[#allocation11 + $0x530] sm:$0xff]
    %v957 = vld [vmem:[#allocation11 + $0x538] sm:$0xff]
    %v958 = vld [vmem:[#allocation11 + $0x540] sm:$0xff]
    %v959 = vld [vmem:[#allocation11 + $0x548] sm:$0xff]
    %v960 = vld [vmem:[#allocation11 + $0x550] sm:$0xff]
    %v961 = vld [vmem:[#allocation11 + $0x558] sm:$0xff]
    %v962 = vld [vmem:[#allocation11 + $0x560] sm:$0xff]
    %v963 = vld [vmem:[#allocation11 + $0x568] sm:$0xff]
    %v964 = vld [vmem:[#allocation11 + $0x570] sm:$0xff]
    %v965 = vld [vmem:[#allocation11 + $0x578] sm:$0xff]
    %v966 = vld [vmem:[#allocation11 + $0x580] sm:$0xff]
    %v967 = vld [vmem:[#allocation11 + $0x588] sm:$0xff]
    %v968 = vld [vmem:[#allocation11 + $0x590] sm:$0xff]
    %v969 = vld [vmem:[#allocation11 + $0x598] sm:$0xff]
    %v970 = vld [vmem:[#allocation11 + $0x5a0] sm:$0xff]
    %v971 = vld [vmem:[#allocation11 + $0x5a8] sm:$0xff]
    %v972 = vld [vmem:[#allocation11 + $0x5b0] sm:$0xff]
    %v973 = vld [vmem:[#allocation11 + $0x5b8] sm:$0xff]
    %v974 = vld [vmem:[#allocation11 + $0x5c0] sm:$0xff]
    %v975 = vld [vmem:[#allocation11 + $0x5c8] sm:$0xff]
    %v976 = vld [vmem:[#allocation11 + $0x5d0] sm:$0xff]
    %v977 = vld [vmem:[#allocation11 + $0x5d8] sm:$0xff]
    %v978 = vld [vmem:[#allocation11 + $0x5e0] sm:$0xff]
    %v979 = vld [vmem:[#allocation11 + $0x5e8] sm:$0xff]
    %v980 = vld [vmem:[#allocation11 + $0x5f0] sm:$0xff]
    %v981 = vld [vmem:[#allocation11 + $0x5f8] sm:$0xff]
    %v982 = vld [vmem:[#allocation11 + $0x600] sm:$0xff]
    %v983 = vld [vmem:[#allocation11 + $0x608] sm:$0xff]
    %v984 = vld [vmem:[#allocation11 + $0x610] sm:$0xff]
    %v985 = vld [vmem:[#allocation11 + $0x618] sm:$0xff]
    %v986 = vld [vmem:[#allocation11 + $0x620] sm:$0xff]
    %v987 = vld [vmem:[#allocation11 + $0x628] sm:$0xff]
    %v988 = vld [vmem:[#allocation11 + $0x630] sm:$0xff]
    %v989 = vld [vmem:[#allocation11 + $0x638] sm:$0xff]
    %v990 = vld [vmem:[#allocation11 + $0x640] sm:$0xff]
    %v991 = vld [vmem:[#allocation11 + $0x648] sm:$0xff]
    %v992 = vld [vmem:[#allocation11 + $0x650] sm:$0xff]
    %v993 = vld [vmem:[#allocation11 + $0x658] sm:$0xff]
    %v994 = vld [vmem:[#allocation11 + $0x660] sm:$0xff]
    %v995 = vld [vmem:[#allocation11 + $0x668] sm:$0xff]
    %v996 = vld [vmem:[#allocation11 + $0x670] sm:$0xff]
    %v997 = vld [vmem:[#allocation11 + $0x678] sm:$0xff]
    %v998 = vld [vmem:[#allocation11 + $0x680] sm:$0xff]
    %v999 = vld [vmem:[#allocation11 + $0x688] sm:$0xff]
    %v1000 = vld [vmem:[#allocation11 + $0x690] sm:$0xff]
    %v1001 = vld [vmem:[#allocation11 + $0x698] sm:$0xff]
    %v1002 = vld [vmem:[#allocation11 + $0x6a0] sm:$0xff]
    %v1003 = vld [vmem:[#allocation11 + $0x6a8] sm:$0xff]
    %v1004 = vld [vmem:[#allocation11 + $0x6b0] sm:$0xff]
    %v1005 = vld [vmem:[#allocation11 + $0x6b8] sm:$0xff]
    %v1006 = vld [vmem:[#allocation11 + $0x6c0] sm:$0xff]
    %v1007 = vld [vmem:[#allocation11 + $0x6c8] sm:$0xff]
    %v1008 = vld [vmem:[#allocation11 + $0x6d0] sm:$0xff]
    %v1009 = vld [vmem:[#allocation11 + $0x6d8] sm:$0xff]
    %v1010 = vld [vmem:[#allocation11 + $0x6e0] sm:$0xff]
    %v1011 = vld [vmem:[#allocation11 + $0x6e8] sm:$0xff]
    %v1012 = vld [vmem:[#allocation11 + $0x6f0] sm:$0xff]
    %v1013 = vld [vmem:[#allocation11 + $0x6f8] sm:$0xff]
    %v1014 = vld [vmem:[#allocation11 + $0x700] sm:$0xff]
    %v1015 = vld [vmem:[#allocation11 + $0x708] sm:$0xff]
    %v1016 = vld [vmem:[#allocation11 + $0x710] sm:$0xff]
    %v1017 = vld [vmem:[#allocation11 + $0x718] sm:$0xff]
    %v1018 = vld [vmem:[#allocation11 + $0x720] sm:$0xff]
    %v1019 = vld [vmem:[#allocation11 + $0x728] sm:$0xff]
    %v1020 = vld [vmem:[#allocation11 + $0x730] sm:$0xff]
    %v1021 = vld [vmem:[#allocation11 + $0x738] sm:$0xff]
    %v1022 = vld [vmem:[#allocation11 + $0x740] sm:$0xff]
    %v1023 = vld [vmem:[#allocation11 + $0x748] sm:$0xff]
    %v1024 = vld [vmem:[#allocation11 + $0x750] sm:$0xff]
    %v1025 = vld [vmem:[#allocation11 + $0x758] sm:$0xff]
    %v1026 = vld [vmem:[#allocation11 + $0x760] sm:$0xff]
    %v1027 = vld [vmem:[#allocation11 + $0x768] sm:$0xff]
    %v1028 = vld [vmem:[#allocation11 + $0x770] sm:$0xff]
    %v1029 = vld [vmem:[#allocation11 + $0x778] sm:$0xff]
    %v1030 = vld [vmem:[#allocation11 + $0x780] sm:$0xff]
    %v1031 = vld [vmem:[#allocation11 + $0x788] sm:$0xff]
    %v1032 = vld [vmem:[#allocation11 + $0x790] sm:$0xff]
    %v1033 = vld [vmem:[#allocation11 + $0x798] sm:$0xff]
    %v1034 = vld [vmem:[#allocation11 + $0x7a0] sm:$0xff]
    %v1035 = vld [vmem:[#allocation11 + $0x7a8] sm:$0xff]
    %v1036 = vld [vmem:[#allocation11 + $0x7b0] sm:$0xff]
    %v1037 = vld [vmem:[#allocation11 + $0x7b8] sm:$0xff]
    %v1038 = vld [vmem:[#allocation11 + $0x7c0] sm:$0xff]
    %v1039 = vld [vmem:[#allocation11 + $0x7c8] sm:$0xff]
    %v1040 = vld [vmem:[#allocation11 + $0x7d0] sm:$0xff]
    %v1041 = vld [vmem:[#allocation11 + $0x7d8] sm:$0xff]
    %v1042 = vld [vmem:[#allocation11 + $0x7e0] sm:$0xff]
    %v1043 = vld [vmem:[#allocation11 + $0x7e8] sm:$0xff]
    %v1044 = vld [vmem:[#allocation11 + $0x7f0] sm:$0xff]
    %v1045 = vld [vmem:[#allocation11 + $0x7f8] sm:$0xff]
    %v1046 = vld [vmem:[#allocation13] sm:$0xff]
    %v1048 = vperm.slane %v1046, 0
    %v1049 = vperm.slane %v1046, 1
    %v1050 = vperm.slane %v1046, 2
    %v1051 = vperm.slane %v1046, 3
    %v1052 = vperm.slane %v1046, 4
    %v1053 = vperm.slane %v1046, 5
    %v1054 = vperm.slane %v1046, 6
    %v1055 = vperm.slane %v1046, 7
    %v1320 = vunpack.c.l.b16 %v790
    %v1321 = vunpack.c.h.b16 %v790
    %v1322 = vunpack.c.l.b16 %v791
    %v1323 = vunpack.c.h.b16 %v791
    %v1324 = vunpack.c.l.b16 %v792
    %v1325 = vunpack.c.h.b16 %v792
    %v1326 = vunpack.c.l.b16 %v793
    %v1327 = vunpack.c.h.b16 %v793
    %v1328 = vunpack.c.l.b16 %v794
    %v1329 = vunpack.c.h.b16 %v794
    %v1330 = vunpack.c.l.b16 %v795
    %v1331 = vunpack.c.h.b16 %v795
    %v1332 = vunpack.c.l.b16 %v796
    %v1333 = vunpack.c.h.b16 %v796
    %v1334 = vunpack.c.l.b16 %v797
    %v1335 = vunpack.c.h.b16 %v797
    %v1336 = vunpack.c.l.b16 %v798
    %v1337 = vunpack.c.h.b16 %v798
    %v1338 = vunpack.c.l.b16 %v799
    %v1339 = vunpack.c.h.b16 %v799
    %v1340 = vunpack.c.l.b16 %v800
    %v1341 = vunpack.c.h.b16 %v800
    %v1342 = vunpack.c.l.b16 %v801
    %v1343 = vunpack.c.h.b16 %v801
    %v1344 = vunpack.c.l.b16 %v802
    %v1345 = vunpack.c.h.b16 %v802
    %v1346 = vunpack.c.l.b16 %v803
    %v1347 = vunpack.c.h.b16 %v803
    %v1348 = vunpack.c.l.b16 %v804
    %v1349 = vunpack.c.h.b16 %v804
    %v1350 = vunpack.c.l.b16 %v805
    %v1351 = vunpack.c.h.b16 %v805
    %v1352 = vunpack.c.l.b16 %v806
    %v1353 = vunpack.c.h.b16 %v806
    %v1354 = vunpack.c.l.b16 %v807
    %v1355 = vunpack.c.h.b16 %v807
    %v1356 = vunpack.c.l.b16 %v808
    %v1357 = vunpack.c.h.b16 %v808
    %v1358 = vunpack.c.l.b16 %v809
    %v1359 = vunpack.c.h.b16 %v809
    %v1360 = vunpack.c.l.b16 %v810
    %v1361 = vunpack.c.h.b16 %v810
    %v1362 = vunpack.c.l.b16 %v811
    %v1363 = vunpack.c.h.b16 %v811
    %v1364 = vunpack.c.l.b16 %v812
    %v1365 = vunpack.c.h.b16 %v812
    %v1366 = vunpack.c.l.b16 %v813
    %v1367 = vunpack.c.h.b16 %v813
    %v1368 = vunpack.c.l.b16 %v814
    %v1369 = vunpack.c.h.b16 %v814
    %v1370 = vunpack.c.l.b16 %v815
    %v1371 = vunpack.c.h.b16 %v815
    %v1372 = vunpack.c.l.b16 %v816
    %v1373 = vunpack.c.h.b16 %v816
    %v1374 = vunpack.c.l.b16 %v817
    %v1375 = vunpack.c.h.b16 %v817
    %v1376 = vunpack.c.l.b16 %v818
    %v1377 = vunpack.c.h.b16 %v818
    %v1378 = vunpack.c.l.b16 %v819
    %v1379 = vunpack.c.h.b16 %v819
    %v1380 = vunpack.c.l.b16 %v820
    %v1381 = vunpack.c.h.b16 %v820
    %v1382 = vunpack.c.l.b16 %v821
    %v1383 = vunpack.c.h.b16 %v821
    %v1384 = vunpack.c.l.b16 %v822
    %v1385 = vunpack.c.h.b16 %v822
    %v1386 = vunpack.c.l.b16 %v823
    %v1387 = vunpack.c.h.b16 %v823
    %v1388 = vunpack.c.l.b16 %v824
    %v1389 = vunpack.c.h.b16 %v824
    %v1390 = vunpack.c.l.b16 %v825
    %v1391 = vunpack.c.h.b16 %v825
    %v1392 = vunpack.c.l.b16 %v826
    %v1393 = vunpack.c.h.b16 %v826
    %v1394 = vunpack.c.l.b16 %v827
    %v1395 = vunpack.c.h.b16 %v827
    %v1396 = vunpack.c.l.b16 %v828
    %v1397 = vunpack.c.h.b16 %v828
    %v1398 = vunpack.c.l.b16 %v829
    %v1399 = vunpack.c.h.b16 %v829
    %v1400 = vunpack.c.l.b16 %v830
    %v1401 = vunpack.c.h.b16 %v830
    %v1402 = vunpack.c.l.b16 %v831
    %v1403 = vunpack.c.h.b16 %v831
    %v1404 = vunpack.c.l.b16 %v832
    %v1405 = vunpack.c.h.b16 %v832
    %v1406 = vunpack.c.l.b16 %v833
    %v1407 = vunpack.c.h.b16 %v833
    %v1408 = vunpack.c.l.b16 %v834
    %v1409 = vunpack.c.h.b16 %v834
    %v1410 = vunpack.c.l.b16 %v835
    %v1411 = vunpack.c.h.b16 %v835
    %v1412 = vunpack.c.l.b16 %v836
    %v1413 = vunpack.c.h.b16 %v836
    %v1414 = vunpack.c.l.b16 %v837
    %v1415 = vunpack.c.h.b16 %v837
    %v1416 = vunpack.c.l.b16 %v838
    %v1417 = vunpack.c.h.b16 %v838
    %v1418 = vunpack.c.l.b16 %v839
    %v1419 = vunpack.c.h.b16 %v839
    %v1420 = vunpack.c.l.b16 %v840
    %v1421 = vunpack.c.h.b16 %v840
    %v1422 = vunpack.c.l.b16 %v841
    %v1423 = vunpack.c.h.b16 %v841
    %v1424 = vunpack.c.l.b16 %v842
    %v1425 = vunpack.c.h.b16 %v842
    %v1426 = vunpack.c.l.b16 %v843
    %v1427 = vunpack.c.h.b16 %v843
    %v1428 = vunpack.c.l.b16 %v844
    %v1429 = vunpack.c.h.b16 %v844
    %v1430 = vunpack.c.l.b16 %v845
    %v1431 = vunpack.c.h.b16 %v845
    %v1432 = vunpack.c.l.b16 %v846
    %v1433 = vunpack.c.h.b16 %v846
    %v1434 = vunpack.c.l.b16 %v847
    %v1435 = vunpack.c.h.b16 %v847
    %v1436 = vunpack.c.l.b16 %v848
    %v1437 = vunpack.c.h.b16 %v848
    %v1438 = vunpack.c.l.b16 %v849
    %v1439 = vunpack.c.h.b16 %v849
    %v1440 = vunpack.c.l.b16 %v850
    %v1441 = vunpack.c.h.b16 %v850
    %v1442 = vunpack.c.l.b16 %v851
    %v1443 = vunpack.c.h.b16 %v851
    %v1444 = vunpack.c.l.b16 %v852
    %v1445 = vunpack.c.h.b16 %v852
    %v1446 = vunpack.c.l.b16 %v853
    %v1447 = vunpack.c.h.b16 %v853
    %v1448 = vunpack.c.l.b16 %v854
    %v1449 = vunpack.c.h.b16 %v854
    %v1450 = vunpack.c.l.b16 %v855
    %v1451 = vunpack.c.h.b16 %v855
    %v1452 = vunpack.c.l.b16 %v856
    %v1453 = vunpack.c.h.b16 %v856
    %v1454 = vunpack.c.l.b16 %v857
    %v1455 = vunpack.c.h.b16 %v857
    %v1456 = vunpack.c.l.b16 %v858
    %v1457 = vunpack.c.h.b16 %v858
    %v1458 = vunpack.c.l.b16 %v859
    %v1459 = vunpack.c.h.b16 %v859
    %v1460 = vunpack.c.l.b16 %v860
    %v1461 = vunpack.c.h.b16 %v860
    %v1462 = vunpack.c.l.b16 %v861
    %v1463 = vunpack.c.h.b16 %v861
    %v1464 = vunpack.c.l.b16 %v862
    %v1465 = vunpack.c.h.b16 %v862
    %v1466 = vunpack.c.l.b16 %v863
    %v1467 = vunpack.c.h.b16 %v863
    %v1468 = vunpack.c.l.b16 %v864
    %v1469 = vunpack.c.h.b16 %v864
    %v1470 = vunpack.c.l.b16 %v865
    %v1471 = vunpack.c.h.b16 %v865
    %v1472 = vunpack.c.l.b16 %v866
    %v1473 = vunpack.c.h.b16 %v866
    %v1474 = vunpack.c.l.b16 %v867
    %v1475 = vunpack.c.h.b16 %v867
    %v1476 = vunpack.c.l.b16 %v868
    %v1477 = vunpack.c.h.b16 %v868
    %v1478 = vunpack.c.l.b16 %v869
    %v1479 = vunpack.c.h.b16 %v869
    %v1480 = vunpack.c.l.b16 %v870
    %v1481 = vunpack.c.h.b16 %v870
    %v1482 = vunpack.c.l.b16 %v871
    %v1483 = vunpack.c.h.b16 %v871
    %v1484 = vunpack.c.l.b16 %v872
    %v1485 = vunpack.c.h.b16 %v872
    %v1486 = vunpack.c.l.b16 %v873
    %v1487 = vunpack.c.h.b16 %v873
    %v1488 = vunpack.c.l.b16 %v874
    %v1489 = vunpack.c.h.b16 %v874
    %v1490 = vunpack.c.l.b16 %v875
    %v1491 = vunpack.c.h.b16 %v875
    %v1492 = vunpack.c.l.b16 %v876
    %v1493 = vunpack.c.h.b16 %v876
    %v1494 = vunpack.c.l.b16 %v877
    %v1495 = vunpack.c.h.b16 %v877
    %v1496 = vunpack.c.l.b16 %v878
    %v1497 = vunpack.c.h.b16 %v878
    %v1498 = vunpack.c.l.b16 %v879
    %v1499 = vunpack.c.h.b16 %v879
    %v1500 = vunpack.c.l.b16 %v880
    %v1501 = vunpack.c.h.b16 %v880
    %v1502 = vunpack.c.l.b16 %v881
    %v1503 = vunpack.c.h.b16 %v881
    %v1504 = vunpack.c.l.b16 %v882
    %v1505 = vunpack.c.h.b16 %v882
    %v1506 = vunpack.c.l.b16 %v883
    %v1507 = vunpack.c.h.b16 %v883
    %v1508 = vunpack.c.l.b16 %v884
    %v1509 = vunpack.c.h.b16 %v884
    %v1510 = vunpack.c.l.b16 %v885
    %v1511 = vunpack.c.h.b16 %v885
    %v1512 = vunpack.c.l.b16 %v886
    %v1513 = vunpack.c.h.b16 %v886
    %v1514 = vunpack.c.l.b16 %v887
    %v1515 = vunpack.c.h.b16 %v887
    %v1516 = vunpack.c.l.b16 %v888
    %v1517 = vunpack.c.h.b16 %v888
    %v1518 = vunpack.c.l.b16 %v889
    %v1519 = vunpack.c.h.b16 %v889
    %v1520 = vunpack.c.l.b16 %v890
    %v1521 = vunpack.c.h.b16 %v890
    %v1522 = vunpack.c.l.b16 %v891
    %v1523 = vunpack.c.h.b16 %v891
    %v1524 = vunpack.c.l.b16 %v892
    %v1525 = vunpack.c.h.b16 %v892
    %v1526 = vunpack.c.l.b16 %v893
    %v1527 = vunpack.c.h.b16 %v893
    %v1528 = vunpack.c.l.b16 %v894
    %v1529 = vunpack.c.h.b16 %v894
    %v1530 = vunpack.c.l.b16 %v895
    %v1531 = vunpack.c.h.b16 %v895
    %v1532 = vunpack.c.l.b16 %v896
    %v1533 = vunpack.c.h.b16 %v896
    %v1534 = vunpack.c.l.b16 %v897
    %v1535 = vunpack.c.h.b16 %v897
    %v1536 = vunpack.c.l.b16 %v898
    %v1537 = vunpack.c.h.b16 %v898
    %v1538 = vunpack.c.l.b16 %v899
    %v1539 = vunpack.c.h.b16 %v899
    %v1540 = vunpack.c.l.b16 %v900
    %v1541 = vunpack.c.h.b16 %v900
    %v1542 = vunpack.c.l.b16 %v901
    %v1543 = vunpack.c.h.b16 %v901
    %v1544 = vunpack.c.l.b16 %v902
    %v1545 = vunpack.c.h.b16 %v902
    %v1546 = vunpack.c.l.b16 %v903
    %v1547 = vunpack.c.h.b16 %v903
    %v1548 = vunpack.c.l.b16 %v904
    %v1549 = vunpack.c.h.b16 %v904
    %v1550 = vunpack.c.l.b16 %v905
    %v1551 = vunpack.c.h.b16 %v905
    %v1552 = vunpack.c.l.b16 %v906
    %v1553 = vunpack.c.h.b16 %v906
    %v1554 = vunpack.c.l.b16 %v907
    %v1555 = vunpack.c.h.b16 %v907
    %v1556 = vunpack.c.l.b16 %v908
    %v1557 = vunpack.c.h.b16 %v908
    %v1558 = vunpack.c.l.b16 %v909
    %v1559 = vunpack.c.h.b16 %v909
    %v1560 = vunpack.c.l.b16 %v910
    %v1561 = vunpack.c.h.b16 %v910
    %v1562 = vunpack.c.l.b16 %v911
    %v1563 = vunpack.c.h.b16 %v911
    %v1564 = vunpack.c.l.b16 %v912
    %v1565 = vunpack.c.h.b16 %v912
    %v1566 = vunpack.c.l.b16 %v913
    %v1567 = vunpack.c.h.b16 %v913
    %v1568 = vunpack.c.l.b16 %v914
    %v1569 = vunpack.c.h.b16 %v914
    %v1570 = vunpack.c.l.b16 %v915
    %v1571 = vunpack.c.h.b16 %v915
    %v1572 = vunpack.c.l.b16 %v916
    %v1573 = vunpack.c.h.b16 %v916
    %v1574 = vunpack.c.l.b16 %v917
    %v1575 = vunpack.c.h.b16 %v917
    %v1576 = vunpack.c.l.b16 %v918
    %v1577 = vunpack.c.h.b16 %v918
    %v1578 = vunpack.c.l.b16 %v919
    %v1579 = vunpack.c.h.b16 %v919
    %v1580 = vunpack.c.l.b16 %v920
    %v1581 = vunpack.c.h.b16 %v920
    %v1582 = vunpack.c.l.b16 %v921
    %v1583 = vunpack.c.h.b16 %v921
    %v1584 = vunpack.c.l.b16 %v922
    %v1585 = vunpack.c.h.b16 %v922
    %v1586 = vunpack.c.l.b16 %v923
    %v1587 = vunpack.c.h.b16 %v923
    %v1588 = vunpack.c.l.b16 %v924
    %v1589 = vunpack.c.h.b16 %v924
    %v1590 = vunpack.c.l.b16 %v925
    %v1591 = vunpack.c.h.b16 %v925
    %v1592 = vunpack.c.l.b16 %v926
    %v1593 = vunpack.c.h.b16 %v926
    %v1594 = vunpack.c.l.b16 %v927
    %v1595 = vunpack.c.h.b16 %v927
    %v1596 = vunpack.c.l.b16 %v928
    %v1597 = vunpack.c.h.b16 %v928
    %v1598 = vunpack.c.l.b16 %v929
    %v1599 = vunpack.c.h.b16 %v929
    %v1600 = vunpack.c.l.b16 %v930
    %v1601 = vunpack.c.h.b16 %v930
    %v1602 = vunpack.c.l.b16 %v931
    %v1603 = vunpack.c.h.b16 %v931
    %v1604 = vunpack.c.l.b16 %v932
    %v1605 = vunpack.c.h.b16 %v932
    %v1606 = vunpack.c.l.b16 %v933
    %v1607 = vunpack.c.h.b16 %v933
    %v1608 = vunpack.c.l.b16 %v934
    %v1609 = vunpack.c.h.b16 %v934
    %v1610 = vunpack.c.l.b16 %v935
    %v1611 = vunpack.c.h.b16 %v935
    %v1612 = vunpack.c.l.b16 %v936
    %v1613 = vunpack.c.h.b16 %v936
    %v1614 = vunpack.c.l.b16 %v937
    %v1615 = vunpack.c.h.b16 %v937
    %v1616 = vunpack.c.l.b16 %v938
    %v1617 = vunpack.c.h.b16 %v938
    %v1618 = vunpack.c.l.b16 %v939
    %v1619 = vunpack.c.h.b16 %v939
    %v1620 = vunpack.c.l.b16 %v940
    %v1621 = vunpack.c.h.b16 %v940
    %v1622 = vunpack.c.l.b16 %v941
    %v1623 = vunpack.c.h.b16 %v941
    %v1624 = vunpack.c.l.b16 %v942
    %v1625 = vunpack.c.h.b16 %v942
    %v1626 = vunpack.c.l.b16 %v943
    %v1627 = vunpack.c.h.b16 %v943
    %v1628 = vunpack.c.l.b16 %v944
    %v1629 = vunpack.c.h.b16 %v944
    %v1630 = vunpack.c.l.b16 %v945
    %v1631 = vunpack.c.h.b16 %v945
    %v1632 = vunpack.c.l.b16 %v946
    %v1633 = vunpack.c.h.b16 %v946
    %v1634 = vunpack.c.l.b16 %v947
    %v1635 = vunpack.c.h.b16 %v947
    %v1636 = vunpack.c.l.b16 %v948
    %v1637 = vunpack.c.h.b16 %v948
    %v1638 = vunpack.c.l.b16 %v949
    %v1639 = vunpack.c.h.b16 %v949
    %v1640 = vunpack.c.l.b16 %v950
    %v1641 = vunpack.c.h.b16 %v950
    %v1642 = vunpack.c.l.b16 %v951
    %v1643 = vunpack.c.h.b16 %v951
    %v1644 = vunpack.c.l.b16 %v952
    %v1645 = vunpack.c.h.b16 %v952
    %v1646 = vunpack.c.l.b16 %v953
    %v1647 = vunpack.c.h.b16 %v953
    %v1648 = vunpack.c.l.b16 %v954
    %v1649 = vunpack.c.h.b16 %v954
    %v1650 = vunpack.c.l.b16 %v955
    %v1651 = vunpack.c.h.b16 %v955
    %v1652 = vunpack.c.l.b16 %v956
    %v1653 = vunpack.c.h.b16 %v956
    %v1654 = vunpack.c.l.b16 %v957
    %v1655 = vunpack.c.h.b16 %v957
    %v1656 = vunpack.c.l.b16 %v958
    %v1657 = vunpack.c.h.b16 %v958
    %v1658 = vunpack.c.l.b16 %v959
    %v1659 = vunpack.c.h.b16 %v959
    %v1660 = vunpack.c.l.b16 %v960
    %v1661 = vunpack.c.h.b16 %v960
    %v1662 = vunpack.c.l.b16 %v961
    %v1663 = vunpack.c.h.b16 %v961
    %v1664 = vunpack.c.l.b16 %v962
    %v1665 = vunpack.c.h.b16 %v962
    %v1666 = vunpack.c.l.b16 %v963
    %v1667 = vunpack.c.h.b16 %v963
    %v1668 = vunpack.c.l.b16 %v964
    %v1669 = vunpack.c.h.b16 %v964
    %v1670 = vunpack.c.l.b16 %v965
    %v1671 = vunpack.c.h.b16 %v965
    %v1672 = vunpack.c.l.b16 %v966
    %v1673 = vunpack.c.h.b16 %v966
    %v1674 = vunpack.c.l.b16 %v967
    %v1675 = vunpack.c.h.b16 %v967
    %v1676 = vunpack.c.l.b16 %v968
    %v1677 = vunpack.c.h.b16 %v968
    %v1678 = vunpack.c.l.b16 %v969
    %v1679 = vunpack.c.h.b16 %v969
    %v1680 = vunpack.c.l.b16 %v970
    %v1681 = vunpack.c.h.b16 %v970
    %v1682 = vunpack.c.l.b16 %v971
    %v1683 = vunpack.c.h.b16 %v971
    %v1684 = vunpack.c.l.b16 %v972
    %v1685 = vunpack.c.h.b16 %v972
    %v1686 = vunpack.c.l.b16 %v973
    %v1687 = vunpack.c.h.b16 %v973
    %v1688 = vunpack.c.l.b16 %v974
    %v1689 = vunpack.c.h.b16 %v974
    %v1690 = vunpack.c.l.b16 %v975
    %v1691 = vunpack.c.h.b16 %v975
    %v1692 = vunpack.c.l.b16 %v976
    %v1693 = vunpack.c.h.b16 %v976
    %v1694 = vunpack.c.l.b16 %v977
    %v1695 = vunpack.c.h.b16 %v977
    %v1696 = vunpack.c.l.b16 %v978
    %v1697 = vunpack.c.h.b16 %v978
    %v1698 = vunpack.c.l.b16 %v979
    %v1699 = vunpack.c.h.b16 %v979
    %v1700 = vunpack.c.l.b16 %v980
    %v1701 = vunpack.c.h.b16 %v980
    %v1702 = vunpack.c.l.b16 %v981
    %v1703 = vunpack.c.h.b16 %v981
    %v1704 = vunpack.c.l.b16 %v982
    %v1705 = vunpack.c.h.b16 %v982
    %v1706 = vunpack.c.l.b16 %v983
    %v1707 = vunpack.c.h.b16 %v983
    %v1708 = vunpack.c.l.b16 %v984
    %v1709 = vunpack.c.h.b16 %v984
    %v1710 = vunpack.c.l.b16 %v985
    %v1711 = vunpack.c.h.b16 %v985
    %v1712 = vunpack.c.l.b16 %v986
    %v1713 = vunpack.c.h.b16 %v986
    %v1714 = vunpack.c.l.b16 %v987
    %v1715 = vunpack.c.h.b16 %v987
    %v1716 = vunpack.c.l.b16 %v988
    %v1717 = vunpack.c.h.b16 %v988
    %v1718 = vunpack.c.l.b16 %v989
    %v1719 = vunpack.c.h.b16 %v989
    %v1720 = vunpack.c.l.b16 %v990
    %v1721 = vunpack.c.h.b16 %v990
    %v1722 = vunpack.c.l.b16 %v991
    %v1723 = vunpack.c.h.b16 %v991
    %v1724 = vunpack.c.l.b16 %v992
    %v1725 = vunpack.c.h.b16 %v992
    %v1726 = vunpack.c.l.b16 %v993
    %v1727 = vunpack.c.h.b16 %v993
    %v1728 = vunpack.c.l.b16 %v994
    %v1729 = vunpack.c.h.b16 %v994
    %v1730 = vunpack.c.l.b16 %v995
    %v1731 = vunpack.c.h.b16 %v995
    %v1732 = vunpack.c.l.b16 %v996
    %v1733 = vunpack.c.h.b16 %v996
    %v1734 = vunpack.c.l.b16 %v997
    %v1735 = vunpack.c.h.b16 %v997
    %v1736 = vunpack.c.l.b16 %v998
    %v1737 = vunpack.c.h.b16 %v998
    %v1738 = vunpack.c.l.b16 %v999
    %v1739 = vunpack.c.h.b16 %v999
    %v1740 = vunpack.c.l.b16 %v1000
    %v1741 = vunpack.c.h.b16 %v1000
    %v1742 = vunpack.c.l.b16 %v1001
    %v1743 = vunpack.c.h.b16 %v1001
    %v1744 = vunpack.c.l.b16 %v1002
    %v1745 = vunpack.c.h.b16 %v1002
    %v1746 = vunpack.c.l.b16 %v1003
    %v1747 = vunpack.c.h.b16 %v1003
    %v1748 = vunpack.c.l.b16 %v1004
    %v1749 = vunpack.c.h.b16 %v1004
    %v1750 = vunpack.c.l.b16 %v1005
    %v1751 = vunpack.c.h.b16 %v1005
    %v1752 = vunpack.c.l.b16 %v1006
    %v1753 = vunpack.c.h.b16 %v1006
    %v1754 = vunpack.c.l.b16 %v1007
    %v1755 = vunpack.c.h.b16 %v1007
    %v1756 = vunpack.c.l.b16 %v1008
    %v1757 = vunpack.c.h.b16 %v1008
    %v1758 = vunpack.c.l.b16 %v1009
    %v1759 = vunpack.c.h.b16 %v1009
    %v1760 = vunpack.c.l.b16 %v1010
    %v1761 = vunpack.c.h.b16 %v1010
    %v1762 = vunpack.c.l.b16 %v1011
    %v1763 = vunpack.c.h.b16 %v1011
    %v1764 = vunpack.c.l.b16 %v1012
    %v1765 = vunpack.c.h.b16 %v1012
    %v1766 = vunpack.c.l.b16 %v1013
    %v1767 = vunpack.c.h.b16 %v1013
    %v1768 = vunpack.c.l.b16 %v1014
    %v1769 = vunpack.c.h.b16 %v1014
    %v1770 = vunpack.c.l.b16 %v1015
    %v1771 = vunpack.c.h.b16 %v1015
    %v1772 = vunpack.c.l.b16 %v1016
    %v1773 = vunpack.c.h.b16 %v1016
    %v1774 = vunpack.c.l.b16 %v1017
    %v1775 = vunpack.c.h.b16 %v1017
    %v1776 = vunpack.c.l.b16 %v1018
    %v1777 = vunpack.c.h.b16 %v1018
    %v1778 = vunpack.c.l.b16 %v1019
    %v1779 = vunpack.c.h.b16 %v1019
    %v1780 = vunpack.c.l.b16 %v1020
    %v1781 = vunpack.c.h.b16 %v1020
    %v1782 = vunpack.c.l.b16 %v1021
    %v1783 = vunpack.c.h.b16 %v1021
    %v1784 = vunpack.c.l.b16 %v1022
    %v1785 = vunpack.c.h.b16 %v1022
    %v1786 = vunpack.c.l.b16 %v1023
    %v1787 = vunpack.c.h.b16 %v1023
    %v1788 = vunpack.c.l.b16 %v1024
    %v1789 = vunpack.c.h.b16 %v1024
    %v1790 = vunpack.c.l.b16 %v1025
    %v1791 = vunpack.c.h.b16 %v1025
    %v1792 = vunpack.c.l.b16 %v1026
    %v1793 = vunpack.c.h.b16 %v1026
    %v1794 = vunpack.c.l.b16 %v1027
    %v1795 = vunpack.c.h.b16 %v1027
    %v1796 = vunpack.c.l.b16 %v1028
    %v1797 = vunpack.c.h.b16 %v1028
    %v1798 = vunpack.c.l.b16 %v1029
    %v1799 = vunpack.c.h.b16 %v1029
    %v1800 = vunpack.c.l.b16 %v1030
    %v1801 = vunpack.c.h.b16 %v1030
    %v1802 = vunpack.c.l.b16 %v1031
    %v1803 = vunpack.c.h.b16 %v1031
    %v1804 = vunpack.c.l.b16 %v1032
    %v1805 = vunpack.c.h.b16 %v1032
    %v1806 = vunpack.c.l.b16 %v1033
    %v1807 = vunpack.c.h.b16 %v1033
    %v1808 = vunpack.c.l.b16 %v1034
    %v1809 = vunpack.c.h.b16 %v1034
    %v1810 = vunpack.c.l.b16 %v1035
    %v1811 = vunpack.c.h.b16 %v1035
    %v1812 = vunpack.c.l.b16 %v1036
    %v1813 = vunpack.c.h.b16 %v1036
    %v1814 = vunpack.c.l.b16 %v1037
    %v1815 = vunpack.c.h.b16 %v1037
    %v1816 = vunpack.c.l.b16 %v1038
    %v1817 = vunpack.c.h.b16 %v1038
    %v1818 = vunpack.c.l.b16 %v1039
    %v1819 = vunpack.c.h.b16 %v1039
    %v1820 = vunpack.c.l.b16 %v1040
    %v1821 = vunpack.c.h.b16 %v1040
    %v1822 = vunpack.c.l.b16 %v1041
    %v1823 = vunpack.c.h.b16 %v1041
    %v1824 = vunpack.c.l.b16 %v1042
    %v1825 = vunpack.c.h.b16 %v1042
    %v1826 = vunpack.c.l.b16 %v1043
    %v1827 = vunpack.c.h.b16 %v1043
    %v1828 = vunpack.c.l.b16 %v1044
    %v1829 = vunpack.c.h.b16 %v1044
    %v1830 = vunpack.c.l.b16 %v1045
    %v1831 = vunpack.c.h.b16 %v1045
    %v1832 = vpack.c.b16 %v1328, %v1320
    %v1833 = vpack.c.b16 %v1329, %v1321
    %v1834 = vpack.c.b16 %v1330, %v1322
    %v1835 = vpack.c.b16 %v1331, %v1323
    %v1836 = vpack.c.b16 %v1332, %v1324
    %v1837 = vpack.c.b16 %v1333, %v1325
    %v1838 = vpack.c.b16 %v1334, %v1326
    %v1839 = vpack.c.b16 %v1335, %v1327
    %v1840 = vpack.c.b16 %v1344, %v1336
    %v1841 = vpack.c.b16 %v1345, %v1337
    %v1842 = vpack.c.b16 %v1346, %v1338
    %v1843 = vpack.c.b16 %v1347, %v1339
    %v1844 = vpack.c.b16 %v1348, %v1340
    %v1845 = vpack.c.b16 %v1349, %v1341
    %v1846 = vpack.c.b16 %v1350, %v1342
    %v1847 = vpack.c.b16 %v1351, %v1343
    %v1848 = vpack.c.b16 %v1360, %v1352
    %v1849 = vpack.c.b16 %v1361, %v1353
    %v1850 = vpack.c.b16 %v1362, %v1354
    %v1851 = vpack.c.b16 %v1363, %v1355
    %v1852 = vpack.c.b16 %v1364, %v1356
    %v1853 = vpack.c.b16 %v1365, %v1357
    %v1854 = vpack.c.b16 %v1366, %v1358
    %v1855 = vpack.c.b16 %v1367, %v1359
    %v1856 = vpack.c.b16 %v1376, %v1368
    %v1857 = vpack.c.b16 %v1377, %v1369
    %v1858 = vpack.c.b16 %v1378, %v1370
    %v1859 = vpack.c.b16 %v1379, %v1371
    %v1860 = vpack.c.b16 %v1380, %v1372
    %v1861 = vpack.c.b16 %v1381, %v1373
    %v1862 = vpack.c.b16 %v1382, %v1374
    %v1863 = vpack.c.b16 %v1383, %v1375
    %v1864 = vpack.c.b16 %v1392, %v1384
    %v1865 = vpack.c.b16 %v1393, %v1385
    %v1866 = vpack.c.b16 %v1394, %v1386
    %v1867 = vpack.c.b16 %v1395, %v1387
    %v1868 = vpack.c.b16 %v1396, %v1388
    %v1869 = vpack.c.b16 %v1397, %v1389
    %v1870 = vpack.c.b16 %v1398, %v1390
    %v1871 = vpack.c.b16 %v1399, %v1391
    %v1872 = vpack.c.b16 %v1408, %v1400
    %v1873 = vpack.c.b16 %v1409, %v1401
    %v1874 = vpack.c.b16 %v1410, %v1402
    %v1875 = vpack.c.b16 %v1411, %v1403
    %v1876 = vpack.c.b16 %v1412, %v1404
    %v1877 = vpack.c.b16 %v1413, %v1405
    %v1878 = vpack.c.b16 %v1414, %v1406
    %v1879 = vpack.c.b16 %v1415, %v1407
    %v1880 = vpack.c.b16 %v1424, %v1416
    %v1881 = vpack.c.b16 %v1425, %v1417
    %v1882 = vpack.c.b16 %v1426, %v1418
    %v1883 = vpack.c.b16 %v1427, %v1419
    %v1884 = vpack.c.b16 %v1428, %v1420
    %v1885 = vpack.c.b16 %v1429, %v1421
    %v1886 = vpack.c.b16 %v1430, %v1422
    %v1887 = vpack.c.b16 %v1431, %v1423
    %v1888 = vpack.c.b16 %v1440, %v1432
    %v1889 = vpack.c.b16 %v1441, %v1433
    %v1890 = vpack.c.b16 %v1442, %v1434
    %v1891 = vpack.c.b16 %v1443, %v1435
    %v1892 = vpack.c.b16 %v1444, %v1436
    %v1893 = vpack.c.b16 %v1445, %v1437
    %v1894 = vpack.c.b16 %v1446, %v1438
    %v1895 = vpack.c.b16 %v1447, %v1439
    %v1896 = vpack.c.b16 %v1456, %v1448
    %v1897 = vpack.c.b16 %v1457, %v1449
    %v1898 = vpack.c.b16 %v1458, %v1450
    %v1899 = vpack.c.b16 %v1459, %v1451
    %v1900 = vpack.c.b16 %v1460, %v1452
    %v1901 = vpack.c.b16 %v1461, %v1453
    %v1902 = vpack.c.b16 %v1462, %v1454
    %v1903 = vpack.c.b16 %v1463, %v1455
    %v1904 = vpack.c.b16 %v1472, %v1464
    %v1905 = vpack.c.b16 %v1473, %v1465
    %v1906 = vpack.c.b16 %v1474, %v1466
    %v1907 = vpack.c.b16 %v1475, %v1467
    %v1908 = vpack.c.b16 %v1476, %v1468
    %v1909 = vpack.c.b16 %v1477, %v1469
    %v1910 = vpack.c.b16 %v1478, %v1470
    %v1911 = vpack.c.b16 %v1479, %v1471
    %v1912 = vpack.c.b16 %v1488, %v1480
    %v1913 = vpack.c.b16 %v1489, %v1481
    %v1914 = vpack.c.b16 %v1490, %v1482
    %v1915 = vpack.c.b16 %v1491, %v1483
    %v1916 = vpack.c.b16 %v1492, %v1484
    %v1917 = vpack.c.b16 %v1493, %v1485
    %v1918 = vpack.c.b16 %v1494, %v1486
    %v1919 = vpack.c.b16 %v1495, %v1487
    %v1920 = vpack.c.b16 %v1504, %v1496
    %v1921 = vpack.c.b16 %v1505, %v1497
    %v1922 = vpack.c.b16 %v1506, %v1498
    %v1923 = vpack.c.b16 %v1507, %v1499
    %v1924 = vpack.c.b16 %v1508, %v1500
    %v1925 = vpack.c.b16 %v1509, %v1501
    %v1926 = vpack.c.b16 %v1510, %v1502
    %v1927 = vpack.c.b16 %v1511, %v1503
    %v1928 = vpack.c.b16 %v1520, %v1512
    %v1929 = vpack.c.b16 %v1521, %v1513
    %v1930 = vpack.c.b16 %v1522, %v1514
    %v1931 = vpack.c.b16 %v1523, %v1515
    %v1932 = vpack.c.b16 %v1524, %v1516
    %v1933 = vpack.c.b16 %v1525, %v1517
    %v1934 = vpack.c.b16 %v1526, %v1518
    %v1935 = vpack.c.b16 %v1527, %v1519
    %v1936 = vpack.c.b16 %v1536, %v1528
    %v1937 = vpack.c.b16 %v1537, %v1529
    %v1938 = vpack.c.b16 %v1538, %v1530
    %v1939 = vpack.c.b16 %v1539, %v1531
    %v1940 = vpack.c.b16 %v1540, %v1532
    %v1941 = vpack.c.b16 %v1541, %v1533
    %v1942 = vpack.c.b16 %v1542, %v1534
    %v1943 = vpack.c.b16 %v1543, %v1535
    %v1944 = vpack.c.b16 %v1552, %v1544
    %v1945 = vpack.c.b16 %v1553, %v1545
    %v1946 = vpack.c.b16 %v1554, %v1546
    %v1947 = vpack.c.b16 %v1555, %v1547
    %v1948 = vpack.c.b16 %v1556, %v1548
    %v1949 = vpack.c.b16 %v1557, %v1549
    %v1950 = vpack.c.b16 %v1558, %v1550
    %v1951 = vpack.c.b16 %v1559, %v1551
    %v1952 = vpack.c.b16 %v1568, %v1560
    %v1953 = vpack.c.b16 %v1569, %v1561
    %v1954 = vpack.c.b16 %v1570, %v1562
    %v1955 = vpack.c.b16 %v1571, %v1563
    %v1956 = vpack.c.b16 %v1572, %v1564
    %v1957 = vpack.c.b16 %v1573, %v1565
    %v1958 = vpack.c.b16 %v1574, %v1566
    %v1959 = vpack.c.b16 %v1575, %v1567
    %v1960 = vpack.c.b16 %v1584, %v1576
    %v1961 = vpack.c.b16 %v1585, %v1577
    %v1962 = vpack.c.b16 %v1586, %v1578
    %v1963 = vpack.c.b16 %v1587, %v1579
    %v1964 = vpack.c.b16 %v1588, %v1580
    %v1965 = vpack.c.b16 %v1589, %v1581
    %v1966 = vpack.c.b16 %v1590, %v1582
    %v1967 = vpack.c.b16 %v1591, %v1583
    %v1968 = vpack.c.b16 %v1600, %v1592
    %v1969 = vpack.c.b16 %v1601, %v1593
    %v1970 = vpack.c.b16 %v1602, %v1594
    %v1971 = vpack.c.b16 %v1603, %v1595
    %v1972 = vpack.c.b16 %v1604, %v1596
    %v1973 = vpack.c.b16 %v1605, %v1597
    %v1974 = vpack.c.b16 %v1606, %v1598
    %v1975 = vpack.c.b16 %v1607, %v1599
    %v1976 = vpack.c.b16 %v1616, %v1608
    %v1977 = vpack.c.b16 %v1617, %v1609
    %v1978 = vpack.c.b16 %v1618, %v1610
    %v1979 = vpack.c.b16 %v1619, %v1611
    %v1980 = vpack.c.b16 %v1620, %v1612
    %v1981 = vpack.c.b16 %v1621, %v1613
    %v1982 = vpack.c.b16 %v1622, %v1614
    %v1983 = vpack.c.b16 %v1623, %v1615
    %v1984 = vpack.c.b16 %v1632, %v1624
    %v1985 = vpack.c.b16 %v1633, %v1625
    %v1986 = vpack.c.b16 %v1634, %v1626
    %v1987 = vpack.c.b16 %v1635, %v1627
    %v1988 = vpack.c.b16 %v1636, %v1628
    %v1989 = vpack.c.b16 %v1637, %v1629
    %v1990 = vpack.c.b16 %v1638, %v1630
    %v1991 = vpack.c.b16 %v1639, %v1631
    %v1992 = vpack.c.b16 %v1648, %v1640
    %v1993 = vpack.c.b16 %v1649, %v1641
    %v1994 = vpack.c.b16 %v1650, %v1642
    %v1995 = vpack.c.b16 %v1651, %v1643
    %v1996 = vpack.c.b16 %v1652, %v1644
    %v1997 = vpack.c.b16 %v1653, %v1645
    %v1998 = vpack.c.b16 %v1654, %v1646
    %v1999 = vpack.c.b16 %v1655, %v1647
    %v2000 = vpack.c.b16 %v1664, %v1656
    %v2001 = vpack.c.b16 %v1665, %v1657
    %v2002 = vpack.c.b16 %v1666, %v1658
    %v2003 = vpack.c.b16 %v1667, %v1659
    %v2004 = vpack.c.b16 %v1668, %v1660
    %v2005 = vpack.c.b16 %v1669, %v1661
    %v2006 = vpack.c.b16 %v1670, %v1662
    %v2007 = vpack.c.b16 %v1671, %v1663
    %v2008 = vpack.c.b16 %v1680, %v1672
    %v2009 = vpack.c.b16 %v1681, %v1673
    %v2010 = vpack.c.b16 %v1682, %v1674
    %v2011 = vpack.c.b16 %v1683, %v1675
    %v2012 = vpack.c.b16 %v1684, %v1676
    %v2013 = vpack.c.b16 %v1685, %v1677
    %v2014 = vpack.c.b16 %v1686, %v1678
    %v2015 = vpack.c.b16 %v1687, %v1679
    %v2016 = vpack.c.b16 %v1696, %v1688
    %v2017 = vpack.c.b16 %v1697, %v1689
    %v2018 = vpack.c.b16 %v1698, %v1690
    %v2019 = vpack.c.b16 %v1699, %v1691
    %v2020 = vpack.c.b16 %v1700, %v1692
    %v2021 = vpack.c.b16 %v1701, %v1693
    %v2022 = vpack.c.b16 %v1702, %v1694
    %v2023 = vpack.c.b16 %v1703, %v1695
    %v2024 = vpack.c.b16 %v1712, %v1704
    %v2025 = vpack.c.b16 %v1713, %v1705
    %v2026 = vpack.c.b16 %v1714, %v1706
    %v2027 = vpack.c.b16 %v1715, %v1707
    %v2028 = vpack.c.b16 %v1716, %v1708
    %v2029 = vpack.c.b16 %v1717, %v1709
    %v2030 = vpack.c.b16 %v1718, %v1710
    %v2031 = vpack.c.b16 %v1719, %v1711
    %v2032 = vpack.c.b16 %v1728, %v1720
    %v2033 = vpack.c.b16 %v1729, %v1721
    %v2034 = vpack.c.b16 %v1730, %v1722
    %v2035 = vpack.c.b16 %v1731, %v1723
    %v2036 = vpack.c.b16 %v1732, %v1724
    %v2037 = vpack.c.b16 %v1733, %v1725
    %v2038 = vpack.c.b16 %v1734, %v1726
    %v2039 = vpack.c.b16 %v1735, %v1727
    %v2040 = vpack.c.b16 %v1744, %v1736
    %v2041 = vpack.c.b16 %v1745, %v1737
    %v2042 = vpack.c.b16 %v1746, %v1738
    %v2043 = vpack.c.b16 %v1747, %v1739
    %v2044 = vpack.c.b16 %v1748, %v1740
    %v2045 = vpack.c.b16 %v1749, %v1741
    %v2046 = vpack.c.b16 %v1750, %v1742
    %v2047 = vpack.c.b16 %v1751, %v1743
    %v2048 = vpack.c.b16 %v1760, %v1752
    %v2049 = vpack.c.b16 %v1761, %v1753
    %v2050 = vpack.c.b16 %v1762, %v1754
    %v2051 = vpack.c.b16 %v1763, %v1755
    %v2052 = vpack.c.b16 %v1764, %v1756
    %v2053 = vpack.c.b16 %v1765, %v1757
    %v2054 = vpack.c.b16 %v1766, %v1758
    %v2055 = vpack.c.b16 %v1767, %v1759
    %v2056 = vpack.c.b16 %v1776, %v1768
    %v2057 = vpack.c.b16 %v1777, %v1769
    %v2058 = vpack.c.b16 %v1778, %v1770
    %v2059 = vpack.c.b16 %v1779, %v1771
    %v2060 = vpack.c.b16 %v1780, %v1772
    %v2061 = vpack.c.b16 %v1781, %v1773
    %v2062 = vpack.c.b16 %v1782, %v1774
    %v2063 = vpack.c.b16 %v1783, %v1775
    %v2064 = vpack.c.b16 %v1792, %v1784
    %v2065 = vpack.c.b16 %v1793, %v1785
    %v2066 = vpack.c.b16 %v1794, %v1786
    %v2067 = vpack.c.b16 %v1795, %v1787
    %v2068 = vpack.c.b16 %v1796, %v1788
    %v2069 = vpack.c.b16 %v1797, %v1789
    %v2070 = vpack.c.b16 %v1798, %v1790
    %v2071 = vpack.c.b16 %v1799, %v1791
    %v2072 = vpack.c.b16 %v1808, %v1800
    %v2073 = vpack.c.b16 %v1809, %v1801
    %v2074 = vpack.c.b16 %v1810, %v1802
    %v2075 = vpack.c.b16 %v1811, %v1803
    %v2076 = vpack.c.b16 %v1812, %v1804
    %v2077 = vpack.c.b16 %v1813, %v1805
    %v2078 = vpack.c.b16 %v1814, %v1806
    %v2079 = vpack.c.b16 %v1815, %v1807
    %v2080 = vpack.c.b16 %v1824, %v1816
    %v2081 = vpack.c.b16 %v1825, %v1817
    %v2082 = vpack.c.b16 %v1826, %v1818
    %v2083 = vpack.c.b16 %v1827, %v1819
    %v2084 = vpack.c.b16 %v1828, %v1820
    %v2085 = vpack.c.b16 %v1829, %v1821
    %v2086 = vpack.c.b16 %v1830, %v1822
    %v2087 = vpack.c.b16 %v1831, %v1823
    %2344 = vmatpush.bf16.msra.mxu0 %v1888
    %2345 = vmatpush.bf16.msra.mxu0 %v1880
    %2346 = vmatpush.bf16.msra.mxu0 %v1872
    %2347 = vmatpush.bf16.msra.mxu0 %v1864
    %2348 = vmatpush.bf16.msra.mxu0 %v1856
    %2349 = vmatpush.bf16.msra.mxu0 %v1848
    %2350 = vmatpush.bf16.msra.mxu0 %v1840
    %2351 = vmatpush.bf16.msra.mxu0 %v1832
    %2352 = vmatmul.bf16.gmra.mxu0 %v786
    %v2353 = vpop.f32.mrf.mxu0
    %v2354 = vadd.f32 %v1048, %v2353
    %v2355 = vpop.f32.mrf.mxu0
    %2356 = vdwg.mxu0
    %2357 = vmatpush.bf16.msra.mxu0 %v1952
    %2358 = vmatpush.bf16.msra.mxu0 %v1944
    %2359 = vmatpush.bf16.msra.mxu0 %v1936
    %2360 = vmatpush.bf16.msra.mxu0 %v1928
    %2361 = vmatpush.bf16.msra.mxu0 %v1920
    %2362 = vmatpush.bf16.msra.mxu0 %v1912
    %2363 = vmatpush.bf16.msra.mxu0 %v1904
    %2364 = vmatpush.bf16.msra.mxu0 %v1896
    %2365 = vmatmul.bf16.gmra.mxu0 %v787
    %v2366 = vpop.f32.mrf.mxu0
    %v2367 = vadd.f32 %v2354, %v2366
    %v2368 = vpop.f32.mrf.mxu0
    %2369 = vdwg.mxu0
    %2370 = vmatpush.bf16.msra.mxu0 %v2016
    %2371 = vmatpush.bf16.msra.mxu0 %v2008
    %2372 = vmatpush.bf16.msra.mxu0 %v2000
    %2373 = vmatpush.bf16.msra.mxu0 %v1992
    %2374 = vmatpush.bf16.msra.mxu0 %v1984
    %2375 = vmatpush.bf16.msra.mxu0 %v1976
    %2376 = vmatpush.bf16.msra.mxu0 %v1968
    %2377 = vmatpush.bf16.msra.mxu0 %v1960
    %2378 = vmatmul.bf16.gmra.mxu0 %v788
    %v2379 = vpop.f32.mrf.mxu0
    %v2380 = vadd.f32 %v2367, %v2379
    %v2381 = vpop.f32.mrf.mxu0
    %2382 = vdwg.mxu0
    %2383 = vmatpush.bf16.msra.mxu0 %v2080
    %2384 = vmatpush.bf16.msra.mxu0 %v2072
    %2385 = vmatpush.bf16.msra.mxu0 %v2064
    %2386 = vmatpush.bf16.msra.mxu0 %v2056
    %2387 = vmatpush.bf16.msra.mxu0 %v2048
    %2388 = vmatpush.bf16.msra.mxu0 %v2040
    %2389 = vmatpush.bf16.msra.mxu0 %v2032
    %2390 = vmatpush.bf16.msra.mxu0 %v2024
    %2391 = vmatmul.bf16.gmra.mxu0 %v789
    %v2392 = vpop.f32.mrf.mxu0
    %v2393 = vadd.f32 %v2380, %v2392
    %v2394 = vpop.f32.mrf.mxu0
    %2395 = vdwg.mxu0
    %2396 = vmatpush.bf16.msra.mxu0 %v1889
    %2397 = vmatpush.bf16.msra.mxu0 %v1881
    %2398 = vmatpush.bf16.msra.mxu0 %v1873
    %2399 = vmatpush.bf16.msra.mxu0 %v1865
    %2400 = vmatpush.bf16.msra.mxu0 %v1857
    %2401 = vmatpush.bf16.msra.mxu0 %v1849
    %2402 = vmatpush.bf16.msra.mxu0 %v1841
    %2403 = vmatpush.bf16.msra.mxu0 %v1833
    %2404 = vmatmul.bf16.gmra.mxu0 %v786
    %v2405 = vpop.f32.mrf.mxu0
    %v2406 = vadd.f32 %v1049, %v2405
    %v2407 = vpop.f32.mrf.mxu0
    %2408 = vdwg.mxu0
    %2409 = vmatpush.bf16.msra.mxu0 %v1953
    %2410 = vmatpush.bf16.msra.mxu0 %v1945
    %2411 = vmatpush.bf16.msra.mxu0 %v1937
    %2412 = vmatpush.bf16.msra.mxu0 %v1929
    %2413 = vmatpush.bf16.msra.mxu0 %v1921
    %2414 = vmatpush.bf16.msra.mxu0 %v1913
    %2415 = vmatpush.bf16.msra.mxu0 %v1905
    %2416 = vmatpush.bf16.msra.mxu0 %v1897
    %2417 = vmatmul.bf16.gmra.mxu0 %v787
    %v2418 = vpop.f32.mrf.mxu0
    %v2419 = vadd.f32 %v2406, %v2418
    %v2420 = vpop.f32.mrf.mxu0
    %2421 = vdwg.mxu0
    %2422 = vmatpush.bf16.msra.mxu0 %v2017
    %2423 = vmatpush.bf16.msra.mxu0 %v2009
    %2424 = vmatpush.bf16.msra.mxu0 %v2001
    %2425 = vmatpush.bf16.msra.mxu0 %v1993
    %2426 = vmatpush.bf16.msra.mxu0 %v1985
    %2427 = vmatpush.bf16.msra.mxu0 %v1977
    %2428 = vmatpush.bf16.msra.mxu0 %v1969
    %2429 = vmatpush.bf16.msra.mxu0 %v1961
    %2430 = vmatmul.bf16.gmra.mxu0 %v788
    %v2431 = vpop.f32.mrf.mxu0
    %v2432 = vadd.f32 %v2419, %v2431
    %v2433 = vpop.f32.mrf.mxu0
    %2434 = vdwg.mxu0
    %2435 = vmatpush.bf16.msra.mxu0 %v2081
    %2436 = vmatpush.bf16.msra.mxu0 %v2073
    %2437 = vmatpush.bf16.msra.mxu0 %v2065
    %2438 = vmatpush.bf16.msra.mxu0 %v2057
    %2439 = vmatpush.bf16.msra.mxu0 %v2049
    %2440 = vmatpush.bf16.msra.mxu0 %v2041
    %2441 = vmatpush.bf16.msra.mxu0 %v2033
    %2442 = vmatpush.bf16.msra.mxu0 %v2025
    %2443 = vmatmul.bf16.gmra.mxu0 %v789
    %v2444 = vpop.f32.mrf.mxu0
    %v2445 = vadd.f32 %v2432, %v2444
    %v2446 = vpop.f32.mrf.mxu0
    %2447 = vdwg.mxu0
    %2448 = vmatpush.bf16.msra.mxu0 %v1890
    %2449 = vmatpush.bf16.msra.mxu0 %v1882
    %2450 = vmatpush.bf16.msra.mxu0 %v1874
    %2451 = vmatpush.bf16.msra.mxu0 %v1866
    %2452 = vmatpush.bf16.msra.mxu0 %v1858
    %2453 = vmatpush.bf16.msra.mxu0 %v1850
    %2454 = vmatpush.bf16.msra.mxu0 %v1842
    %2455 = vmatpush.bf16.msra.mxu0 %v1834
    %2456 = vmatmul.bf16.gmra.mxu0 %v786
    %v2457 = vpop.f32.mrf.mxu0
    %v2458 = vadd.f32 %v1050, %v2457
    %v2459 = vpop.f32.mrf.mxu0
    %2460 = vdwg.mxu0
    %2461 = vmatpush.bf16.msra.mxu0 %v1954
    %2462 = vmatpush.bf16.msra.mxu0 %v1946
    %2463 = vmatpush.bf16.msra.mxu0 %v1938
    %2464 = vmatpush.bf16.msra.mxu0 %v1930
    %2465 = vmatpush.bf16.msra.mxu0 %v1922
    %2466 = vmatpush.bf16.msra.mxu0 %v1914
    %2467 = vmatpush.bf16.msra.mxu0 %v1906
    %2468 = vmatpush.bf16.msra.mxu0 %v1898
    %2469 = vmatmul.bf16.gmra.mxu0 %v787
    %v2470 = vpop.f32.mrf.mxu0
    %v2471 = vadd.f32 %v2458, %v2470
    %v2472 = vpop.f32.mrf.mxu0
    %2473 = vdwg.mxu0
    %2474 = vmatpush.bf16.msra.mxu0 %v2018
    %2475 = vmatpush.bf16.msra.mxu0 %v2010
    %2476 = vmatpush.bf16.msra.mxu0 %v2002
    %2477 = vmatpush.bf16.msra.mxu0 %v1994
    %2478 = vmatpush.bf16.msra.mxu0 %v1986
    %2479 = vmatpush.bf16.msra.mxu0 %v1978
    %2480 = vmatpush.bf16.msra.mxu0 %v1970
    %2481 = vmatpush.bf16.msra.mxu0 %v1962
    %2482 = vmatmul.bf16.gmra.mxu0 %v788
    %v2483 = vpop.f32.mrf.mxu0
    %v2484 = vadd.f32 %v2471, %v2483
    %v2485 = vpop.f32.mrf.mxu0
    %2486 = vdwg.mxu0
    %2487 = vmatpush.bf16.msra.mxu0 %v2082
    %2488 = vmatpush.bf16.msra.mxu0 %v2074
    %2489 = vmatpush.bf16.msra.mxu0 %v2066
    %2490 = vmatpush.bf16.msra.mxu0 %v2058
    %2491 = vmatpush.bf16.msra.mxu0 %v2050
    %2492 = vmatpush.bf16.msra.mxu0 %v2042
    %2493 = vmatpush.bf16.msra.mxu0 %v2034
    %2494 = vmatpush.bf16.msra.mxu0 %v2026
    %2495 = vmatmul.bf16.gmra.mxu0 %v789
    %v2496 = vpop.f32.mrf.mxu0
    %v2497 = vadd.f32 %v2484, %v2496
    %v2498 = vpop.f32.mrf.mxu0
    %2499 = vdwg.mxu0
    %2500 = vmatpush.bf16.msra.mxu0 %v1891
    %2501 = vmatpush.bf16.msra.mxu0 %v1883
    %2502 = vmatpush.bf16.msra.mxu0 %v1875
    %2503 = vmatpush.bf16.msra.mxu0 %v1867
    %2504 = vmatpush.bf16.msra.mxu0 %v1859
    %2505 = vmatpush.bf16.msra.mxu0 %v1851
    %2506 = vmatpush.bf16.msra.mxu0 %v1843
    %2507 = vmatpush.bf16.msra.mxu0 %v1835
    %2508 = vmatmul.bf16.gmra.mxu0 %v786
    %v2509 = vpop.f32.mrf.mxu0
    %v2510 = vadd.f32 %v1051, %v2509
    %v2511 = vpop.f32.mrf.mxu0
    %2512 = vdwg.mxu0
    %2513 = vmatpush.bf16.msra.mxu0 %v1955
    %2514 = vmatpush.bf16.msra.mxu0 %v1947
    %2515 = vmatpush.bf16.msra.mxu0 %v1939
    %2516 = vmatpush.bf16.msra.mxu0 %v1931
    %2517 = vmatpush.bf16.msra.mxu0 %v1923
    %2518 = vmatpush.bf16.msra.mxu0 %v1915
    %2519 = vmatpush.bf16.msra.mxu0 %v1907
    %2520 = vmatpush.bf16.msra.mxu0 %v1899
    %2521 = vmatmul.bf16.gmra.mxu0 %v787
    %v2522 = vpop.f32.mrf.mxu0
    %v2523 = vadd.f32 %v2510, %v2522
    %v2524 = vpop.f32.mrf.mxu0
    %2525 = vdwg.mxu0
    %2526 = vmatpush.bf16.msra.mxu0 %v2019
    %2527 = vmatpush.bf16.msra.mxu0 %v2011
    %2528 = vmatpush.bf16.msra.mxu0 %v2003
    %2529 = vmatpush.bf16.msra.mxu0 %v1995
    %2530 = vmatpush.bf16.msra.mxu0 %v1987
    %2531 = vmatpush.bf16.msra.mxu0 %v1979
    %2532 = vmatpush.bf16.msra.mxu0 %v1971
    %2533 = vmatpush.bf16.msra.mxu0 %v1963
    %2534 = vmatmul.bf16.gmra.mxu0 %v788
    %v2535 = vpop.f32.mrf.mxu0
    %v2536 = vadd.f32 %v2523, %v2535
    %v2537 = vpop.f32.mrf.mxu0
    %2538 = vdwg.mxu0
    %2539 = vmatpush.bf16.msra.mxu0 %v2083
    %2540 = vmatpush.bf16.msra.mxu0 %v2075
    %2541 = vmatpush.bf16.msra.mxu0 %v2067
    %2542 = vmatpush.bf16.msra.mxu0 %v2059
    %2543 = vmatpush.bf16.msra.mxu0 %v2051
    %2544 = vmatpush.bf16.msra.mxu0 %v2043
    %2545 = vmatpush.bf16.msra.mxu0 %v2035
    %2546 = vmatpush.bf16.msra.mxu0 %v2027
    %2547 = vmatmul.bf16.gmra.mxu0 %v789
    %v2548 = vpop.f32.mrf.mxu0
    %v2549 = vadd.f32 %v2536, %v2548
    %v2550 = vpop.f32.mrf.mxu0
    %2551 = vdwg.mxu0
    %2552 = vmatpush.bf16.msra.mxu0 %v1892
    %2553 = vmatpush.bf16.msra.mxu0 %v1884
    %2554 = vmatpush.bf16.msra.mxu0 %v1876
    %2555 = vmatpush.bf16.msra.mxu0 %v1868
    %2556 = vmatpush.bf16.msra.mxu0 %v1860
    %2557 = vmatpush.bf16.msra.mxu0 %v1852
    %2558 = vmatpush.bf16.msra.mxu0 %v1844
    %2559 = vmatpush.bf16.msra.mxu0 %v1836
    %2560 = vmatmul.bf16.gmra.mxu0 %v786
    %v2561 = vpop.f32.mrf.mxu0
    %v2562 = vadd.f32 %v1052, %v2561
    %v2563 = vpop.f32.mrf.mxu0
    %2564 = vdwg.mxu0
    %2565 = vmatpush.bf16.msra.mxu0 %v1956
    %2566 = vmatpush.bf16.msra.mxu0 %v1948
    %2567 = vmatpush.bf16.msra.mxu0 %v1940
    %2568 = vmatpush.bf16.msra.mxu0 %v1932
    %2569 = vmatpush.bf16.msra.mxu0 %v1924
    %2570 = vmatpush.bf16.msra.mxu0 %v1916
    %2571 = vmatpush.bf16.msra.mxu0 %v1908
    %2572 = vmatpush.bf16.msra.mxu0 %v1900
    %2573 = vmatmul.bf16.gmra.mxu0 %v787
    %v2574 = vpop.f32.mrf.mxu0
    %v2575 = vadd.f32 %v2562, %v2574
    %v2576 = vpop.f32.mrf.mxu0
    %2577 = vdwg.mxu0
    %2578 = vmatpush.bf16.msra.mxu0 %v2020
    %2579 = vmatpush.bf16.msra.mxu0 %v2012
    %2580 = vmatpush.bf16.msra.mxu0 %v2004
    %2581 = vmatpush.bf16.msra.mxu0 %v1996
    %2582 = vmatpush.bf16.msra.mxu0 %v1988
    %2583 = vmatpush.bf16.msra.mxu0 %v1980
    %2584 = vmatpush.bf16.msra.mxu0 %v1972
    %2585 = vmatpush.bf16.msra.mxu0 %v1964
    %2586 = vmatmul.bf16.gmra.mxu0 %v788
    %v2587 = vpop.f32.mrf.mxu0
    %v2588 = vadd.f32 %v2575, %v2587
    %v2589 = vpop.f32.mrf.mxu0
    %2590 = vdwg.mxu0
    %2591 = vmatpush.bf16.msra.mxu0 %v2084
    %2592 = vmatpush.bf16.msra.mxu0 %v2076
    %2593 = vmatpush.bf16.msra.mxu0 %v2068
    %2594 = vmatpush.bf16.msra.mxu0 %v2060
    %2595 = vmatpush.bf16.msra.mxu0 %v2052
    %2596 = vmatpush.bf16.msra.mxu0 %v2044
    %2597 = vmatpush.bf16.msra.mxu0 %v2036
    %2598 = vmatpush.bf16.msra.mxu0 %v2028
    %2599 = vmatmul.bf16.gmra.mxu0 %v789
    %v2600 = vpop.f32.mrf.mxu0
    %v2601 = vadd.f32 %v2588, %v2600
    %v2602 = vpop.f32.mrf.mxu0
    %2603 = vdwg.mxu0
    %2604 = vmatpush.bf16.msra.mxu0 %v1893
    %2605 = vmatpush.bf16.msra.mxu0 %v1885
    %2606 = vmatpush.bf16.msra.mxu0 %v1877
    %2607 = vmatpush.bf16.msra.mxu0 %v1869
    %2608 = vmatpush.bf16.msra.mxu0 %v1861
    %2609 = vmatpush.bf16.msra.mxu0 %v1853
    %2610 = vmatpush.bf16.msra.mxu0 %v1845
    %2611 = vmatpush.bf16.msra.mxu0 %v1837
    %2612 = vmatmul.bf16.gmra.mxu0 %v786
    %v2613 = vpop.f32.mrf.mxu0
    %v2614 = vadd.f32 %v1053, %v2613
    %v2615 = vpop.f32.mrf.mxu0
    %2616 = vdwg.mxu0
    %2617 = vmatpush.bf16.msra.mxu0 %v1957
    %2618 = vmatpush.bf16.msra.mxu0 %v1949
    %2619 = vmatpush.bf16.msra.mxu0 %v1941
    %2620 = vmatpush.bf16.msra.mxu0 %v1933
    %2621 = vmatpush.bf16.msra.mxu0 %v1925
    %2622 = vmatpush.bf16.msra.mxu0 %v1917
    %2623 = vmatpush.bf16.msra.mxu0 %v1909
    %2624 = vmatpush.bf16.msra.mxu0 %v1901
    %2625 = vmatmul.bf16.gmra.mxu0 %v787
    %v2626 = vpop.f32.mrf.mxu0
    %v2627 = vadd.f32 %v2614, %v2626
    %v2628 = vpop.f32.mrf.mxu0
    %2629 = vdwg.mxu0
    %2630 = vmatpush.bf16.msra.mxu0 %v2021
    %2631 = vmatpush.bf16.msra.mxu0 %v2013
    %2632 = vmatpush.bf16.msra.mxu0 %v2005
    %2633 = vmatpush.bf16.msra.mxu0 %v1997
    %2634 = vmatpush.bf16.msra.mxu0 %v1989
    %2635 = vmatpush.bf16.msra.mxu0 %v1981
    %2636 = vmatpush.bf16.msra.mxu0 %v1973
    %2637 = vmatpush.bf16.msra.mxu0 %v1965
    %2638 = vmatmul.bf16.gmra.mxu0 %v788
    %v2639 = vpop.f32.mrf.mxu0
    %v2640 = vadd.f32 %v2627, %v2639
    %v2641 = vpop.f32.mrf.mxu0
    %2642 = vdwg.mxu0
    %2643 = vmatpush.bf16.msra.mxu0 %v2085
    %2644 = vmatpush.bf16.msra.mxu0 %v2077
    %2645 = vmatpush.bf16.msra.mxu0 %v2069
    %2646 = vmatpush.bf16.msra.mxu0 %v2061
    %2647 = vmatpush.bf16.msra.mxu0 %v2053
    %2648 = vmatpush.bf16.msra.mxu0 %v2045
    %2649 = vmatpush.bf16.msra.mxu0 %v2037
    %2650 = vmatpush.bf16.msra.mxu0 %v2029
    %2651 = vmatmul.bf16.gmra.mxu0 %v789
    %v2652 = vpop.f32.mrf.mxu0
    %v2653 = vadd.f32 %v2640, %v2652
    %v2654 = vpop.f32.mrf.mxu0
    %2655 = vdwg.mxu0
    %2656 = vmatpush.bf16.msra.mxu0 %v1894
    %2657 = vmatpush.bf16.msra.mxu0 %v1886
    %2658 = vmatpush.bf16.msra.mxu0 %v1878
    %2659 = vmatpush.bf16.msra.mxu0 %v1870
    %2660 = vmatpush.bf16.msra.mxu0 %v1862
    %2661 = vmatpush.bf16.msra.mxu0 %v1854
    %2662 = vmatpush.bf16.msra.mxu0 %v1846
    %2663 = vmatpush.bf16.msra.mxu0 %v1838
    %2664 = vmatmul.bf16.gmra.mxu0 %v786
    %v2665 = vpop.f32.mrf.mxu0
    %v2666 = vadd.f32 %v1054, %v2665
    %v2667 = vpop.f32.mrf.mxu0
    %2668 = vdwg.mxu0
    %2669 = vmatpush.bf16.msra.mxu0 %v1958
    %2670 = vmatpush.bf16.msra.mxu0 %v1950
    %2671 = vmatpush.bf16.msra.mxu0 %v1942
    %2672 = vmatpush.bf16.msra.mxu0 %v1934
    %2673 = vmatpush.bf16.msra.mxu0 %v1926
    %2674 = vmatpush.bf16.msra.mxu0 %v1918
    %2675 = vmatpush.bf16.msra.mxu0 %v1910
    %2676 = vmatpush.bf16.msra.mxu0 %v1902
    %2677 = vmatmul.bf16.gmra.mxu0 %v787
    %v2678 = vpop.f32.mrf.mxu0
    %v2679 = vadd.f32 %v2666, %v2678
    %v2680 = vpop.f32.mrf.mxu0
    %2681 = vdwg.mxu0
    %2682 = vmatpush.bf16.msra.mxu0 %v2022
    %2683 = vmatpush.bf16.msra.mxu0 %v2014
    %2684 = vmatpush.bf16.msra.mxu0 %v2006
    %2685 = vmatpush.bf16.msra.mxu0 %v1998
    %2686 = vmatpush.bf16.msra.mxu0 %v1990
    %2687 = vmatpush.bf16.msra.mxu0 %v1982
    %2688 = vmatpush.bf16.msra.mxu0 %v1974
    %2689 = vmatpush.bf16.msra.mxu0 %v1966
    %2690 = vmatmul.bf16.gmra.mxu0 %v788
    %v2691 = vpop.f32.mrf.mxu0
    %v2692 = vadd.f32 %v2679, %v2691
    %v2693 = vpop.f32.mrf.mxu0
    %2694 = vdwg.mxu0
    %2695 = vmatpush.bf16.msra.mxu0 %v2086
    %2696 = vmatpush.bf16.msra.mxu0 %v2078
    %2697 = vmatpush.bf16.msra.mxu0 %v2070
    %2698 = vmatpush.bf16.msra.mxu0 %v2062
    %2699 = vmatpush.bf16.msra.mxu0 %v2054
    %2700 = vmatpush.bf16.msra.mxu0 %v2046
    %2701 = vmatpush.bf16.msra.mxu0 %v2038
    %2702 = vmatpush.bf16.msra.mxu0 %v2030
    %2703 = vmatmul.bf16.gmra.mxu0 %v789
    %v2704 = vpop.f32.mrf.mxu0
    %v2705 = vadd.f32 %v2692, %v2704
    %v2706 = vpop.f32.mrf.mxu0
    %2707 = vdwg.mxu0
    %2708 = vmatpush.bf16.msra.mxu0 %v1895
    %2709 = vmatpush.bf16.msra.mxu0 %v1887
    %2710 = vmatpush.bf16.msra.mxu0 %v1879
    %2711 = vmatpush.bf16.msra.mxu0 %v1871
    %2712 = vmatpush.bf16.msra.mxu0 %v1863
    %2713 = vmatpush.bf16.msra.mxu0 %v1855
    %2714 = vmatpush.bf16.msra.mxu0 %v1847
    %2715 = vmatpush.bf16.msra.mxu0 %v1839
    %2716 = vmatmul.bf16.gmra.mxu0 %v786
    %v2717 = vpop.f32.mrf.mxu0
    %v2718 = vadd.f32 %v1055, %v2717
    %v2719 = vpop.f32.mrf.mxu0
    %2720 = vdwg.mxu0
    %2721 = vmatpush.bf16.msra.mxu0 %v1959
    %2722 = vmatpush.bf16.msra.mxu0 %v1951
    %2723 = vmatpush.bf16.msra.mxu0 %v1943
    %2724 = vmatpush.bf16.msra.mxu0 %v1935
    %2725 = vmatpush.bf16.msra.mxu0 %v1927
    %2726 = vmatpush.bf16.msra.mxu0 %v1919
    %2727 = vmatpush.bf16.msra.mxu0 %v1911
    %2728 = vmatpush.bf16.msra.mxu0 %v1903
    %2729 = vmatmul.bf16.gmra.mxu0 %v787
    %v2730 = vpop.f32.mrf.mxu0
    %v2731 = vadd.f32 %v2718, %v2730
    %v2732 = vpop.f32.mrf.mxu0
    %2733 = vdwg.mxu0
    %2734 = vmatpush.bf16.msra.mxu0 %v2023
    %2735 = vmatpush.bf16.msra.mxu0 %v2015
    %2736 = vmatpush.bf16.msra.mxu0 %v2007
    %2737 = vmatpush.bf16.msra.mxu0 %v1999
    %2738 = vmatpush.bf16.msra.mxu0 %v1991
    %2739 = vmatpush.bf16.msra.mxu0 %v1983
    %2740 = vmatpush.bf16.msra.mxu0 %v1975
    %2741 = vmatpush.bf16.msra.mxu0 %v1967
    %2742 = vmatmul.bf16.gmra.mxu0 %v788
    %v2743 = vpop.f32.mrf.mxu0
    %v2744 = vadd.f32 %v2731, %v2743
    %v2745 = vpop.f32.mrf.mxu0
    %2746 = vdwg.mxu0
    %2747 = vmatpush.bf16.msra.mxu0 %v2087
    %2748 = vmatpush.bf16.msra.mxu0 %v2079
    %2749 = vmatpush.bf16.msra.mxu0 %v2071
    %2750 = vmatpush.bf16.msra.mxu0 %v2063
    %2751 = vmatpush.bf16.msra.mxu0 %v2055
    %2752 = vmatpush.bf16.msra.mxu0 %v2047
    %2753 = vmatpush.bf16.msra.mxu0 %v2039
    %2754 = vmatpush.bf16.msra.mxu0 %v2031
    %2755 = vmatmul.bf16.gmra.mxu0 %v789
    %v2756 = vpop.f32.mrf.mxu0
    %v2757 = vadd.f32 %v2744, %v2756
    %v2758 = vpop.f32.mrf.mxu0
    %2759 = vdwg.mxu0
    %v2760 = vmax.f32 %v2393, 0.0
    %v2761 = vmax.f32 %v2445, 0.0
    %v2762 = vmax.f32 %v2497, 0.0
    %v2763 = vmax.f32 %v2549, 0.0
    %v2764 = vmax.f32 %v2601, 0.0
    %v2765 = vmax.f32 %v2653, 0.0
    %v2766 = vmax.f32 %v2705, 0.0
    %v2767 = vmax.f32 %v2757, 0.0
    %v2768 = vpack.c.bf16 %v2760, %v2760
    %v2769 = vpack.c.bf16 %v2761, %v2761
    %v2770 = vpack.c.bf16 %v2762, %v2762
    %v2771 = vpack.c.bf16 %v2763, %v2763
    %v2772 = vpack.c.bf16 %v2764, %v2764
    %v2773 = vpack.c.bf16 %v2765, %v2765
    %v2774 = vpack.c.bf16 %v2766, %v2766
    %v2775 = vpack.c.bf16 %v2767, %v2767
    %v2776 = vld [vmem:[#allocation14] sm:$0xff]
    %v2777 = vld [vmem:[#allocation14 + $0x8] sm:$0xff]
    %v2778 = vld [vmem:[#allocation14 + $0x10] sm:$0xff]
    %v2779 = vld [vmem:[#allocation14 + $0x18] sm:$0xff]
    %v2780 = vld [vmem:[#allocation14 + $0x20] sm:$0xff]
    %v2781 = vld [vmem:[#allocation14 + $0x28] sm:$0xff]
    %v2782 = vld [vmem:[#allocation14 + $0x30] sm:$0xff]
    %v2783 = vld [vmem:[#allocation14 + $0x38] sm:$0xff]
    %v2784 = vld [vmem:[#allocation14 + $0x40] sm:$0xff]
    %v2785 = vld [vmem:[#allocation14 + $0x48] sm:$0xff]
    %v2786 = vld [vmem:[#allocation14 + $0x50] sm:$0xff]
    %v2787 = vld [vmem:[#allocation14 + $0x58] sm:$0xff]
    %v2788 = vld [vmem:[#allocation14 + $0x60] sm:$0xff]
    %v2789 = vld [vmem:[#allocation14 + $0x68] sm:$0xff]
    %v2790 = vld [vmem:[#allocation14 + $0x70] sm:$0xff]
    %v2791 = vld [vmem:[#allocation14 + $0x78] sm:$0xff]
    %v2792 = vld [vmem:[#allocation14 + $0x80] sm:$0xff]
    %v2793 = vld [vmem:[#allocation14 + $0x88] sm:$0xff]
    %v2794 = vld [vmem:[#allocation14 + $0x90] sm:$0xff]
    %v2795 = vld [vmem:[#allocation14 + $0x98] sm:$0xff]
    %v2796 = vld [vmem:[#allocation14 + $0xa0] sm:$0xff]
    %v2797 = vld [vmem:[#allocation14 + $0xa8] sm:$0xff]
    %v2798 = vld [vmem:[#allocation14 + $0xb0] sm:$0xff]
    %v2799 = vld [vmem:[#allocation14 + $0xb8] sm:$0xff]
    %v2800 = vld [vmem:[#allocation14 + $0xc0] sm:$0xff]
    %v2801 = vld [vmem:[#allocation14 + $0xc8] sm:$0xff]
    %v2802 = vld [vmem:[#allocation14 + $0xd0] sm:$0xff]
    %v2803 = vld [vmem:[#allocation14 + $0xd8] sm:$0xff]
    %v2804 = vld [vmem:[#allocation14 + $0xe0] sm:$0xff]
    %v2805 = vld [vmem:[#allocation14 + $0xe8] sm:$0xff]
    %v2806 = vld [vmem:[#allocation14 + $0xf0] sm:$0xff]
    %v2807 = vld [vmem:[#allocation14 + $0xf8] sm:$0xff]
    %v2808 = vld [vmem:[#allocation14 + $0x100] sm:$0xff]
    %v2809 = vld [vmem:[#allocation14 + $0x108] sm:$0xff]
    %v2810 = vld [vmem:[#allocation14 + $0x110] sm:$0xff]
    %v2811 = vld [vmem:[#allocation14 + $0x118] sm:$0xff]
    %v2812 = vld [vmem:[#allocation14 + $0x120] sm:$0xff]
    %v2813 = vld [vmem:[#allocation14 + $0x128] sm:$0xff]
    %v2814 = vld [vmem:[#allocation14 + $0x130] sm:$0xff]
    %v2815 = vld [vmem:[#allocation14 + $0x138] sm:$0xff]
    %v2816 = vld [vmem:[#allocation14 + $0x140] sm:$0xff]
    %v2817 = vld [vmem:[#allocation14 + $0x148] sm:$0xff]
    %v2818 = vld [vmem:[#allocation14 + $0x150] sm:$0xff]
    %v2819 = vld [vmem:[#allocation14 + $0x158] sm:$0xff]
    %v2820 = vld [vmem:[#allocation14 + $0x160] sm:$0xff]
    %v2821 = vld [vmem:[#allocation14 + $0x168] sm:$0xff]
    %v2822 = vld [vmem:[#allocation14 + $0x170] sm:$0xff]
    %v2823 = vld [vmem:[#allocation14 + $0x178] sm:$0xff]
    %v2824 = vld [vmem:[#allocation14 + $0x180] sm:$0xff]
    %v2825 = vld [vmem:[#allocation14 + $0x188] sm:$0xff]
    %v2826 = vld [vmem:[#allocation14 + $0x190] sm:$0xff]
    %v2827 = vld [vmem:[#allocation14 + $0x198] sm:$0xff]
    %v2828 = vld [vmem:[#allocation14 + $0x1a0] sm:$0xff]
    %v2829 = vld [vmem:[#allocation14 + $0x1a8] sm:$0xff]
    %v2830 = vld [vmem:[#allocation14 + $0x1b0] sm:$0xff]
    %v2831 = vld [vmem:[#allocation14 + $0x1b8] sm:$0xff]
    %v2832 = vld [vmem:[#allocation14 + $0x1c0] sm:$0xff]
    %v2833 = vld [vmem:[#allocation14 + $0x1c8] sm:$0xff]
    %v2834 = vld [vmem:[#allocation14 + $0x1d0] sm:$0xff]
    %v2835 = vld [vmem:[#allocation14 + $0x1d8] sm:$0xff]
    %v2836 = vld [vmem:[#allocation14 + $0x1e0] sm:$0xff]
    %v2837 = vld [vmem:[#allocation14 + $0x1e8] sm:$0xff]
    %v2838 = vld [vmem:[#allocation14 + $0x1f0] sm:$0xff]
    %v2839 = vld [vmem:[#allocation14 + $0x1f8] sm:$0xff]
    %v2840 = vld [vmem:[#allocation14 + $0x200] sm:$0xff]
    %v2841 = vld [vmem:[#allocation14 + $0x208] sm:$0xff]
    %v2842 = vld [vmem:[#allocation14 + $0x210] sm:$0xff]
    %v2843 = vld [vmem:[#allocation14 + $0x218] sm:$0xff]
    %v2844 = vld [vmem:[#allocation14 + $0x220] sm:$0xff]
    %v2845 = vld [vmem:[#allocation14 + $0x228] sm:$0xff]
    %v2846 = vld [vmem:[#allocation14 + $0x230] sm:$0xff]
    %v2847 = vld [vmem:[#allocation14 + $0x238] sm:$0xff]
    %v2848 = vld [vmem:[#allocation14 + $0x240] sm:$0xff]
    %v2849 = vld [vmem:[#allocation14 + $0x248] sm:$0xff]
    %v2850 = vld [vmem:[#allocation14 + $0x250] sm:$0xff]
    %v2851 = vld [vmem:[#allocation14 + $0x258] sm:$0xff]
    %v2852 = vld [vmem:[#allocation14 + $0x260] sm:$0xff]
    %v2853 = vld [vmem:[#allocation14 + $0x268] sm:$0xff]
    %v2854 = vld [vmem:[#allocation14 + $0x270] sm:$0xff]
    %v2855 = vld [vmem:[#allocation14 + $0x278] sm:$0xff]
    %v2856 = vld [vmem:[#allocation14 + $0x280] sm:$0xff]
    %v2857 = vld [vmem:[#allocation14 + $0x288] sm:$0xff]
    %v2858 = vld [vmem:[#allocation14 + $0x290] sm:$0xff]
    %v2859 = vld [vmem:[#allocation14 + $0x298] sm:$0xff]
    %v2860 = vld [vmem:[#allocation14 + $0x2a0] sm:$0xff]
    %v2861 = vld [vmem:[#allocation14 + $0x2a8] sm:$0xff]
    %v2862 = vld [vmem:[#allocation14 + $0x2b0] sm:$0xff]
    %v2863 = vld [vmem:[#allocation14 + $0x2b8] sm:$0xff]
    %v2864 = vld [vmem:[#allocation14 + $0x2c0] sm:$0xff]
    %v2865 = vld [vmem:[#allocation14 + $0x2c8] sm:$0xff]
    %v2866 = vld [vmem:[#allocation14 + $0x2d0] sm:$0xff]
    %v2867 = vld [vmem:[#allocation14 + $0x2d8] sm:$0xff]
    %v2868 = vld [vmem:[#allocation14 + $0x2e0] sm:$0xff]
    %v2869 = vld [vmem:[#allocation14 + $0x2e8] sm:$0xff]
    %v2870 = vld [vmem:[#allocation14 + $0x2f0] sm:$0xff]
    %v2871 = vld [vmem:[#allocation14 + $0x2f8] sm:$0xff]
    %v2872 = vld [vmem:[#allocation14 + $0x300] sm:$0xff]
    %v2873 = vld [vmem:[#allocation14 + $0x308] sm:$0xff]
    %v2874 = vld [vmem:[#allocation14 + $0x310] sm:$0xff]
    %v2875 = vld [vmem:[#allocation14 + $0x318] sm:$0xff]
    %v2876 = vld [vmem:[#allocation14 + $0x320] sm:$0xff]
    %v2877 = vld [vmem:[#allocation14 + $0x328] sm:$0xff]
    %v2878 = vld [vmem:[#allocation14 + $0x330] sm:$0xff]
    %v2879 = vld [vmem:[#allocation14 + $0x338] sm:$0xff]
    %v2880 = vld [vmem:[#allocation14 + $0x340] sm:$0xff]
    %v2881 = vld [vmem:[#allocation14 + $0x348] sm:$0xff]
    %v2882 = vld [vmem:[#allocation14 + $0x350] sm:$0xff]
    %v2883 = vld [vmem:[#allocation14 + $0x358] sm:$0xff]
    %v2884 = vld [vmem:[#allocation14 + $0x360] sm:$0xff]
    %v2885 = vld [vmem:[#allocation14 + $0x368] sm:$0xff]
    %v2886 = vld [vmem:[#allocation14 + $0x370] sm:$0xff]
    %v2887 = vld [vmem:[#allocation14 + $0x378] sm:$0xff]
    %v2888 = vld [vmem:[#allocation14 + $0x380] sm:$0xff]
    %v2889 = vld [vmem:[#allocation14 + $0x388] sm:$0xff]
    %v2890 = vld [vmem:[#allocation14 + $0x390] sm:$0xff]
    %v2891 = vld [vmem:[#allocation14 + $0x398] sm:$0xff]
    %v2892 = vld [vmem:[#allocation14 + $0x3a0] sm:$0xff]
    %v2893 = vld [vmem:[#allocation14 + $0x3a8] sm:$0xff]
    %v2894 = vld [vmem:[#allocation14 + $0x3b0] sm:$0xff]
    %v2895 = vld [vmem:[#allocation14 + $0x3b8] sm:$0xff]
    %v2896 = vld [vmem:[#allocation14 + $0x3c0] sm:$0xff]
    %v2897 = vld [vmem:[#allocation14 + $0x3c8] sm:$0xff]
    %v2898 = vld [vmem:[#allocation14 + $0x3d0] sm:$0xff]
    %v2899 = vld [vmem:[#allocation14 + $0x3d8] sm:$0xff]
    %v2900 = vld [vmem:[#allocation14 + $0x3e0] sm:$0xff]
    %v2901 = vld [vmem:[#allocation14 + $0x3e8] sm:$0xff]
    %v2902 = vld [vmem:[#allocation14 + $0x3f0] sm:$0xff]
    %v2903 = vld [vmem:[#allocation14 + $0x3f8] sm:$0xff]
    %v2904 = vld [vmem:[#allocation14 + $0x400] sm:$0xff]
    %v2905 = vld [vmem:[#allocation14 + $0x408] sm:$0xff]
    %v2906 = vld [vmem:[#allocation14 + $0x410] sm:$0xff]
    %v2907 = vld [vmem:[#allocation14 + $0x418] sm:$0xff]
    %v2908 = vld [vmem:[#allocation14 + $0x420] sm:$0xff]
    %v2909 = vld [vmem:[#allocation14 + $0x428] sm:$0xff]
    %v2910 = vld [vmem:[#allocation14 + $0x430] sm:$0xff]
    %v2911 = vld [vmem:[#allocation14 + $0x438] sm:$0xff]
    %v2912 = vld [vmem:[#allocation14 + $0x440] sm:$0xff]
    %v2913 = vld [vmem:[#allocation14 + $0x448] sm:$0xff]
    %v2914 = vld [vmem:[#allocation14 + $0x450] sm:$0xff]
    %v2915 = vld [vmem:[#allocation14 + $0x458] sm:$0xff]
    %v2916 = vld [vmem:[#allocation14 + $0x460] sm:$0xff]
    %v2917 = vld [vmem:[#allocation14 + $0x468] sm:$0xff]
    %v2918 = vld [vmem:[#allocation14 + $0x470] sm:$0xff]
    %v2919 = vld [vmem:[#allocation14 + $0x478] sm:$0xff]
    %v2920 = vld [vmem:[#allocation14 + $0x480] sm:$0xff]
    %v2921 = vld [vmem:[#allocation14 + $0x488] sm:$0xff]
    %v2922 = vld [vmem:[#allocation14 + $0x490] sm:$0xff]
    %v2923 = vld [vmem:[#allocation14 + $0x498] sm:$0xff]
    %v2924 = vld [vmem:[#allocation14 + $0x4a0] sm:$0xff]
    %v2925 = vld [vmem:[#allocation14 + $0x4a8] sm:$0xff]
    %v2926 = vld [vmem:[#allocation14 + $0x4b0] sm:$0xff]
    %v2927 = vld [vmem:[#allocation14 + $0x4b8] sm:$0xff]
    %v2928 = vld [vmem:[#allocation14 + $0x4c0] sm:$0xff]
    %v2929 = vld [vmem:[#allocation14 + $0x4c8] sm:$0xff]
    %v2930 = vld [vmem:[#allocation14 + $0x4d0] sm:$0xff]
    %v2931 = vld [vmem:[#allocation14 + $0x4d8] sm:$0xff]
    %v2932 = vld [vmem:[#allocation14 + $0x4e0] sm:$0xff]
    %v2933 = vld [vmem:[#allocation14 + $0x4e8] sm:$0xff]
    %v2934 = vld [vmem:[#allocation14 + $0x4f0] sm:$0xff]
    %v2935 = vld [vmem:[#allocation14 + $0x4f8] sm:$0xff]
    %v2936 = vld [vmem:[#allocation14 + $0x500] sm:$0xff]
    %v2937 = vld [vmem:[#allocation14 + $0x508] sm:$0xff]
    %v2938 = vld [vmem:[#allocation14 + $0x510] sm:$0xff]
    %v2939 = vld [vmem:[#allocation14 + $0x518] sm:$0xff]
    %v2940 = vld [vmem:[#allocation14 + $0x520] sm:$0xff]
    %v2941 = vld [vmem:[#allocation14 + $0x528] sm:$0xff]
    %v2942 = vld [vmem:[#allocation14 + $0x530] sm:$0xff]
    %v2943 = vld [vmem:[#allocation14 + $0x538] sm:$0xff]
    %v2944 = vld [vmem:[#allocation14 + $0x540] sm:$0xff]
    %v2945 = vld [vmem:[#allocation14 + $0x548] sm:$0xff]
    %v2946 = vld [vmem:[#allocation14 + $0x550] sm:$0xff]
    %v2947 = vld [vmem:[#allocation14 + $0x558] sm:$0xff]
    %v2948 = vld [vmem:[#allocation14 + $0x560] sm:$0xff]
    %v2949 = vld [vmem:[#allocation14 + $0x568] sm:$0xff]
    %v2950 = vld [vmem:[#allocation14 + $0x570] sm:$0xff]
    %v2951 = vld [vmem:[#allocation14 + $0x578] sm:$0xff]
    %v2952 = vld [vmem:[#allocation14 + $0x580] sm:$0xff]
    %v2953 = vld [vmem:[#allocation14 + $0x588] sm:$0xff]
    %v2954 = vld [vmem:[#allocation14 + $0x590] sm:$0xff]
    %v2955 = vld [vmem:[#allocation14 + $0x598] sm:$0xff]
    %v2956 = vld [vmem:[#allocation14 + $0x5a0] sm:$0xff]
    %v2957 = vld [vmem:[#allocation14 + $0x5a8] sm:$0xff]
    %v2958 = vld [vmem:[#allocation14 + $0x5b0] sm:$0xff]
    %v2959 = vld [vmem:[#allocation14 + $0x5b8] sm:$0xff]
    %v2960 = vld [vmem:[#allocation14 + $0x5c0] sm:$0xff]
    %v2961 = vld [vmem:[#allocation14 + $0x5c8] sm:$0xff]
    %v2962 = vld [vmem:[#allocation14 + $0x5d0] sm:$0xff]
    %v2963 = vld [vmem:[#allocation14 + $0x5d8] sm:$0xff]
    %v2964 = vld [vmem:[#allocation14 + $0x5e0] sm:$0xff]
    %v2965 = vld [vmem:[#allocation14 + $0x5e8] sm:$0xff]
    %v2966 = vld [vmem:[#allocation14 + $0x5f0] sm:$0xff]
    %v2967 = vld [vmem:[#allocation14 + $0x5f8] sm:$0xff]
    %v2968 = vld [vmem:[#allocation14 + $0x600] sm:$0xff]
    %v2969 = vld [vmem:[#allocation14 + $0x608] sm:$0xff]
    %v2970 = vld [vmem:[#allocation14 + $0x610] sm:$0xff]
    %v2971 = vld [vmem:[#allocation14 + $0x618] sm:$0xff]
    %v2972 = vld [vmem:[#allocation14 + $0x620] sm:$0xff]
    %v2973 = vld [vmem:[#allocation14 + $0x628] sm:$0xff]
    %v2974 = vld [vmem:[#allocation14 + $0x630] sm:$0xff]
    %v2975 = vld [vmem:[#allocation14 + $0x638] sm:$0xff]
    %v2976 = vld [vmem:[#allocation14 + $0x640] sm:$0xff]
    %v2977 = vld [vmem:[#allocation14 + $0x648] sm:$0xff]
    %v2978 = vld [vmem:[#allocation14 + $0x650] sm:$0xff]
    %v2979 = vld [vmem:[#allocation14 + $0x658] sm:$0xff]
    %v2980 = vld [vmem:[#allocation14 + $0x660] sm:$0xff]
    %v2981 = vld [vmem:[#allocation14 + $0x668] sm:$0xff]
    %v2982 = vld [vmem:[#allocation14 + $0x670] sm:$0xff]
    %v2983 = vld [vmem:[#allocation14 + $0x678] sm:$0xff]
    %v2984 = vld [vmem:[#allocation14 + $0x680] sm:$0xff]
    %v2985 = vld [vmem:[#allocation14 + $0x688] sm:$0xff]
    %v2986 = vld [vmem:[#allocation14 + $0x690] sm:$0xff]
    %v2987 = vld [vmem:[#allocation14 + $0x698] sm:$0xff]
    %v2988 = vld [vmem:[#allocation14 + $0x6a0] sm:$0xff]
    %v2989 = vld [vmem:[#allocation14 + $0x6a8] sm:$0xff]
    %v2990 = vld [vmem:[#allocation14 + $0x6b0] sm:$0xff]
    %v2991 = vld [vmem:[#allocation14 + $0x6b8] sm:$0xff]
    %v2992 = vld [vmem:[#allocation14 + $0x6c0] sm:$0xff]
    %v2993 = vld [vmem:[#allocation14 + $0x6c8] sm:$0xff]
    %v2994 = vld [vmem:[#allocation14 + $0x6d0] sm:$0xff]
    %v2995 = vld [vmem:[#allocation14 + $0x6d8] sm:$0xff]
    %v2996 = vld [vmem:[#allocation14 + $0x6e0] sm:$0xff]
    %v2997 = vld [vmem:[#allocation14 + $0x6e8] sm:$0xff]
    %v2998 = vld [vmem:[#allocation14 + $0x6f0] sm:$0xff]
    %v2999 = vld [vmem:[#allocation14 + $0x6f8] sm:$0xff]
    %v3000 = vld [vmem:[#allocation14 + $0x700] sm:$0xff]
    %v3001 = vld [vmem:[#allocation14 + $0x708] sm:$0xff]
    %v3002 = vld [vmem:[#allocation14 + $0x710] sm:$0xff]
    %v3003 = vld [vmem:[#allocation14 + $0x718] sm:$0xff]
    %v3004 = vld [vmem:[#allocation14 + $0x720] sm:$0xff]
    %v3005 = vld [vmem:[#allocation14 + $0x728] sm:$0xff]
    %v3006 = vld [vmem:[#allocation14 + $0x730] sm:$0xff]
    %v3007 = vld [vmem:[#allocation14 + $0x738] sm:$0xff]
    %v3008 = vld [vmem:[#allocation14 + $0x740] sm:$0xff]
    %v3009 = vld [vmem:[#allocation14 + $0x748] sm:$0xff]
    %v3010 = vld [vmem:[#allocation14 + $0x750] sm:$0xff]
    %v3011 = vld [vmem:[#allocation14 + $0x758] sm:$0xff]
    %v3012 = vld [vmem:[#allocation14 + $0x760] sm:$0xff]
    %v3013 = vld [vmem:[#allocation14 + $0x768] sm:$0xff]
    %v3014 = vld [vmem:[#allocation14 + $0x770] sm:$0xff]
    %v3015 = vld [vmem:[#allocation14 + $0x778] sm:$0xff]
    %v3016 = vld [vmem:[#allocation14 + $0x780] sm:$0xff]
    %v3017 = vld [vmem:[#allocation14 + $0x788] sm:$0xff]
    %v3018 = vld [vmem:[#allocation14 + $0x790] sm:$0xff]
    %v3019 = vld [vmem:[#allocation14 + $0x798] sm:$0xff]
    %v3020 = vld [vmem:[#allocation14 + $0x7a0] sm:$0xff]
    %v3021 = vld [vmem:[#allocation14 + $0x7a8] sm:$0xff]
    %v3022 = vld [vmem:[#allocation14 + $0x7b0] sm:$0xff]
    %v3023 = vld [vmem:[#allocation14 + $0x7b8] sm:$0xff]
    %v3024 = vld [vmem:[#allocation14 + $0x7c0] sm:$0xff]
    %v3025 = vld [vmem:[#allocation14 + $0x7c8] sm:$0xff]
    %v3026 = vld [vmem:[#allocation14 + $0x7d0] sm:$0xff]
    %v3027 = vld [vmem:[#allocation14 + $0x7d8] sm:$0xff]
    %v3028 = vld [vmem:[#allocation14 + $0x7e0] sm:$0xff]
    %v3029 = vld [vmem:[#allocation14 + $0x7e8] sm:$0xff]
    %v3030 = vld [vmem:[#allocation14 + $0x7f0] sm:$0xff]
    %v3031 = vld [vmem:[#allocation14 + $0x7f8] sm:$0xff]
    %v3032 = vld [vmem:[#allocation14 + $0x800] sm:$0xff]
    %v3033 = vld [vmem:[#allocation14 + $0x808] sm:$0xff]
    %v3034 = vld [vmem:[#allocation14 + $0x810] sm:$0xff]
    %v3035 = vld [vmem:[#allocation14 + $0x818] sm:$0xff]
    %v3036 = vld [vmem:[#allocation14 + $0x820] sm:$0xff]
    %v3037 = vld [vmem:[#allocation14 + $0x828] sm:$0xff]
    %v3038 = vld [vmem:[#allocation14 + $0x830] sm:$0xff]
    %v3039 = vld [vmem:[#allocation14 + $0x838] sm:$0xff]
    %v3040 = vld [vmem:[#allocation14 + $0x840] sm:$0xff]
    %v3041 = vld [vmem:[#allocation14 + $0x848] sm:$0xff]
    %v3042 = vld [vmem:[#allocation14 + $0x850] sm:$0xff]
    %v3043 = vld [vmem:[#allocation14 + $0x858] sm:$0xff]
    %v3044 = vld [vmem:[#allocation14 + $0x860] sm:$0xff]
    %v3045 = vld [vmem:[#allocation14 + $0x868] sm:$0xff]
    %v3046 = vld [vmem:[#allocation14 + $0x870] sm:$0xff]
    %v3047 = vld [vmem:[#allocation14 + $0x878] sm:$0xff]
    %v3048 = vld [vmem:[#allocation14 + $0x880] sm:$0xff]
    %v3049 = vld [vmem:[#allocation14 + $0x888] sm:$0xff]
    %v3050 = vld [vmem:[#allocation14 + $0x890] sm:$0xff]
    %v3051 = vld [vmem:[#allocation14 + $0x898] sm:$0xff]
    %v3052 = vld [vmem:[#allocation14 + $0x8a0] sm:$0xff]
    %v3053 = vld [vmem:[#allocation14 + $0x8a8] sm:$0xff]
    %v3054 = vld [vmem:[#allocation14 + $0x8b0] sm:$0xff]
    %v3055 = vld [vmem:[#allocation14 + $0x8b8] sm:$0xff]
    %v3056 = vld [vmem:[#allocation14 + $0x8c0] sm:$0xff]
    %v3057 = vld [vmem:[#allocation14 + $0x8c8] sm:$0xff]
    %v3058 = vld [vmem:[#allocation14 + $0x8d0] sm:$0xff]
    %v3059 = vld [vmem:[#allocation14 + $0x8d8] sm:$0xff]
    %v3060 = vld [vmem:[#allocation14 + $0x8e0] sm:$0xff]
    %v3061 = vld [vmem:[#allocation14 + $0x8e8] sm:$0xff]
    %v3062 = vld [vmem:[#allocation14 + $0x8f0] sm:$0xff]
    %v3063 = vld [vmem:[#allocation14 + $0x8f8] sm:$0xff]
    %v3064 = vld [vmem:[#allocation14 + $0x900] sm:$0xff]
    %v3065 = vld [vmem:[#allocation14 + $0x908] sm:$0xff]
    %v3066 = vld [vmem:[#allocation14 + $0x910] sm:$0xff]
    %v3067 = vld [vmem:[#allocation14 + $0x918] sm:$0xff]
    %v3068 = vld [vmem:[#allocation14 + $0x920] sm:$0xff]
    %v3069 = vld [vmem:[#allocation14 + $0x928] sm:$0xff]
    %v3070 = vld [vmem:[#allocation14 + $0x930] sm:$0xff]
    %v3071 = vld [vmem:[#allocation14 + $0x938] sm:$0xff]
    %v3072 = vld [vmem:[#allocation14 + $0x940] sm:$0xff]
    %v3073 = vld [vmem:[#allocation14 + $0x948] sm:$0xff]
    %v3074 = vld [vmem:[#allocation14 + $0x950] sm:$0xff]
    %v3075 = vld [vmem:[#allocation14 + $0x958] sm:$0xff]
    %v3076 = vld [vmem:[#allocation14 + $0x960] sm:$0xff]
    %v3077 = vld [vmem:[#allocation14 + $0x968] sm:$0xff]
    %v3078 = vld [vmem:[#allocation14 + $0x970] sm:$0xff]
    %v3079 = vld [vmem:[#allocation14 + $0x978] sm:$0xff]
    %v3080 = vld [vmem:[#allocation14 + $0x980] sm:$0xff]
    %v3081 = vld [vmem:[#allocation14 + $0x988] sm:$0xff]
    %v3082 = vld [vmem:[#allocation14 + $0x990] sm:$0xff]
    %v3083 = vld [vmem:[#allocation14 + $0x998] sm:$0xff]
    %v3084 = vld [vmem:[#allocation14 + $0x9a0] sm:$0xff]
    %v3085 = vld [vmem:[#allocation14 + $0x9a8] sm:$0xff]
    %v3086 = vld [vmem:[#allocation14 + $0x9b0] sm:$0xff]
    %v3087 = vld [vmem:[#allocation14 + $0x9b8] sm:$0xff]
    %v3088 = vld [vmem:[#allocation14 + $0x9c0] sm:$0xff]
    %v3089 = vld [vmem:[#allocation14 + $0x9c8] sm:$0xff]
    %v3090 = vld [vmem:[#allocation14 + $0x9d0] sm:$0xff]
    %v3091 = vld [vmem:[#allocation14 + $0x9d8] sm:$0xff]
    %v3092 = vld [vmem:[#allocation14 + $0x9e0] sm:$0xff]
    %v3093 = vld [vmem:[#allocation14 + $0x9e8] sm:$0xff]
    %v3094 = vld [vmem:[#allocation14 + $0x9f0] sm:$0xff]
    %v3095 = vld [vmem:[#allocation14 + $0x9f8] sm:$0xff]
    %v3096 = vld [vmem:[#allocation14 + $0xa00] sm:$0xff]
    %v3097 = vld [vmem:[#allocation14 + $0xa08] sm:$0xff]
    %v3098 = vld [vmem:[#allocation14 + $0xa10] sm:$0xff]
    %v3099 = vld [vmem:[#allocation14 + $0xa18] sm:$0xff]
    %v3100 = vld [vmem:[#allocation14 + $0xa20] sm:$0xff]
    %v3101 = vld [vmem:[#allocation14 + $0xa28] sm:$0xff]
    %v3102 = vld [vmem:[#allocation14 + $0xa30] sm:$0xff]
    %v3103 = vld [vmem:[#allocation14 + $0xa38] sm:$0xff]
    %v3104 = vld [vmem:[#allocation14 + $0xa40] sm:$0xff]
    %v3105 = vld [vmem:[#allocation14 + $0xa48] sm:$0xff]
    %v3106 = vld [vmem:[#allocation14 + $0xa50] sm:$0xff]
    %v3107 = vld [vmem:[#allocation14 + $0xa58] sm:$0xff]
    %v3108 = vld [vmem:[#allocation14 + $0xa60] sm:$0xff]
    %v3109 = vld [vmem:[#allocation14 + $0xa68] sm:$0xff]
    %v3110 = vld [vmem:[#allocation14 + $0xa70] sm:$0xff]
    %v3111 = vld [vmem:[#allocation14 + $0xa78] sm:$0xff]
    %v3112 = vld [vmem:[#allocation14 + $0xa80] sm:$0xff]
    %v3113 = vld [vmem:[#allocation14 + $0xa88] sm:$0xff]
    %v3114 = vld [vmem:[#allocation14 + $0xa90] sm:$0xff]
    %v3115 = vld [vmem:[#allocation14 + $0xa98] sm:$0xff]
    %v3116 = vld [vmem:[#allocation14 + $0xaa0] sm:$0xff]
    %v3117 = vld [vmem:[#allocation14 + $0xaa8] sm:$0xff]
    %v3118 = vld [vmem:[#allocation14 + $0xab0] sm:$0xff]
    %v3119 = vld [vmem:[#allocation14 + $0xab8] sm:$0xff]
    %v3120 = vld [vmem:[#allocation14 + $0xac0] sm:$0xff]
    %v3121 = vld [vmem:[#allocation14 + $0xac8] sm:$0xff]
    %v3122 = vld [vmem:[#allocation14 + $0xad0] sm:$0xff]
    %v3123 = vld [vmem:[#allocation14 + $0xad8] sm:$0xff]
    %v3124 = vld [vmem:[#allocation14 + $0xae0] sm:$0xff]
    %v3125 = vld [vmem:[#allocation14 + $0xae8] sm:$0xff]
    %v3126 = vld [vmem:[#allocation14 + $0xaf0] sm:$0xff]
    %v3127 = vld [vmem:[#allocation14 + $0xaf8] sm:$0xff]
    %v3128 = vld [vmem:[#allocation14 + $0xb00] sm:$0xff]
    %v3129 = vld [vmem:[#allocation14 + $0xb08] sm:$0xff]
    %v3130 = vld [vmem:[#allocation14 + $0xb10] sm:$0xff]
    %v3131 = vld [vmem:[#allocation14 + $0xb18] sm:$0xff]
    %v3132 = vld [vmem:[#allocation14 + $0xb20] sm:$0xff]
    %v3133 = vld [vmem:[#allocation14 + $0xb28] sm:$0xff]
    %v3134 = vld [vmem:[#allocation14 + $0xb30] sm:$0xff]
    %v3135 = vld [vmem:[#allocation14 + $0xb38] sm:$0xff]
    %v3136 = vld [vmem:[#allocation14 + $0xb40] sm:$0xff]
    %v3137 = vld [vmem:[#allocation14 + $0xb48] sm:$0xff]
    %v3138 = vld [vmem:[#allocation14 + $0xb50] sm:$0xff]
    %v3139 = vld [vmem:[#allocation14 + $0xb58] sm:$0xff]
    %v3140 = vld [vmem:[#allocation14 + $0xb60] sm:$0xff]
    %v3141 = vld [vmem:[#allocation14 + $0xb68] sm:$0xff]
    %v3142 = vld [vmem:[#allocation14 + $0xb70] sm:$0xff]
    %v3143 = vld [vmem:[#allocation14 + $0xb78] sm:$0xff]
    %v3144 = vld [vmem:[#allocation14 + $0xb80] sm:$0xff]
    %v3145 = vld [vmem:[#allocation14 + $0xb88] sm:$0xff]
    %v3146 = vld [vmem:[#allocation14 + $0xb90] sm:$0xff]
    %v3147 = vld [vmem:[#allocation14 + $0xb98] sm:$0xff]
    %v3148 = vld [vmem:[#allocation14 + $0xba0] sm:$0xff]
    %v3149 = vld [vmem:[#allocation14 + $0xba8] sm:$0xff]
    %v3150 = vld [vmem:[#allocation14 + $0xbb0] sm:$0xff]
    %v3151 = vld [vmem:[#allocation14 + $0xbb8] sm:$0xff]
    %v3152 = vld [vmem:[#allocation14 + $0xbc0] sm:$0xff]
    %v3153 = vld [vmem:[#allocation14 + $0xbc8] sm:$0xff]
    %v3154 = vld [vmem:[#allocation14 + $0xbd0] sm:$0xff]
    %v3155 = vld [vmem:[#allocation14 + $0xbd8] sm:$0xff]
    %v3156 = vld [vmem:[#allocation14 + $0xbe0] sm:$0xff]
    %v3157 = vld [vmem:[#allocation14 + $0xbe8] sm:$0xff]
    %v3158 = vld [vmem:[#allocation14 + $0xbf0] sm:$0xff]
    %v3159 = vld [vmem:[#allocation14 + $0xbf8] sm:$0xff]
    %v3160 = vld [vmem:[#allocation14 + $0xc00] sm:$0xff]
    %v3161 = vld [vmem:[#allocation14 + $0xc08] sm:$0xff]
    %v3162 = vld [vmem:[#allocation14 + $0xc10] sm:$0xff]
    %v3163 = vld [vmem:[#allocation14 + $0xc18] sm:$0xff]
    %v3164 = vld [vmem:[#allocation14 + $0xc20] sm:$0xff]
    %v3165 = vld [vmem:[#allocation14 + $0xc28] sm:$0xff]
    %v3166 = vld [vmem:[#allocation14 + $0xc30] sm:$0xff]
    %v3167 = vld [vmem:[#allocation14 + $0xc38] sm:$0xff]
    %v3168 = vld [vmem:[#allocation14 + $0xc40] sm:$0xff]
    %v3169 = vld [vmem:[#allocation14 + $0xc48] sm:$0xff]
    %v3170 = vld [vmem:[#allocation14 + $0xc50] sm:$0xff]
    %v3171 = vld [vmem:[#allocation14 + $0xc58] sm:$0xff]
    %v3172 = vld [vmem:[#allocation14 + $0xc60] sm:$0xff]
    %v3173 = vld [vmem:[#allocation14 + $0xc68] sm:$0xff]
    %v3174 = vld [vmem:[#allocation14 + $0xc70] sm:$0xff]
    %v3175 = vld [vmem:[#allocation14 + $0xc78] sm:$0xff]
    %v3176 = vld [vmem:[#allocation14 + $0xc80] sm:$0xff]
    %v3177 = vld [vmem:[#allocation14 + $0xc88] sm:$0xff]
    %v3178 = vld [vmem:[#allocation14 + $0xc90] sm:$0xff]
    %v3179 = vld [vmem:[#allocation14 + $0xc98] sm:$0xff]
    %v3180 = vld [vmem:[#allocation14 + $0xca0] sm:$0xff]
    %v3181 = vld [vmem:[#allocation14 + $0xca8] sm:$0xff]
    %v3182 = vld [vmem:[#allocation14 + $0xcb0] sm:$0xff]
    %v3183 = vld [vmem:[#allocation14 + $0xcb8] sm:$0xff]
    %v3184 = vld [vmem:[#allocation14 + $0xcc0] sm:$0xff]
    %v3185 = vld [vmem:[#allocation14 + $0xcc8] sm:$0xff]
    %v3186 = vld [vmem:[#allocation14 + $0xcd0] sm:$0xff]
    %v3187 = vld [vmem:[#allocation14 + $0xcd8] sm:$0xff]
    %v3188 = vld [vmem:[#allocation14 + $0xce0] sm:$0xff]
    %v3189 = vld [vmem:[#allocation14 + $0xce8] sm:$0xff]
    %v3190 = vld [vmem:[#allocation14 + $0xcf0] sm:$0xff]
    %v3191 = vld [vmem:[#allocation14 + $0xcf8] sm:$0xff]
    %v3192 = vld [vmem:[#allocation14 + $0xd00] sm:$0xff]
    %v3193 = vld [vmem:[#allocation14 + $0xd08] sm:$0xff]
    %v3194 = vld [vmem:[#allocation14 + $0xd10] sm:$0xff]
    %v3195 = vld [vmem:[#allocation14 + $0xd18] sm:$0xff]
    %v3196 = vld [vmem:[#allocation14 + $0xd20] sm:$0xff]
    %v3197 = vld [vmem:[#allocation14 + $0xd28] sm:$0xff]
    %v3198 = vld [vmem:[#allocation14 + $0xd30] sm:$0xff]
    %v3199 = vld [vmem:[#allocation14 + $0xd38] sm:$0xff]
    %v3200 = vld [vmem:[#allocation14 + $0xd40] sm:$0xff]
    %v3201 = vld [vmem:[#allocation14 + $0xd48] sm:$0xff]
    %v3202 = vld [vmem:[#allocation14 + $0xd50] sm:$0xff]
    %v3203 = vld [vmem:[#allocation14 + $0xd58] sm:$0xff]
    %v3204 = vld [vmem:[#allocation14 + $0xd60] sm:$0xff]
    %v3205 = vld [vmem:[#allocation14 + $0xd68] sm:$0xff]
    %v3206 = vld [vmem:[#allocation14 + $0xd70] sm:$0xff]
    %v3207 = vld [vmem:[#allocation14 + $0xd78] sm:$0xff]
    %v3208 = vld [vmem:[#allocation14 + $0xd80] sm:$0xff]
    %v3209 = vld [vmem:[#allocation14 + $0xd88] sm:$0xff]
    %v3210 = vld [vmem:[#allocation14 + $0xd90] sm:$0xff]
    %v3211 = vld [vmem:[#allocation14 + $0xd98] sm:$0xff]
    %v3212 = vld [vmem:[#allocation14 + $0xda0] sm:$0xff]
    %v3213 = vld [vmem:[#allocation14 + $0xda8] sm:$0xff]
    %v3214 = vld [vmem:[#allocation14 + $0xdb0] sm:$0xff]
    %v3215 = vld [vmem:[#allocation14 + $0xdb8] sm:$0xff]
    %v3216 = vld [vmem:[#allocation14 + $0xdc0] sm:$0xff]
    %v3217 = vld [vmem:[#allocation14 + $0xdc8] sm:$0xff]
    %v3218 = vld [vmem:[#allocation14 + $0xdd0] sm:$0xff]
    %v3219 = vld [vmem:[#allocation14 + $0xdd8] sm:$0xff]
    %v3220 = vld [vmem:[#allocation14 + $0xde0] sm:$0xff]
    %v3221 = vld [vmem:[#allocation14 + $0xde8] sm:$0xff]
    %v3222 = vld [vmem:[#allocation14 + $0xdf0] sm:$0xff]
    %v3223 = vld [vmem:[#allocation14 + $0xdf8] sm:$0xff]
    %v3224 = vld [vmem:[#allocation14 + $0xe00] sm:$0xff]
    %v3225 = vld [vmem:[#allocation14 + $0xe08] sm:$0xff]
    %v3226 = vld [vmem:[#allocation14 + $0xe10] sm:$0xff]
    %v3227 = vld [vmem:[#allocation14 + $0xe18] sm:$0xff]
    %v3228 = vld [vmem:[#allocation14 + $0xe20] sm:$0xff]
    %v3229 = vld [vmem:[#allocation14 + $0xe28] sm:$0xff]
    %v3230 = vld [vmem:[#allocation14 + $0xe30] sm:$0xff]
    %v3231 = vld [vmem:[#allocation14 + $0xe38] sm:$0xff]
    %v3232 = vld [vmem:[#allocation14 + $0xe40] sm:$0xff]
    %v3233 = vld [vmem:[#allocation14 + $0xe48] sm:$0xff]
    %v3234 = vld [vmem:[#allocation14 + $0xe50] sm:$0xff]
    %v3235 = vld [vmem:[#allocation14 + $0xe58] sm:$0xff]
    %v3236 = vld [vmem:[#allocation14 + $0xe60] sm:$0xff]
    %v3237 = vld [vmem:[#allocation14 + $0xe68] sm:$0xff]
    %v3238 = vld [vmem:[#allocation14 + $0xe70] sm:$0xff]
    %v3239 = vld [vmem:[#allocation14 + $0xe78] sm:$0xff]
    %v3240 = vld [vmem:[#allocation14 + $0xe80] sm:$0xff]
    %v3241 = vld [vmem:[#allocation14 + $0xe88] sm:$0xff]
    %v3242 = vld [vmem:[#allocation14 + $0xe90] sm:$0xff]
    %v3243 = vld [vmem:[#allocation14 + $0xe98] sm:$0xff]
    %v3244 = vld [vmem:[#allocation14 + $0xea0] sm:$0xff]
    %v3245 = vld [vmem:[#allocation14 + $0xea8] sm:$0xff]
    %v3246 = vld [vmem:[#allocation14 + $0xeb0] sm:$0xff]
    %v3247 = vld [vmem:[#allocation14 + $0xeb8] sm:$0xff]
    %v3248 = vld [vmem:[#allocation14 + $0xec0] sm:$0xff]
    %v3249 = vld [vmem:[#allocation14 + $0xec8] sm:$0xff]
    %v3250 = vld [vmem:[#allocation14 + $0xed0] sm:$0xff]
    %v3251 = vld [vmem:[#allocation14 + $0xed8] sm:$0xff]
    %v3252 = vld [vmem:[#allocation14 + $0xee0] sm:$0xff]
    %v3253 = vld [vmem:[#allocation14 + $0xee8] sm:$0xff]
    %v3254 = vld [vmem:[#allocation14 + $0xef0] sm:$0xff]
    %v3255 = vld [vmem:[#allocation14 + $0xef8] sm:$0xff]
    %v3256 = vld [vmem:[#allocation14 + $0xf00] sm:$0xff]
    %v3257 = vld [vmem:[#allocation14 + $0xf08] sm:$0xff]
    %v3258 = vld [vmem:[#allocation14 + $0xf10] sm:$0xff]
    %v3259 = vld [vmem:[#allocation14 + $0xf18] sm:$0xff]
    %v3260 = vld [vmem:[#allocation14 + $0xf20] sm:$0xff]
    %v3261 = vld [vmem:[#allocation14 + $0xf28] sm:$0xff]
    %v3262 = vld [vmem:[#allocation14 + $0xf30] sm:$0xff]
    %v3263 = vld [vmem:[#allocation14 + $0xf38] sm:$0xff]
    %v3264 = vld [vmem:[#allocation14 + $0xf40] sm:$0xff]
    %v3265 = vld [vmem:[#allocation14 + $0xf48] sm:$0xff]
    %v3266 = vld [vmem:[#allocation14 + $0xf50] sm:$0xff]
    %v3267 = vld [vmem:[#allocation14 + $0xf58] sm:$0xff]
    %v3268 = vld [vmem:[#allocation14 + $0xf60] sm:$0xff]
    %v3269 = vld [vmem:[#allocation14 + $0xf68] sm:$0xff]
    %v3270 = vld [vmem:[#allocation14 + $0xf70] sm:$0xff]
    %v3271 = vld [vmem:[#allocation14 + $0xf78] sm:$0xff]
    %v3272 = vld [vmem:[#allocation14 + $0xf80] sm:$0xff]
    %v3273 = vld [vmem:[#allocation14 + $0xf88] sm:$0xff]
    %v3274 = vld [vmem:[#allocation14 + $0xf90] sm:$0xff]
    %v3275 = vld [vmem:[#allocation14 + $0xf98] sm:$0xff]
    %v3276 = vld [vmem:[#allocation14 + $0xfa0] sm:$0xff]
    %v3277 = vld [vmem:[#allocation14 + $0xfa8] sm:$0xff]
    %v3278 = vld [vmem:[#allocation14 + $0xfb0] sm:$0xff]
    %v3279 = vld [vmem:[#allocation14 + $0xfb8] sm:$0xff]
    %v3280 = vld [vmem:[#allocation14 + $0xfc0] sm:$0xff]
    %v3281 = vld [vmem:[#allocation14 + $0xfc8] sm:$0xff]
    %v3282 = vld [vmem:[#allocation14 + $0xfd0] sm:$0xff]
    %v3283 = vld [vmem:[#allocation14 + $0xfd8] sm:$0xff]
    %v3284 = vld [vmem:[#allocation14 + $0xfe0] sm:$0xff]
    %v3285 = vld [vmem:[#allocation14 + $0xfe8] sm:$0xff]
    %v3286 = vld [vmem:[#allocation14 + $0xff0] sm:$0xff]
    %v3287 = vld [vmem:[#allocation14 + $0xff8] sm:$0xff]
    %v3288 = vld [vmem:[#allocation16] sm:$0xff]
    %v3290 = vperm.slane %v3288, 0
    %v3291 = vperm.slane %v3288, 1
    %v3292 = vperm.slane %v3288, 2
    %v3293 = vperm.slane %v3288, 3
    %v3294 = vperm.slane %v3288, 4
    %v3295 = vperm.slane %v3288, 5
    %v3296 = vperm.slane %v3288, 6
    %v3297 = vperm.slane %v3288, 7
    %v3818 = vunpack.c.l.b16 %v2776
    %v3819 = vunpack.c.h.b16 %v2776
    %v3820 = vunpack.c.l.b16 %v2777
    %v3821 = vunpack.c.h.b16 %v2777
    %v3822 = vunpack.c.l.b16 %v2778
    %v3823 = vunpack.c.h.b16 %v2778
    %v3824 = vunpack.c.l.b16 %v2779
    %v3825 = vunpack.c.h.b16 %v2779
    %v3826 = vunpack.c.l.b16 %v2780
    %v3827 = vunpack.c.h.b16 %v2780
    %v3828 = vunpack.c.l.b16 %v2781
    %v3829 = vunpack.c.h.b16 %v2781
    %v3830 = vunpack.c.l.b16 %v2782
    %v3831 = vunpack.c.h.b16 %v2782
    %v3832 = vunpack.c.l.b16 %v2783
    %v3833 = vunpack.c.h.b16 %v2783
    %v3834 = vunpack.c.l.b16 %v2784
    %v3835 = vunpack.c.h.b16 %v2784
    %v3836 = vunpack.c.l.b16 %v2785
    %v3837 = vunpack.c.h.b16 %v2785
    %v3838 = vunpack.c.l.b16 %v2786
    %v3839 = vunpack.c.h.b16 %v2786
    %v3840 = vunpack.c.l.b16 %v2787
    %v3841 = vunpack.c.h.b16 %v2787
    %v3842 = vunpack.c.l.b16 %v2788
    %v3843 = vunpack.c.h.b16 %v2788
    %v3844 = vunpack.c.l.b16 %v2789
    %v3845 = vunpack.c.h.b16 %v2789
    %v3846 = vunpack.c.l.b16 %v2790
    %v3847 = vunpack.c.h.b16 %v2790
    %v3848 = vunpack.c.l.b16 %v2791
    %v3849 = vunpack.c.h.b16 %v2791
    %v3850 = vunpack.c.l.b16 %v2792
    %v3851 = vunpack.c.h.b16 %v2792
    %v3852 = vunpack.c.l.b16 %v2793
    %v3853 = vunpack.c.h.b16 %v2793
    %v3854 = vunpack.c.l.b16 %v2794
    %v3855 = vunpack.c.h.b16 %v2794
    %v3856 = vunpack.c.l.b16 %v2795
    %v3857 = vunpack.c.h.b16 %v2795
    %v3858 = vunpack.c.l.b16 %v2796
    %v3859 = vunpack.c.h.b16 %v2796
    %v3860 = vunpack.c.l.b16 %v2797
    %v3861 = vunpack.c.h.b16 %v2797
    %v3862 = vunpack.c.l.b16 %v2798
    %v3863 = vunpack.c.h.b16 %v2798
    %v3864 = vunpack.c.l.b16 %v2799
    %v3865 = vunpack.c.h.b16 %v2799
    %v3866 = vunpack.c.l.b16 %v2800
    %v3867 = vunpack.c.h.b16 %v2800
    %v3868 = vunpack.c.l.b16 %v2801
    %v3869 = vunpack.c.h.b16 %v2801
    %v3870 = vunpack.c.l.b16 %v2802
    %v3871 = vunpack.c.h.b16 %v2802
    %v3872 = vunpack.c.l.b16 %v2803
    %v3873 = vunpack.c.h.b16 %v2803
    %v3874 = vunpack.c.l.b16 %v2804
    %v3875 = vunpack.c.h.b16 %v2804
    %v3876 = vunpack.c.l.b16 %v2805
    %v3877 = vunpack.c.h.b16 %v2805
    %v3878 = vunpack.c.l.b16 %v2806
    %v3879 = vunpack.c.h.b16 %v2806
    %v3880 = vunpack.c.l.b16 %v2807
    %v3881 = vunpack.c.h.b16 %v2807
    %v3882 = vunpack.c.l.b16 %v2808
    %v3883 = vunpack.c.h.b16 %v2808
    %v3884 = vunpack.c.l.b16 %v2809
    %v3885 = vunpack.c.h.b16 %v2809
    %v3886 = vunpack.c.l.b16 %v2810
    %v3887 = vunpack.c.h.b16 %v2810
    %v3888 = vunpack.c.l.b16 %v2811
    %v3889 = vunpack.c.h.b16 %v2811
    %v3890 = vunpack.c.l.b16 %v2812
    %v3891 = vunpack.c.h.b16 %v2812
    %v3892 = vunpack.c.l.b16 %v2813
    %v3893 = vunpack.c.h.b16 %v2813
    %v3894 = vunpack.c.l.b16 %v2814
    %v3895 = vunpack.c.h.b16 %v2814
    %v3896 = vunpack.c.l.b16 %v2815
    %v3897 = vunpack.c.h.b16 %v2815
    %v3898 = vunpack.c.l.b16 %v2816
    %v3899 = vunpack.c.h.b16 %v2816
    %v3900 = vunpack.c.l.b16 %v2817
    %v3901 = vunpack.c.h.b16 %v2817
    %v3902 = vunpack.c.l.b16 %v2818
    %v3903 = vunpack.c.h.b16 %v2818
    %v3904 = vunpack.c.l.b16 %v2819
    %v3905 = vunpack.c.h.b16 %v2819
    %v3906 = vunpack.c.l.b16 %v2820
    %v3907 = vunpack.c.h.b16 %v2820
    %v3908 = vunpack.c.l.b16 %v2821
    %v3909 = vunpack.c.h.b16 %v2821
    %v3910 = vunpack.c.l.b16 %v2822
    %v3911 = vunpack.c.h.b16 %v2822
    %v3912 = vunpack.c.l.b16 %v2823
    %v3913 = vunpack.c.h.b16 %v2823
    %v3914 = vunpack.c.l.b16 %v2824
    %v3915 = vunpack.c.h.b16 %v2824
    %v3916 = vunpack.c.l.b16 %v2825
    %v3917 = vunpack.c.h.b16 %v2825
    %v3918 = vunpack.c.l.b16 %v2826
    %v3919 = vunpack.c.h.b16 %v2826
    %v3920 = vunpack.c.l.b16 %v2827
    %v3921 = vunpack.c.h.b16 %v2827
    %v3922 = vunpack.c.l.b16 %v2828
    %v3923 = vunpack.c.h.b16 %v2828
    %v3924 = vunpack.c.l.b16 %v2829
    %v3925 = vunpack.c.h.b16 %v2829
    %v3926 = vunpack.c.l.b16 %v2830
    %v3927 = vunpack.c.h.b16 %v2830
    %v3928 = vunpack.c.l.b16 %v2831
    %v3929 = vunpack.c.h.b16 %v2831
    %v3930 = vunpack.c.l.b16 %v2832
    %v3931 = vunpack.c.h.b16 %v2832
    %v3932 = vunpack.c.l.b16 %v2833
    %v3933 = vunpack.c.h.b16 %v2833
    %v3934 = vunpack.c.l.b16 %v2834
    %v3935 = vunpack.c.h.b16 %v2834
    %v3936 = vunpack.c.l.b16 %v2835
    %v3937 = vunpack.c.h.b16 %v2835
    %v3938 = vunpack.c.l.b16 %v2836
    %v3939 = vunpack.c.h.b16 %v2836
    %v3940 = vunpack.c.l.b16 %v2837
    %v3941 = vunpack.c.h.b16 %v2837
    %v3942 = vunpack.c.l.b16 %v2838
    %v3943 = vunpack.c.h.b16 %v2838
    %v3944 = vunpack.c.l.b16 %v2839
    %v3945 = vunpack.c.h.b16 %v2839
    %v3946 = vunpack.c.l.b16 %v2840
    %v3947 = vunpack.c.h.b16 %v2840
    %v3948 = vunpack.c.l.b16 %v2841
    %v3949 = vunpack.c.h.b16 %v2841
    %v3950 = vunpack.c.l.b16 %v2842
    %v3951 = vunpack.c.h.b16 %v2842
    %v3952 = vunpack.c.l.b16 %v2843
    %v3953 = vunpack.c.h.b16 %v2843
    %v3954 = vunpack.c.l.b16 %v2844
    %v3955 = vunpack.c.h.b16 %v2844
    %v3956 = vunpack.c.l.b16 %v2845
    %v3957 = vunpack.c.h.b16 %v2845
    %v3958 = vunpack.c.l.b16 %v2846
    %v3959 = vunpack.c.h.b16 %v2846
    %v3960 = vunpack.c.l.b16 %v2847
    %v3961 = vunpack.c.h.b16 %v2847
    %v3962 = vunpack.c.l.b16 %v2848
    %v3963 = vunpack.c.h.b16 %v2848
    %v3964 = vunpack.c.l.b16 %v2849
    %v3965 = vunpack.c.h.b16 %v2849
    %v3966 = vunpack.c.l.b16 %v2850
    %v3967 = vunpack.c.h.b16 %v2850
    %v3968 = vunpack.c.l.b16 %v2851
    %v3969 = vunpack.c.h.b16 %v2851
    %v3970 = vunpack.c.l.b16 %v2852
    %v3971 = vunpack.c.h.b16 %v2852
    %v3972 = vunpack.c.l.b16 %v2853
    %v3973 = vunpack.c.h.b16 %v2853
    %v3974 = vunpack.c.l.b16 %v2854
    %v3975 = vunpack.c.h.b16 %v2854
    %v3976 = vunpack.c.l.b16 %v2855
    %v3977 = vunpack.c.h.b16 %v2855
    %v3978 = vunpack.c.l.b16 %v2856
    %v3979 = vunpack.c.h.b16 %v2856
    %v3980 = vunpack.c.l.b16 %v2857
    %v3981 = vunpack.c.h.b16 %v2857
    %v3982 = vunpack.c.l.b16 %v2858
    %v3983 = vunpack.c.h.b16 %v2858
    %v3984 = vunpack.c.l.b16 %v2859
    %v3985 = vunpack.c.h.b16 %v2859
    %v3986 = vunpack.c.l.b16 %v2860
    %v3987 = vunpack.c.h.b16 %v2860
    %v3988 = vunpack.c.l.b16 %v2861
    %v3989 = vunpack.c.h.b16 %v2861
    %v3990 = vunpack.c.l.b16 %v2862
    %v3991 = vunpack.c.h.b16 %v2862
    %v3992 = vunpack.c.l.b16 %v2863
    %v3993 = vunpack.c.h.b16 %v2863
    %v3994 = vunpack.c.l.b16 %v2864
    %v3995 = vunpack.c.h.b16 %v2864
    %v3996 = vunpack.c.l.b16 %v2865
    %v3997 = vunpack.c.h.b16 %v2865
    %v3998 = vunpack.c.l.b16 %v2866
    %v3999 = vunpack.c.h.b16 %v2866
    %v4000 = vunpack.c.l.b16 %v2867
    %v4001 = vunpack.c.h.b16 %v2867
    %v4002 = vunpack.c.l.b16 %v2868
    %v4003 = vunpack.c.h.b16 %v2868
    %v4004 = vunpack.c.l.b16 %v2869
    %v4005 = vunpack.c.h.b16 %v2869
    %v4006 = vunpack.c.l.b16 %v2870
    %v4007 = vunpack.c.h.b16 %v2870
    %v4008 = vunpack.c.l.b16 %v2871
    %v4009 = vunpack.c.h.b16 %v2871
    %v4010 = vunpack.c.l.b16 %v2872
    %v4011 = vunpack.c.h.b16 %v2872
    %v4012 = vunpack.c.l.b16 %v2873
    %v4013 = vunpack.c.h.b16 %v2873
    %v4014 = vunpack.c.l.b16 %v2874
    %v4015 = vunpack.c.h.b16 %v2874
    %v4016 = vunpack.c.l.b16 %v2875
    %v4017 = vunpack.c.h.b16 %v2875
    %v4018 = vunpack.c.l.b16 %v2876
    %v4019 = vunpack.c.h.b16 %v2876
    %v4020 = vunpack.c.l.b16 %v2877
    %v4021 = vunpack.c.h.b16 %v2877
    %v4022 = vunpack.c.l.b16 %v2878
    %v4023 = vunpack.c.h.b16 %v2878
    %v4024 = vunpack.c.l.b16 %v2879
    %v4025 = vunpack.c.h.b16 %v2879
    %v4026 = vunpack.c.l.b16 %v2880
    %v4027 = vunpack.c.h.b16 %v2880
    %v4028 = vunpack.c.l.b16 %v2881
    %v4029 = vunpack.c.h.b16 %v2881
    %v4030 = vunpack.c.l.b16 %v2882
    %v4031 = vunpack.c.h.b16 %v2882
    %v4032 = vunpack.c.l.b16 %v2883
    %v4033 = vunpack.c.h.b16 %v2883
    %v4034 = vunpack.c.l.b16 %v2884
    %v4035 = vunpack.c.h.b16 %v2884
    %v4036 = vunpack.c.l.b16 %v2885
    %v4037 = vunpack.c.h.b16 %v2885
    %v4038 = vunpack.c.l.b16 %v2886
    %v4039 = vunpack.c.h.b16 %v2886
    %v4040 = vunpack.c.l.b16 %v2887
    %v4041 = vunpack.c.h.b16 %v2887
    %v4042 = vunpack.c.l.b16 %v2888
    %v4043 = vunpack.c.h.b16 %v2888
    %v4044 = vunpack.c.l.b16 %v2889
    %v4045 = vunpack.c.h.b16 %v2889
    %v4046 = vunpack.c.l.b16 %v2890
    %v4047 = vunpack.c.h.b16 %v2890
    %v4048 = vunpack.c.l.b16 %v2891
    %v4049 = vunpack.c.h.b16 %v2891
    %v4050 = vunpack.c.l.b16 %v2892
    %v4051 = vunpack.c.h.b16 %v2892
    %v4052 = vunpack.c.l.b16 %v2893
    %v4053 = vunpack.c.h.b16 %v2893
    %v4054 = vunpack.c.l.b16 %v2894
    %v4055 = vunpack.c.h.b16 %v2894
    %v4056 = vunpack.c.l.b16 %v2895
    %v4057 = vunpack.c.h.b16 %v2895
    %v4058 = vunpack.c.l.b16 %v2896
    %v4059 = vunpack.c.h.b16 %v2896
    %v4060 = vunpack.c.l.b16 %v2897
    %v4061 = vunpack.c.h.b16 %v2897
    %v4062 = vunpack.c.l.b16 %v2898
    %v4063 = vunpack.c.h.b16 %v2898
    %v4064 = vunpack.c.l.b16 %v2899
    %v4065 = vunpack.c.h.b16 %v2899
    %v4066 = vunpack.c.l.b16 %v2900
    %v4067 = vunpack.c.h.b16 %v2900
    %v4068 = vunpack.c.l.b16 %v2901
    %v4069 = vunpack.c.h.b16 %v2901
    %v4070 = vunpack.c.l.b16 %v2902
    %v4071 = vunpack.c.h.b16 %v2902
    %v4072 = vunpack.c.l.b16 %v2903
    %v4073 = vunpack.c.h.b16 %v2903
    %v4074 = vunpack.c.l.b16 %v2904
    %v4075 = vunpack.c.h.b16 %v2904
    %v4076 = vunpack.c.l.b16 %v2905
    %v4077 = vunpack.c.h.b16 %v2905
    %v4078 = vunpack.c.l.b16 %v2906
    %v4079 = vunpack.c.h.b16 %v2906
    %v4080 = vunpack.c.l.b16 %v2907
    %v4081 = vunpack.c.h.b16 %v2907
    %v4082 = vunpack.c.l.b16 %v2908
    %v4083 = vunpack.c.h.b16 %v2908
    %v4084 = vunpack.c.l.b16 %v2909
    %v4085 = vunpack.c.h.b16 %v2909
    %v4086 = vunpack.c.l.b16 %v2910
    %v4087 = vunpack.c.h.b16 %v2910
    %v4088 = vunpack.c.l.b16 %v2911
    %v4089 = vunpack.c.h.b16 %v2911
    %v4090 = vunpack.c.l.b16 %v2912
    %v4091 = vunpack.c.h.b16 %v2912
    %v4092 = vunpack.c.l.b16 %v2913
    %v4093 = vunpack.c.h.b16 %v2913
    %v4094 = vunpack.c.l.b16 %v2914
    %v4095 = vunpack.c.h.b16 %v2914
    %v4096 = vunpack.c.l.b16 %v2915
    %v4097 = vunpack.c.h.b16 %v2915
    %v4098 = vunpack.c.l.b16 %v2916
    %v4099 = vunpack.c.h.b16 %v2916
    %v4100 = vunpack.c.l.b16 %v2917
    %v4101 = vunpack.c.h.b16 %v2917
    %v4102 = vunpack.c.l.b16 %v2918
    %v4103 = vunpack.c.h.b16 %v2918
    %v4104 = vunpack.c.l.b16 %v2919
    %v4105 = vunpack.c.h.b16 %v2919
    %v4106 = vunpack.c.l.b16 %v2920
    %v4107 = vunpack.c.h.b16 %v2920
    %v4108 = vunpack.c.l.b16 %v2921
    %v4109 = vunpack.c.h.b16 %v2921
    %v4110 = vunpack.c.l.b16 %v2922
    %v4111 = vunpack.c.h.b16 %v2922
    %v4112 = vunpack.c.l.b16 %v2923
    %v4113 = vunpack.c.h.b16 %v2923
    %v4114 = vunpack.c.l.b16 %v2924
    %v4115 = vunpack.c.h.b16 %v2924
    %v4116 = vunpack.c.l.b16 %v2925
    %v4117 = vunpack.c.h.b16 %v2925
    %v4118 = vunpack.c.l.b16 %v2926
    %v4119 = vunpack.c.h.b16 %v2926
    %v4120 = vunpack.c.l.b16 %v2927
    %v4121 = vunpack.c.h.b16 %v2927
    %v4122 = vunpack.c.l.b16 %v2928
    %v4123 = vunpack.c.h.b16 %v2928
    %v4124 = vunpack.c.l.b16 %v2929
    %v4125 = vunpack.c.h.b16 %v2929
    %v4126 = vunpack.c.l.b16 %v2930
    %v4127 = vunpack.c.h.b16 %v2930
    %v4128 = vunpack.c.l.b16 %v2931
    %v4129 = vunpack.c.h.b16 %v2931
    %v4130 = vunpack.c.l.b16 %v2932
    %v4131 = vunpack.c.h.b16 %v2932
    %v4132 = vunpack.c.l.b16 %v2933
    %v4133 = vunpack.c.h.b16 %v2933
    %v4134 = vunpack.c.l.b16 %v2934
    %v4135 = vunpack.c.h.b16 %v2934
    %v4136 = vunpack.c.l.b16 %v2935
    %v4137 = vunpack.c.h.b16 %v2935
    %v4138 = vunpack.c.l.b16 %v2936
    %v4139 = vunpack.c.h.b16 %v2936
    %v4140 = vunpack.c.l.b16 %v2937
    %v4141 = vunpack.c.h.b16 %v2937
    %v4142 = vunpack.c.l.b16 %v2938
    %v4143 = vunpack.c.h.b16 %v2938
    %v4144 = vunpack.c.l.b16 %v2939
    %v4145 = vunpack.c.h.b16 %v2939
    %v4146 = vunpack.c.l.b16 %v2940
    %v4147 = vunpack.c.h.b16 %v2940
    %v4148 = vunpack.c.l.b16 %v2941
    %v4149 = vunpack.c.h.b16 %v2941
    %v4150 = vunpack.c.l.b16 %v2942
    %v4151 = vunpack.c.h.b16 %v2942
    %v4152 = vunpack.c.l.b16 %v2943
    %v4153 = vunpack.c.h.b16 %v2943
    %v4154 = vunpack.c.l.b16 %v2944
    %v4155 = vunpack.c.h.b16 %v2944
    %v4156 = vunpack.c.l.b16 %v2945
    %v4157 = vunpack.c.h.b16 %v2945
    %v4158 = vunpack.c.l.b16 %v2946
    %v4159 = vunpack.c.h.b16 %v2946
    %v4160 = vunpack.c.l.b16 %v2947
    %v4161 = vunpack.c.h.b16 %v2947
    %v4162 = vunpack.c.l.b16 %v2948
    %v4163 = vunpack.c.h.b16 %v2948
    %v4164 = vunpack.c.l.b16 %v2949
    %v4165 = vunpack.c.h.b16 %v2949
    %v4166 = vunpack.c.l.b16 %v2950
    %v4167 = vunpack.c.h.b16 %v2950
    %v4168 = vunpack.c.l.b16 %v2951
    %v4169 = vunpack.c.h.b16 %v2951
    %v4170 = vunpack.c.l.b16 %v2952
    %v4171 = vunpack.c.h.b16 %v2952
    %v4172 = vunpack.c.l.b16 %v2953
    %v4173 = vunpack.c.h.b16 %v2953
    %v4174 = vunpack.c.l.b16 %v2954
    %v4175 = vunpack.c.h.b16 %v2954
    %v4176 = vunpack.c.l.b16 %v2955
    %v4177 = vunpack.c.h.b16 %v2955
    %v4178 = vunpack.c.l.b16 %v2956
    %v4179 = vunpack.c.h.b16 %v2956
    %v4180 = vunpack.c.l.b16 %v2957
    %v4181 = vunpack.c.h.b16 %v2957
    %v4182 = vunpack.c.l.b16 %v2958
    %v4183 = vunpack.c.h.b16 %v2958
    %v4184 = vunpack.c.l.b16 %v2959
    %v4185 = vunpack.c.h.b16 %v2959
    %v4186 = vunpack.c.l.b16 %v2960
    %v4187 = vunpack.c.h.b16 %v2960
    %v4188 = vunpack.c.l.b16 %v2961
    %v4189 = vunpack.c.h.b16 %v2961
    %v4190 = vunpack.c.l.b16 %v2962
    %v4191 = vunpack.c.h.b16 %v2962
    %v4192 = vunpack.c.l.b16 %v2963
    %v4193 = vunpack.c.h.b16 %v2963
    %v4194 = vunpack.c.l.b16 %v2964
    %v4195 = vunpack.c.h.b16 %v2964
    %v4196 = vunpack.c.l.b16 %v2965
    %v4197 = vunpack.c.h.b16 %v2965
    %v4198 = vunpack.c.l.b16 %v2966
    %v4199 = vunpack.c.h.b16 %v2966
    %v4200 = vunpack.c.l.b16 %v2967
    %v4201 = vunpack.c.h.b16 %v2967
    %v4202 = vunpack.c.l.b16 %v2968
    %v4203 = vunpack.c.h.b16 %v2968
    %v4204 = vunpack.c.l.b16 %v2969
    %v4205 = vunpack.c.h.b16 %v2969
    %v4206 = vunpack.c.l.b16 %v2970
    %v4207 = vunpack.c.h.b16 %v2970
    %v4208 = vunpack.c.l.b16 %v2971
    %v4209 = vunpack.c.h.b16 %v2971
    %v4210 = vunpack.c.l.b16 %v2972
    %v4211 = vunpack.c.h.b16 %v2972
    %v4212 = vunpack.c.l.b16 %v2973
    %v4213 = vunpack.c.h.b16 %v2973
    %v4214 = vunpack.c.l.b16 %v2974
    %v4215 = vunpack.c.h.b16 %v2974
    %v4216 = vunpack.c.l.b16 %v2975
    %v4217 = vunpack.c.h.b16 %v2975
    %v4218 = vunpack.c.l.b16 %v2976
    %v4219 = vunpack.c.h.b16 %v2976
    %v4220 = vunpack.c.l.b16 %v2977
    %v4221 = vunpack.c.h.b16 %v2977
    %v4222 = vunpack.c.l.b16 %v2978
    %v4223 = vunpack.c.h.b16 %v2978
    %v4224 = vunpack.c.l.b16 %v2979
    %v4225 = vunpack.c.h.b16 %v2979
    %v4226 = vunpack.c.l.b16 %v2980
    %v4227 = vunpack.c.h.b16 %v2980
    %v4228 = vunpack.c.l.b16 %v2981
    %v4229 = vunpack.c.h.b16 %v2981
    %v4230 = vunpack.c.l.b16 %v2982
    %v4231 = vunpack.c.h.b16 %v2982
    %v4232 = vunpack.c.l.b16 %v2983
    %v4233 = vunpack.c.h.b16 %v2983
    %v4234 = vunpack.c.l.b16 %v2984
    %v4235 = vunpack.c.h.b16 %v2984
    %v4236 = vunpack.c.l.b16 %v2985
    %v4237 = vunpack.c.h.b16 %v2985
    %v4238 = vunpack.c.l.b16 %v2986
    %v4239 = vunpack.c.h.b16 %v2986
    %v4240 = vunpack.c.l.b16 %v2987
    %v4241 = vunpack.c.h.b16 %v2987
    %v4242 = vunpack.c.l.b16 %v2988
    %v4243 = vunpack.c.h.b16 %v2988
    %v4244 = vunpack.c.l.b16 %v2989
    %v4245 = vunpack.c.h.b16 %v2989
    %v4246 = vunpack.c.l.b16 %v2990
    %v4247 = vunpack.c.h.b16 %v2990
    %v4248 = vunpack.c.l.b16 %v2991
    %v4249 = vunpack.c.h.b16 %v2991
    %v4250 = vunpack.c.l.b16 %v2992
    %v4251 = vunpack.c.h.b16 %v2992
    %v4252 = vunpack.c.l.b16 %v2993
    %v4253 = vunpack.c.h.b16 %v2993
    %v4254 = vunpack.c.l.b16 %v2994
    %v4255 = vunpack.c.h.b16 %v2994
    %v4256 = vunpack.c.l.b16 %v2995
    %v4257 = vunpack.c.h.b16 %v2995
    %v4258 = vunpack.c.l.b16 %v2996
    %v4259 = vunpack.c.h.b16 %v2996
    %v4260 = vunpack.c.l.b16 %v2997
    %v4261 = vunpack.c.h.b16 %v2997
    %v4262 = vunpack.c.l.b16 %v2998
    %v4263 = vunpack.c.h.b16 %v2998
    %v4264 = vunpack.c.l.b16 %v2999
    %v4265 = vunpack.c.h.b16 %v2999
    %v4266 = vunpack.c.l.b16 %v3000
    %v4267 = vunpack.c.h.b16 %v3000
    %v4268 = vunpack.c.l.b16 %v3001
    %v4269 = vunpack.c.h.b16 %v3001
    %v4270 = vunpack.c.l.b16 %v3002
    %v4271 = vunpack.c.h.b16 %v3002
    %v4272 = vunpack.c.l.b16 %v3003
    %v4273 = vunpack.c.h.b16 %v3003
    %v4274 = vunpack.c.l.b16 %v3004
    %v4275 = vunpack.c.h.b16 %v3004
    %v4276 = vunpack.c.l.b16 %v3005
    %v4277 = vunpack.c.h.b16 %v3005
    %v4278 = vunpack.c.l.b16 %v3006
    %v4279 = vunpack.c.h.b16 %v3006
    %v4280 = vunpack.c.l.b16 %v3007
    %v4281 = vunpack.c.h.b16 %v3007
    %v4282 = vunpack.c.l.b16 %v3008
    %v4283 = vunpack.c.h.b16 %v3008
    %v4284 = vunpack.c.l.b16 %v3009
    %v4285 = vunpack.c.h.b16 %v3009
    %v4286 = vunpack.c.l.b16 %v3010
    %v4287 = vunpack.c.h.b16 %v3010
    %v4288 = vunpack.c.l.b16 %v3011
    %v4289 = vunpack.c.h.b16 %v3011
    %v4290 = vunpack.c.l.b16 %v3012
    %v4291 = vunpack.c.h.b16 %v3012
    %v4292 = vunpack.c.l.b16 %v3013
    %v4293 = vunpack.c.h.b16 %v3013
    %v4294 = vunpack.c.l.b16 %v3014
    %v4295 = vunpack.c.h.b16 %v3014
    %v4296 = vunpack.c.l.b16 %v3015
    %v4297 = vunpack.c.h.b16 %v3015
    %v4298 = vunpack.c.l.b16 %v3016
    %v4299 = vunpack.c.h.b16 %v3016
    %v4300 = vunpack.c.l.b16 %v3017
    %v4301 = vunpack.c.h.b16 %v3017
    %v4302 = vunpack.c.l.b16 %v3018
    %v4303 = vunpack.c.h.b16 %v3018
    %v4304 = vunpack.c.l.b16 %v3019
    %v4305 = vunpack.c.h.b16 %v3019
    %v4306 = vunpack.c.l.b16 %v3020
    %v4307 = vunpack.c.h.b16 %v3020
    %v4308 = vunpack.c.l.b16 %v3021
    %v4309 = vunpack.c.h.b16 %v3021
    %v4310 = vunpack.c.l.b16 %v3022
    %v4311 = vunpack.c.h.b16 %v3022
    %v4312 = vunpack.c.l.b16 %v3023
    %v4313 = vunpack.c.h.b16 %v3023
    %v4314 = vunpack.c.l.b16 %v3024
    %v4315 = vunpack.c.h.b16 %v3024
    %v4316 = vunpack.c.l.b16 %v3025
    %v4317 = vunpack.c.h.b16 %v3025
    %v4318 = vunpack.c.l.b16 %v3026
    %v4319 = vunpack.c.h.b16 %v3026
    %v4320 = vunpack.c.l.b16 %v3027
    %v4321 = vunpack.c.h.b16 %v3027
    %v4322 = vunpack.c.l.b16 %v3028
    %v4323 = vunpack.c.h.b16 %v3028
    %v4324 = vunpack.c.l.b16 %v3029
    %v4325 = vunpack.c.h.b16 %v3029
    %v4326 = vunpack.c.l.b16 %v3030
    %v4327 = vunpack.c.h.b16 %v3030
    %v4328 = vunpack.c.l.b16 %v3031
    %v4329 = vunpack.c.h.b16 %v3031
    %v4330 = vunpack.c.l.b16 %v3032
    %v4331 = vunpack.c.h.b16 %v3032
    %v4332 = vunpack.c.l.b16 %v3033
    %v4333 = vunpack.c.h.b16 %v3033
    %v4334 = vunpack.c.l.b16 %v3034
    %v4335 = vunpack.c.h.b16 %v3034
    %v4336 = vunpack.c.l.b16 %v3035
    %v4337 = vunpack.c.h.b16 %v3035
    %v4338 = vunpack.c.l.b16 %v3036
    %v4339 = vunpack.c.h.b16 %v3036
    %v4340 = vunpack.c.l.b16 %v3037
    %v4341 = vunpack.c.h.b16 %v3037
    %v4342 = vunpack.c.l.b16 %v3038
    %v4343 = vunpack.c.h.b16 %v3038
    %v4344 = vunpack.c.l.b16 %v3039
    %v4345 = vunpack.c.h.b16 %v3039
    %v4346 = vunpack.c.l.b16 %v3040
    %v4347 = vunpack.c.h.b16 %v3040
    %v4348 = vunpack.c.l.b16 %v3041
    %v4349 = vunpack.c.h.b16 %v3041
    %v4350 = vunpack.c.l.b16 %v3042
    %v4351 = vunpack.c.h.b16 %v3042
    %v4352 = vunpack.c.l.b16 %v3043
    %v4353 = vunpack.c.h.b16 %v3043
    %v4354 = vunpack.c.l.b16 %v3044
    %v4355 = vunpack.c.h.b16 %v3044
    %v4356 = vunpack.c.l.b16 %v3045
    %v4357 = vunpack.c.h.b16 %v3045
    %v4358 = vunpack.c.l.b16 %v3046
    %v4359 = vunpack.c.h.b16 %v3046
    %v4360 = vunpack.c.l.b16 %v3047
    %v4361 = vunpack.c.h.b16 %v3047
    %v4362 = vunpack.c.l.b16 %v3048
    %v4363 = vunpack.c.h.b16 %v3048
    %v4364 = vunpack.c.l.b16 %v3049
    %v4365 = vunpack.c.h.b16 %v3049
    %v4366 = vunpack.c.l.b16 %v3050
    %v4367 = vunpack.c.h.b16 %v3050
    %v4368 = vunpack.c.l.b16 %v3051
    %v4369 = vunpack.c.h.b16 %v3051
    %v4370 = vunpack.c.l.b16 %v3052
    %v4371 = vunpack.c.h.b16 %v3052
    %v4372 = vunpack.c.l.b16 %v3053
    %v4373 = vunpack.c.h.b16 %v3053
    %v4374 = vunpack.c.l.b16 %v3054
    %v4375 = vunpack.c.h.b16 %v3054
    %v4376 = vunpack.c.l.b16 %v3055
    %v4377 = vunpack.c.h.b16 %v3055
    %v4378 = vunpack.c.l.b16 %v3056
    %v4379 = vunpack.c.h.b16 %v3056
    %v4380 = vunpack.c.l.b16 %v3057
    %v4381 = vunpack.c.h.b16 %v3057
    %v4382 = vunpack.c.l.b16 %v3058
    %v4383 = vunpack.c.h.b16 %v3058
    %v4384 = vunpack.c.l.b16 %v3059
    %v4385 = vunpack.c.h.b16 %v3059
    %v4386 = vunpack.c.l.b16 %v3060
    %v4387 = vunpack.c.h.b16 %v3060
    %v4388 = vunpack.c.l.b16 %v3061
    %v4389 = vunpack.c.h.b16 %v3061
    %v4390 = vunpack.c.l.b16 %v3062
    %v4391 = vunpack.c.h.b16 %v3062
    %v4392 = vunpack.c.l.b16 %v3063
    %v4393 = vunpack.c.h.b16 %v3063
    %v4394 = vunpack.c.l.b16 %v3064
    %v4395 = vunpack.c.h.b16 %v3064
    %v4396 = vunpack.c.l.b16 %v3065
    %v4397 = vunpack.c.h.b16 %v3065
    %v4398 = vunpack.c.l.b16 %v3066
    %v4399 = vunpack.c.h.b16 %v3066
    %v4400 = vunpack.c.l.b16 %v3067
    %v4401 = vunpack.c.h.b16 %v3067
    %v4402 = vunpack.c.l.b16 %v3068
    %v4403 = vunpack.c.h.b16 %v3068
    %v4404 = vunpack.c.l.b16 %v3069
    %v4405 = vunpack.c.h.b16 %v3069
    %v4406 = vunpack.c.l.b16 %v3070
    %v4407 = vunpack.c.h.b16 %v3070
    %v4408 = vunpack.c.l.b16 %v3071
    %v4409 = vunpack.c.h.b16 %v3071
    %v4410 = vunpack.c.l.b16 %v3072
    %v4411 = vunpack.c.h.b16 %v3072
    %v4412 = vunpack.c.l.b16 %v3073
    %v4413 = vunpack.c.h.b16 %v3073
    %v4414 = vunpack.c.l.b16 %v3074
    %v4415 = vunpack.c.h.b16 %v3074
    %v4416 = vunpack.c.l.b16 %v3075
    %v4417 = vunpack.c.h.b16 %v3075
    %v4418 = vunpack.c.l.b16 %v3076
    %v4419 = vunpack.c.h.b16 %v3076
    %v4420 = vunpack.c.l.b16 %v3077
    %v4421 = vunpack.c.h.b16 %v3077
    %v4422 = vunpack.c.l.b16 %v3078
    %v4423 = vunpack.c.h.b16 %v3078
    %v4424 = vunpack.c.l.b16 %v3079
    %v4425 = vunpack.c.h.b16 %v3079
    %v4426 = vunpack.c.l.b16 %v3080
    %v4427 = vunpack.c.h.b16 %v3080
    %v4428 = vunpack.c.l.b16 %v3081
    %v4429 = vunpack.c.h.b16 %v3081
    %v4430 = vunpack.c.l.b16 %v3082
    %v4431 = vunpack.c.h.b16 %v3082
    %v4432 = vunpack.c.l.b16 %v3083
    %v4433 = vunpack.c.h.b16 %v3083
    %v4434 = vunpack.c.l.b16 %v3084
    %v4435 = vunpack.c.h.b16 %v3084
    %v4436 = vunpack.c.l.b16 %v3085
    %v4437 = vunpack.c.h.b16 %v3085
    %v4438 = vunpack.c.l.b16 %v3086
    %v4439 = vunpack.c.h.b16 %v3086
    %v4440 = vunpack.c.l.b16 %v3087
    %v4441 = vunpack.c.h.b16 %v3087
    %v4442 = vunpack.c.l.b16 %v3088
    %v4443 = vunpack.c.h.b16 %v3088
    %v4444 = vunpack.c.l.b16 %v3089
    %v4445 = vunpack.c.h.b16 %v3089
    %v4446 = vunpack.c.l.b16 %v3090
    %v4447 = vunpack.c.h.b16 %v3090
    %v4448 = vunpack.c.l.b16 %v3091
    %v4449 = vunpack.c.h.b16 %v3091
    %v4450 = vunpack.c.l.b16 %v3092
    %v4451 = vunpack.c.h.b16 %v3092
    %v4452 = vunpack.c.l.b16 %v3093
    %v4453 = vunpack.c.h.b16 %v3093
    %v4454 = vunpack.c.l.b16 %v3094
    %v4455 = vunpack.c.h.b16 %v3094
    %v4456 = vunpack.c.l.b16 %v3095
    %v4457 = vunpack.c.h.b16 %v3095
    %v4458 = vunpack.c.l.b16 %v3096
    %v4459 = vunpack.c.h.b16 %v3096
    %v4460 = vunpack.c.l.b16 %v3097
    %v4461 = vunpack.c.h.b16 %v3097
    %v4462 = vunpack.c.l.b16 %v3098
    %v4463 = vunpack.c.h.b16 %v3098
    %v4464 = vunpack.c.l.b16 %v3099
    %v4465 = vunpack.c.h.b16 %v3099
    %v4466 = vunpack.c.l.b16 %v3100
    %v4467 = vunpack.c.h.b16 %v3100
    %v4468 = vunpack.c.l.b16 %v3101
    %v4469 = vunpack.c.h.b16 %v3101
    %v4470 = vunpack.c.l.b16 %v3102
    %v4471 = vunpack.c.h.b16 %v3102
    %v4472 = vunpack.c.l.b16 %v3103
    %v4473 = vunpack.c.h.b16 %v3103
    %v4474 = vunpack.c.l.b16 %v3104
    %v4475 = vunpack.c.h.b16 %v3104
    %v4476 = vunpack.c.l.b16 %v3105
    %v4477 = vunpack.c.h.b16 %v3105
    %v4478 = vunpack.c.l.b16 %v3106
    %v4479 = vunpack.c.h.b16 %v3106
    %v4480 = vunpack.c.l.b16 %v3107
    %v4481 = vunpack.c.h.b16 %v3107
    %v4482 = vunpack.c.l.b16 %v3108
    %v4483 = vunpack.c.h.b16 %v3108
    %v4484 = vunpack.c.l.b16 %v3109
    %v4485 = vunpack.c.h.b16 %v3109
    %v4486 = vunpack.c.l.b16 %v3110
    %v4487 = vunpack.c.h.b16 %v3110
    %v4488 = vunpack.c.l.b16 %v3111
    %v4489 = vunpack.c.h.b16 %v3111
    %v4490 = vunpack.c.l.b16 %v3112
    %v4491 = vunpack.c.h.b16 %v3112
    %v4492 = vunpack.c.l.b16 %v3113
    %v4493 = vunpack.c.h.b16 %v3113
    %v4494 = vunpack.c.l.b16 %v3114
    %v4495 = vunpack.c.h.b16 %v3114
    %v4496 = vunpack.c.l.b16 %v3115
    %v4497 = vunpack.c.h.b16 %v3115
    %v4498 = vunpack.c.l.b16 %v3116
    %v4499 = vunpack.c.h.b16 %v3116
    %v4500 = vunpack.c.l.b16 %v3117
    %v4501 = vunpack.c.h.b16 %v3117
    %v4502 = vunpack.c.l.b16 %v3118
    %v4503 = vunpack.c.h.b16 %v3118
    %v4504 = vunpack.c.l.b16 %v3119
    %v4505 = vunpack.c.h.b16 %v3119
    %v4506 = vunpack.c.l.b16 %v3120
    %v4507 = vunpack.c.h.b16 %v3120
    %v4508 = vunpack.c.l.b16 %v3121
    %v4509 = vunpack.c.h.b16 %v3121
    %v4510 = vunpack.c.l.b16 %v3122
    %v4511 = vunpack.c.h.b16 %v3122
    %v4512 = vunpack.c.l.b16 %v3123
    %v4513 = vunpack.c.h.b16 %v3123
    %v4514 = vunpack.c.l.b16 %v3124
    %v4515 = vunpack.c.h.b16 %v3124
    %v4516 = vunpack.c.l.b16 %v3125
    %v4517 = vunpack.c.h.b16 %v3125
    %v4518 = vunpack.c.l.b16 %v3126
    %v4519 = vunpack.c.h.b16 %v3126
    %v4520 = vunpack.c.l.b16 %v3127
    %v4521 = vunpack.c.h.b16 %v3127
    %v4522 = vunpack.c.l.b16 %v3128
    %v4523 = vunpack.c.h.b16 %v3128
    %v4524 = vunpack.c.l.b16 %v3129
    %v4525 = vunpack.c.h.b16 %v3129
    %v4526 = vunpack.c.l.b16 %v3130
    %v4527 = vunpack.c.h.b16 %v3130
    %v4528 = vunpack.c.l.b16 %v3131
    %v4529 = vunpack.c.h.b16 %v3131
    %v4530 = vunpack.c.l.b16 %v3132
    %v4531 = vunpack.c.h.b16 %v3132
    %v4532 = vunpack.c.l.b16 %v3133
    %v4533 = vunpack.c.h.b16 %v3133
    %v4534 = vunpack.c.l.b16 %v3134
    %v4535 = vunpack.c.h.b16 %v3134
    %v4536 = vunpack.c.l.b16 %v3135
    %v4537 = vunpack.c.h.b16 %v3135
    %v4538 = vunpack.c.l.b16 %v3136
    %v4539 = vunpack.c.h.b16 %v3136
    %v4540 = vunpack.c.l.b16 %v3137
    %v4541 = vunpack.c.h.b16 %v3137
    %v4542 = vunpack.c.l.b16 %v3138
    %v4543 = vunpack.c.h.b16 %v3138
    %v4544 = vunpack.c.l.b16 %v3139
    %v4545 = vunpack.c.h.b16 %v3139
    %v4546 = vunpack.c.l.b16 %v3140
    %v4547 = vunpack.c.h.b16 %v3140
    %v4548 = vunpack.c.l.b16 %v3141
    %v4549 = vunpack.c.h.b16 %v3141
    %v4550 = vunpack.c.l.b16 %v3142
    %v4551 = vunpack.c.h.b16 %v3142
    %v4552 = vunpack.c.l.b16 %v3143
    %v4553 = vunpack.c.h.b16 %v3143
    %v4554 = vunpack.c.l.b16 %v3144
    %v4555 = vunpack.c.h.b16 %v3144
    %v4556 = vunpack.c.l.b16 %v3145
    %v4557 = vunpack.c.h.b16 %v3145
    %v4558 = vunpack.c.l.b16 %v3146
    %v4559 = vunpack.c.h.b16 %v3146
    %v4560 = vunpack.c.l.b16 %v3147
    %v4561 = vunpack.c.h.b16 %v3147
    %v4562 = vunpack.c.l.b16 %v3148
    %v4563 = vunpack.c.h.b16 %v3148
    %v4564 = vunpack.c.l.b16 %v3149
    %v4565 = vunpack.c.h.b16 %v3149
    %v4566 = vunpack.c.l.b16 %v3150
    %v4567 = vunpack.c.h.b16 %v3150
    %v4568 = vunpack.c.l.b16 %v3151
    %v4569 = vunpack.c.h.b16 %v3151
    %v4570 = vunpack.c.l.b16 %v3152
    %v4571 = vunpack.c.h.b16 %v3152
    %v4572 = vunpack.c.l.b16 %v3153
    %v4573 = vunpack.c.h.b16 %v3153
    %v4574 = vunpack.c.l.b16 %v3154
    %v4575 = vunpack.c.h.b16 %v3154
    %v4576 = vunpack.c.l.b16 %v3155
    %v4577 = vunpack.c.h.b16 %v3155
    %v4578 = vunpack.c.l.b16 %v3156
    %v4579 = vunpack.c.h.b16 %v3156
    %v4580 = vunpack.c.l.b16 %v3157
    %v4581 = vunpack.c.h.b16 %v3157
    %v4582 = vunpack.c.l.b16 %v3158
    %v4583 = vunpack.c.h.b16 %v3158
    %v4584 = vunpack.c.l.b16 %v3159
    %v4585 = vunpack.c.h.b16 %v3159
    %v4586 = vunpack.c.l.b16 %v3160
    %v4587 = vunpack.c.h.b16 %v3160
    %v4588 = vunpack.c.l.b16 %v3161
    %v4589 = vunpack.c.h.b16 %v3161
    %v4590 = vunpack.c.l.b16 %v3162
    %v4591 = vunpack.c.h.b16 %v3162
    %v4592 = vunpack.c.l.b16 %v3163
    %v4593 = vunpack.c.h.b16 %v3163
    %v4594 = vunpack.c.l.b16 %v3164
    %v4595 = vunpack.c.h.b16 %v3164
    %v4596 = vunpack.c.l.b16 %v3165
    %v4597 = vunpack.c.h.b16 %v3165
    %v4598 = vunpack.c.l.b16 %v3166
    %v4599 = vunpack.c.h.b16 %v3166
    %v4600 = vunpack.c.l.b16 %v3167
    %v4601 = vunpack.c.h.b16 %v3167
    %v4602 = vunpack.c.l.b16 %v3168
    %v4603 = vunpack.c.h.b16 %v3168
    %v4604 = vunpack.c.l.b16 %v3169
    %v4605 = vunpack.c.h.b16 %v3169
    %v4606 = vunpack.c.l.b16 %v3170
    %v4607 = vunpack.c.h.b16 %v3170
    %v4608 = vunpack.c.l.b16 %v3171
    %v4609 = vunpack.c.h.b16 %v3171
    %v4610 = vunpack.c.l.b16 %v3172
    %v4611 = vunpack.c.h.b16 %v3172
    %v4612 = vunpack.c.l.b16 %v3173
    %v4613 = vunpack.c.h.b16 %v3173
    %v4614 = vunpack.c.l.b16 %v3174
    %v4615 = vunpack.c.h.b16 %v3174
    %v4616 = vunpack.c.l.b16 %v3175
    %v4617 = vunpack.c.h.b16 %v3175
    %v4618 = vunpack.c.l.b16 %v3176
    %v4619 = vunpack.c.h.b16 %v3176
    %v4620 = vunpack.c.l.b16 %v3177
    %v4621 = vunpack.c.h.b16 %v3177
    %v4622 = vunpack.c.l.b16 %v3178
    %v4623 = vunpack.c.h.b16 %v3178
    %v4624 = vunpack.c.l.b16 %v3179
    %v4625 = vunpack.c.h.b16 %v3179
    %v4626 = vunpack.c.l.b16 %v3180
    %v4627 = vunpack.c.h.b16 %v3180
    %v4628 = vunpack.c.l.b16 %v3181
    %v4629 = vunpack.c.h.b16 %v3181
    %v4630 = vunpack.c.l.b16 %v3182
    %v4631 = vunpack.c.h.b16 %v3182
    %v4632 = vunpack.c.l.b16 %v3183
    %v4633 = vunpack.c.h.b16 %v3183
    %v4634 = vunpack.c.l.b16 %v3184
    %v4635 = vunpack.c.h.b16 %v3184
    %v4636 = vunpack.c.l.b16 %v3185
    %v4637 = vunpack.c.h.b16 %v3185
    %v4638 = vunpack.c.l.b16 %v3186
    %v4639 = vunpack.c.h.b16 %v3186
    %v4640 = vunpack.c.l.b16 %v3187
    %v4641 = vunpack.c.h.b16 %v3187
    %v4642 = vunpack.c.l.b16 %v3188
    %v4643 = vunpack.c.h.b16 %v3188
    %v4644 = vunpack.c.l.b16 %v3189
    %v4645 = vunpack.c.h.b16 %v3189
    %v4646 = vunpack.c.l.b16 %v3190
    %v4647 = vunpack.c.h.b16 %v3190
    %v4648 = vunpack.c.l.b16 %v3191
    %v4649 = vunpack.c.h.b16 %v3191
    %v4650 = vunpack.c.l.b16 %v3192
    %v4651 = vunpack.c.h.b16 %v3192
    %v4652 = vunpack.c.l.b16 %v3193
    %v4653 = vunpack.c.h.b16 %v3193
    %v4654 = vunpack.c.l.b16 %v3194
    %v4655 = vunpack.c.h.b16 %v3194
    %v4656 = vunpack.c.l.b16 %v3195
    %v4657 = vunpack.c.h.b16 %v3195
    %v4658 = vunpack.c.l.b16 %v3196
    %v4659 = vunpack.c.h.b16 %v3196
    %v4660 = vunpack.c.l.b16 %v3197
    %v4661 = vunpack.c.h.b16 %v3197
    %v4662 = vunpack.c.l.b16 %v3198
    %v4663 = vunpack.c.h.b16 %v3198
    %v4664 = vunpack.c.l.b16 %v3199
    %v4665 = vunpack.c.h.b16 %v3199
    %v4666 = vunpack.c.l.b16 %v3200
    %v4667 = vunpack.c.h.b16 %v3200
    %v4668 = vunpack.c.l.b16 %v3201
    %v4669 = vunpack.c.h.b16 %v3201
    %v4670 = vunpack.c.l.b16 %v3202
    %v4671 = vunpack.c.h.b16 %v3202
    %v4672 = vunpack.c.l.b16 %v3203
    %v4673 = vunpack.c.h.b16 %v3203
    %v4674 = vunpack.c.l.b16 %v3204
    %v4675 = vunpack.c.h.b16 %v3204
    %v4676 = vunpack.c.l.b16 %v3205
    %v4677 = vunpack.c.h.b16 %v3205
    %v4678 = vunpack.c.l.b16 %v3206
    %v4679 = vunpack.c.h.b16 %v3206
    %v4680 = vunpack.c.l.b16 %v3207
    %v4681 = vunpack.c.h.b16 %v3207
    %v4682 = vunpack.c.l.b16 %v3208
    %v4683 = vunpack.c.h.b16 %v3208
    %v4684 = vunpack.c.l.b16 %v3209
    %v4685 = vunpack.c.h.b16 %v3209
    %v4686 = vunpack.c.l.b16 %v3210
    %v4687 = vunpack.c.h.b16 %v3210
    %v4688 = vunpack.c.l.b16 %v3211
    %v4689 = vunpack.c.h.b16 %v3211
    %v4690 = vunpack.c.l.b16 %v3212
    %v4691 = vunpack.c.h.b16 %v3212
    %v4692 = vunpack.c.l.b16 %v3213
    %v4693 = vunpack.c.h.b16 %v3213
    %v4694 = vunpack.c.l.b16 %v3214
    %v4695 = vunpack.c.h.b16 %v3214
    %v4696 = vunpack.c.l.b16 %v3215
    %v4697 = vunpack.c.h.b16 %v3215
    %v4698 = vunpack.c.l.b16 %v3216
    %v4699 = vunpack.c.h.b16 %v3216
    %v4700 = vunpack.c.l.b16 %v3217
    %v4701 = vunpack.c.h.b16 %v3217
    %v4702 = vunpack.c.l.b16 %v3218
    %v4703 = vunpack.c.h.b16 %v3218
    %v4704 = vunpack.c.l.b16 %v3219
    %v4705 = vunpack.c.h.b16 %v3219
    %v4706 = vunpack.c.l.b16 %v3220
    %v4707 = vunpack.c.h.b16 %v3220
    %v4708 = vunpack.c.l.b16 %v3221
    %v4709 = vunpack.c.h.b16 %v3221
    %v4710 = vunpack.c.l.b16 %v3222
    %v4711 = vunpack.c.h.b16 %v3222
    %v4712 = vunpack.c.l.b16 %v3223
    %v4713 = vunpack.c.h.b16 %v3223
    %v4714 = vunpack.c.l.b16 %v3224
    %v4715 = vunpack.c.h.b16 %v3224
    %v4716 = vunpack.c.l.b16 %v3225
    %v4717 = vunpack.c.h.b16 %v3225
    %v4718 = vunpack.c.l.b16 %v3226
    %v4719 = vunpack.c.h.b16 %v3226
    %v4720 = vunpack.c.l.b16 %v3227
    %v4721 = vunpack.c.h.b16 %v3227
    %v4722 = vunpack.c.l.b16 %v3228
    %v4723 = vunpack.c.h.b16 %v3228
    %v4724 = vunpack.c.l.b16 %v3229
    %v4725 = vunpack.c.h.b16 %v3229
    %v4726 = vunpack.c.l.b16 %v3230
    %v4727 = vunpack.c.h.b16 %v3230
    %v4728 = vunpack.c.l.b16 %v3231
    %v4729 = vunpack.c.h.b16 %v3231
    %v4730 = vunpack.c.l.b16 %v3232
    %v4731 = vunpack.c.h.b16 %v3232
    %v4732 = vunpack.c.l.b16 %v3233
    %v4733 = vunpack.c.h.b16 %v3233
    %v4734 = vunpack.c.l.b16 %v3234
    %v4735 = vunpack.c.h.b16 %v3234
    %v4736 = vunpack.c.l.b16 %v3235
    %v4737 = vunpack.c.h.b16 %v3235
    %v4738 = vunpack.c.l.b16 %v3236
    %v4739 = vunpack.c.h.b16 %v3236
    %v4740 = vunpack.c.l.b16 %v3237
    %v4741 = vunpack.c.h.b16 %v3237
    %v4742 = vunpack.c.l.b16 %v3238
    %v4743 = vunpack.c.h.b16 %v3238
    %v4744 = vunpack.c.l.b16 %v3239
    %v4745 = vunpack.c.h.b16 %v3239
    %v4746 = vunpack.c.l.b16 %v3240
    %v4747 = vunpack.c.h.b16 %v3240
    %v4748 = vunpack.c.l.b16 %v3241
    %v4749 = vunpack.c.h.b16 %v3241
    %v4750 = vunpack.c.l.b16 %v3242
    %v4751 = vunpack.c.h.b16 %v3242
    %v4752 = vunpack.c.l.b16 %v3243
    %v4753 = vunpack.c.h.b16 %v3243
    %v4754 = vunpack.c.l.b16 %v3244
    %v4755 = vunpack.c.h.b16 %v3244
    %v4756 = vunpack.c.l.b16 %v3245
    %v4757 = vunpack.c.h.b16 %v3245
    %v4758 = vunpack.c.l.b16 %v3246
    %v4759 = vunpack.c.h.b16 %v3246
    %v4760 = vunpack.c.l.b16 %v3247
    %v4761 = vunpack.c.h.b16 %v3247
    %v4762 = vunpack.c.l.b16 %v3248
    %v4763 = vunpack.c.h.b16 %v3248
    %v4764 = vunpack.c.l.b16 %v3249
    %v4765 = vunpack.c.h.b16 %v3249
    %v4766 = vunpack.c.l.b16 %v3250
    %v4767 = vunpack.c.h.b16 %v3250
    %v4768 = vunpack.c.l.b16 %v3251
    %v4769 = vunpack.c.h.b16 %v3251
    %v4770 = vunpack.c.l.b16 %v3252
    %v4771 = vunpack.c.h.b16 %v3252
    %v4772 = vunpack.c.l.b16 %v3253
    %v4773 = vunpack.c.h.b16 %v3253
    %v4774 = vunpack.c.l.b16 %v3254
    %v4775 = vunpack.c.h.b16 %v3254
    %v4776 = vunpack.c.l.b16 %v3255
    %v4777 = vunpack.c.h.b16 %v3255
    %v4778 = vunpack.c.l.b16 %v3256
    %v4779 = vunpack.c.h.b16 %v3256
    %v4780 = vunpack.c.l.b16 %v3257
    %v4781 = vunpack.c.h.b16 %v3257
    %v4782 = vunpack.c.l.b16 %v3258
    %v4783 = vunpack.c.h.b16 %v3258
    %v4784 = vunpack.c.l.b16 %v3259
    %v4785 = vunpack.c.h.b16 %v3259
    %v4786 = vunpack.c.l.b16 %v3260
    %v4787 = vunpack.c.h.b16 %v3260
    %v4788 = vunpack.c.l.b16 %v3261
    %v4789 = vunpack.c.h.b16 %v3261
    %v4790 = vunpack.c.l.b16 %v3262
    %v4791 = vunpack.c.h.b16 %v3262
    %v4792 = vunpack.c.l.b16 %v3263
    %v4793 = vunpack.c.h.b16 %v3263
    %v4794 = vunpack.c.l.b16 %v3264
    %v4795 = vunpack.c.h.b16 %v3264
    %v4796 = vunpack.c.l.b16 %v3265
    %v4797 = vunpack.c.h.b16 %v3265
    %v4798 = vunpack.c.l.b16 %v3266
    %v4799 = vunpack.c.h.b16 %v3266
    %v4800 = vunpack.c.l.b16 %v3267
    %v4801 = vunpack.c.h.b16 %v3267
    %v4802 = vunpack.c.l.b16 %v3268
    %v4803 = vunpack.c.h.b16 %v3268
    %v4804 = vunpack.c.l.b16 %v3269
    %v4805 = vunpack.c.h.b16 %v3269
    %v4806 = vunpack.c.l.b16 %v3270
    %v4807 = vunpack.c.h.b16 %v3270
    %v4808 = vunpack.c.l.b16 %v3271
    %v4809 = vunpack.c.h.b16 %v3271
    %v4810 = vunpack.c.l.b16 %v3272
    %v4811 = vunpack.c.h.b16 %v3272
    %v4812 = vunpack.c.l.b16 %v3273
    %v4813 = vunpack.c.h.b16 %v3273
    %v4814 = vunpack.c.l.b16 %v3274
    %v4815 = vunpack.c.h.b16 %v3274
    %v4816 = vunpack.c.l.b16 %v3275
    %v4817 = vunpack.c.h.b16 %v3275
    %v4818 = vunpack.c.l.b16 %v3276
    %v4819 = vunpack.c.h.b16 %v3276
    %v4820 = vunpack.c.l.b16 %v3277
    %v4821 = vunpack.c.h.b16 %v3277
    %v4822 = vunpack.c.l.b16 %v3278
    %v4823 = vunpack.c.h.b16 %v3278
    %v4824 = vunpack.c.l.b16 %v3279
    %v4825 = vunpack.c.h.b16 %v3279
    %v4826 = vunpack.c.l.b16 %v3280
    %v4827 = vunpack.c.h.b16 %v3280
    %v4828 = vunpack.c.l.b16 %v3281
    %v4829 = vunpack.c.h.b16 %v3281
    %v4830 = vunpack.c.l.b16 %v3282
    %v4831 = vunpack.c.h.b16 %v3282
    %v4832 = vunpack.c.l.b16 %v3283
    %v4833 = vunpack.c.h.b16 %v3283
    %v4834 = vunpack.c.l.b16 %v3284
    %v4835 = vunpack.c.h.b16 %v3284
    %v4836 = vunpack.c.l.b16 %v3285
    %v4837 = vunpack.c.h.b16 %v3285
    %v4838 = vunpack.c.l.b16 %v3286
    %v4839 = vunpack.c.h.b16 %v3286
    %v4840 = vunpack.c.l.b16 %v3287
    %v4841 = vunpack.c.h.b16 %v3287
    %v4842 = vpack.c.b16 %v3826, %v3818
    %v4843 = vpack.c.b16 %v3827, %v3819
    %v4844 = vpack.c.b16 %v3828, %v3820
    %v4845 = vpack.c.b16 %v3829, %v3821
    %v4846 = vpack.c.b16 %v3830, %v3822
    %v4847 = vpack.c.b16 %v3831, %v3823
    %v4848 = vpack.c.b16 %v3832, %v3824
    %v4849 = vpack.c.b16 %v3833, %v3825
    %v4850 = vpack.c.b16 %v3842, %v3834
    %v4851 = vpack.c.b16 %v3843, %v3835
    %v4852 = vpack.c.b16 %v3844, %v3836
    %v4853 = vpack.c.b16 %v3845, %v3837
    %v4854 = vpack.c.b16 %v3846, %v3838
    %v4855 = vpack.c.b16 %v3847, %v3839
    %v4856 = vpack.c.b16 %v3848, %v3840
    %v4857 = vpack.c.b16 %v3849, %v3841
    %v4858 = vpack.c.b16 %v3858, %v3850
    %v4859 = vpack.c.b16 %v3859, %v3851
    %v4860 = vpack.c.b16 %v3860, %v3852
    %v4861 = vpack.c.b16 %v3861, %v3853
    %v4862 = vpack.c.b16 %v3862, %v3854
    %v4863 = vpack.c.b16 %v3863, %v3855
    %v4864 = vpack.c.b16 %v3864, %v3856
    %v4865 = vpack.c.b16 %v3865, %v3857
    %v4866 = vpack.c.b16 %v3874, %v3866
    %v4867 = vpack.c.b16 %v3875, %v3867
    %v4868 = vpack.c.b16 %v3876, %v3868
    %v4869 = vpack.c.b16 %v3877, %v3869
    %v4870 = vpack.c.b16 %v3878, %v3870
    %v4871 = vpack.c.b16 %v3879, %v3871
    %v4872 = vpack.c.b16 %v3880, %v3872
    %v4873 = vpack.c.b16 %v3881, %v3873
    %v4874 = vpack.c.b16 %v3890, %v3882
    %v4875 = vpack.c.b16 %v3891, %v3883
    %v4876 = vpack.c.b16 %v3892, %v3884
    %v4877 = vpack.c.b16 %v3893, %v3885
    %v4878 = vpack.c.b16 %v3894, %v3886
    %v4879 = vpack.c.b16 %v3895, %v3887
    %v4880 = vpack.c.b16 %v3896, %v3888
    %v4881 = vpack.c.b16 %v3897, %v3889
    %v4882 = vpack.c.b16 %v3906, %v3898
    %v4883 = vpack.c.b16 %v3907, %v3899
    %v4884 = vpack.c.b16 %v3908, %v3900
    %v4885 = vpack.c.b16 %v3909, %v3901
    %v4886 = vpack.c.b16 %v3910, %v3902
    %v4887 = vpack.c.b16 %v3911, %v3903
    %v4888 = vpack.c.b16 %v3912, %v3904
    %v4889 = vpack.c.b16 %v3913, %v3905
    %v4890 = vpack.c.b16 %v3922, %v3914
    %v4891 = vpack.c.b16 %v3923, %v3915
    %v4892 = vpack.c.b16 %v3924, %v3916
    %v4893 = vpack.c.b16 %v3925, %v3917
    %v4894 = vpack.c.b16 %v3926, %v3918
    %v4895 = vpack.c.b16 %v3927, %v3919
    %v4896 = vpack.c.b16 %v3928, %v3920
    %v4897 = vpack.c.b16 %v3929, %v3921
    %v4898 = vpack.c.b16 %v3938, %v3930
    %v4899 = vpack.c.b16 %v3939, %v3931
    %v4900 = vpack.c.b16 %v3940, %v3932
    %v4901 = vpack.c.b16 %v3941, %v3933
    %v4902 = vpack.c.b16 %v3942, %v3934
    %v4903 = vpack.c.b16 %v3943, %v3935
    %v4904 = vpack.c.b16 %v3944, %v3936
    %v4905 = vpack.c.b16 %v3945, %v3937
    %v4906 = vpack.c.b16 %v3954, %v3946
    %v4907 = vpack.c.b16 %v3955, %v3947
    %v4908 = vpack.c.b16 %v3956, %v3948
    %v4909 = vpack.c.b16 %v3957, %v3949
    %v4910 = vpack.c.b16 %v3958, %v3950
    %v4911 = vpack.c.b16 %v3959, %v3951
    %v4912 = vpack.c.b16 %v3960, %v3952
    %v4913 = vpack.c.b16 %v3961, %v3953
    %v4914 = vpack.c.b16 %v3970, %v3962
    %v4915 = vpack.c.b16 %v3971, %v3963
    %v4916 = vpack.c.b16 %v3972, %v3964
    %v4917 = vpack.c.b16 %v3973, %v3965
    %v4918 = vpack.c.b16 %v3974, %v3966
    %v4919 = vpack.c.b16 %v3975, %v3967
    %v4920 = vpack.c.b16 %v3976, %v3968
    %v4921 = vpack.c.b16 %v3977, %v3969
    %v4922 = vpack.c.b16 %v3986, %v3978
    %v4923 = vpack.c.b16 %v3987, %v3979
    %v4924 = vpack.c.b16 %v3988, %v3980
    %v4925 = vpack.c.b16 %v3989, %v3981
    %v4926 = vpack.c.b16 %v3990, %v3982
    %v4927 = vpack.c.b16 %v3991, %v3983
    %v4928 = vpack.c.b16 %v3992, %v3984
    %v4929 = vpack.c.b16 %v3993, %v3985
    %v4930 = vpack.c.b16 %v4002, %v3994
    %v4931 = vpack.c.b16 %v4003, %v3995
    %v4932 = vpack.c.b16 %v4004, %v3996
    %v4933 = vpack.c.b16 %v4005, %v3997
    %v4934 = vpack.c.b16 %v4006, %v3998
    %v4935 = vpack.c.b16 %v4007, %v3999
    %v4936 = vpack.c.b16 %v4008, %v4000
    %v4937 = vpack.c.b16 %v4009, %v4001
    %v4938 = vpack.c.b16 %v4018, %v4010
    %v4939 = vpack.c.b16 %v4019, %v4011
    %v4940 = vpack.c.b16 %v4020, %v4012
    %v4941 = vpack.c.b16 %v4021, %v4013
    %v4942 = vpack.c.b16 %v4022, %v4014
    %v4943 = vpack.c.b16 %v4023, %v4015
    %v4944 = vpack.c.b16 %v4024, %v4016
    %v4945 = vpack.c.b16 %v4025, %v4017
    %v4946 = vpack.c.b16 %v4034, %v4026
    %v4947 = vpack.c.b16 %v4035, %v4027
    %v4948 = vpack.c.b16 %v4036, %v4028
    %v4949 = vpack.c.b16 %v4037, %v4029
    %v4950 = vpack.c.b16 %v4038, %v4030
    %v4951 = vpack.c.b16 %v4039, %v4031
    %v4952 = vpack.c.b16 %v4040, %v4032
    %v4953 = vpack.c.b16 %v4041, %v4033
    %v4954 = vpack.c.b16 %v4050, %v4042
    %v4955 = vpack.c.b16 %v4051, %v4043
    %v4956 = vpack.c.b16 %v4052, %v4044
    %v4957 = vpack.c.b16 %v4053, %v4045
    %v4958 = vpack.c.b16 %v4054, %v4046
    %v4959 = vpack.c.b16 %v4055, %v4047
    %v4960 = vpack.c.b16 %v4056, %v4048
    %v4961 = vpack.c.b16 %v4057, %v4049
    %v4962 = vpack.c.b16 %v4066, %v4058
    %v4963 = vpack.c.b16 %v4067, %v4059
    %v4964 = vpack.c.b16 %v4068, %v4060
    %v4965 = vpack.c.b16 %v4069, %v4061
    %v4966 = vpack.c.b16 %v4070, %v4062
    %v4967 = vpack.c.b16 %v4071, %v4063
    %v4968 = vpack.c.b16 %v4072, %v4064
    %v4969 = vpack.c.b16 %v4073, %v4065
    %v4970 = vpack.c.b16 %v4082, %v4074
    %v4971 = vpack.c.b16 %v4083, %v4075
    %v4972 = vpack.c.b16 %v4084, %v4076
    %v4973 = vpack.c.b16 %v4085, %v4077
    %v4974 = vpack.c.b16 %v4086, %v4078
    %v4975 = vpack.c.b16 %v4087, %v4079
    %v4976 = vpack.c.b16 %v4088, %v4080
    %v4977 = vpack.c.b16 %v4089, %v4081
    %v4978 = vpack.c.b16 %v4098, %v4090
    %v4979 = vpack.c.b16 %v4099, %v4091
    %v4980 = vpack.c.b16 %v4100, %v4092
    %v4981 = vpack.c.b16 %v4101, %v4093
    %v4982 = vpack.c.b16 %v4102, %v4094
    %v4983 = vpack.c.b16 %v4103, %v4095
    %v4984 = vpack.c.b16 %v4104, %v4096
    %v4985 = vpack.c.b16 %v4105, %v4097
    %v4986 = vpack.c.b16 %v4114, %v4106
    %v4987 = vpack.c.b16 %v4115, %v4107
    %v4988 = vpack.c.b16 %v4116, %v4108
    %v4989 = vpack.c.b16 %v4117, %v4109
    %v4990 = vpack.c.b16 %v4118, %v4110
    %v4991 = vpack.c.b16 %v4119, %v4111
    %v4992 = vpack.c.b16 %v4120, %v4112
    %v4993 = vpack.c.b16 %v4121, %v4113
    %v4994 = vpack.c.b16 %v4130, %v4122
    %v4995 = vpack.c.b16 %v4131, %v4123
    %v4996 = vpack.c.b16 %v4132, %v4124
    %v4997 = vpack.c.b16 %v4133, %v4125
    %v4998 = vpack.c.b16 %v4134, %v4126
    %v4999 = vpack.c.b16 %v4135, %v4127
    %v5000 = vpack.c.b16 %v4136, %v4128
    %v5001 = vpack.c.b16 %v4137, %v4129
    %v5002 = vpack.c.b16 %v4146, %v4138
    %v5003 = vpack.c.b16 %v4147, %v4139
    %v5004 = vpack.c.b16 %v4148, %v4140
    %v5005 = vpack.c.b16 %v4149, %v4141
    %v5006 = vpack.c.b16 %v4150, %v4142
    %v5007 = vpack.c.b16 %v4151, %v4143
    %v5008 = vpack.c.b16 %v4152, %v4144
    %v5009 = vpack.c.b16 %v4153, %v4145
    %v5010 = vpack.c.b16 %v4162, %v4154
    %v5011 = vpack.c.b16 %v4163, %v4155
    %v5012 = vpack.c.b16 %v4164, %v4156
    %v5013 = vpack.c.b16 %v4165, %v4157
    %v5014 = vpack.c.b16 %v4166, %v4158
    %v5015 = vpack.c.b16 %v4167, %v4159
    %v5016 = vpack.c.b16 %v4168, %v4160
    %v5017 = vpack.c.b16 %v4169, %v4161
    %v5018 = vpack.c.b16 %v4178, %v4170
    %v5019 = vpack.c.b16 %v4179, %v4171
    %v5020 = vpack.c.b16 %v4180, %v4172
    %v5021 = vpack.c.b16 %v4181, %v4173
    %v5022 = vpack.c.b16 %v4182, %v4174
    %v5023 = vpack.c.b16 %v4183, %v4175
    %v5024 = vpack.c.b16 %v4184, %v4176
    %v5025 = vpack.c.b16 %v4185, %v4177
    %v5026 = vpack.c.b16 %v4194, %v4186
    %v5027 = vpack.c.b16 %v4195, %v4187
    %v5028 = vpack.c.b16 %v4196, %v4188
    %v5029 = vpack.c.b16 %v4197, %v4189
    %v5030 = vpack.c.b16 %v4198, %v4190
    %v5031 = vpack.c.b16 %v4199, %v4191
    %v5032 = vpack.c.b16 %v4200, %v4192
    %v5033 = vpack.c.b16 %v4201, %v4193
    %v5034 = vpack.c.b16 %v4210, %v4202
    %v5035 = vpack.c.b16 %v4211, %v4203
    %v5036 = vpack.c.b16 %v4212, %v4204
    %v5037 = vpack.c.b16 %v4213, %v4205
    %v5038 = vpack.c.b16 %v4214, %v4206
    %v5039 = vpack.c.b16 %v4215, %v4207
    %v5040 = vpack.c.b16 %v4216, %v4208
    %v5041 = vpack.c.b16 %v4217, %v4209
    %v5042 = vpack.c.b16 %v4226, %v4218
    %v5043 = vpack.c.b16 %v4227, %v4219
    %v5044 = vpack.c.b16 %v4228, %v4220
    %v5045 = vpack.c.b16 %v4229, %v4221
    %v5046 = vpack.c.b16 %v4230, %v4222
    %v5047 = vpack.c.b16 %v4231, %v4223
    %v5048 = vpack.c.b16 %v4232, %v4224
    %v5049 = vpack.c.b16 %v4233, %v4225
    %v5050 = vpack.c.b16 %v4242, %v4234
    %v5051 = vpack.c.b16 %v4243, %v4235
    %v5052 = vpack.c.b16 %v4244, %v4236
    %v5053 = vpack.c.b16 %v4245, %v4237
    %v5054 = vpack.c.b16 %v4246, %v4238
    %v5055 = vpack.c.b16 %v4247, %v4239
    %v5056 = vpack.c.b16 %v4248, %v4240
    %v5057 = vpack.c.b16 %v4249, %v4241
    %v5058 = vpack.c.b16 %v4258, %v4250
    %v5059 = vpack.c.b16 %v4259, %v4251
    %v5060 = vpack.c.b16 %v4260, %v4252
    %v5061 = vpack.c.b16 %v4261, %v4253
    %v5062 = vpack.c.b16 %v4262, %v4254
    %v5063 = vpack.c.b16 %v4263, %v4255
    %v5064 = vpack.c.b16 %v4264, %v4256
    %v5065 = vpack.c.b16 %v4265, %v4257
    %v5066 = vpack.c.b16 %v4274, %v4266
    %v5067 = vpack.c.b16 %v4275, %v4267
    %v5068 = vpack.c.b16 %v4276, %v4268
    %v5069 = vpack.c.b16 %v4277, %v4269
    %v5070 = vpack.c.b16 %v4278, %v4270
    %v5071 = vpack.c.b16 %v4279, %v4271
    %v5072 = vpack.c.b16 %v4280, %v4272
    %v5073 = vpack.c.b16 %v4281, %v4273
    %v5074 = vpack.c.b16 %v4290, %v4282
    %v5075 = vpack.c.b16 %v4291, %v4283
    %v5076 = vpack.c.b16 %v4292, %v4284
    %v5077 = vpack.c.b16 %v4293, %v4285
    %v5078 = vpack.c.b16 %v4294, %v4286
    %v5079 = vpack.c.b16 %v4295, %v4287
    %v5080 = vpack.c.b16 %v4296, %v4288
    %v5081 = vpack.c.b16 %v4297, %v4289
    %v5082 = vpack.c.b16 %v4306, %v4298
    %v5083 = vpack.c.b16 %v4307, %v4299
    %v5084 = vpack.c.b16 %v4308, %v4300
    %v5085 = vpack.c.b16 %v4309, %v4301
    %v5086 = vpack.c.b16 %v4310, %v4302
    %v5087 = vpack.c.b16 %v4311, %v4303
    %v5088 = vpack.c.b16 %v4312, %v4304
    %v5089 = vpack.c.b16 %v4313, %v4305
    %v5090 = vpack.c.b16 %v4322, %v4314
    %v5091 = vpack.c.b16 %v4323, %v4315
    %v5092 = vpack.c.b16 %v4324, %v4316
    %v5093 = vpack.c.b16 %v4325, %v4317
    %v5094 = vpack.c.b16 %v4326, %v4318
    %v5095 = vpack.c.b16 %v4327, %v4319
    %v5096 = vpack.c.b16 %v4328, %v4320
    %v5097 = vpack.c.b16 %v4329, %v4321
    %v5098 = vpack.c.b16 %v4338, %v4330
    %v5099 = vpack.c.b16 %v4339, %v4331
    %v5100 = vpack.c.b16 %v4340, %v4332
    %v5101 = vpack.c.b16 %v4341, %v4333
    %v5102 = vpack.c.b16 %v4342, %v4334
    %v5103 = vpack.c.b16 %v4343, %v4335
    %v5104 = vpack.c.b16 %v4344, %v4336
    %v5105 = vpack.c.b16 %v4345, %v4337
    %v5106 = vpack.c.b16 %v4354, %v4346
    %v5107 = vpack.c.b16 %v4355, %v4347
    %v5108 = vpack.c.b16 %v4356, %v4348
    %v5109 = vpack.c.b16 %v4357, %v4349
    %v5110 = vpack.c.b16 %v4358, %v4350
    %v5111 = vpack.c.b16 %v4359, %v4351
    %v5112 = vpack.c.b16 %v4360, %v4352
    %v5113 = vpack.c.b16 %v4361, %v4353
    %v5114 = vpack.c.b16 %v4370, %v4362
    %v5115 = vpack.c.b16 %v4371, %v4363
    %v5116 = vpack.c.b16 %v4372, %v4364
    %v5117 = vpack.c.b16 %v4373, %v4365
    %v5118 = vpack.c.b16 %v4374, %v4366
    %v5119 = vpack.c.b16 %v4375, %v4367
    %v5120 = vpack.c.b16 %v4376, %v4368
    %v5121 = vpack.c.b16 %v4377, %v4369
    %v5122 = vpack.c.b16 %v4386, %v4378
    %v5123 = vpack.c.b16 %v4387, %v4379
    %v5124 = vpack.c.b16 %v4388, %v4380
    %v5125 = vpack.c.b16 %v4389, %v4381
    %v5126 = vpack.c.b16 %v4390, %v4382
    %v5127 = vpack.c.b16 %v4391, %v4383
    %v5128 = vpack.c.b16 %v4392, %v4384
    %v5129 = vpack.c.b16 %v4393, %v4385
    %v5130 = vpack.c.b16 %v4402, %v4394
    %v5131 = vpack.c.b16 %v4403, %v4395
    %v5132 = vpack.c.b16 %v4404, %v4396
    %v5133 = vpack.c.b16 %v4405, %v4397
    %v5134 = vpack.c.b16 %v4406, %v4398
    %v5135 = vpack.c.b16 %v4407, %v4399
    %v5136 = vpack.c.b16 %v4408, %v4400
    %v5137 = vpack.c.b16 %v4409, %v4401
    %v5138 = vpack.c.b16 %v4418, %v4410
    %v5139 = vpack.c.b16 %v4419, %v4411
    %v5140 = vpack.c.b16 %v4420, %v4412
    %v5141 = vpack.c.b16 %v4421, %v4413
    %v5142 = vpack.c.b16 %v4422, %v4414
    %v5143 = vpack.c.b16 %v4423, %v4415
    %v5144 = vpack.c.b16 %v4424, %v4416
    %v5145 = vpack.c.b16 %v4425, %v4417
    %v5146 = vpack.c.b16 %v4434, %v4426
    %v5147 = vpack.c.b16 %v4435, %v4427
    %v5148 = vpack.c.b16 %v4436, %v4428
    %v5149 = vpack.c.b16 %v4437, %v4429
    %v5150 = vpack.c.b16 %v4438, %v4430
    %v5151 = vpack.c.b16 %v4439, %v4431
    %v5152 = vpack.c.b16 %v4440, %v4432
    %v5153 = vpack.c.b16 %v4441, %v4433
    %v5154 = vpack.c.b16 %v4450, %v4442
    %v5155 = vpack.c.b16 %v4451, %v4443
    %v5156 = vpack.c.b16 %v4452, %v4444
    %v5157 = vpack.c.b16 %v4453, %v4445
    %v5158 = vpack.c.b16 %v4454, %v4446
    %v5159 = vpack.c.b16 %v4455, %v4447
    %v5160 = vpack.c.b16 %v4456, %v4448
    %v5161 = vpack.c.b16 %v4457, %v4449
    %v5162 = vpack.c.b16 %v4466, %v4458
    %v5163 = vpack.c.b16 %v4467, %v4459
    %v5164 = vpack.c.b16 %v4468, %v4460
    %v5165 = vpack.c.b16 %v4469, %v4461
    %v5166 = vpack.c.b16 %v4470, %v4462
    %v5167 = vpack.c.b16 %v4471, %v4463
    %v5168 = vpack.c.b16 %v4472, %v4464
    %v5169 = vpack.c.b16 %v4473, %v4465
    %v5170 = vpack.c.b16 %v4482, %v4474
    %v5171 = vpack.c.b16 %v4483, %v4475
    %v5172 = vpack.c.b16 %v4484, %v4476
    %v5173 = vpack.c.b16 %v4485, %v4477
    %v5174 = vpack.c.b16 %v4486, %v4478
    %v5175 = vpack.c.b16 %v4487, %v4479
    %v5176 = vpack.c.b16 %v4488, %v4480
    %v5177 = vpack.c.b16 %v4489, %v4481
    %v5178 = vpack.c.b16 %v4498, %v4490
    %v5179 = vpack.c.b16 %v4499, %v4491
    %v5180 = vpack.c.b16 %v4500, %v4492
    %v5181 = vpack.c.b16 %v4501, %v4493
    %v5182 = vpack.c.b16 %v4502, %v4494
    %v5183 = vpack.c.b16 %v4503, %v4495
    %v5184 = vpack.c.b16 %v4504, %v4496
    %v5185 = vpack.c.b16 %v4505, %v4497
    %v5186 = vpack.c.b16 %v4514, %v4506
    %v5187 = vpack.c.b16 %v4515, %v4507
    %v5188 = vpack.c.b16 %v4516, %v4508
    %v5189 = vpack.c.b16 %v4517, %v4509
    %v5190 = vpack.c.b16 %v4518, %v4510
    %v5191 = vpack.c.b16 %v4519, %v4511
    %v5192 = vpack.c.b16 %v4520, %v4512
    %v5193 = vpack.c.b16 %v4521, %v4513
    %v5194 = vpack.c.b16 %v4530, %v4522
    %v5195 = vpack.c.b16 %v4531, %v4523
    %v5196 = vpack.c.b16 %v4532, %v4524
    %v5197 = vpack.c.b16 %v4533, %v4525
    %v5198 = vpack.c.b16 %v4534, %v4526
    %v5199 = vpack.c.b16 %v4535, %v4527
    %v5200 = vpack.c.b16 %v4536, %v4528
    %v5201 = vpack.c.b16 %v4537, %v4529
    %v5202 = vpack.c.b16 %v4546, %v4538
    %v5203 = vpack.c.b16 %v4547, %v4539
    %v5204 = vpack.c.b16 %v4548, %v4540
    %v5205 = vpack.c.b16 %v4549, %v4541
    %v5206 = vpack.c.b16 %v4550, %v4542
    %v5207 = vpack.c.b16 %v4551, %v4543
    %v5208 = vpack.c.b16 %v4552, %v4544
    %v5209 = vpack.c.b16 %v4553, %v4545
    %v5210 = vpack.c.b16 %v4562, %v4554
    %v5211 = vpack.c.b16 %v4563, %v4555
    %v5212 = vpack.c.b16 %v4564, %v4556
    %v5213 = vpack.c.b16 %v4565, %v4557
    %v5214 = vpack.c.b16 %v4566, %v4558
    %v5215 = vpack.c.b16 %v4567, %v4559
    %v5216 = vpack.c.b16 %v4568, %v4560
    %v5217 = vpack.c.b16 %v4569, %v4561
    %v5218 = vpack.c.b16 %v4578, %v4570
    %v5219 = vpack.c.b16 %v4579, %v4571
    %v5220 = vpack.c.b16 %v4580, %v4572
    %v5221 = vpack.c.b16 %v4581, %v4573
    %v5222 = vpack.c.b16 %v4582, %v4574
    %v5223 = vpack.c.b16 %v4583, %v4575
    %v5224 = vpack.c.b16 %v4584, %v4576
    %v5225 = vpack.c.b16 %v4585, %v4577
    %v5226 = vpack.c.b16 %v4594, %v4586
    %v5227 = vpack.c.b16 %v4595, %v4587
    %v5228 = vpack.c.b16 %v4596, %v4588
    %v5229 = vpack.c.b16 %v4597, %v4589
    %v5230 = vpack.c.b16 %v4598, %v4590
    %v5231 = vpack.c.b16 %v4599, %v4591
    %v5232 = vpack.c.b16 %v4600, %v4592
    %v5233 = vpack.c.b16 %v4601, %v4593
    %v5234 = vpack.c.b16 %v4610, %v4602
    %v5235 = vpack.c.b16 %v4611, %v4603
    %v5236 = vpack.c.b16 %v4612, %v4604
    %v5237 = vpack.c.b16 %v4613, %v4605
    %v5238 = vpack.c.b16 %v4614, %v4606
    %v5239 = vpack.c.b16 %v4615, %v4607
    %v5240 = vpack.c.b16 %v4616, %v4608
    %v5241 = vpack.c.b16 %v4617, %v4609
    %v5242 = vpack.c.b16 %v4626, %v4618
    %v5243 = vpack.c.b16 %v4627, %v4619
    %v5244 = vpack.c.b16 %v4628, %v4620
    %v5245 = vpack.c.b16 %v4629, %v4621
    %v5246 = vpack.c.b16 %v4630, %v4622
    %v5247 = vpack.c.b16 %v4631, %v4623
    %v5248 = vpack.c.b16 %v4632, %v4624
    %v5249 = vpack.c.b16 %v4633, %v4625
    %v5250 = vpack.c.b16 %v4642, %v4634
    %v5251 = vpack.c.b16 %v4643, %v4635
    %v5252 = vpack.c.b16 %v4644, %v4636
    %v5253 = vpack.c.b16 %v4645, %v4637
    %v5254 = vpack.c.b16 %v4646, %v4638
    %v5255 = vpack.c.b16 %v4647, %v4639
    %v5256 = vpack.c.b16 %v4648, %v4640
    %v5257 = vpack.c.b16 %v4649, %v4641
    %v5258 = vpack.c.b16 %v4658, %v4650
    %v5259 = vpack.c.b16 %v4659, %v4651
    %v5260 = vpack.c.b16 %v4660, %v4652
    %v5261 = vpack.c.b16 %v4661, %v4653
    %v5262 = vpack.c.b16 %v4662, %v4654
    %v5263 = vpack.c.b16 %v4663, %v4655
    %v5264 = vpack.c.b16 %v4664, %v4656
    %v5265 = vpack.c.b16 %v4665, %v4657
    %v5266 = vpack.c.b16 %v4674, %v4666
    %v5267 = vpack.c.b16 %v4675, %v4667
    %v5268 = vpack.c.b16 %v4676, %v4668
    %v5269 = vpack.c.b16 %v4677, %v4669
    %v5270 = vpack.c.b16 %v4678, %v4670
    %v5271 = vpack.c.b16 %v4679, %v4671
    %v5272 = vpack.c.b16 %v4680, %v4672
    %v5273 = vpack.c.b16 %v4681, %v4673
    %v5274 = vpack.c.b16 %v4690, %v4682
    %v5275 = vpack.c.b16 %v4691, %v4683
    %v5276 = vpack.c.b16 %v4692, %v4684
    %v5277 = vpack.c.b16 %v4693, %v4685
    %v5278 = vpack.c.b16 %v4694, %v4686
    %v5279 = vpack.c.b16 %v4695, %v4687
    %v5280 = vpack.c.b16 %v4696, %v4688
    %v5281 = vpack.c.b16 %v4697, %v4689
    %v5282 = vpack.c.b16 %v4706, %v4698
    %v5283 = vpack.c.b16 %v4707, %v4699
    %v5284 = vpack.c.b16 %v4708, %v4700
    %v5285 = vpack.c.b16 %v4709, %v4701
    %v5286 = vpack.c.b16 %v4710, %v4702
    %v5287 = vpack.c.b16 %v4711, %v4703
    %v5288 = vpack.c.b16 %v4712, %v4704
    %v5289 = vpack.c.b16 %v4713, %v4705
    %v5290 = vpack.c.b16 %v4722, %v4714
    %v5291 = vpack.c.b16 %v4723, %v4715
    %v5292 = vpack.c.b16 %v4724, %v4716
    %v5293 = vpack.c.b16 %v4725, %v4717
    %v5294 = vpack.c.b16 %v4726, %v4718
    %v5295 = vpack.c.b16 %v4727, %v4719
    %v5296 = vpack.c.b16 %v4728, %v4720
    %v5297 = vpack.c.b16 %v4729, %v4721
    %v5298 = vpack.c.b16 %v4738, %v4730
    %v5299 = vpack.c.b16 %v4739, %v4731
    %v5300 = vpack.c.b16 %v4740, %v4732
    %v5301 = vpack.c.b16 %v4741, %v4733
    %v5302 = vpack.c.b16 %v4742, %v4734
    %v5303 = vpack.c.b16 %v4743, %v4735
    %v5304 = vpack.c.b16 %v4744, %v4736
    %v5305 = vpack.c.b16 %v4745, %v4737
    %v5306 = vpack.c.b16 %v4754, %v4746
    %v5307 = vpack.c.b16 %v4755, %v4747
    %v5308 = vpack.c.b16 %v4756, %v4748
    %v5309 = vpack.c.b16 %v4757, %v4749
    %v5310 = vpack.c.b16 %v4758, %v4750
    %v5311 = vpack.c.b16 %v4759, %v4751
    %v5312 = vpack.c.b16 %v4760, %v4752
    %v5313 = vpack.c.b16 %v4761, %v4753
    %v5314 = vpack.c.b16 %v4770, %v4762
    %v5315 = vpack.c.b16 %v4771, %v4763
    %v5316 = vpack.c.b16 %v4772, %v4764
    %v5317 = vpack.c.b16 %v4773, %v4765
    %v5318 = vpack.c.b16 %v4774, %v4766
    %v5319 = vpack.c.b16 %v4775, %v4767
    %v5320 = vpack.c.b16 %v4776, %v4768
    %v5321 = vpack.c.b16 %v4777, %v4769
    %v5322 = vpack.c.b16 %v4786, %v4778
    %v5323 = vpack.c.b16 %v4787, %v4779
    %v5324 = vpack.c.b16 %v4788, %v4780
    %v5325 = vpack.c.b16 %v4789, %v4781
    %v5326 = vpack.c.b16 %v4790, %v4782
    %v5327 = vpack.c.b16 %v4791, %v4783
    %v5328 = vpack.c.b16 %v4792, %v4784
    %v5329 = vpack.c.b16 %v4793, %v4785
    %v5330 = vpack.c.b16 %v4802, %v4794
    %v5331 = vpack.c.b16 %v4803, %v4795
    %v5332 = vpack.c.b16 %v4804, %v4796
    %v5333 = vpack.c.b16 %v4805, %v4797
    %v5334 = vpack.c.b16 %v4806, %v4798
    %v5335 = vpack.c.b16 %v4807, %v4799
    %v5336 = vpack.c.b16 %v4808, %v4800
    %v5337 = vpack.c.b16 %v4809, %v4801
    %v5338 = vpack.c.b16 %v4818, %v4810
    %v5339 = vpack.c.b16 %v4819, %v4811
    %v5340 = vpack.c.b16 %v4820, %v4812
    %v5341 = vpack.c.b16 %v4821, %v4813
    %v5342 = vpack.c.b16 %v4822, %v4814
    %v5343 = vpack.c.b16 %v4823, %v4815
    %v5344 = vpack.c.b16 %v4824, %v4816
    %v5345 = vpack.c.b16 %v4825, %v4817
    %v5346 = vpack.c.b16 %v4834, %v4826
    %v5347 = vpack.c.b16 %v4835, %v4827
    %v5348 = vpack.c.b16 %v4836, %v4828
    %v5349 = vpack.c.b16 %v4837, %v4829
    %v5350 = vpack.c.b16 %v4838, %v4830
    %v5351 = vpack.c.b16 %v4839, %v4831
    %v5352 = vpack.c.b16 %v4840, %v4832
    %v5353 = vpack.c.b16 %v4841, %v4833
    %5866 = vmatpush.bf16.msra.mxu0 %v4898
    %5867 = vmatpush.bf16.msra.mxu0 %v4890
    %5868 = vmatpush.bf16.msra.mxu0 %v4882
    %5869 = vmatpush.bf16.msra.mxu0 %v4874
    %5870 = vmatpush.bf16.msra.mxu0 %v4866
    %5871 = vmatpush.bf16.msra.mxu0 %v4858
    %5872 = vmatpush.bf16.msra.mxu0 %v4850
    %5873 = vmatpush.bf16.msra.mxu0 %v4842
    %5874 = vmatmul.bf16.gmra.mxu0 %v2768
    %v5875 = vpop.f32.mrf.mxu0
    %v5876 = vadd.f32 %v3290, %v5875
    %v5877 = vpop.f32.mrf.mxu0
    %5878 = vdwg.mxu0
    %5879 = vmatpush.bf16.msra.mxu0 %v4962
    %5880 = vmatpush.bf16.msra.mxu0 %v4954
    %5881 = vmatpush.bf16.msra.mxu0 %v4946
    %5882 = vmatpush.bf16.msra.mxu0 %v4938
    %5883 = vmatpush.bf16.msra.mxu0 %v4930
    %5884 = vmatpush.bf16.msra.mxu0 %v4922
    %5885 = vmatpush.bf16.msra.mxu0 %v4914
    %5886 = vmatpush.bf16.msra.mxu0 %v4906
    %5887 = vmatmul.bf16.gmra.mxu0 %v2769
    %v5888 = vpop.f32.mrf.mxu0
    %v5889 = vadd.f32 %v5876, %v5888
    %v5890 = vpop.f32.mrf.mxu0
    %5891 = vdwg.mxu0
    %5892 = vmatpush.bf16.msra.mxu0 %v5026
    %5893 = vmatpush.bf16.msra.mxu0 %v5018
    %5894 = vmatpush.bf16.msra.mxu0 %v5010
    %5895 = vmatpush.bf16.msra.mxu0 %v5002
    %5896 = vmatpush.bf16.msra.mxu0 %v4994
    %5897 = vmatpush.bf16.msra.mxu0 %v4986
    %5898 = vmatpush.bf16.msra.mxu0 %v4978
    %5899 = vmatpush.bf16.msra.mxu0 %v4970
    %5900 = vmatmul.bf16.gmra.mxu0 %v2770
    %v5901 = vpop.f32.mrf.mxu0
    %v5902 = vadd.f32 %v5889, %v5901
    %v5903 = vpop.f32.mrf.mxu0
    %5904 = vdwg.mxu0
    %5905 = vmatpush.bf16.msra.mxu0 %v5090
    %5906 = vmatpush.bf16.msra.mxu0 %v5082
    %5907 = vmatpush.bf16.msra.mxu0 %v5074
    %5908 = vmatpush.bf16.msra.mxu0 %v5066
    %5909 = vmatpush.bf16.msra.mxu0 %v5058
    %5910 = vmatpush.bf16.msra.mxu0 %v5050
    %5911 = vmatpush.bf16.msra.mxu0 %v5042
    %5912 = vmatpush.bf16.msra.mxu0 %v5034
    %5913 = vmatmul.bf16.gmra.mxu0 %v2771
    %v5914 = vpop.f32.mrf.mxu0
    %v5915 = vadd.f32 %v5902, %v5914
    %v5916 = vpop.f32.mrf.mxu0
    %5917 = vdwg.mxu0
    %5918 = vmatpush.bf16.msra.mxu0 %v5154
    %5919 = vmatpush.bf16.msra.mxu0 %v5146
    %5920 = vmatpush.bf16.msra.mxu0 %v5138
    %5921 = vmatpush.bf16.msra.mxu0 %v5130
    %5922 = vmatpush.bf16.msra.mxu0 %v5122
    %5923 = vmatpush.bf16.msra.mxu0 %v5114
    %5924 = vmatpush.bf16.msra.mxu0 %v5106
    %5925 = vmatpush.bf16.msra.mxu0 %v5098
    %5926 = vmatmul.bf16.gmra.mxu0 %v2772
    %v5927 = vpop.f32.mrf.mxu0
    %v5928 = vadd.f32 %v5915, %v5927
    %v5929 = vpop.f32.mrf.mxu0
    %5930 = vdwg.mxu0
    %5931 = vmatpush.bf16.msra.mxu0 %v5218
    %5932 = vmatpush.bf16.msra.mxu0 %v5210
    %5933 = vmatpush.bf16.msra.mxu0 %v5202
    %5934 = vmatpush.bf16.msra.mxu0 %v5194
    %5935 = vmatpush.bf16.msra.mxu0 %v5186
    %5936 = vmatpush.bf16.msra.mxu0 %v5178
    %5937 = vmatpush.bf16.msra.mxu0 %v5170
    %5938 = vmatpush.bf16.msra.mxu0 %v5162
    %5939 = vmatmul.bf16.gmra.mxu0 %v2773
    %v5940 = vpop.f32.mrf.mxu0
    %v5941 = vadd.f32 %v5928, %v5940
    %v5942 = vpop.f32.mrf.mxu0
    %5943 = vdwg.mxu0
    %5944 = vmatpush.bf16.msra.mxu0 %v5282
    %5945 = vmatpush.bf16.msra.mxu0 %v5274
    %5946 = vmatpush.bf16.msra.mxu0 %v5266
    %5947 = vmatpush.bf16.msra.mxu0 %v5258
    %5948 = vmatpush.bf16.msra.mxu0 %v5250
    %5949 = vmatpush.bf16.msra.mxu0 %v5242
    %5950 = vmatpush.bf16.msra.mxu0 %v5234
    %5951 = vmatpush.bf16.msra.mxu0 %v5226
    %5952 = vmatmul.bf16.gmra.mxu0 %v2774
    %v5953 = vpop.f32.mrf.mxu0
    %v5954 = vadd.f32 %v5941, %v5953
    %v5955 = vpop.f32.mrf.mxu0
    %5956 = vdwg.mxu0
    %5957 = vmatpush.bf16.msra.mxu0 %v5346
    %5958 = vmatpush.bf16.msra.mxu0 %v5338
    %5959 = vmatpush.bf16.msra.mxu0 %v5330
    %5960 = vmatpush.bf16.msra.mxu0 %v5322
    %5961 = vmatpush.bf16.msra.mxu0 %v5314
    %5962 = vmatpush.bf16.msra.mxu0 %v5306
    %5963 = vmatpush.bf16.msra.mxu0 %v5298
    %5964 = vmatpush.bf16.msra.mxu0 %v5290
    %5965 = vmatmul.bf16.gmra.mxu0 %v2775
    %v5966 = vpop.f32.mrf.mxu0
    %v5967 = vadd.f32 %v5954, %v5966
    %v5968 = vpop.f32.mrf.mxu0
    %5969 = vdwg.mxu0
    %5970 = vmatpush.bf16.msra.mxu0 %v4899
    %5971 = vmatpush.bf16.msra.mxu0 %v4891
    %5972 = vmatpush.bf16.msra.mxu0 %v4883
    %5973 = vmatpush.bf16.msra.mxu0 %v4875
    %5974 = vmatpush.bf16.msra.mxu0 %v4867
    %5975 = vmatpush.bf16.msra.mxu0 %v4859
    %5976 = vmatpush.bf16.msra.mxu0 %v4851
    %5977 = vmatpush.bf16.msra.mxu0 %v4843
    %5978 = vmatmul.bf16.gmra.mxu0 %v2768
    %v5979 = vpop.f32.mrf.mxu0
    %v5980 = vadd.f32 %v3291, %v5979
    %v5981 = vpop.f32.mrf.mxu0
    %5982 = vdwg.mxu0
    %5983 = vmatpush.bf16.msra.mxu0 %v4963
    %5984 = vmatpush.bf16.msra.mxu0 %v4955
    %5985 = vmatpush.bf16.msra.mxu0 %v4947
    %5986 = vmatpush.bf16.msra.mxu0 %v4939
    %5987 = vmatpush.bf16.msra.mxu0 %v4931
    %5988 = vmatpush.bf16.msra.mxu0 %v4923
    %5989 = vmatpush.bf16.msra.mxu0 %v4915
    %5990 = vmatpush.bf16.msra.mxu0 %v4907
    %5991 = vmatmul.bf16.gmra.mxu0 %v2769
    %v5992 = vpop.f32.mrf.mxu0
    %v5993 = vadd.f32 %v5980, %v5992
    %v5994 = vpop.f32.mrf.mxu0
    %5995 = vdwg.mxu0
    %5996 = vmatpush.bf16.msra.mxu0 %v5027
    %5997 = vmatpush.bf16.msra.mxu0 %v5019
    %5998 = vmatpush.bf16.msra.mxu0 %v5011
    %5999 = vmatpush.bf16.msra.mxu0 %v5003
    %6000 = vmatpush.bf16.msra.mxu0 %v4995
    %6001 = vmatpush.bf16.msra.mxu0 %v4987
    %6002 = vmatpush.bf16.msra.mxu0 %v4979
    %6003 = vmatpush.bf16.msra.mxu0 %v4971
    %6004 = vmatmul.bf16.gmra.mxu0 %v2770
    %v6005 = vpop.f32.mrf.mxu0
    %v6006 = vadd.f32 %v5993, %v6005
    %v6007 = vpop.f32.mrf.mxu0
    %6008 = vdwg.mxu0
    %6009 = vmatpush.bf16.msra.mxu0 %v5091
    %6010 = vmatpush.bf16.msra.mxu0 %v5083
    %6011 = vmatpush.bf16.msra.mxu0 %v5075
    %6012 = vmatpush.bf16.msra.mxu0 %v5067
    %6013 = vmatpush.bf16.msra.mxu0 %v5059
    %6014 = vmatpush.bf16.msra.mxu0 %v5051
    %6015 = vmatpush.bf16.msra.mxu0 %v5043
    %6016 = vmatpush.bf16.msra.mxu0 %v5035
    %6017 = vmatmul.bf16.gmra.mxu0 %v2771
    %v6018 = vpop.f32.mrf.mxu0
    %v6019 = vadd.f32 %v6006, %v6018
    %v6020 = vpop.f32.mrf.mxu0
    %6021 = vdwg.mxu0
    %6022 = vmatpush.bf16.msra.mxu0 %v5155
    %6023 = vmatpush.bf16.msra.mxu0 %v5147
    %6024 = vmatpush.bf16.msra.mxu0 %v5139
    %6025 = vmatpush.bf16.msra.mxu0 %v5131
    %6026 = vmatpush.bf16.msra.mxu0 %v5123
    %6027 = vmatpush.bf16.msra.mxu0 %v5115
    %6028 = vmatpush.bf16.msra.mxu0 %v5107
    %6029 = vmatpush.bf16.msra.mxu0 %v5099
    %6030 = vmatmul.bf16.gmra.mxu0 %v2772
    %v6031 = vpop.f32.mrf.mxu0
    %v6032 = vadd.f32 %v6019, %v6031
    %v6033 = vpop.f32.mrf.mxu0
    %6034 = vdwg.mxu0
    %6035 = vmatpush.bf16.msra.mxu0 %v5219
    %6036 = vmatpush.bf16.msra.mxu0 %v5211
    %6037 = vmatpush.bf16.msra.mxu0 %v5203
    %6038 = vmatpush.bf16.msra.mxu0 %v5195
    %6039 = vmatpush.bf16.msra.mxu0 %v5187
    %6040 = vmatpush.bf16.msra.mxu0 %v5179
    %6041 = vmatpush.bf16.msra.mxu0 %v5171
    %6042 = vmatpush.bf16.msra.mxu0 %v5163
    %6043 = vmatmul.bf16.gmra.mxu0 %v2773
    %v6044 = vpop.f32.mrf.mxu0
    %v6045 = vadd.f32 %v6032, %v6044
    %v6046 = vpop.f32.mrf.mxu0
    %6047 = vdwg.mxu0
    %6048 = vmatpush.bf16.msra.mxu0 %v5283
    %6049 = vmatpush.bf16.msra.mxu0 %v5275
    %6050 = vmatpush.bf16.msra.mxu0 %v5267
    %6051 = vmatpush.bf16.msra.mxu0 %v5259
    %6052 = vmatpush.bf16.msra.mxu0 %v5251
    %6053 = vmatpush.bf16.msra.mxu0 %v5243
    %6054 = vmatpush.bf16.msra.mxu0 %v5235
    %6055 = vmatpush.bf16.msra.mxu0 %v5227
    %6056 = vmatmul.bf16.gmra.mxu0 %v2774
    %v6057 = vpop.f32.mrf.mxu0
    %v6058 = vadd.f32 %v6045, %v6057
    %v6059 = vpop.f32.mrf.mxu0
    %6060 = vdwg.mxu0
    %6061 = vmatpush.bf16.msra.mxu0 %v5347
    %6062 = vmatpush.bf16.msra.mxu0 %v5339
    %6063 = vmatpush.bf16.msra.mxu0 %v5331
    %6064 = vmatpush.bf16.msra.mxu0 %v5323
    %6065 = vmatpush.bf16.msra.mxu0 %v5315
    %6066 = vmatpush.bf16.msra.mxu0 %v5307
    %6067 = vmatpush.bf16.msra.mxu0 %v5299
    %6068 = vmatpush.bf16.msra.mxu0 %v5291
    %6069 = vmatmul.bf16.gmra.mxu0 %v2775
    %v6070 = vpop.f32.mrf.mxu0
    %v6071 = vadd.f32 %v6058, %v6070
    %v6072 = vpop.f32.mrf.mxu0
    %6073 = vdwg.mxu0
    %6074 = vmatpush.bf16.msra.mxu0 %v4900
    %6075 = vmatpush.bf16.msra.mxu0 %v4892
    %6076 = vmatpush.bf16.msra.mxu0 %v4884
    %6077 = vmatpush.bf16.msra.mxu0 %v4876
    %6078 = vmatpush.bf16.msra.mxu0 %v4868
    %6079 = vmatpush.bf16.msra.mxu0 %v4860
    %6080 = vmatpush.bf16.msra.mxu0 %v4852
    %6081 = vmatpush.bf16.msra.mxu0 %v4844
    %6082 = vmatmul.bf16.gmra.mxu0 %v2768
    %v6083 = vpop.f32.mrf.mxu0
    %v6084 = vadd.f32 %v3292, %v6083
    %v6085 = vpop.f32.mrf.mxu0
    %6086 = vdwg.mxu0
    %6087 = vmatpush.bf16.msra.mxu0 %v4964
    %6088 = vmatpush.bf16.msra.mxu0 %v4956
    %6089 = vmatpush.bf16.msra.mxu0 %v4948
    %6090 = vmatpush.bf16.msra.mxu0 %v4940
    %6091 = vmatpush.bf16.msra.mxu0 %v4932
    %6092 = vmatpush.bf16.msra.mxu0 %v4924
    %6093 = vmatpush.bf16.msra.mxu0 %v4916
    %6094 = vmatpush.bf16.msra.mxu0 %v4908
    %6095 = vmatmul.bf16.gmra.mxu0 %v2769
    %v6096 = vpop.f32.mrf.mxu0
    %v6097 = vadd.f32 %v6084, %v6096
    %v6098 = vpop.f32.mrf.mxu0
    %6099 = vdwg.mxu0
    %6100 = vmatpush.bf16.msra.mxu0 %v5028
    %6101 = vmatpush.bf16.msra.mxu0 %v5020
    %6102 = vmatpush.bf16.msra.mxu0 %v5012
    %6103 = vmatpush.bf16.msra.mxu0 %v5004
    %6104 = vmatpush.bf16.msra.mxu0 %v4996
    %6105 = vmatpush.bf16.msra.mxu0 %v4988
    %6106 = vmatpush.bf16.msra.mxu0 %v4980
    %6107 = vmatpush.bf16.msra.mxu0 %v4972
    %6108 = vmatmul.bf16.gmra.mxu0 %v2770
    %v6109 = vpop.f32.mrf.mxu0
    %v6110 = vadd.f32 %v6097, %v6109
    %v6111 = vpop.f32.mrf.mxu0
    %6112 = vdwg.mxu0
    %6113 = vmatpush.bf16.msra.mxu0 %v5092
    %6114 = vmatpush.bf16.msra.mxu0 %v5084
    %6115 = vmatpush.bf16.msra.mxu0 %v5076
    %6116 = vmatpush.bf16.msra.mxu0 %v5068
    %6117 = vmatpush.bf16.msra.mxu0 %v5060
    %6118 = vmatpush.bf16.msra.mxu0 %v5052
    %6119 = vmatpush.bf16.msra.mxu0 %v5044
    %6120 = vmatpush.bf16.msra.mxu0 %v5036
    %6121 = vmatmul.bf16.gmra.mxu0 %v2771
    %v6122 = vpop.f32.mrf.mxu0
    %v6123 = vadd.f32 %v6110, %v6122
    %v6124 = vpop.f32.mrf.mxu0
    %6125 = vdwg.mxu0
    %6126 = vmatpush.bf16.msra.mxu0 %v5156
    %6127 = vmatpush.bf16.msra.mxu0 %v5148
    %6128 = vmatpush.bf16.msra.mxu0 %v5140
    %6129 = vmatpush.bf16.msra.mxu0 %v5132
    %6130 = vmatpush.bf16.msra.mxu0 %v5124
    %6131 = vmatpush.bf16.msra.mxu0 %v5116
    %6132 = vmatpush.bf16.msra.mxu0 %v5108
    %6133 = vmatpush.bf16.msra.mxu0 %v5100
    %6134 = vmatmul.bf16.gmra.mxu0 %v2772
    %v6135 = vpop.f32.mrf.mxu0
    %v6136 = vadd.f32 %v6123, %v6135
    %v6137 = vpop.f32.mrf.mxu0
    %6138 = vdwg.mxu0
    %6139 = vmatpush.bf16.msra.mxu0 %v5220
    %6140 = vmatpush.bf16.msra.mxu0 %v5212
    %6141 = vmatpush.bf16.msra.mxu0 %v5204
    %6142 = vmatpush.bf16.msra.mxu0 %v5196
    %6143 = vmatpush.bf16.msra.mxu0 %v5188
    %6144 = vmatpush.bf16.msra.mxu0 %v5180
    %6145 = vmatpush.bf16.msra.mxu0 %v5172
    %6146 = vmatpush.bf16.msra.mxu0 %v5164
    %6147 = vmatmul.bf16.gmra.mxu0 %v2773
    %v6148 = vpop.f32.mrf.mxu0
    %v6149 = vadd.f32 %v6136, %v6148
    %v6150 = vpop.f32.mrf.mxu0
    %6151 = vdwg.mxu0
    %6152 = vmatpush.bf16.msra.mxu0 %v5284
    %6153 = vmatpush.bf16.msra.mxu0 %v5276
    %6154 = vmatpush.bf16.msra.mxu0 %v5268
    %6155 = vmatpush.bf16.msra.mxu0 %v5260
    %6156 = vmatpush.bf16.msra.mxu0 %v5252
    %6157 = vmatpush.bf16.msra.mxu0 %v5244
    %6158 = vmatpush.bf16.msra.mxu0 %v5236
    %6159 = vmatpush.bf16.msra.mxu0 %v5228
    %6160 = vmatmul.bf16.gmra.mxu0 %v2774
    %v6161 = vpop.f32.mrf.mxu0
    %v6162 = vadd.f32 %v6149, %v6161
    %v6163 = vpop.f32.mrf.mxu0
    %6164 = vdwg.mxu0
    %6165 = vmatpush.bf16.msra.mxu0 %v5348
    %6166 = vmatpush.bf16.msra.mxu0 %v5340
    %6167 = vmatpush.bf16.msra.mxu0 %v5332
    %6168 = vmatpush.bf16.msra.mxu0 %v5324
    %6169 = vmatpush.bf16.msra.mxu0 %v5316
    %6170 = vmatpush.bf16.msra.mxu0 %v5308
    %6171 = vmatpush.bf16.msra.mxu0 %v5300
    %6172 = vmatpush.bf16.msra.mxu0 %v5292
    %6173 = vmatmul.bf16.gmra.mxu0 %v2775
    %v6174 = vpop.f32.mrf.mxu0
    %v6175 = vadd.f32 %v6162, %v6174
    %v6176 = vpop.f32.mrf.mxu0
    %6177 = vdwg.mxu0
    %6178 = vmatpush.bf16.msra.mxu0 %v4901
    %6179 = vmatpush.bf16.msra.mxu0 %v4893
    %6180 = vmatpush.bf16.msra.mxu0 %v4885
    %6181 = vmatpush.bf16.msra.mxu0 %v4877
    %6182 = vmatpush.bf16.msra.mxu0 %v4869
    %6183 = vmatpush.bf16.msra.mxu0 %v4861
    %6184 = vmatpush.bf16.msra.mxu0 %v4853
    %6185 = vmatpush.bf16.msra.mxu0 %v4845
    %6186 = vmatmul.bf16.gmra.mxu0 %v2768
    %v6187 = vpop.f32.mrf.mxu0
    %v6188 = vadd.f32 %v3293, %v6187
    %v6189 = vpop.f32.mrf.mxu0
    %6190 = vdwg.mxu0
    %6191 = vmatpush.bf16.msra.mxu0 %v4965
    %6192 = vmatpush.bf16.msra.mxu0 %v4957
    %6193 = vmatpush.bf16.msra.mxu0 %v4949
    %6194 = vmatpush.bf16.msra.mxu0 %v4941
    %6195 = vmatpush.bf16.msra.mxu0 %v4933
    %6196 = vmatpush.bf16.msra.mxu0 %v4925
    %6197 = vmatpush.bf16.msra.mxu0 %v4917
    %6198 = vmatpush.bf16.msra.mxu0 %v4909
    %6199 = vmatmul.bf16.gmra.mxu0 %v2769
    %v6200 = vpop.f32.mrf.mxu0
    %v6201 = vadd.f32 %v6188, %v6200
    %v6202 = vpop.f32.mrf.mxu0
    %6203 = vdwg.mxu0
    %6204 = vmatpush.bf16.msra.mxu0 %v5029
    %6205 = vmatpush.bf16.msra.mxu0 %v5021
    %6206 = vmatpush.bf16.msra.mxu0 %v5013
    %6207 = vmatpush.bf16.msra.mxu0 %v5005
    %6208 = vmatpush.bf16.msra.mxu0 %v4997
    %6209 = vmatpush.bf16.msra.mxu0 %v4989
    %6210 = vmatpush.bf16.msra.mxu0 %v4981
    %6211 = vmatpush.bf16.msra.mxu0 %v4973
    %6212 = vmatmul.bf16.gmra.mxu0 %v2770
    %v6213 = vpop.f32.mrf.mxu0
    %v6214 = vadd.f32 %v6201, %v6213
    %v6215 = vpop.f32.mrf.mxu0
    %6216 = vdwg.mxu0
    %6217 = vmatpush.bf16.msra.mxu0 %v5093
    %6218 = vmatpush.bf16.msra.mxu0 %v5085
    %6219 = vmatpush.bf16.msra.mxu0 %v5077
    %6220 = vmatpush.bf16.msra.mxu0 %v5069
    %6221 = vmatpush.bf16.msra.mxu0 %v5061
    %6222 = vmatpush.bf16.msra.mxu0 %v5053
    %6223 = vmatpush.bf16.msra.mxu0 %v5045
    %6224 = vmatpush.bf16.msra.mxu0 %v5037
    %6225 = vmatmul.bf16.gmra.mxu0 %v2771
    %v6226 = vpop.f32.mrf.mxu0
    %v6227 = vadd.f32 %v6214, %v6226
    %v6228 = vpop.f32.mrf.mxu0
    %6229 = vdwg.mxu0
    %6230 = vmatpush.bf16.msra.mxu0 %v5157
    %6231 = vmatpush.bf16.msra.mxu0 %v5149
    %6232 = vmatpush.bf16.msra.mxu0 %v5141
    %6233 = vmatpush.bf16.msra.mxu0 %v5133
    %6234 = vmatpush.bf16.msra.mxu0 %v5125
    %6235 = vmatpush.bf16.msra.mxu0 %v5117
    %6236 = vmatpush.bf16.msra.mxu0 %v5109
    %6237 = vmatpush.bf16.msra.mxu0 %v5101
    %6238 = vmatmul.bf16.gmra.mxu0 %v2772
    %v6239 = vpop.f32.mrf.mxu0
    %v6240 = vadd.f32 %v6227, %v6239
    %v6241 = vpop.f32.mrf.mxu0
    %6242 = vdwg.mxu0
    %6243 = vmatpush.bf16.msra.mxu0 %v5221
    %6244 = vmatpush.bf16.msra.mxu0 %v5213
    %6245 = vmatpush.bf16.msra.mxu0 %v5205
    %6246 = vmatpush.bf16.msra.mxu0 %v5197
    %6247 = vmatpush.bf16.msra.mxu0 %v5189
    %6248 = vmatpush.bf16.msra.mxu0 %v5181
    %6249 = vmatpush.bf16.msra.mxu0 %v5173
    %6250 = vmatpush.bf16.msra.mxu0 %v5165
    %6251 = vmatmul.bf16.gmra.mxu0 %v2773
    %v6252 = vpop.f32.mrf.mxu0
    %v6253 = vadd.f32 %v6240, %v6252
    %v6254 = vpop.f32.mrf.mxu0
    %6255 = vdwg.mxu0
    %6256 = vmatpush.bf16.msra.mxu0 %v5285
    %6257 = vmatpush.bf16.msra.mxu0 %v5277
    %6258 = vmatpush.bf16.msra.mxu0 %v5269
    %6259 = vmatpush.bf16.msra.mxu0 %v5261
    %6260 = vmatpush.bf16.msra.mxu0 %v5253
    %6261 = vmatpush.bf16.msra.mxu0 %v5245
    %6262 = vmatpush.bf16.msra.mxu0 %v5237
    %6263 = vmatpush.bf16.msra.mxu0 %v5229
    %6264 = vmatmul.bf16.gmra.mxu0 %v2774
    %v6265 = vpop.f32.mrf.mxu0
    %v6266 = vadd.f32 %v6253, %v6265
    %v6267 = vpop.f32.mrf.mxu0
    %6268 = vdwg.mxu0
    %6269 = vmatpush.bf16.msra.mxu0 %v5349
    %6270 = vmatpush.bf16.msra.mxu0 %v5341
    %6271 = vmatpush.bf16.msra.mxu0 %v5333
    %6272 = vmatpush.bf16.msra.mxu0 %v5325
    %6273 = vmatpush.bf16.msra.mxu0 %v5317
    %6274 = vmatpush.bf16.msra.mxu0 %v5309
    %6275 = vmatpush.bf16.msra.mxu0 %v5301
    %6276 = vmatpush.bf16.msra.mxu0 %v5293
    %6277 = vmatmul.bf16.gmra.mxu0 %v2775
    %v6278 = vpop.f32.mrf.mxu0
    %v6279 = vadd.f32 %v6266, %v6278
    %v6280 = vpop.f32.mrf.mxu0
    %6281 = vdwg.mxu0
    %6282 = vmatpush.bf16.msra.mxu0 %v4902
    %6283 = vmatpush.bf16.msra.mxu0 %v4894
    %6284 = vmatpush.bf16.msra.mxu0 %v4886
    %6285 = vmatpush.bf16.msra.mxu0 %v4878
    %6286 = vmatpush.bf16.msra.mxu0 %v4870
    %6287 = vmatpush.bf16.msra.mxu0 %v4862
    %6288 = vmatpush.bf16.msra.mxu0 %v4854
    %6289 = vmatpush.bf16.msra.mxu0 %v4846
    %6290 = vmatmul.bf16.gmra.mxu0 %v2768
    %v6291 = vpop.f32.mrf.mxu0
    %v6292 = vadd.f32 %v3294, %v6291
    %v6293 = vpop.f32.mrf.mxu0
    %6294 = vdwg.mxu0
    %6295 = vmatpush.bf16.msra.mxu0 %v4966
    %6296 = vmatpush.bf16.msra.mxu0 %v4958
    %6297 = vmatpush.bf16.msra.mxu0 %v4950
    %6298 = vmatpush.bf16.msra.mxu0 %v4942
    %6299 = vmatpush.bf16.msra.mxu0 %v4934
    %6300 = vmatpush.bf16.msra.mxu0 %v4926
    %6301 = vmatpush.bf16.msra.mxu0 %v4918
    %6302 = vmatpush.bf16.msra.mxu0 %v4910
    %6303 = vmatmul.bf16.gmra.mxu0 %v2769
    %v6304 = vpop.f32.mrf.mxu0
    %v6305 = vadd.f32 %v6292, %v6304
    %v6306 = vpop.f32.mrf.mxu0
    %6307 = vdwg.mxu0
    %6308 = vmatpush.bf16.msra.mxu0 %v5030
    %6309 = vmatpush.bf16.msra.mxu0 %v5022
    %6310 = vmatpush.bf16.msra.mxu0 %v5014
    %6311 = vmatpush.bf16.msra.mxu0 %v5006
    %6312 = vmatpush.bf16.msra.mxu0 %v4998
    %6313 = vmatpush.bf16.msra.mxu0 %v4990
    %6314 = vmatpush.bf16.msra.mxu0 %v4982
    %6315 = vmatpush.bf16.msra.mxu0 %v4974
    %6316 = vmatmul.bf16.gmra.mxu0 %v2770
    %v6317 = vpop.f32.mrf.mxu0
    %v6318 = vadd.f32 %v6305, %v6317
    %v6319 = vpop.f32.mrf.mxu0
    %6320 = vdwg.mxu0
    %6321 = vmatpush.bf16.msra.mxu0 %v5094
    %6322 = vmatpush.bf16.msra.mxu0 %v5086
    %6323 = vmatpush.bf16.msra.mxu0 %v5078
    %6324 = vmatpush.bf16.msra.mxu0 %v5070
    %6325 = vmatpush.bf16.msra.mxu0 %v5062
    %6326 = vmatpush.bf16.msra.mxu0 %v5054
    %6327 = vmatpush.bf16.msra.mxu0 %v5046
    %6328 = vmatpush.bf16.msra.mxu0 %v5038
    %6329 = vmatmul.bf16.gmra.mxu0 %v2771
    %v6330 = vpop.f32.mrf.mxu0
    %v6331 = vadd.f32 %v6318, %v6330
    %v6332 = vpop.f32.mrf.mxu0
    %6333 = vdwg.mxu0
    %6334 = vmatpush.bf16.msra.mxu0 %v5158
    %6335 = vmatpush.bf16.msra.mxu0 %v5150
    %6336 = vmatpush.bf16.msra.mxu0 %v5142
    %6337 = vmatpush.bf16.msra.mxu0 %v5134
    %6338 = vmatpush.bf16.msra.mxu0 %v5126
    %6339 = vmatpush.bf16.msra.mxu0 %v5118
    %6340 = vmatpush.bf16.msra.mxu0 %v5110
    %6341 = vmatpush.bf16.msra.mxu0 %v5102
    %6342 = vmatmul.bf16.gmra.mxu0 %v2772
    %v6343 = vpop.f32.mrf.mxu0
    %v6344 = vadd.f32 %v6331, %v6343
    %v6345 = vpop.f32.mrf.mxu0
    %6346 = vdwg.mxu0
    %6347 = vmatpush.bf16.msra.mxu0 %v5222
    %6348 = vmatpush.bf16.msra.mxu0 %v5214
    %6349 = vmatpush.bf16.msra.mxu0 %v5206
    %6350 = vmatpush.bf16.msra.mxu0 %v5198
    %6351 = vmatpush.bf16.msra.mxu0 %v5190
    %6352 = vmatpush.bf16.msra.mxu0 %v5182
    %6353 = vmatpush.bf16.msra.mxu0 %v5174
    %6354 = vmatpush.bf16.msra.mxu0 %v5166
    %6355 = vmatmul.bf16.gmra.mxu0 %v2773
    %v6356 = vpop.f32.mrf.mxu0
    %v6357 = vadd.f32 %v6344, %v6356
    %v6358 = vpop.f32.mrf.mxu0
    %6359 = vdwg.mxu0
    %6360 = vmatpush.bf16.msra.mxu0 %v5286
    %6361 = vmatpush.bf16.msra.mxu0 %v5278
    %6362 = vmatpush.bf16.msra.mxu0 %v5270
    %6363 = vmatpush.bf16.msra.mxu0 %v5262
    %6364 = vmatpush.bf16.msra.mxu0 %v5254
    %6365 = vmatpush.bf16.msra.mxu0 %v5246
    %6366 = vmatpush.bf16.msra.mxu0 %v5238
    %6367 = vmatpush.bf16.msra.mxu0 %v5230
    %6368 = vmatmul.bf16.gmra.mxu0 %v2774
    %v6369 = vpop.f32.mrf.mxu0
    %v6370 = vadd.f32 %v6357, %v6369
    %v6371 = vpop.f32.mrf.mxu0
    %6372 = vdwg.mxu0
    %6373 = vmatpush.bf16.msra.mxu0 %v5350
    %6374 = vmatpush.bf16.msra.mxu0 %v5342
    %6375 = vmatpush.bf16.msra.mxu0 %v5334
    %6376 = vmatpush.bf16.msra.mxu0 %v5326
    %6377 = vmatpush.bf16.msra.mxu0 %v5318
    %6378 = vmatpush.bf16.msra.mxu0 %v5310
    %6379 = vmatpush.bf16.msra.mxu0 %v5302
    %6380 = vmatpush.bf16.msra.mxu0 %v5294
    %6381 = vmatmul.bf16.gmra.mxu0 %v2775
    %v6382 = vpop.f32.mrf.mxu0
    %v6383 = vadd.f32 %v6370, %v6382
    %v6384 = vpop.f32.mrf.mxu0
    %6385 = vdwg.mxu0
    %6386 = vmatpush.bf16.msra.mxu0 %v4903
    %6387 = vmatpush.bf16.msra.mxu0 %v4895
    %6388 = vmatpush.bf16.msra.mxu0 %v4887
    %6389 = vmatpush.bf16.msra.mxu0 %v4879
    %6390 = vmatpush.bf16.msra.mxu0 %v4871
    %6391 = vmatpush.bf16.msra.mxu0 %v4863
    %6392 = vmatpush.bf16.msra.mxu0 %v4855
    %6393 = vmatpush.bf16.msra.mxu0 %v4847
    %6394 = vmatmul.bf16.gmra.mxu0 %v2768
    %v6395 = vpop.f32.mrf.mxu0
    %v6396 = vadd.f32 %v3295, %v6395
    %v6397 = vpop.f32.mrf.mxu0
    %6398 = vdwg.mxu0
    %6399 = vmatpush.bf16.msra.mxu0 %v4967
    %6400 = vmatpush.bf16.msra.mxu0 %v4959
    %6401 = vmatpush.bf16.msra.mxu0 %v4951
    %6402 = vmatpush.bf16.msra.mxu0 %v4943
    %6403 = vmatpush.bf16.msra.mxu0 %v4935
    %6404 = vmatpush.bf16.msra.mxu0 %v4927
    %6405 = vmatpush.bf16.msra.mxu0 %v4919
    %6406 = vmatpush.bf16.msra.mxu0 %v4911
    %6407 = vmatmul.bf16.gmra.mxu0 %v2769
    %v6408 = vpop.f32.mrf.mxu0
    %v6409 = vadd.f32 %v6396, %v6408
    %v6410 = vpop.f32.mrf.mxu0
    %6411 = vdwg.mxu0
    %6412 = vmatpush.bf16.msra.mxu0 %v5031
    %6413 = vmatpush.bf16.msra.mxu0 %v5023
    %6414 = vmatpush.bf16.msra.mxu0 %v5015
    %6415 = vmatpush.bf16.msra.mxu0 %v5007
    %6416 = vmatpush.bf16.msra.mxu0 %v4999
    %6417 = vmatpush.bf16.msra.mxu0 %v4991
    %6418 = vmatpush.bf16.msra.mxu0 %v4983
    %6419 = vmatpush.bf16.msra.mxu0 %v4975
    %6420 = vmatmul.bf16.gmra.mxu0 %v2770
    %v6421 = vpop.f32.mrf.mxu0
    %v6422 = vadd.f32 %v6409, %v6421
    %v6423 = vpop.f32.mrf.mxu0
    %6424 = vdwg.mxu0
    %6425 = vmatpush.bf16.msra.mxu0 %v5095
    %6426 = vmatpush.bf16.msra.mxu0 %v5087
    %6427 = vmatpush.bf16.msra.mxu0 %v5079
    %6428 = vmatpush.bf16.msra.mxu0 %v5071
    %6429 = vmatpush.bf16.msra.mxu0 %v5063
    %6430 = vmatpush.bf16.msra.mxu0 %v5055
    %6431 = vmatpush.bf16.msra.mxu0 %v5047
    %6432 = vmatpush.bf16.msra.mxu0 %v5039
    %6433 = vmatmul.bf16.gmra.mxu0 %v2771
    %v6434 = vpop.f32.mrf.mxu0
    %v6435 = vadd.f32 %v6422, %v6434
    %v6436 = vpop.f32.mrf.mxu0
    %6437 = vdwg.mxu0
    %6438 = vmatpush.bf16.msra.mxu0 %v5159
    %6439 = vmatpush.bf16.msra.mxu0 %v5151
    %6440 = vmatpush.bf16.msra.mxu0 %v5143
    %6441 = vmatpush.bf16.msra.mxu0 %v5135
    %6442 = vmatpush.bf16.msra.mxu0 %v5127
    %6443 = vmatpush.bf16.msra.mxu0 %v5119
    %6444 = vmatpush.bf16.msra.mxu0 %v5111
    %6445 = vmatpush.bf16.msra.mxu0 %v5103
    %6446 = vmatmul.bf16.gmra.mxu0 %v2772
    %v6447 = vpop.f32.mrf.mxu0
    %v6448 = vadd.f32 %v6435, %v6447
    %v6449 = vpop.f32.mrf.mxu0
    %6450 = vdwg.mxu0
    %6451 = vmatpush.bf16.msra.mxu0 %v5223
    %6452 = vmatpush.bf16.msra.mxu0 %v5215
    %6453 = vmatpush.bf16.msra.mxu0 %v5207
    %6454 = vmatpush.bf16.msra.mxu0 %v5199
    %6455 = vmatpush.bf16.msra.mxu0 %v5191
    %6456 = vmatpush.bf16.msra.mxu0 %v5183
    %6457 = vmatpush.bf16.msra.mxu0 %v5175
    %6458 = vmatpush.bf16.msra.mxu0 %v5167
    %6459 = vmatmul.bf16.gmra.mxu0 %v2773
    %v6460 = vpop.f32.mrf.mxu0
    %v6461 = vadd.f32 %v6448, %v6460
    %v6462 = vpop.f32.mrf.mxu0
    %6463 = vdwg.mxu0
    %6464 = vmatpush.bf16.msra.mxu0 %v5287
    %6465 = vmatpush.bf16.msra.mxu0 %v5279
    %6466 = vmatpush.bf16.msra.mxu0 %v5271
    %6467 = vmatpush.bf16.msra.mxu0 %v5263
    %6468 = vmatpush.bf16.msra.mxu0 %v5255
    %6469 = vmatpush.bf16.msra.mxu0 %v5247
    %6470 = vmatpush.bf16.msra.mxu0 %v5239
    %6471 = vmatpush.bf16.msra.mxu0 %v5231
    %6472 = vmatmul.bf16.gmra.mxu0 %v2774
    %v6473 = vpop.f32.mrf.mxu0
    %v6474 = vadd.f32 %v6461, %v6473
    %v6475 = vpop.f32.mrf.mxu0
    %6476 = vdwg.mxu0
    %6477 = vmatpush.bf16.msra.mxu0 %v5351
    %6478 = vmatpush.bf16.msra.mxu0 %v5343
    %6479 = vmatpush.bf16.msra.mxu0 %v5335
    %6480 = vmatpush.bf16.msra.mxu0 %v5327
    %6481 = vmatpush.bf16.msra.mxu0 %v5319
    %6482 = vmatpush.bf16.msra.mxu0 %v5311
    %6483 = vmatpush.bf16.msra.mxu0 %v5303
    %6484 = vmatpush.bf16.msra.mxu0 %v5295
    %6485 = vmatmul.bf16.gmra.mxu0 %v2775
    %v6486 = vpop.f32.mrf.mxu0
    %v6487 = vadd.f32 %v6474, %v6486
    %v6488 = vpop.f32.mrf.mxu0
    %6489 = vdwg.mxu0
    %6490 = vmatpush.bf16.msra.mxu0 %v4904
    %6491 = vmatpush.bf16.msra.mxu0 %v4896
    %6492 = vmatpush.bf16.msra.mxu0 %v4888
    %6493 = vmatpush.bf16.msra.mxu0 %v4880
    %6494 = vmatpush.bf16.msra.mxu0 %v4872
    %6495 = vmatpush.bf16.msra.mxu0 %v4864
    %6496 = vmatpush.bf16.msra.mxu0 %v4856
    %6497 = vmatpush.bf16.msra.mxu0 %v4848
    %6498 = vmatmul.bf16.gmra.mxu0 %v2768
    %v6499 = vpop.f32.mrf.mxu0
    %v6500 = vadd.f32 %v3296, %v6499
    %v6501 = vpop.f32.mrf.mxu0
    %6502 = vdwg.mxu0
    %6503 = vmatpush.bf16.msra.mxu0 %v4968
    %6504 = vmatpush.bf16.msra.mxu0 %v4960
    %6505 = vmatpush.bf16.msra.mxu0 %v4952
    %6506 = vmatpush.bf16.msra.mxu0 %v4944
    %6507 = vmatpush.bf16.msra.mxu0 %v4936
    %6508 = vmatpush.bf16.msra.mxu0 %v4928
    %6509 = vmatpush.bf16.msra.mxu0 %v4920
    %6510 = vmatpush.bf16.msra.mxu0 %v4912
    %6511 = vmatmul.bf16.gmra.mxu0 %v2769
    %v6512 = vpop.f32.mrf.mxu0
    %v6513 = vadd.f32 %v6500, %v6512
    %v6514 = vpop.f32.mrf.mxu0
    %6515 = vdwg.mxu0
    %6516 = vmatpush.bf16.msra.mxu0 %v5032
    %6517 = vmatpush.bf16.msra.mxu0 %v5024
    %6518 = vmatpush.bf16.msra.mxu0 %v5016
    %6519 = vmatpush.bf16.msra.mxu0 %v5008
    %6520 = vmatpush.bf16.msra.mxu0 %v5000
    %6521 = vmatpush.bf16.msra.mxu0 %v4992
    %6522 = vmatpush.bf16.msra.mxu0 %v4984
    %6523 = vmatpush.bf16.msra.mxu0 %v4976
    %6524 = vmatmul.bf16.gmra.mxu0 %v2770
    %v6525 = vpop.f32.mrf.mxu0
    %v6526 = vadd.f32 %v6513, %v6525
    %v6527 = vpop.f32.mrf.mxu0
    %6528 = vdwg.mxu0
    %6529 = vmatpush.bf16.msra.mxu0 %v5096
    %6530 = vmatpush.bf16.msra.mxu0 %v5088
    %6531 = vmatpush.bf16.msra.mxu0 %v5080
    %6532 = vmatpush.bf16.msra.mxu0 %v5072
    %6533 = vmatpush.bf16.msra.mxu0 %v5064
    %6534 = vmatpush.bf16.msra.mxu0 %v5056
    %6535 = vmatpush.bf16.msra.mxu0 %v5048
    %6536 = vmatpush.bf16.msra.mxu0 %v5040
    %6537 = vmatmul.bf16.gmra.mxu0 %v2771
    %v6538 = vpop.f32.mrf.mxu0
    %v6539 = vadd.f32 %v6526, %v6538
    %v6540 = vpop.f32.mrf.mxu0
    %6541 = vdwg.mxu0
    %6542 = vmatpush.bf16.msra.mxu0 %v5160
    %6543 = vmatpush.bf16.msra.mxu0 %v5152
    %6544 = vmatpush.bf16.msra.mxu0 %v5144
    %6545 = vmatpush.bf16.msra.mxu0 %v5136
    %6546 = vmatpush.bf16.msra.mxu0 %v5128
    %6547 = vmatpush.bf16.msra.mxu0 %v5120
    %6548 = vmatpush.bf16.msra.mxu0 %v5112
    %6549 = vmatpush.bf16.msra.mxu0 %v5104
    %6550 = vmatmul.bf16.gmra.mxu0 %v2772
    %v6551 = vpop.f32.mrf.mxu0
    %v6552 = vadd.f32 %v6539, %v6551
    %v6553 = vpop.f32.mrf.mxu0
    %6554 = vdwg.mxu0
    %6555 = vmatpush.bf16.msra.mxu0 %v5224
    %6556 = vmatpush.bf16.msra.mxu0 %v5216
    %6557 = vmatpush.bf16.msra.mxu0 %v5208
    %6558 = vmatpush.bf16.msra.mxu0 %v5200
    %6559 = vmatpush.bf16.msra.mxu0 %v5192
    %6560 = vmatpush.bf16.msra.mxu0 %v5184
    %6561 = vmatpush.bf16.msra.mxu0 %v5176
    %6562 = vmatpush.bf16.msra.mxu0 %v5168
    %6563 = vmatmul.bf16.gmra.mxu0 %v2773
    %v6564 = vpop.f32.mrf.mxu0
    %v6565 = vadd.f32 %v6552, %v6564
    %v6566 = vpop.f32.mrf.mxu0
    %6567 = vdwg.mxu0
    %6568 = vmatpush.bf16.msra.mxu0 %v5288
    %6569 = vmatpush.bf16.msra.mxu0 %v5280
    %6570 = vmatpush.bf16.msra.mxu0 %v5272
    %6571 = vmatpush.bf16.msra.mxu0 %v5264
    %6572 = vmatpush.bf16.msra.mxu0 %v5256
    %6573 = vmatpush.bf16.msra.mxu0 %v5248
    %6574 = vmatpush.bf16.msra.mxu0 %v5240
    %6575 = vmatpush.bf16.msra.mxu0 %v5232
    %6576 = vmatmul.bf16.gmra.mxu0 %v2774
    %v6577 = vpop.f32.mrf.mxu0
    %v6578 = vadd.f32 %v6565, %v6577
    %v6579 = vpop.f32.mrf.mxu0
    %6580 = vdwg.mxu0
    %6581 = vmatpush.bf16.msra.mxu0 %v5352
    %6582 = vmatpush.bf16.msra.mxu0 %v5344
    %6583 = vmatpush.bf16.msra.mxu0 %v5336
    %6584 = vmatpush.bf16.msra.mxu0 %v5328
    %6585 = vmatpush.bf16.msra.mxu0 %v5320
    %6586 = vmatpush.bf16.msra.mxu0 %v5312
    %6587 = vmatpush.bf16.msra.mxu0 %v5304
    %6588 = vmatpush.bf16.msra.mxu0 %v5296
    %6589 = vmatmul.bf16.gmra.mxu0 %v2775
    %v6590 = vpop.f32.mrf.mxu0
    %v6591 = vadd.f32 %v6578, %v6590
    %v6592 = vpop.f32.mrf.mxu0
    %6593 = vdwg.mxu0
    %6594 = vmatpush.bf16.msra.mxu0 %v4905
    %6595 = vmatpush.bf16.msra.mxu0 %v4897
    %6596 = vmatpush.bf16.msra.mxu0 %v4889
    %6597 = vmatpush.bf16.msra.mxu0 %v4881
    %6598 = vmatpush.bf16.msra.mxu0 %v4873
    %6599 = vmatpush.bf16.msra.mxu0 %v4865
    %6600 = vmatpush.bf16.msra.mxu0 %v4857
    %6601 = vmatpush.bf16.msra.mxu0 %v4849
    %6602 = vmatmul.bf16.gmra.mxu0 %v2768
    %v6603 = vpop.f32.mrf.mxu0
    %v6604 = vadd.f32 %v3297, %v6603
    %v6605 = vpop.f32.mrf.mxu0
    %6606 = vdwg.mxu0
    %6607 = vmatpush.bf16.msra.mxu0 %v4969
    %6608 = vmatpush.bf16.msra.mxu0 %v4961
    %6609 = vmatpush.bf16.msra.mxu0 %v4953
    %6610 = vmatpush.bf16.msra.mxu0 %v4945
    %6611 = vmatpush.bf16.msra.mxu0 %v4937
    %6612 = vmatpush.bf16.msra.mxu0 %v4929
    %6613 = vmatpush.bf16.msra.mxu0 %v4921
    %6614 = vmatpush.bf16.msra.mxu0 %v4913
    %6615 = vmatmul.bf16.gmra.mxu0 %v2769
    %v6616 = vpop.f32.mrf.mxu0
    %v6617 = vadd.f32 %v6604, %v6616
    %v6618 = vpop.f32.mrf.mxu0
    %6619 = vdwg.mxu0
    %6620 = vmatpush.bf16.msra.mxu0 %v5033
    %6621 = vmatpush.bf16.msra.mxu0 %v5025
    %6622 = vmatpush.bf16.msra.mxu0 %v5017
    %6623 = vmatpush.bf16.msra.mxu0 %v5009
    %6624 = vmatpush.bf16.msra.mxu0 %v5001
    %6625 = vmatpush.bf16.msra.mxu0 %v4993
    %6626 = vmatpush.bf16.msra.mxu0 %v4985
    %6627 = vmatpush.bf16.msra.mxu0 %v4977
    %6628 = vmatmul.bf16.gmra.mxu0 %v2770
    %v6629 = vpop.f32.mrf.mxu0
    %v6630 = vadd.f32 %v6617, %v6629
    %v6631 = vpop.f32.mrf.mxu0
    %6632 = vdwg.mxu0
    %6633 = vmatpush.bf16.msra.mxu0 %v5097
    %6634 = vmatpush.bf16.msra.mxu0 %v5089
    %6635 = vmatpush.bf16.msra.mxu0 %v5081
    %6636 = vmatpush.bf16.msra.mxu0 %v5073
    %6637 = vmatpush.bf16.msra.mxu0 %v5065
    %6638 = vmatpush.bf16.msra.mxu0 %v5057
    %6639 = vmatpush.bf16.msra.mxu0 %v5049
    %6640 = vmatpush.bf16.msra.mxu0 %v5041
    %6641 = vmatmul.bf16.gmra.mxu0 %v2771
    %v6642 = vpop.f32.mrf.mxu0
    %v6643 = vadd.f32 %v6630, %v6642
    %v6644 = vpop.f32.mrf.mxu0
    %6645 = vdwg.mxu0
    %6646 = vmatpush.bf16.msra.mxu0 %v5161
    %6647 = vmatpush.bf16.msra.mxu0 %v5153
    %6648 = vmatpush.bf16.msra.mxu0 %v5145
    %6649 = vmatpush.bf16.msra.mxu0 %v5137
    %6650 = vmatpush.bf16.msra.mxu0 %v5129
    %6651 = vmatpush.bf16.msra.mxu0 %v5121
    %6652 = vmatpush.bf16.msra.mxu0 %v5113
    %6653 = vmatpush.bf16.msra.mxu0 %v5105
    %6654 = vmatmul.bf16.gmra.mxu0 %v2772
    %v6655 = vpop.f32.mrf.mxu0
    %v6656 = vadd.f32 %v6643, %v6655
    %v6657 = vpop.f32.mrf.mxu0
    %6658 = vdwg.mxu0
    %6659 = vmatpush.bf16.msra.mxu0 %v5225
    %6660 = vmatpush.bf16.msra.mxu0 %v5217
    %6661 = vmatpush.bf16.msra.mxu0 %v5209
    %6662 = vmatpush.bf16.msra.mxu0 %v5201
    %6663 = vmatpush.bf16.msra.mxu0 %v5193
    %6664 = vmatpush.bf16.msra.mxu0 %v5185
    %6665 = vmatpush.bf16.msra.mxu0 %v5177
    %6666 = vmatpush.bf16.msra.mxu0 %v5169
    %6667 = vmatmul.bf16.gmra.mxu0 %v2773
    %v6668 = vpop.f32.mrf.mxu0
    %v6669 = vadd.f32 %v6656, %v6668
    %v6670 = vpop.f32.mrf.mxu0
    %6671 = vdwg.mxu0
    %6672 = vmatpush.bf16.msra.mxu0 %v5289
    %6673 = vmatpush.bf16.msra.mxu0 %v5281
    %6674 = vmatpush.bf16.msra.mxu0 %v5273
    %6675 = vmatpush.bf16.msra.mxu0 %v5265
    %6676 = vmatpush.bf16.msra.mxu0 %v5257
    %6677 = vmatpush.bf16.msra.mxu0 %v5249
    %6678 = vmatpush.bf16.msra.mxu0 %v5241
    %6679 = vmatpush.bf16.msra.mxu0 %v5233
    %6680 = vmatmul.bf16.gmra.mxu0 %v2774
    %v6681 = vpop.f32.mrf.mxu0
    %v6682 = vadd.f32 %v6669, %v6681
    %v6683 = vpop.f32.mrf.mxu0
    %6684 = vdwg.mxu0
    %6685 = vmatpush.bf16.msra.mxu0 %v5353
    %6686 = vmatpush.bf16.msra.mxu0 %v5345
    %6687 = vmatpush.bf16.msra.mxu0 %v5337
    %6688 = vmatpush.bf16.msra.mxu0 %v5329
    %6689 = vmatpush.bf16.msra.mxu0 %v5321
    %6690 = vmatpush.bf16.msra.mxu0 %v5313
    %6691 = vmatpush.bf16.msra.mxu0 %v5305
    %6692 = vmatpush.bf16.msra.mxu0 %v5297
    %6693 = vmatmul.bf16.gmra.mxu0 %v2775
    %v6694 = vpop.f32.mrf.mxu0
    %v6695 = vadd.f32 %v6682, %v6694
    %v6696 = vpop.f32.mrf.mxu0
    %6697 = vdwg.mxu0
    %v6698 = vmax.f32 %v5967, 0.0
    %v6699 = vmax.f32 %v6071, 0.0
    %v6700 = vmax.f32 %v6175, 0.0
    %v6701 = vmax.f32 %v6279, 0.0
    %v6702 = vmax.f32 %v6383, 0.0
    %v6703 = vmax.f32 %v6487, 0.0
    %v6704 = vmax.f32 %v6591, 0.0
    %v6705 = vmax.f32 %v6695, 0.0
    %v6706 = vpack.c.bf16 %v6698, %v6698
    %v6707 = vpack.c.bf16 %v6699, %v6699
    %v6708 = vpack.c.bf16 %v6700, %v6700
    %v6709 = vpack.c.bf16 %v6701, %v6701
    %v6710 = vpack.c.bf16 %v6702, %v6702
    %v6711 = vpack.c.bf16 %v6703, %v6703
    %v6712 = vpack.c.bf16 %v6704, %v6704
    %v6713 = vpack.c.bf16 %v6705, %v6705
    %v6714 = vld [vmem:[#allocation17] sm:$0xff]
    %v6715 = vld [vmem:[#allocation17 + $0x8] sm:$0xff]
    %v6716 = vld [vmem:[#allocation17 + $0x10] sm:$0xff]
    %v6717 = vld [vmem:[#allocation17 + $0x18] sm:$0xff]
    %v6718 = vld [vmem:[#allocation17 + $0x20] sm:$0xff]
    %v6719 = vld [vmem:[#allocation17 + $0x28] sm:$0xff]
    %v6720 = vld [vmem:[#allocation17 + $0x30] sm:$0xff]
    %v6721 = vld [vmem:[#allocation17 + $0x38] sm:$0xff]
    %v6722 = vld [vmem:[#allocation17 + $0x40] sm:$0xff]
    %v6723 = vld [vmem:[#allocation17 + $0x48] sm:$0xff]
    %v6724 = vld [vmem:[#allocation17 + $0x50] sm:$0xff]
    %v6725 = vld [vmem:[#allocation17 + $0x58] sm:$0xff]
    %v6726 = vld [vmem:[#allocation17 + $0x60] sm:$0xff]
    %v6727 = vld [vmem:[#allocation17 + $0x68] sm:$0xff]
    %v6728 = vld [vmem:[#allocation17 + $0x70] sm:$0xff]
    %v6729 = vld [vmem:[#allocation17 + $0x78] sm:$0xff]
    %v6730 = vld [vmem:[#allocation17 + $0x80] sm:$0xff]
    %v6731 = vld [vmem:[#allocation17 + $0x88] sm:$0xff]
    %v6732 = vld [vmem:[#allocation17 + $0x90] sm:$0xff]
    %v6733 = vld [vmem:[#allocation17 + $0x98] sm:$0xff]
    %v6734 = vld [vmem:[#allocation17 + $0xa0] sm:$0xff]
    %v6735 = vld [vmem:[#allocation17 + $0xa8] sm:$0xff]
    %v6736 = vld [vmem:[#allocation17 + $0xb0] sm:$0xff]
    %v6737 = vld [vmem:[#allocation17 + $0xb8] sm:$0xff]
    %v6738 = vld [vmem:[#allocation17 + $0xc0] sm:$0xff]
    %v6739 = vld [vmem:[#allocation17 + $0xc8] sm:$0xff]
    %v6740 = vld [vmem:[#allocation17 + $0xd0] sm:$0xff]
    %v6741 = vld [vmem:[#allocation17 + $0xd8] sm:$0xff]
    %v6742 = vld [vmem:[#allocation17 + $0xe0] sm:$0xff]
    %v6743 = vld [vmem:[#allocation17 + $0xe8] sm:$0xff]
    %v6744 = vld [vmem:[#allocation17 + $0xf0] sm:$0xff]
    %v6745 = vld [vmem:[#allocation17 + $0xf8] sm:$0xff]
    %v6746 = vld [vmem:[#allocation17 + $0x100] sm:$0xff]
    %v6747 = vld [vmem:[#allocation17 + $0x108] sm:$0xff]
    %v6748 = vld [vmem:[#allocation17 + $0x110] sm:$0xff]
    %v6749 = vld [vmem:[#allocation17 + $0x118] sm:$0xff]
    %v6750 = vld [vmem:[#allocation17 + $0x120] sm:$0xff]
    %v6751 = vld [vmem:[#allocation17 + $0x128] sm:$0xff]
    %v6752 = vld [vmem:[#allocation17 + $0x130] sm:$0xff]
    %v6753 = vld [vmem:[#allocation17 + $0x138] sm:$0xff]
    %v6754 = vld [vmem:[#allocation17 + $0x140] sm:$0xff]
    %v6755 = vld [vmem:[#allocation17 + $0x148] sm:$0xff]
    %v6756 = vld [vmem:[#allocation17 + $0x150] sm:$0xff]
    %v6757 = vld [vmem:[#allocation17 + $0x158] sm:$0xff]
    %v6758 = vld [vmem:[#allocation17 + $0x160] sm:$0xff]
    %v6759 = vld [vmem:[#allocation17 + $0x168] sm:$0xff]
    %v6760 = vld [vmem:[#allocation17 + $0x170] sm:$0xff]
    %v6761 = vld [vmem:[#allocation17 + $0x178] sm:$0xff]
    %v6762 = vld [vmem:[#allocation17 + $0x180] sm:$0xff]
    %v6763 = vld [vmem:[#allocation17 + $0x188] sm:$0xff]
    %v6764 = vld [vmem:[#allocation17 + $0x190] sm:$0xff]
    %v6765 = vld [vmem:[#allocation17 + $0x198] sm:$0xff]
    %v6766 = vld [vmem:[#allocation17 + $0x1a0] sm:$0xff]
    %v6767 = vld [vmem:[#allocation17 + $0x1a8] sm:$0xff]
    %v6768 = vld [vmem:[#allocation17 + $0x1b0] sm:$0xff]
    %v6769 = vld [vmem:[#allocation17 + $0x1b8] sm:$0xff]
    %v6770 = vld [vmem:[#allocation17 + $0x1c0] sm:$0xff]
    %v6771 = vld [vmem:[#allocation17 + $0x1c8] sm:$0xff]
    %v6772 = vld [vmem:[#allocation17 + $0x1d0] sm:$0xff]
    %v6773 = vld [vmem:[#allocation17 + $0x1d8] sm:$0xff]
    %v6774 = vld [vmem:[#allocation17 + $0x1e0] sm:$0xff]
    %v6775 = vld [vmem:[#allocation17 + $0x1e8] sm:$0xff]
    %v6776 = vld [vmem:[#allocation17 + $0x1f0] sm:$0xff]
    %v6777 = vld [vmem:[#allocation17 + $0x1f8] sm:$0xff]
    %v6778 = vld [vmem:[#allocation17 + $0x200] sm:$0xff]
    %v6779 = vld [vmem:[#allocation17 + $0x208] sm:$0xff]
    %v6780 = vld [vmem:[#allocation17 + $0x210] sm:$0xff]
    %v6781 = vld [vmem:[#allocation17 + $0x218] sm:$0xff]
    %v6782 = vld [vmem:[#allocation17 + $0x220] sm:$0xff]
    %v6783 = vld [vmem:[#allocation17 + $0x228] sm:$0xff]
    %v6784 = vld [vmem:[#allocation17 + $0x230] sm:$0xff]
    %v6785 = vld [vmem:[#allocation17 + $0x238] sm:$0xff]
    %v6786 = vld [vmem:[#allocation17 + $0x240] sm:$0xff]
    %v6787 = vld [vmem:[#allocation17 + $0x248] sm:$0xff]
    %v6788 = vld [vmem:[#allocation17 + $0x250] sm:$0xff]
    %v6789 = vld [vmem:[#allocation17 + $0x258] sm:$0xff]
    %v6790 = vld [vmem:[#allocation17 + $0x260] sm:$0xff]
    %v6791 = vld [vmem:[#allocation17 + $0x268] sm:$0xff]
    %v6792 = vld [vmem:[#allocation17 + $0x270] sm:$0xff]
    %v6793 = vld [vmem:[#allocation17 + $0x278] sm:$0xff]
    %v6794 = vld [vmem:[#allocation17 + $0x280] sm:$0xff]
    %v6795 = vld [vmem:[#allocation17 + $0x288] sm:$0xff]
    %v6796 = vld [vmem:[#allocation17 + $0x290] sm:$0xff]
    %v6797 = vld [vmem:[#allocation17 + $0x298] sm:$0xff]
    %v6798 = vld [vmem:[#allocation17 + $0x2a0] sm:$0xff]
    %v6799 = vld [vmem:[#allocation17 + $0x2a8] sm:$0xff]
    %v6800 = vld [vmem:[#allocation17 + $0x2b0] sm:$0xff]
    %v6801 = vld [vmem:[#allocation17 + $0x2b8] sm:$0xff]
    %v6802 = vld [vmem:[#allocation17 + $0x2c0] sm:$0xff]
    %v6803 = vld [vmem:[#allocation17 + $0x2c8] sm:$0xff]
    %v6804 = vld [vmem:[#allocation17 + $0x2d0] sm:$0xff]
    %v6805 = vld [vmem:[#allocation17 + $0x2d8] sm:$0xff]
    %v6806 = vld [vmem:[#allocation17 + $0x2e0] sm:$0xff]
    %v6807 = vld [vmem:[#allocation17 + $0x2e8] sm:$0xff]
    %v6808 = vld [vmem:[#allocation17 + $0x2f0] sm:$0xff]
    %v6809 = vld [vmem:[#allocation17 + $0x2f8] sm:$0xff]
    %v6810 = vld [vmem:[#allocation17 + $0x300] sm:$0xff]
    %v6811 = vld [vmem:[#allocation17 + $0x308] sm:$0xff]
    %v6812 = vld [vmem:[#allocation17 + $0x310] sm:$0xff]
    %v6813 = vld [vmem:[#allocation17 + $0x318] sm:$0xff]
    %v6814 = vld [vmem:[#allocation17 + $0x320] sm:$0xff]
    %v6815 = vld [vmem:[#allocation17 + $0x328] sm:$0xff]
    %v6816 = vld [vmem:[#allocation17 + $0x330] sm:$0xff]
    %v6817 = vld [vmem:[#allocation17 + $0x338] sm:$0xff]
    %v6818 = vld [vmem:[#allocation17 + $0x340] sm:$0xff]
    %v6819 = vld [vmem:[#allocation17 + $0x348] sm:$0xff]
    %v6820 = vld [vmem:[#allocation17 + $0x350] sm:$0xff]
    %v6821 = vld [vmem:[#allocation17 + $0x358] sm:$0xff]
    %v6822 = vld [vmem:[#allocation17 + $0x360] sm:$0xff]
    %v6823 = vld [vmem:[#allocation17 + $0x368] sm:$0xff]
    %v6824 = vld [vmem:[#allocation17 + $0x370] sm:$0xff]
    %v6825 = vld [vmem:[#allocation17 + $0x378] sm:$0xff]
    %v6826 = vld [vmem:[#allocation17 + $0x380] sm:$0xff]
    %v6827 = vld [vmem:[#allocation17 + $0x388] sm:$0xff]
    %v6828 = vld [vmem:[#allocation17 + $0x390] sm:$0xff]
    %v6829 = vld [vmem:[#allocation17 + $0x398] sm:$0xff]
    %v6830 = vld [vmem:[#allocation17 + $0x3a0] sm:$0xff]
    %v6831 = vld [vmem:[#allocation17 + $0x3a8] sm:$0xff]
    %v6832 = vld [vmem:[#allocation17 + $0x3b0] sm:$0xff]
    %v6833 = vld [vmem:[#allocation17 + $0x3b8] sm:$0xff]
    %v6834 = vld [vmem:[#allocation17 + $0x3c0] sm:$0xff]
    %v6835 = vld [vmem:[#allocation17 + $0x3c8] sm:$0xff]
    %v6836 = vld [vmem:[#allocation17 + $0x3d0] sm:$0xff]
    %v6837 = vld [vmem:[#allocation17 + $0x3d8] sm:$0xff]
    %v6838 = vld [vmem:[#allocation17 + $0x3e0] sm:$0xff]
    %v6839 = vld [vmem:[#allocation17 + $0x3e8] sm:$0xff]
    %v6840 = vld [vmem:[#allocation17 + $0x3f0] sm:$0xff]
    %v6841 = vld [vmem:[#allocation17 + $0x3f8] sm:$0xff]
    %v6842 = vld [vmem:[#allocation17 + $0x400] sm:$0xff]
    %v6843 = vld [vmem:[#allocation17 + $0x408] sm:$0xff]
    %v6844 = vld [vmem:[#allocation17 + $0x410] sm:$0xff]
    %v6845 = vld [vmem:[#allocation17 + $0x418] sm:$0xff]
    %v6846 = vld [vmem:[#allocation17 + $0x420] sm:$0xff]
    %v6847 = vld [vmem:[#allocation17 + $0x428] sm:$0xff]
    %v6848 = vld [vmem:[#allocation17 + $0x430] sm:$0xff]
    %v6849 = vld [vmem:[#allocation17 + $0x438] sm:$0xff]
    %v6850 = vld [vmem:[#allocation17 + $0x440] sm:$0xff]
    %v6851 = vld [vmem:[#allocation17 + $0x448] sm:$0xff]
    %v6852 = vld [vmem:[#allocation17 + $0x450] sm:$0xff]
    %v6853 = vld [vmem:[#allocation17 + $0x458] sm:$0xff]
    %v6854 = vld [vmem:[#allocation17 + $0x460] sm:$0xff]
    %v6855 = vld [vmem:[#allocation17 + $0x468] sm:$0xff]
    %v6856 = vld [vmem:[#allocation17 + $0x470] sm:$0xff]
    %v6857 = vld [vmem:[#allocation17 + $0x478] sm:$0xff]
    %v6858 = vld [vmem:[#allocation17 + $0x480] sm:$0xff]
    %v6859 = vld [vmem:[#allocation17 + $0x488] sm:$0xff]
    %v6860 = vld [vmem:[#allocation17 + $0x490] sm:$0xff]
    %v6861 = vld [vmem:[#allocation17 + $0x498] sm:$0xff]
    %v6862 = vld [vmem:[#allocation17 + $0x4a0] sm:$0xff]
    %v6863 = vld [vmem:[#allocation17 + $0x4a8] sm:$0xff]
    %v6864 = vld [vmem:[#allocation17 + $0x4b0] sm:$0xff]
    %v6865 = vld [vmem:[#allocation17 + $0x4b8] sm:$0xff]
    %v6866 = vld [vmem:[#allocation17 + $0x4c0] sm:$0xff]
    %v6867 = vld [vmem:[#allocation17 + $0x4c8] sm:$0xff]
    %v6868 = vld [vmem:[#allocation17 + $0x4d0] sm:$0xff]
    %v6869 = vld [vmem:[#allocation17 + $0x4d8] sm:$0xff]
    %v6870 = vld [vmem:[#allocation17 + $0x4e0] sm:$0xff]
    %v6871 = vld [vmem:[#allocation17 + $0x4e8] sm:$0xff]
    %v6872 = vld [vmem:[#allocation17 + $0x4f0] sm:$0xff]
    %v6873 = vld [vmem:[#allocation17 + $0x4f8] sm:$0xff]
    %v6874 = vld [vmem:[#allocation17 + $0x500] sm:$0xff]
    %v6875 = vld [vmem:[#allocation17 + $0x508] sm:$0xff]
    %v6876 = vld [vmem:[#allocation17 + $0x510] sm:$0xff]
    %v6877 = vld [vmem:[#allocation17 + $0x518] sm:$0xff]
    %v6878 = vld [vmem:[#allocation17 + $0x520] sm:$0xff]
    %v6879 = vld [vmem:[#allocation17 + $0x528] sm:$0xff]
    %v6880 = vld [vmem:[#allocation17 + $0x530] sm:$0xff]
    %v6881 = vld [vmem:[#allocation17 + $0x538] sm:$0xff]
    %v6882 = vld [vmem:[#allocation17 + $0x540] sm:$0xff]
    %v6883 = vld [vmem:[#allocation17 + $0x548] sm:$0xff]
    %v6884 = vld [vmem:[#allocation17 + $0x550] sm:$0xff]
    %v6885 = vld [vmem:[#allocation17 + $0x558] sm:$0xff]
    %v6886 = vld [vmem:[#allocation17 + $0x560] sm:$0xff]
    %v6887 = vld [vmem:[#allocation17 + $0x568] sm:$0xff]
    %v6888 = vld [vmem:[#allocation17 + $0x570] sm:$0xff]
    %v6889 = vld [vmem:[#allocation17 + $0x578] sm:$0xff]
    %v6890 = vld [vmem:[#allocation17 + $0x580] sm:$0xff]
    %v6891 = vld [vmem:[#allocation17 + $0x588] sm:$0xff]
    %v6892 = vld [vmem:[#allocation17 + $0x590] sm:$0xff]
    %v6893 = vld [vmem:[#allocation17 + $0x598] sm:$0xff]
    %v6894 = vld [vmem:[#allocation17 + $0x5a0] sm:$0xff]
    %v6895 = vld [vmem:[#allocation17 + $0x5a8] sm:$0xff]
    %v6896 = vld [vmem:[#allocation17 + $0x5b0] sm:$0xff]
    %v6897 = vld [vmem:[#allocation17 + $0x5b8] sm:$0xff]
    %v6898 = vld [vmem:[#allocation17 + $0x5c0] sm:$0xff]
    %v6899 = vld [vmem:[#allocation17 + $0x5c8] sm:$0xff]
    %v6900 = vld [vmem:[#allocation17 + $0x5d0] sm:$0xff]
    %v6901 = vld [vmem:[#allocation17 + $0x5d8] sm:$0xff]
    %v6902 = vld [vmem:[#allocation17 + $0x5e0] sm:$0xff]
    %v6903 = vld [vmem:[#allocation17 + $0x5e8] sm:$0xff]
    %v6904 = vld [vmem:[#allocation17 + $0x5f0] sm:$0xff]
    %v6905 = vld [vmem:[#allocation17 + $0x5f8] sm:$0xff]
    %v6906 = vld [vmem:[#allocation17 + $0x600] sm:$0xff]
    %v6907 = vld [vmem:[#allocation17 + $0x608] sm:$0xff]
    %v6908 = vld [vmem:[#allocation17 + $0x610] sm:$0xff]
    %v6909 = vld [vmem:[#allocation17 + $0x618] sm:$0xff]
    %v6910 = vld [vmem:[#allocation17 + $0x620] sm:$0xff]
    %v6911 = vld [vmem:[#allocation17 + $0x628] sm:$0xff]
    %v6912 = vld [vmem:[#allocation17 + $0x630] sm:$0xff]
    %v6913 = vld [vmem:[#allocation17 + $0x638] sm:$0xff]
    %v6914 = vld [vmem:[#allocation17 + $0x640] sm:$0xff]
    %v6915 = vld [vmem:[#allocation17 + $0x648] sm:$0xff]
    %v6916 = vld [vmem:[#allocation17 + $0x650] sm:$0xff]
    %v6917 = vld [vmem:[#allocation17 + $0x658] sm:$0xff]
    %v6918 = vld [vmem:[#allocation17 + $0x660] sm:$0xff]
    %v6919 = vld [vmem:[#allocation17 + $0x668] sm:$0xff]
    %v6920 = vld [vmem:[#allocation17 + $0x670] sm:$0xff]
    %v6921 = vld [vmem:[#allocation17 + $0x678] sm:$0xff]
    %v6922 = vld [vmem:[#allocation17 + $0x680] sm:$0xff]
    %v6923 = vld [vmem:[#allocation17 + $0x688] sm:$0xff]
    %v6924 = vld [vmem:[#allocation17 + $0x690] sm:$0xff]
    %v6925 = vld [vmem:[#allocation17 + $0x698] sm:$0xff]
    %v6926 = vld [vmem:[#allocation17 + $0x6a0] sm:$0xff]
    %v6927 = vld [vmem:[#allocation17 + $0x6a8] sm:$0xff]
    %v6928 = vld [vmem:[#allocation17 + $0x6b0] sm:$0xff]
    %v6929 = vld [vmem:[#allocation17 + $0x6b8] sm:$0xff]
    %v6930 = vld [vmem:[#allocation17 + $0x6c0] sm:$0xff]
    %v6931 = vld [vmem:[#allocation17 + $0x6c8] sm:$0xff]
    %v6932 = vld [vmem:[#allocation17 + $0x6d0] sm:$0xff]
    %v6933 = vld [vmem:[#allocation17 + $0x6d8] sm:$0xff]
    %v6934 = vld [vmem:[#allocation17 + $0x6e0] sm:$0xff]
    %v6935 = vld [vmem:[#allocation17 + $0x6e8] sm:$0xff]
    %v6936 = vld [vmem:[#allocation17 + $0x6f0] sm:$0xff]
    %v6937 = vld [vmem:[#allocation17 + $0x6f8] sm:$0xff]
    %v6938 = vld [vmem:[#allocation17 + $0x700] sm:$0xff]
    %v6939 = vld [vmem:[#allocation17 + $0x708] sm:$0xff]
    %v6940 = vld [vmem:[#allocation17 + $0x710] sm:$0xff]
    %v6941 = vld [vmem:[#allocation17 + $0x718] sm:$0xff]
    %v6942 = vld [vmem:[#allocation17 + $0x720] sm:$0xff]
    %v6943 = vld [vmem:[#allocation17 + $0x728] sm:$0xff]
    %v6944 = vld [vmem:[#allocation17 + $0x730] sm:$0xff]
    %v6945 = vld [vmem:[#allocation17 + $0x738] sm:$0xff]
    %v6946 = vld [vmem:[#allocation17 + $0x740] sm:$0xff]
    %v6947 = vld [vmem:[#allocation17 + $0x748] sm:$0xff]
    %v6948 = vld [vmem:[#allocation17 + $0x750] sm:$0xff]
    %v6949 = vld [vmem:[#allocation17 + $0x758] sm:$0xff]
    %v6950 = vld [vmem:[#allocation17 + $0x760] sm:$0xff]
    %v6951 = vld [vmem:[#allocation17 + $0x768] sm:$0xff]
    %v6952 = vld [vmem:[#allocation17 + $0x770] sm:$0xff]
    %v6953 = vld [vmem:[#allocation17 + $0x778] sm:$0xff]
    %v6954 = vld [vmem:[#allocation17 + $0x780] sm:$0xff]
    %v6955 = vld [vmem:[#allocation17 + $0x788] sm:$0xff]
    %v6956 = vld [vmem:[#allocation17 + $0x790] sm:$0xff]
    %v6957 = vld [vmem:[#allocation17 + $0x798] sm:$0xff]
    %v6958 = vld [vmem:[#allocation17 + $0x7a0] sm:$0xff]
    %v6959 = vld [vmem:[#allocation17 + $0x7a8] sm:$0xff]
    %v6960 = vld [vmem:[#allocation17 + $0x7b0] sm:$0xff]
    %v6961 = vld [vmem:[#allocation17 + $0x7b8] sm:$0xff]
    %v6962 = vld [vmem:[#allocation17 + $0x7c0] sm:$0xff]
    %v6963 = vld [vmem:[#allocation17 + $0x7c8] sm:$0xff]
    %v6964 = vld [vmem:[#allocation17 + $0x7d0] sm:$0xff]
    %v6965 = vld [vmem:[#allocation17 + $0x7d8] sm:$0xff]
    %v6966 = vld [vmem:[#allocation17 + $0x7e0] sm:$0xff]
    %v6967 = vld [vmem:[#allocation17 + $0x7e8] sm:$0xff]
    %v6968 = vld [vmem:[#allocation17 + $0x7f0] sm:$0xff]
    %v6969 = vld [vmem:[#allocation17 + $0x7f8] sm:$0xff]
    %v6970 = vld [vmem:[#allocation17 + $0x800] sm:$0xff]
    %v6971 = vld [vmem:[#allocation17 + $0x808] sm:$0xff]
    %v6972 = vld [vmem:[#allocation17 + $0x810] sm:$0xff]
    %v6973 = vld [vmem:[#allocation17 + $0x818] sm:$0xff]
    %v6974 = vld [vmem:[#allocation17 + $0x820] sm:$0xff]
    %v6975 = vld [vmem:[#allocation17 + $0x828] sm:$0xff]
    %v6976 = vld [vmem:[#allocation17 + $0x830] sm:$0xff]
    %v6977 = vld [vmem:[#allocation17 + $0x838] sm:$0xff]
    %v6978 = vld [vmem:[#allocation17 + $0x840] sm:$0xff]
    %v6979 = vld [vmem:[#allocation17 + $0x848] sm:$0xff]
    %v6980 = vld [vmem:[#allocation17 + $0x850] sm:$0xff]
    %v6981 = vld [vmem:[#allocation17 + $0x858] sm:$0xff]
    %v6982 = vld [vmem:[#allocation17 + $0x860] sm:$0xff]
    %v6983 = vld [vmem:[#allocation17 + $0x868] sm:$0xff]
    %v6984 = vld [vmem:[#allocation17 + $0x870] sm:$0xff]
    %v6985 = vld [vmem:[#allocation17 + $0x878] sm:$0xff]
    %v6986 = vld [vmem:[#allocation17 + $0x880] sm:$0xff]
    %v6987 = vld [vmem:[#allocation17 + $0x888] sm:$0xff]
    %v6988 = vld [vmem:[#allocation17 + $0x890] sm:$0xff]
    %v6989 = vld [vmem:[#allocation17 + $0x898] sm:$0xff]
    %v6990 = vld [vmem:[#allocation17 + $0x8a0] sm:$0xff]
    %v6991 = vld [vmem:[#allocation17 + $0x8a8] sm:$0xff]
    %v6992 = vld [vmem:[#allocation17 + $0x8b0] sm:$0xff]
    %v6993 = vld [vmem:[#allocation17 + $0x8b8] sm:$0xff]
    %v6994 = vld [vmem:[#allocation17 + $0x8c0] sm:$0xff]
    %v6995 = vld [vmem:[#allocation17 + $0x8c8] sm:$0xff]
    %v6996 = vld [vmem:[#allocation17 + $0x8d0] sm:$0xff]
    %v6997 = vld [vmem:[#allocation17 + $0x8d8] sm:$0xff]
    %v6998 = vld [vmem:[#allocation17 + $0x8e0] sm:$0xff]
    %v6999 = vld [vmem:[#allocation17 + $0x8e8] sm:$0xff]
    %v7000 = vld [vmem:[#allocation17 + $0x8f0] sm:$0xff]
    %v7001 = vld [vmem:[#allocation17 + $0x8f8] sm:$0xff]
    %v7002 = vld [vmem:[#allocation17 + $0x900] sm:$0xff]
    %v7003 = vld [vmem:[#allocation17 + $0x908] sm:$0xff]
    %v7004 = vld [vmem:[#allocation17 + $0x910] sm:$0xff]
    %v7005 = vld [vmem:[#allocation17 + $0x918] sm:$0xff]
    %v7006 = vld [vmem:[#allocation17 + $0x920] sm:$0xff]
    %v7007 = vld [vmem:[#allocation17 + $0x928] sm:$0xff]
    %v7008 = vld [vmem:[#allocation17 + $0x930] sm:$0xff]
    %v7009 = vld [vmem:[#allocation17 + $0x938] sm:$0xff]
    %v7010 = vld [vmem:[#allocation17 + $0x940] sm:$0xff]
    %v7011 = vld [vmem:[#allocation17 + $0x948] sm:$0xff]
    %v7012 = vld [vmem:[#allocation17 + $0x950] sm:$0xff]
    %v7013 = vld [vmem:[#allocation17 + $0x958] sm:$0xff]
    %v7014 = vld [vmem:[#allocation17 + $0x960] sm:$0xff]
    %v7015 = vld [vmem:[#allocation17 + $0x968] sm:$0xff]
    %v7016 = vld [vmem:[#allocation17 + $0x970] sm:$0xff]
    %v7017 = vld [vmem:[#allocation17 + $0x978] sm:$0xff]
    %v7018 = vld [vmem:[#allocation17 + $0x980] sm:$0xff]
    %v7019 = vld [vmem:[#allocation17 + $0x988] sm:$0xff]
    %v7020 = vld [vmem:[#allocation17 + $0x990] sm:$0xff]
    %v7021 = vld [vmem:[#allocation17 + $0x998] sm:$0xff]
    %v7022 = vld [vmem:[#allocation17 + $0x9a0] sm:$0xff]
    %v7023 = vld [vmem:[#allocation17 + $0x9a8] sm:$0xff]
    %v7024 = vld [vmem:[#allocation17 + $0x9b0] sm:$0xff]
    %v7025 = vld [vmem:[#allocation17 + $0x9b8] sm:$0xff]
    %v7026 = vld [vmem:[#allocation17 + $0x9c0] sm:$0xff]
    %v7027 = vld [vmem:[#allocation17 + $0x9c8] sm:$0xff]
    %v7028 = vld [vmem:[#allocation17 + $0x9d0] sm:$0xff]
    %v7029 = vld [vmem:[#allocation17 + $0x9d8] sm:$0xff]
    %v7030 = vld [vmem:[#allocation17 + $0x9e0] sm:$0xff]
    %v7031 = vld [vmem:[#allocation17 + $0x9e8] sm:$0xff]
    %v7032 = vld [vmem:[#allocation17 + $0x9f0] sm:$0xff]
    %v7033 = vld [vmem:[#allocation17 + $0x9f8] sm:$0xff]
    %v7034 = vld [vmem:[#allocation17 + $0xa00] sm:$0xff]
    %v7035 = vld [vmem:[#allocation17 + $0xa08] sm:$0xff]
    %v7036 = vld [vmem:[#allocation17 + $0xa10] sm:$0xff]
    %v7037 = vld [vmem:[#allocation17 + $0xa18] sm:$0xff]
    %v7038 = vld [vmem:[#allocation17 + $0xa20] sm:$0xff]
    %v7039 = vld [vmem:[#allocation17 + $0xa28] sm:$0xff]
    %v7040 = vld [vmem:[#allocation17 + $0xa30] sm:$0xff]
    %v7041 = vld [vmem:[#allocation17 + $0xa38] sm:$0xff]
    %v7042 = vld [vmem:[#allocation17 + $0xa40] sm:$0xff]
    %v7043 = vld [vmem:[#allocation17 + $0xa48] sm:$0xff]
    %v7044 = vld [vmem:[#allocation17 + $0xa50] sm:$0xff]
    %v7045 = vld [vmem:[#allocation17 + $0xa58] sm:$0xff]
    %v7046 = vld [vmem:[#allocation17 + $0xa60] sm:$0xff]
    %v7047 = vld [vmem:[#allocation17 + $0xa68] sm:$0xff]
    %v7048 = vld [vmem:[#allocation17 + $0xa70] sm:$0xff]
    %v7049 = vld [vmem:[#allocation17 + $0xa78] sm:$0xff]
    %v7050 = vld [vmem:[#allocation17 + $0xa80] sm:$0xff]
    %v7051 = vld [vmem:[#allocation17 + $0xa88] sm:$0xff]
    %v7052 = vld [vmem:[#allocation17 + $0xa90] sm:$0xff]
    %v7053 = vld [vmem:[#allocation17 + $0xa98] sm:$0xff]
    %v7054 = vld [vmem:[#allocation17 + $0xaa0] sm:$0xff]
    %v7055 = vld [vmem:[#allocation17 + $0xaa8] sm:$0xff]
    %v7056 = vld [vmem:[#allocation17 + $0xab0] sm:$0xff]
    %v7057 = vld [vmem:[#allocation17 + $0xab8] sm:$0xff]
    %v7058 = vld [vmem:[#allocation17 + $0xac0] sm:$0xff]
    %v7059 = vld [vmem:[#allocation17 + $0xac8] sm:$0xff]
    %v7060 = vld [vmem:[#allocation17 + $0xad0] sm:$0xff]
    %v7061 = vld [vmem:[#allocation17 + $0xad8] sm:$0xff]
    %v7062 = vld [vmem:[#allocation17 + $0xae0] sm:$0xff]
    %v7063 = vld [vmem:[#allocation17 + $0xae8] sm:$0xff]
    %v7064 = vld [vmem:[#allocation17 + $0xaf0] sm:$0xff]
    %v7065 = vld [vmem:[#allocation17 + $0xaf8] sm:$0xff]
    %v7066 = vld [vmem:[#allocation17 + $0xb00] sm:$0xff]
    %v7067 = vld [vmem:[#allocation17 + $0xb08] sm:$0xff]
    %v7068 = vld [vmem:[#allocation17 + $0xb10] sm:$0xff]
    %v7069 = vld [vmem:[#allocation17 + $0xb18] sm:$0xff]
    %v7070 = vld [vmem:[#allocation17 + $0xb20] sm:$0xff]
    %v7071 = vld [vmem:[#allocation17 + $0xb28] sm:$0xff]
    %v7072 = vld [vmem:[#allocation17 + $0xb30] sm:$0xff]
    %v7073 = vld [vmem:[#allocation17 + $0xb38] sm:$0xff]
    %v7074 = vld [vmem:[#allocation17 + $0xb40] sm:$0xff]
    %v7075 = vld [vmem:[#allocation17 + $0xb48] sm:$0xff]
    %v7076 = vld [vmem:[#allocation17 + $0xb50] sm:$0xff]
    %v7077 = vld [vmem:[#allocation17 + $0xb58] sm:$0xff]
    %v7078 = vld [vmem:[#allocation17 + $0xb60] sm:$0xff]
    %v7079 = vld [vmem:[#allocation17 + $0xb68] sm:$0xff]
    %v7080 = vld [vmem:[#allocation17 + $0xb70] sm:$0xff]
    %v7081 = vld [vmem:[#allocation17 + $0xb78] sm:$0xff]
    %v7082 = vld [vmem:[#allocation17 + $0xb80] sm:$0xff]
    %v7083 = vld [vmem:[#allocation17 + $0xb88] sm:$0xff]
    %v7084 = vld [vmem:[#allocation17 + $0xb90] sm:$0xff]
    %v7085 = vld [vmem:[#allocation17 + $0xb98] sm:$0xff]
    %v7086 = vld [vmem:[#allocation17 + $0xba0] sm:$0xff]
    %v7087 = vld [vmem:[#allocation17 + $0xba8] sm:$0xff]
    %v7088 = vld [vmem:[#allocation17 + $0xbb0] sm:$0xff]
    %v7089 = vld [vmem:[#allocation17 + $0xbb8] sm:$0xff]
    %v7090 = vld [vmem:[#allocation17 + $0xbc0] sm:$0xff]
    %v7091 = vld [vmem:[#allocation17 + $0xbc8] sm:$0xff]
    %v7092 = vld [vmem:[#allocation17 + $0xbd0] sm:$0xff]
    %v7093 = vld [vmem:[#allocation17 + $0xbd8] sm:$0xff]
    %v7094 = vld [vmem:[#allocation17 + $0xbe0] sm:$0xff]
    %v7095 = vld [vmem:[#allocation17 + $0xbe8] sm:$0xff]
    %v7096 = vld [vmem:[#allocation17 + $0xbf0] sm:$0xff]
    %v7097 = vld [vmem:[#allocation17 + $0xbf8] sm:$0xff]
    %v7098 = vld [vmem:[#allocation17 + $0xc00] sm:$0xff]
    %v7099 = vld [vmem:[#allocation17 + $0xc08] sm:$0xff]
    %v7100 = vld [vmem:[#allocation17 + $0xc10] sm:$0xff]
    %v7101 = vld [vmem:[#allocation17 + $0xc18] sm:$0xff]
    %v7102 = vld [vmem:[#allocation17 + $0xc20] sm:$0xff]
    %v7103 = vld [vmem:[#allocation17 + $0xc28] sm:$0xff]
    %v7104 = vld [vmem:[#allocation17 + $0xc30] sm:$0xff]
    %v7105 = vld [vmem:[#allocation17 + $0xc38] sm:$0xff]
    %v7106 = vld [vmem:[#allocation17 + $0xc40] sm:$0xff]
    %v7107 = vld [vmem:[#allocation17 + $0xc48] sm:$0xff]
    %v7108 = vld [vmem:[#allocation17 + $0xc50] sm:$0xff]
    %v7109 = vld [vmem:[#allocation17 + $0xc58] sm:$0xff]
    %v7110 = vld [vmem:[#allocation17 + $0xc60] sm:$0xff]
    %v7111 = vld [vmem:[#allocation17 + $0xc68] sm:$0xff]
    %v7112 = vld [vmem:[#allocation17 + $0xc70] sm:$0xff]
    %v7113 = vld [vmem:[#allocation17 + $0xc78] sm:$0xff]
    %v7114 = vld [vmem:[#allocation17 + $0xc80] sm:$0xff]
    %v7115 = vld [vmem:[#allocation17 + $0xc88] sm:$0xff]
    %v7116 = vld [vmem:[#allocation17 + $0xc90] sm:$0xff]
    %v7117 = vld [vmem:[#allocation17 + $0xc98] sm:$0xff]
    %v7118 = vld [vmem:[#allocation17 + $0xca0] sm:$0xff]
    %v7119 = vld [vmem:[#allocation17 + $0xca8] sm:$0xff]
    %v7120 = vld [vmem:[#allocation17 + $0xcb0] sm:$0xff]
    %v7121 = vld [vmem:[#allocation17 + $0xcb8] sm:$0xff]
    %v7122 = vld [vmem:[#allocation17 + $0xcc0] sm:$0xff]
    %v7123 = vld [vmem:[#allocation17 + $0xcc8] sm:$0xff]
    %v7124 = vld [vmem:[#allocation17 + $0xcd0] sm:$0xff]
    %v7125 = vld [vmem:[#allocation17 + $0xcd8] sm:$0xff]
    %v7126 = vld [vmem:[#allocation17 + $0xce0] sm:$0xff]
    %v7127 = vld [vmem:[#allocation17 + $0xce8] sm:$0xff]
    %v7128 = vld [vmem:[#allocation17 + $0xcf0] sm:$0xff]
    %v7129 = vld [vmem:[#allocation17 + $0xcf8] sm:$0xff]
    %v7130 = vld [vmem:[#allocation17 + $0xd00] sm:$0xff]
    %v7131 = vld [vmem:[#allocation17 + $0xd08] sm:$0xff]
    %v7132 = vld [vmem:[#allocation17 + $0xd10] sm:$0xff]
    %v7133 = vld [vmem:[#allocation17 + $0xd18] sm:$0xff]
    %v7134 = vld [vmem:[#allocation17 + $0xd20] sm:$0xff]
    %v7135 = vld [vmem:[#allocation17 + $0xd28] sm:$0xff]
    %v7136 = vld [vmem:[#allocation17 + $0xd30] sm:$0xff]
    %v7137 = vld [vmem:[#allocation17 + $0xd38] sm:$0xff]
    %v7138 = vld [vmem:[#allocation17 + $0xd40] sm:$0xff]
    %v7139 = vld [vmem:[#allocation17 + $0xd48] sm:$0xff]
    %v7140 = vld [vmem:[#allocation17 + $0xd50] sm:$0xff]
    %v7141 = vld [vmem:[#allocation17 + $0xd58] sm:$0xff]
    %v7142 = vld [vmem:[#allocation17 + $0xd60] sm:$0xff]
    %v7143 = vld [vmem:[#allocation17 + $0xd68] sm:$0xff]
    %v7144 = vld [vmem:[#allocation17 + $0xd70] sm:$0xff]
    %v7145 = vld [vmem:[#allocation17 + $0xd78] sm:$0xff]
    %v7146 = vld [vmem:[#allocation17 + $0xd80] sm:$0xff]
    %v7147 = vld [vmem:[#allocation17 + $0xd88] sm:$0xff]
    %v7148 = vld [vmem:[#allocation17 + $0xd90] sm:$0xff]
    %v7149 = vld [vmem:[#allocation17 + $0xd98] sm:$0xff]
    %v7150 = vld [vmem:[#allocation17 + $0xda0] sm:$0xff]
    %v7151 = vld [vmem:[#allocation17 + $0xda8] sm:$0xff]
    %v7152 = vld [vmem:[#allocation17 + $0xdb0] sm:$0xff]
    %v7153 = vld [vmem:[#allocation17 + $0xdb8] sm:$0xff]
    %v7154 = vld [vmem:[#allocation17 + $0xdc0] sm:$0xff]
    %v7155 = vld [vmem:[#allocation17 + $0xdc8] sm:$0xff]
    %v7156 = vld [vmem:[#allocation17 + $0xdd0] sm:$0xff]
    %v7157 = vld [vmem:[#allocation17 + $0xdd8] sm:$0xff]
    %v7158 = vld [vmem:[#allocation17 + $0xde0] sm:$0xff]
    %v7159 = vld [vmem:[#allocation17 + $0xde8] sm:$0xff]
    %v7160 = vld [vmem:[#allocation17 + $0xdf0] sm:$0xff]
    %v7161 = vld [vmem:[#allocation17 + $0xdf8] sm:$0xff]
    %v7162 = vld [vmem:[#allocation17 + $0xe00] sm:$0xff]
    %v7163 = vld [vmem:[#allocation17 + $0xe08] sm:$0xff]
    %v7164 = vld [vmem:[#allocation17 + $0xe10] sm:$0xff]
    %v7165 = vld [vmem:[#allocation17 + $0xe18] sm:$0xff]
    %v7166 = vld [vmem:[#allocation17 + $0xe20] sm:$0xff]
    %v7167 = vld [vmem:[#allocation17 + $0xe28] sm:$0xff]
    %v7168 = vld [vmem:[#allocation17 + $0xe30] sm:$0xff]
    %v7169 = vld [vmem:[#allocation17 + $0xe38] sm:$0xff]
    %v7170 = vld [vmem:[#allocation17 + $0xe40] sm:$0xff]
    %v7171 = vld [vmem:[#allocation17 + $0xe48] sm:$0xff]
    %v7172 = vld [vmem:[#allocation17 + $0xe50] sm:$0xff]
    %v7173 = vld [vmem:[#allocation17 + $0xe58] sm:$0xff]
    %v7174 = vld [vmem:[#allocation17 + $0xe60] sm:$0xff]
    %v7175 = vld [vmem:[#allocation17 + $0xe68] sm:$0xff]
    %v7176 = vld [vmem:[#allocation17 + $0xe70] sm:$0xff]
    %v7177 = vld [vmem:[#allocation17 + $0xe78] sm:$0xff]
    %v7178 = vld [vmem:[#allocation17 + $0xe80] sm:$0xff]
    %v7179 = vld [vmem:[#allocation17 + $0xe88] sm:$0xff]
    %v7180 = vld [vmem:[#allocation17 + $0xe90] sm:$0xff]
    %v7181 = vld [vmem:[#allocation17 + $0xe98] sm:$0xff]
    %v7182 = vld [vmem:[#allocation17 + $0xea0] sm:$0xff]
    %v7183 = vld [vmem:[#allocation17 + $0xea8] sm:$0xff]
    %v7184 = vld [vmem:[#allocation17 + $0xeb0] sm:$0xff]
    %v7185 = vld [vmem:[#allocation17 + $0xeb8] sm:$0xff]
    %v7186 = vld [vmem:[#allocation17 + $0xec0] sm:$0xff]
    %v7187 = vld [vmem:[#allocation17 + $0xec8] sm:$0xff]
    %v7188 = vld [vmem:[#allocation17 + $0xed0] sm:$0xff]
    %v7189 = vld [vmem:[#allocation17 + $0xed8] sm:$0xff]
    %v7190 = vld [vmem:[#allocation17 + $0xee0] sm:$0xff]
    %v7191 = vld [vmem:[#allocation17 + $0xee8] sm:$0xff]
    %v7192 = vld [vmem:[#allocation17 + $0xef0] sm:$0xff]
    %v7193 = vld [vmem:[#allocation17 + $0xef8] sm:$0xff]
    %v7194 = vld [vmem:[#allocation17 + $0xf00] sm:$0xff]
    %v7195 = vld [vmem:[#allocation17 + $0xf08] sm:$0xff]
    %v7196 = vld [vmem:[#allocation17 + $0xf10] sm:$0xff]
    %v7197 = vld [vmem:[#allocation17 + $0xf18] sm:$0xff]
    %v7198 = vld [vmem:[#allocation17 + $0xf20] sm:$0xff]
    %v7199 = vld [vmem:[#allocation17 + $0xf28] sm:$0xff]
    %v7200 = vld [vmem:[#allocation17 + $0xf30] sm:$0xff]
    %v7201 = vld [vmem:[#allocation17 + $0xf38] sm:$0xff]
    %v7202 = vld [vmem:[#allocation17 + $0xf40] sm:$0xff]
    %v7203 = vld [vmem:[#allocation17 + $0xf48] sm:$0xff]
    %v7204 = vld [vmem:[#allocation17 + $0xf50] sm:$0xff]
    %v7205 = vld [vmem:[#allocation17 + $0xf58] sm:$0xff]
    %v7206 = vld [vmem:[#allocation17 + $0xf60] sm:$0xff]
    %v7207 = vld [vmem:[#allocation17 + $0xf68] sm:$0xff]
    %v7208 = vld [vmem:[#allocation17 + $0xf70] sm:$0xff]
    %v7209 = vld [vmem:[#allocation17 + $0xf78] sm:$0xff]
    %v7210 = vld [vmem:[#allocation17 + $0xf80] sm:$0xff]
    %v7211 = vld [vmem:[#allocation17 + $0xf88] sm:$0xff]
    %v7212 = vld [vmem:[#allocation17 + $0xf90] sm:$0xff]
    %v7213 = vld [vmem:[#allocation17 + $0xf98] sm:$0xff]
    %v7214 = vld [vmem:[#allocation17 + $0xfa0] sm:$0xff]
    %v7215 = vld [vmem:[#allocation17 + $0xfa8] sm:$0xff]
    %v7216 = vld [vmem:[#allocation17 + $0xfb0] sm:$0xff]
    %v7217 = vld [vmem:[#allocation17 + $0xfb8] sm:$0xff]
    %v7218 = vld [vmem:[#allocation17 + $0xfc0] sm:$0xff]
    %v7219 = vld [vmem:[#allocation17 + $0xfc8] sm:$0xff]
    %v7220 = vld [vmem:[#allocation17 + $0xfd0] sm:$0xff]
    %v7221 = vld [vmem:[#allocation17 + $0xfd8] sm:$0xff]
    %v7222 = vld [vmem:[#allocation17 + $0xfe0] sm:$0xff]
    %v7223 = vld [vmem:[#allocation17 + $0xfe8] sm:$0xff]
    %v7224 = vld [vmem:[#allocation17 + $0xff0] sm:$0xff]
    %v7225 = vld [vmem:[#allocation17 + $0xff8] sm:$0xff]
    %v7226 = vld [vmem:[#allocation19] sm:$0xff]
    %v7228 = vperm.slane %v7226, 0
    %v7229 = vperm.slane %v7226, 1
    %v7230 = vperm.slane %v7226, 2
    %v7231 = vperm.slane %v7226, 3
    %v7232 = vperm.slane %v7226, 4
    %v7233 = vperm.slane %v7226, 5
    %v7234 = vperm.slane %v7226, 6
    %v7235 = vperm.slane %v7226, 7
    %v7756 = vunpack.c.l.b16 %v6714
    %v7757 = vunpack.c.h.b16 %v6714
    %v7758 = vunpack.c.l.b16 %v6715
    %v7759 = vunpack.c.h.b16 %v6715
    %v7760 = vunpack.c.l.b16 %v6716
    %v7761 = vunpack.c.h.b16 %v6716
    %v7762 = vunpack.c.l.b16 %v6717
    %v7763 = vunpack.c.h.b16 %v6717
    %v7764 = vunpack.c.l.b16 %v6718
    %v7765 = vunpack.c.h.b16 %v6718
    %v7766 = vunpack.c.l.b16 %v6719
    %v7767 = vunpack.c.h.b16 %v6719
    %v7768 = vunpack.c.l.b16 %v6720
    %v7769 = vunpack.c.h.b16 %v6720
    %v7770 = vunpack.c.l.b16 %v6721
    %v7771 = vunpack.c.h.b16 %v6721
    %v7772 = vunpack.c.l.b16 %v6722
    %v7773 = vunpack.c.h.b16 %v6722
    %v7774 = vunpack.c.l.b16 %v6723
    %v7775 = vunpack.c.h.b16 %v6723
    %v7776 = vunpack.c.l.b16 %v6724
    %v7777 = vunpack.c.h.b16 %v6724
    %v7778 = vunpack.c.l.b16 %v6725
    %v7779 = vunpack.c.h.b16 %v6725
    %v7780 = vunpack.c.l.b16 %v6726
    %v7781 = vunpack.c.h.b16 %v6726
    %v7782 = vunpack.c.l.b16 %v6727
    %v7783 = vunpack.c.h.b16 %v6727
    %v7784 = vunpack.c.l.b16 %v6728
    %v7785 = vunpack.c.h.b16 %v6728
    %v7786 = vunpack.c.l.b16 %v6729
    %v7787 = vunpack.c.h.b16 %v6729
    %v7788 = vunpack.c.l.b16 %v6730
    %v7789 = vunpack.c.h.b16 %v6730
    %v7790 = vunpack.c.l.b16 %v6731
    %v7791 = vunpack.c.h.b16 %v6731
    %v7792 = vunpack.c.l.b16 %v6732
    %v7793 = vunpack.c.h.b16 %v6732
    %v7794 = vunpack.c.l.b16 %v6733
    %v7795 = vunpack.c.h.b16 %v6733
    %v7796 = vunpack.c.l.b16 %v6734
    %v7797 = vunpack.c.h.b16 %v6734
    %v7798 = vunpack.c.l.b16 %v6735
    %v7799 = vunpack.c.h.b16 %v6735
    %v7800 = vunpack.c.l.b16 %v6736
    %v7801 = vunpack.c.h.b16 %v6736
    %v7802 = vunpack.c.l.b16 %v6737
    %v7803 = vunpack.c.h.b16 %v6737
    %v7804 = vunpack.c.l.b16 %v6738
    %v7805 = vunpack.c.h.b16 %v6738
    %v7806 = vunpack.c.l.b16 %v6739
    %v7807 = vunpack.c.h.b16 %v6739
    %v7808 = vunpack.c.l.b16 %v6740
    %v7809 = vunpack.c.h.b16 %v6740
    %v7810 = vunpack.c.l.b16 %v6741
    %v7811 = vunpack.c.h.b16 %v6741
    %v7812 = vunpack.c.l.b16 %v6742
    %v7813 = vunpack.c.h.b16 %v6742
    %v7814 = vunpack.c.l.b16 %v6743
    %v7815 = vunpack.c.h.b16 %v6743
    %v7816 = vunpack.c.l.b16 %v6744
    %v7817 = vunpack.c.h.b16 %v6744
    %v7818 = vunpack.c.l.b16 %v6745
    %v7819 = vunpack.c.h.b16 %v6745
    %v7820 = vunpack.c.l.b16 %v6746
    %v7821 = vunpack.c.h.b16 %v6746
    %v7822 = vunpack.c.l.b16 %v6747
    %v7823 = vunpack.c.h.b16 %v6747
    %v7824 = vunpack.c.l.b16 %v6748
    %v7825 = vunpack.c.h.b16 %v6748
    %v7826 = vunpack.c.l.b16 %v6749
    %v7827 = vunpack.c.h.b16 %v6749
    %v7828 = vunpack.c.l.b16 %v6750
    %v7829 = vunpack.c.h.b16 %v6750
    %v7830 = vunpack.c.l.b16 %v6751
    %v7831 = vunpack.c.h.b16 %v6751
    %v7832 = vunpack.c.l.b16 %v6752
    %v7833 = vunpack.c.h.b16 %v6752
    %v7834 = vunpack.c.l.b16 %v6753
    %v7835 = vunpack.c.h.b16 %v6753
    %v7836 = vunpack.c.l.b16 %v6754
    %v7837 = vunpack.c.h.b16 %v6754
    %v7838 = vunpack.c.l.b16 %v6755
    %v7839 = vunpack.c.h.b16 %v6755
    %v7840 = vunpack.c.l.b16 %v6756
    %v7841 = vunpack.c.h.b16 %v6756
    %v7842 = vunpack.c.l.b16 %v6757
    %v7843 = vunpack.c.h.b16 %v6757
    %v7844 = vunpack.c.l.b16 %v6758
    %v7845 = vunpack.c.h.b16 %v6758
    %v7846 = vunpack.c.l.b16 %v6759
    %v7847 = vunpack.c.h.b16 %v6759
    %v7848 = vunpack.c.l.b16 %v6760
    %v7849 = vunpack.c.h.b16 %v6760
    %v7850 = vunpack.c.l.b16 %v6761
    %v7851 = vunpack.c.h.b16 %v6761
    %v7852 = vunpack.c.l.b16 %v6762
    %v7853 = vunpack.c.h.b16 %v6762
    %v7854 = vunpack.c.l.b16 %v6763
    %v7855 = vunpack.c.h.b16 %v6763
    %v7856 = vunpack.c.l.b16 %v6764
    %v7857 = vunpack.c.h.b16 %v6764
    %v7858 = vunpack.c.l.b16 %v6765
    %v7859 = vunpack.c.h.b16 %v6765
    %v7860 = vunpack.c.l.b16 %v6766
    %v7861 = vunpack.c.h.b16 %v6766
    %v7862 = vunpack.c.l.b16 %v6767
    %v7863 = vunpack.c.h.b16 %v6767
    %v7864 = vunpack.c.l.b16 %v6768
    %v7865 = vunpack.c.h.b16 %v6768
    %v7866 = vunpack.c.l.b16 %v6769
    %v7867 = vunpack.c.h.b16 %v6769
    %v7868 = vunpack.c.l.b16 %v6770
    %v7869 = vunpack.c.h.b16 %v6770
    %v7870 = vunpack.c.l.b16 %v6771
    %v7871 = vunpack.c.h.b16 %v6771
    %v7872 = vunpack.c.l.b16 %v6772
    %v7873 = vunpack.c.h.b16 %v6772
    %v7874 = vunpack.c.l.b16 %v6773
    %v7875 = vunpack.c.h.b16 %v6773
    %v7876 = vunpack.c.l.b16 %v6774
    %v7877 = vunpack.c.h.b16 %v6774
    %v7878 = vunpack.c.l.b16 %v6775
    %v7879 = vunpack.c.h.b16 %v6775
    %v7880 = vunpack.c.l.b16 %v6776
    %v7881 = vunpack.c.h.b16 %v6776
    %v7882 = vunpack.c.l.b16 %v6777
    %v7883 = vunpack.c.h.b16 %v6777
    %v7884 = vunpack.c.l.b16 %v6778
    %v7885 = vunpack.c.h.b16 %v6778
    %v7886 = vunpack.c.l.b16 %v6779
    %v7887 = vunpack.c.h.b16 %v6779
    %v7888 = vunpack.c.l.b16 %v6780
    %v7889 = vunpack.c.h.b16 %v6780
    %v7890 = vunpack.c.l.b16 %v6781
    %v7891 = vunpack.c.h.b16 %v6781
    %v7892 = vunpack.c.l.b16 %v6782
    %v7893 = vunpack.c.h.b16 %v6782
    %v7894 = vunpack.c.l.b16 %v6783
    %v7895 = vunpack.c.h.b16 %v6783
    %v7896 = vunpack.c.l.b16 %v6784
    %v7897 = vunpack.c.h.b16 %v6784
    %v7898 = vunpack.c.l.b16 %v6785
    %v7899 = vunpack.c.h.b16 %v6785
    %v7900 = vunpack.c.l.b16 %v6786
    %v7901 = vunpack.c.h.b16 %v6786
    %v7902 = vunpack.c.l.b16 %v6787
    %v7903 = vunpack.c.h.b16 %v6787
    %v7904 = vunpack.c.l.b16 %v6788
    %v7905 = vunpack.c.h.b16 %v6788
    %v7906 = vunpack.c.l.b16 %v6789
    %v7907 = vunpack.c.h.b16 %v6789
    %v7908 = vunpack.c.l.b16 %v6790
    %v7909 = vunpack.c.h.b16 %v6790
    %v7910 = vunpack.c.l.b16 %v6791
    %v7911 = vunpack.c.h.b16 %v6791
    %v7912 = vunpack.c.l.b16 %v6792
    %v7913 = vunpack.c.h.b16 %v6792
    %v7914 = vunpack.c.l.b16 %v6793
    %v7915 = vunpack.c.h.b16 %v6793
    %v7916 = vunpack.c.l.b16 %v6794
    %v7917 = vunpack.c.h.b16 %v6794
    %v7918 = vunpack.c.l.b16 %v6795
    %v7919 = vunpack.c.h.b16 %v6795
    %v7920 = vunpack.c.l.b16 %v6796
    %v7921 = vunpack.c.h.b16 %v6796
    %v7922 = vunpack.c.l.b16 %v6797
    %v7923 = vunpack.c.h.b16 %v6797
    %v7924 = vunpack.c.l.b16 %v6798
    %v7925 = vunpack.c.h.b16 %v6798
    %v7926 = vunpack.c.l.b16 %v6799
    %v7927 = vunpack.c.h.b16 %v6799
    %v7928 = vunpack.c.l.b16 %v6800
    %v7929 = vunpack.c.h.b16 %v6800
    %v7930 = vunpack.c.l.b16 %v6801
    %v7931 = vunpack.c.h.b16 %v6801
    %v7932 = vunpack.c.l.b16 %v6802
    %v7933 = vunpack.c.h.b16 %v6802
    %v7934 = vunpack.c.l.b16 %v6803
    %v7935 = vunpack.c.h.b16 %v6803
    %v7936 = vunpack.c.l.b16 %v6804
    %v7937 = vunpack.c.h.b16 %v6804
    %v7938 = vunpack.c.l.b16 %v6805
    %v7939 = vunpack.c.h.b16 %v6805
    %v7940 = vunpack.c.l.b16 %v6806
    %v7941 = vunpack.c.h.b16 %v6806
    %v7942 = vunpack.c.l.b16 %v6807
    %v7943 = vunpack.c.h.b16 %v6807
    %v7944 = vunpack.c.l.b16 %v6808
    %v7945 = vunpack.c.h.b16 %v6808
    %v7946 = vunpack.c.l.b16 %v6809
    %v7947 = vunpack.c.h.b16 %v6809
    %v7948 = vunpack.c.l.b16 %v6810
    %v7949 = vunpack.c.h.b16 %v6810
    %v7950 = vunpack.c.l.b16 %v6811
    %v7951 = vunpack.c.h.b16 %v6811
    %v7952 = vunpack.c.l.b16 %v6812
    %v7953 = vunpack.c.h.b16 %v6812
    %v7954 = vunpack.c.l.b16 %v6813
    %v7955 = vunpack.c.h.b16 %v6813
    %v7956 = vunpack.c.l.b16 %v6814
    %v7957 = vunpack.c.h.b16 %v6814
    %v7958 = vunpack.c.l.b16 %v6815
    %v7959 = vunpack.c.h.b16 %v6815
    %v7960 = vunpack.c.l.b16 %v6816
    %v7961 = vunpack.c.h.b16 %v6816
    %v7962 = vunpack.c.l.b16 %v6817
    %v7963 = vunpack.c.h.b16 %v6817
    %v7964 = vunpack.c.l.b16 %v6818
    %v7965 = vunpack.c.h.b16 %v6818
    %v7966 = vunpack.c.l.b16 %v6819
    %v7967 = vunpack.c.h.b16 %v6819
    %v7968 = vunpack.c.l.b16 %v6820
    %v7969 = vunpack.c.h.b16 %v6820
    %v7970 = vunpack.c.l.b16 %v6821
    %v7971 = vunpack.c.h.b16 %v6821
    %v7972 = vunpack.c.l.b16 %v6822
    %v7973 = vunpack.c.h.b16 %v6822
    %v7974 = vunpack.c.l.b16 %v6823
    %v7975 = vunpack.c.h.b16 %v6823
    %v7976 = vunpack.c.l.b16 %v6824
    %v7977 = vunpack.c.h.b16 %v6824
    %v7978 = vunpack.c.l.b16 %v6825
    %v7979 = vunpack.c.h.b16 %v6825
    %v7980 = vunpack.c.l.b16 %v6826
    %v7981 = vunpack.c.h.b16 %v6826
    %v7982 = vunpack.c.l.b16 %v6827
    %v7983 = vunpack.c.h.b16 %v6827
    %v7984 = vunpack.c.l.b16 %v6828
    %v7985 = vunpack.c.h.b16 %v6828
    %v7986 = vunpack.c.l.b16 %v6829
    %v7987 = vunpack.c.h.b16 %v6829
    %v7988 = vunpack.c.l.b16 %v6830
    %v7989 = vunpack.c.h.b16 %v6830
    %v7990 = vunpack.c.l.b16 %v6831
    %v7991 = vunpack.c.h.b16 %v6831
    %v7992 = vunpack.c.l.b16 %v6832
    %v7993 = vunpack.c.h.b16 %v6832
    %v7994 = vunpack.c.l.b16 %v6833
    %v7995 = vunpack.c.h.b16 %v6833
    %v7996 = vunpack.c.l.b16 %v6834
    %v7997 = vunpack.c.h.b16 %v6834
    %v7998 = vunpack.c.l.b16 %v6835
    %v7999 = vunpack.c.h.b16 %v6835
    %v8000 = vunpack.c.l.b16 %v6836
    %v8001 = vunpack.c.h.b16 %v6836
    %v8002 = vunpack.c.l.b16 %v6837
    %v8003 = vunpack.c.h.b16 %v6837
    %v8004 = vunpack.c.l.b16 %v6838
    %v8005 = vunpack.c.h.b16 %v6838
    %v8006 = vunpack.c.l.b16 %v6839
    %v8007 = vunpack.c.h.b16 %v6839
    %v8008 = vunpack.c.l.b16 %v6840
    %v8009 = vunpack.c.h.b16 %v6840
    %v8010 = vunpack.c.l.b16 %v6841
    %v8011 = vunpack.c.h.b16 %v6841
    %v8012 = vunpack.c.l.b16 %v6842
    %v8013 = vunpack.c.h.b16 %v6842
    %v8014 = vunpack.c.l.b16 %v6843
    %v8015 = vunpack.c.h.b16 %v6843
    %v8016 = vunpack.c.l.b16 %v6844
    %v8017 = vunpack.c.h.b16 %v6844
    %v8018 = vunpack.c.l.b16 %v6845
    %v8019 = vunpack.c.h.b16 %v6845
    %v8020 = vunpack.c.l.b16 %v6846
    %v8021 = vunpack.c.h.b16 %v6846
    %v8022 = vunpack.c.l.b16 %v6847
    %v8023 = vunpack.c.h.b16 %v6847
    %v8024 = vunpack.c.l.b16 %v6848
    %v8025 = vunpack.c.h.b16 %v6848
    %v8026 = vunpack.c.l.b16 %v6849
    %v8027 = vunpack.c.h.b16 %v6849
    %v8028 = vunpack.c.l.b16 %v6850
    %v8029 = vunpack.c.h.b16 %v6850
    %v8030 = vunpack.c.l.b16 %v6851
    %v8031 = vunpack.c.h.b16 %v6851
    %v8032 = vunpack.c.l.b16 %v6852
    %v8033 = vunpack.c.h.b16 %v6852
    %v8034 = vunpack.c.l.b16 %v6853
    %v8035 = vunpack.c.h.b16 %v6853
    %v8036 = vunpack.c.l.b16 %v6854
    %v8037 = vunpack.c.h.b16 %v6854
    %v8038 = vunpack.c.l.b16 %v6855
    %v8039 = vunpack.c.h.b16 %v6855
    %v8040 = vunpack.c.l.b16 %v6856
    %v8041 = vunpack.c.h.b16 %v6856
    %v8042 = vunpack.c.l.b16 %v6857
    %v8043 = vunpack.c.h.b16 %v6857
    %v8044 = vunpack.c.l.b16 %v6858
    %v8045 = vunpack.c.h.b16 %v6858
    %v8046 = vunpack.c.l.b16 %v6859
    %v8047 = vunpack.c.h.b16 %v6859
    %v8048 = vunpack.c.l.b16 %v6860
    %v8049 = vunpack.c.h.b16 %v6860
    %v8050 = vunpack.c.l.b16 %v6861
    %v8051 = vunpack.c.h.b16 %v6861
    %v8052 = vunpack.c.l.b16 %v6862
    %v8053 = vunpack.c.h.b16 %v6862
    %v8054 = vunpack.c.l.b16 %v6863
    %v8055 = vunpack.c.h.b16 %v6863
    %v8056 = vunpack.c.l.b16 %v6864
    %v8057 = vunpack.c.h.b16 %v6864
    %v8058 = vunpack.c.l.b16 %v6865
    %v8059 = vunpack.c.h.b16 %v6865
    %v8060 = vunpack.c.l.b16 %v6866
    %v8061 = vunpack.c.h.b16 %v6866
    %v8062 = vunpack.c.l.b16 %v6867
    %v8063 = vunpack.c.h.b16 %v6867
    %v8064 = vunpack.c.l.b16 %v6868
    %v8065 = vunpack.c.h.b16 %v6868
    %v8066 = vunpack.c.l.b16 %v6869
    %v8067 = vunpack.c.h.b16 %v6869
    %v8068 = vunpack.c.l.b16 %v6870
    %v8069 = vunpack.c.h.b16 %v6870
    %v8070 = vunpack.c.l.b16 %v6871
    %v8071 = vunpack.c.h.b16 %v6871
    %v8072 = vunpack.c.l.b16 %v6872
    %v8073 = vunpack.c.h.b16 %v6872
    %v8074 = vunpack.c.l.b16 %v6873
    %v8075 = vunpack.c.h.b16 %v6873
    %v8076 = vunpack.c.l.b16 %v6874
    %v8077 = vunpack.c.h.b16 %v6874
    %v8078 = vunpack.c.l.b16 %v6875
    %v8079 = vunpack.c.h.b16 %v6875
    %v8080 = vunpack.c.l.b16 %v6876
    %v8081 = vunpack.c.h.b16 %v6876
    %v8082 = vunpack.c.l.b16 %v6877
    %v8083 = vunpack.c.h.b16 %v6877
    %v8084 = vunpack.c.l.b16 %v6878
    %v8085 = vunpack.c.h.b16 %v6878
    %v8086 = vunpack.c.l.b16 %v6879
    %v8087 = vunpack.c.h.b16 %v6879
    %v8088 = vunpack.c.l.b16 %v6880
    %v8089 = vunpack.c.h.b16 %v6880
    %v8090 = vunpack.c.l.b16 %v6881
    %v8091 = vunpack.c.h.b16 %v6881
    %v8092 = vunpack.c.l.b16 %v6882
    %v8093 = vunpack.c.h.b16 %v6882
    %v8094 = vunpack.c.l.b16 %v6883
    %v8095 = vunpack.c.h.b16 %v6883
    %v8096 = vunpack.c.l.b16 %v6884
    %v8097 = vunpack.c.h.b16 %v6884
    %v8098 = vunpack.c.l.b16 %v6885
    %v8099 = vunpack.c.h.b16 %v6885
    %v8100 = vunpack.c.l.b16 %v6886
    %v8101 = vunpack.c.h.b16 %v6886
    %v8102 = vunpack.c.l.b16 %v6887
    %v8103 = vunpack.c.h.b16 %v6887
    %v8104 = vunpack.c.l.b16 %v6888
    %v8105 = vunpack.c.h.b16 %v6888
    %v8106 = vunpack.c.l.b16 %v6889
    %v8107 = vunpack.c.h.b16 %v6889
    %v8108 = vunpack.c.l.b16 %v6890
    %v8109 = vunpack.c.h.b16 %v6890
    %v8110 = vunpack.c.l.b16 %v6891
    %v8111 = vunpack.c.h.b16 %v6891
    %v8112 = vunpack.c.l.b16 %v6892
    %v8113 = vunpack.c.h.b16 %v6892
    %v8114 = vunpack.c.l.b16 %v6893
    %v8115 = vunpack.c.h.b16 %v6893
    %v8116 = vunpack.c.l.b16 %v6894
    %v8117 = vunpack.c.h.b16 %v6894
    %v8118 = vunpack.c.l.b16 %v6895
    %v8119 = vunpack.c.h.b16 %v6895
    %v8120 = vunpack.c.l.b16 %v6896
    %v8121 = vunpack.c.h.b16 %v6896
    %v8122 = vunpack.c.l.b16 %v6897
    %v8123 = vunpack.c.h.b16 %v6897
    %v8124 = vunpack.c.l.b16 %v6898
    %v8125 = vunpack.c.h.b16 %v6898
    %v8126 = vunpack.c.l.b16 %v6899
    %v8127 = vunpack.c.h.b16 %v6899
    %v8128 = vunpack.c.l.b16 %v6900
    %v8129 = vunpack.c.h.b16 %v6900
    %v8130 = vunpack.c.l.b16 %v6901
    %v8131 = vunpack.c.h.b16 %v6901
    %v8132 = vunpack.c.l.b16 %v6902
    %v8133 = vunpack.c.h.b16 %v6902
    %v8134 = vunpack.c.l.b16 %v6903
    %v8135 = vunpack.c.h.b16 %v6903
    %v8136 = vunpack.c.l.b16 %v6904
    %v8137 = vunpack.c.h.b16 %v6904
    %v8138 = vunpack.c.l.b16 %v6905
    %v8139 = vunpack.c.h.b16 %v6905
    %v8140 = vunpack.c.l.b16 %v6906
    %v8141 = vunpack.c.h.b16 %v6906
    %v8142 = vunpack.c.l.b16 %v6907
    %v8143 = vunpack.c.h.b16 %v6907
    %v8144 = vunpack.c.l.b16 %v6908
    %v8145 = vunpack.c.h.b16 %v6908
    %v8146 = vunpack.c.l.b16 %v6909
    %v8147 = vunpack.c.h.b16 %v6909
    %v8148 = vunpack.c.l.b16 %v6910
    %v8149 = vunpack.c.h.b16 %v6910
    %v8150 = vunpack.c.l.b16 %v6911
    %v8151 = vunpack.c.h.b16 %v6911
    %v8152 = vunpack.c.l.b16 %v6912
    %v8153 = vunpack.c.h.b16 %v6912
    %v8154 = vunpack.c.l.b16 %v6913
    %v8155 = vunpack.c.h.b16 %v6913
    %v8156 = vunpack.c.l.b16 %v6914
    %v8157 = vunpack.c.h.b16 %v6914
    %v8158 = vunpack.c.l.b16 %v6915
    %v8159 = vunpack.c.h.b16 %v6915
    %v8160 = vunpack.c.l.b16 %v6916
    %v8161 = vunpack.c.h.b16 %v6916
    %v8162 = vunpack.c.l.b16 %v6917
    %v8163 = vunpack.c.h.b16 %v6917
    %v8164 = vunpack.c.l.b16 %v6918
    %v8165 = vunpack.c.h.b16 %v6918
    %v8166 = vunpack.c.l.b16 %v6919
    %v8167 = vunpack.c.h.b16 %v6919
    %v8168 = vunpack.c.l.b16 %v6920
    %v8169 = vunpack.c.h.b16 %v6920
    %v8170 = vunpack.c.l.b16 %v6921
    %v8171 = vunpack.c.h.b16 %v6921
    %v8172 = vunpack.c.l.b16 %v6922
    %v8173 = vunpack.c.h.b16 %v6922
    %v8174 = vunpack.c.l.b16 %v6923
    %v8175 = vunpack.c.h.b16 %v6923
    %v8176 = vunpack.c.l.b16 %v6924
    %v8177 = vunpack.c.h.b16 %v6924
    %v8178 = vunpack.c.l.b16 %v6925
    %v8179 = vunpack.c.h.b16 %v6925
    %v8180 = vunpack.c.l.b16 %v6926
    %v8181 = vunpack.c.h.b16 %v6926
    %v8182 = vunpack.c.l.b16 %v6927
    %v8183 = vunpack.c.h.b16 %v6927
    %v8184 = vunpack.c.l.b16 %v6928
    %v8185 = vunpack.c.h.b16 %v6928
    %v8186 = vunpack.c.l.b16 %v6929
    %v8187 = vunpack.c.h.b16 %v6929
    %v8188 = vunpack.c.l.b16 %v6930
    %v8189 = vunpack.c.h.b16 %v6930
    %v8190 = vunpack.c.l.b16 %v6931
    %v8191 = vunpack.c.h.b16 %v6931
    %v8192 = vunpack.c.l.b16 %v6932
    %v8193 = vunpack.c.h.b16 %v6932
    %v8194 = vunpack.c.l.b16 %v6933
    %v8195 = vunpack.c.h.b16 %v6933
    %v8196 = vunpack.c.l.b16 %v6934
    %v8197 = vunpack.c.h.b16 %v6934
    %v8198 = vunpack.c.l.b16 %v6935
    %v8199 = vunpack.c.h.b16 %v6935
    %v8200 = vunpack.c.l.b16 %v6936
    %v8201 = vunpack.c.h.b16 %v6936
    %v8202 = vunpack.c.l.b16 %v6937
    %v8203 = vunpack.c.h.b16 %v6937
    %v8204 = vunpack.c.l.b16 %v6938
    %v8205 = vunpack.c.h.b16 %v6938
    %v8206 = vunpack.c.l.b16 %v6939
    %v8207 = vunpack.c.h.b16 %v6939
    %v8208 = vunpack.c.l.b16 %v6940
    %v8209 = vunpack.c.h.b16 %v6940
    %v8210 = vunpack.c.l.b16 %v6941
    %v8211 = vunpack.c.h.b16 %v6941
    %v8212 = vunpack.c.l.b16 %v6942
    %v8213 = vunpack.c.h.b16 %v6942
    %v8214 = vunpack.c.l.b16 %v6943
    %v8215 = vunpack.c.h.b16 %v6943
    %v8216 = vunpack.c.l.b16 %v6944
    %v8217 = vunpack.c.h.b16 %v6944
    %v8218 = vunpack.c.l.b16 %v6945
    %v8219 = vunpack.c.h.b16 %v6945
    %v8220 = vunpack.c.l.b16 %v6946
    %v8221 = vunpack.c.h.b16 %v6946
    %v8222 = vunpack.c.l.b16 %v6947
    %v8223 = vunpack.c.h.b16 %v6947
    %v8224 = vunpack.c.l.b16 %v6948
    %v8225 = vunpack.c.h.b16 %v6948
    %v8226 = vunpack.c.l.b16 %v6949
    %v8227 = vunpack.c.h.b16 %v6949
    %v8228 = vunpack.c.l.b16 %v6950
    %v8229 = vunpack.c.h.b16 %v6950
    %v8230 = vunpack.c.l.b16 %v6951
    %v8231 = vunpack.c.h.b16 %v6951
    %v8232 = vunpack.c.l.b16 %v6952
    %v8233 = vunpack.c.h.b16 %v6952
    %v8234 = vunpack.c.l.b16 %v6953
    %v8235 = vunpack.c.h.b16 %v6953
    %v8236 = vunpack.c.l.b16 %v6954
    %v8237 = vunpack.c.h.b16 %v6954
    %v8238 = vunpack.c.l.b16 %v6955
    %v8239 = vunpack.c.h.b16 %v6955
    %v8240 = vunpack.c.l.b16 %v6956
    %v8241 = vunpack.c.h.b16 %v6956
    %v8242 = vunpack.c.l.b16 %v6957
    %v8243 = vunpack.c.h.b16 %v6957
    %v8244 = vunpack.c.l.b16 %v6958
    %v8245 = vunpack.c.h.b16 %v6958
    %v8246 = vunpack.c.l.b16 %v6959
    %v8247 = vunpack.c.h.b16 %v6959
    %v8248 = vunpack.c.l.b16 %v6960
    %v8249 = vunpack.c.h.b16 %v6960
    %v8250 = vunpack.c.l.b16 %v6961
    %v8251 = vunpack.c.h.b16 %v6961
    %v8252 = vunpack.c.l.b16 %v6962
    %v8253 = vunpack.c.h.b16 %v6962
    %v8254 = vunpack.c.l.b16 %v6963
    %v8255 = vunpack.c.h.b16 %v6963
    %v8256 = vunpack.c.l.b16 %v6964
    %v8257 = vunpack.c.h.b16 %v6964
    %v8258 = vunpack.c.l.b16 %v6965
    %v8259 = vunpack.c.h.b16 %v6965
    %v8260 = vunpack.c.l.b16 %v6966
    %v8261 = vunpack.c.h.b16 %v6966
    %v8262 = vunpack.c.l.b16 %v6967
    %v8263 = vunpack.c.h.b16 %v6967
    %v8264 = vunpack.c.l.b16 %v6968
    %v8265 = vunpack.c.h.b16 %v6968
    %v8266 = vunpack.c.l.b16 %v6969
    %v8267 = vunpack.c.h.b16 %v6969
    %v8268 = vunpack.c.l.b16 %v6970
    %v8269 = vunpack.c.h.b16 %v6970
    %v8270 = vunpack.c.l.b16 %v6971
    %v8271 = vunpack.c.h.b16 %v6971
    %v8272 = vunpack.c.l.b16 %v6972
    %v8273 = vunpack.c.h.b16 %v6972
    %v8274 = vunpack.c.l.b16 %v6973
    %v8275 = vunpack.c.h.b16 %v6973
    %v8276 = vunpack.c.l.b16 %v6974
    %v8277 = vunpack.c.h.b16 %v6974
    %v8278 = vunpack.c.l.b16 %v6975
    %v8279 = vunpack.c.h.b16 %v6975
    %v8280 = vunpack.c.l.b16 %v6976
    %v8281 = vunpack.c.h.b16 %v6976
    %v8282 = vunpack.c.l.b16 %v6977
    %v8283 = vunpack.c.h.b16 %v6977
    %v8284 = vunpack.c.l.b16 %v6978
    %v8285 = vunpack.c.h.b16 %v6978
    %v8286 = vunpack.c.l.b16 %v6979
    %v8287 = vunpack.c.h.b16 %v6979
    %v8288 = vunpack.c.l.b16 %v6980
    %v8289 = vunpack.c.h.b16 %v6980
    %v8290 = vunpack.c.l.b16 %v6981
    %v8291 = vunpack.c.h.b16 %v6981
    %v8292 = vunpack.c.l.b16 %v6982
    %v8293 = vunpack.c.h.b16 %v6982
    %v8294 = vunpack.c.l.b16 %v6983
    %v8295 = vunpack.c.h.b16 %v6983
    %v8296 = vunpack.c.l.b16 %v6984
    %v8297 = vunpack.c.h.b16 %v6984
    %v8298 = vunpack.c.l.b16 %v6985
    %v8299 = vunpack.c.h.b16 %v6985
    %v8300 = vunpack.c.l.b16 %v6986
    %v8301 = vunpack.c.h.b16 %v6986
    %v8302 = vunpack.c.l.b16 %v6987
    %v8303 = vunpack.c.h.b16 %v6987
    %v8304 = vunpack.c.l.b16 %v6988
    %v8305 = vunpack.c.h.b16 %v6988
    %v8306 = vunpack.c.l.b16 %v6989
    %v8307 = vunpack.c.h.b16 %v6989
    %v8308 = vunpack.c.l.b16 %v6990
    %v8309 = vunpack.c.h.b16 %v6990
    %v8310 = vunpack.c.l.b16 %v6991
    %v8311 = vunpack.c.h.b16 %v6991
    %v8312 = vunpack.c.l.b16 %v6992
    %v8313 = vunpack.c.h.b16 %v6992
    %v8314 = vunpack.c.l.b16 %v6993
    %v8315 = vunpack.c.h.b16 %v6993
    %v8316 = vunpack.c.l.b16 %v6994
    %v8317 = vunpack.c.h.b16 %v6994
    %v8318 = vunpack.c.l.b16 %v6995
    %v8319 = vunpack.c.h.b16 %v6995
    %v8320 = vunpack.c.l.b16 %v6996
    %v8321 = vunpack.c.h.b16 %v6996
    %v8322 = vunpack.c.l.b16 %v6997
    %v8323 = vunpack.c.h.b16 %v6997
    %v8324 = vunpack.c.l.b16 %v6998
    %v8325 = vunpack.c.h.b16 %v6998
    %v8326 = vunpack.c.l.b16 %v6999
    %v8327 = vunpack.c.h.b16 %v6999
    %v8328 = vunpack.c.l.b16 %v7000
    %v8329 = vunpack.c.h.b16 %v7000
    %v8330 = vunpack.c.l.b16 %v7001
    %v8331 = vunpack.c.h.b16 %v7001
    %v8332 = vunpack.c.l.b16 %v7002
    %v8333 = vunpack.c.h.b16 %v7002
    %v8334 = vunpack.c.l.b16 %v7003
    %v8335 = vunpack.c.h.b16 %v7003
    %v8336 = vunpack.c.l.b16 %v7004
    %v8337 = vunpack.c.h.b16 %v7004
    %v8338 = vunpack.c.l.b16 %v7005
    %v8339 = vunpack.c.h.b16 %v7005
    %v8340 = vunpack.c.l.b16 %v7006
    %v8341 = vunpack.c.h.b16 %v7006
    %v8342 = vunpack.c.l.b16 %v7007
    %v8343 = vunpack.c.h.b16 %v7007
    %v8344 = vunpack.c.l.b16 %v7008
    %v8345 = vunpack.c.h.b16 %v7008
    %v8346 = vunpack.c.l.b16 %v7009
    %v8347 = vunpack.c.h.b16 %v7009
    %v8348 = vunpack.c.l.b16 %v7010
    %v8349 = vunpack.c.h.b16 %v7010
    %v8350 = vunpack.c.l.b16 %v7011
    %v8351 = vunpack.c.h.b16 %v7011
    %v8352 = vunpack.c.l.b16 %v7012
    %v8353 = vunpack.c.h.b16 %v7012
    %v8354 = vunpack.c.l.b16 %v7013
    %v8355 = vunpack.c.h.b16 %v7013
    %v8356 = vunpack.c.l.b16 %v7014
    %v8357 = vunpack.c.h.b16 %v7014
    %v8358 = vunpack.c.l.b16 %v7015
    %v8359 = vunpack.c.h.b16 %v7015
    %v8360 = vunpack.c.l.b16 %v7016
    %v8361 = vunpack.c.h.b16 %v7016
    %v8362 = vunpack.c.l.b16 %v7017
    %v8363 = vunpack.c.h.b16 %v7017
    %v8364 = vunpack.c.l.b16 %v7018
    %v8365 = vunpack.c.h.b16 %v7018
    %v8366 = vunpack.c.l.b16 %v7019
    %v8367 = vunpack.c.h.b16 %v7019
    %v8368 = vunpack.c.l.b16 %v7020
    %v8369 = vunpack.c.h.b16 %v7020
    %v8370 = vunpack.c.l.b16 %v7021
    %v8371 = vunpack.c.h.b16 %v7021
    %v8372 = vunpack.c.l.b16 %v7022
    %v8373 = vunpack.c.h.b16 %v7022
    %v8374 = vunpack.c.l.b16 %v7023
    %v8375 = vunpack.c.h.b16 %v7023
    %v8376 = vunpack.c.l.b16 %v7024
    %v8377 = vunpack.c.h.b16 %v7024
    %v8378 = vunpack.c.l.b16 %v7025
    %v8379 = vunpack.c.h.b16 %v7025
    %v8380 = vunpack.c.l.b16 %v7026
    %v8381 = vunpack.c.h.b16 %v7026
    %v8382 = vunpack.c.l.b16 %v7027
    %v8383 = vunpack.c.h.b16 %v7027
    %v8384 = vunpack.c.l.b16 %v7028
    %v8385 = vunpack.c.h.b16 %v7028
    %v8386 = vunpack.c.l.b16 %v7029
    %v8387 = vunpack.c.h.b16 %v7029
    %v8388 = vunpack.c.l.b16 %v7030
    %v8389 = vunpack.c.h.b16 %v7030
    %v8390 = vunpack.c.l.b16 %v7031
    %v8391 = vunpack.c.h.b16 %v7031
    %v8392 = vunpack.c.l.b16 %v7032
    %v8393 = vunpack.c.h.b16 %v7032
    %v8394 = vunpack.c.l.b16 %v7033
    %v8395 = vunpack.c.h.b16 %v7033
    %v8396 = vunpack.c.l.b16 %v7034
    %v8397 = vunpack.c.h.b16 %v7034
    %v8398 = vunpack.c.l.b16 %v7035
    %v8399 = vunpack.c.h.b16 %v7035
    %v8400 = vunpack.c.l.b16 %v7036
    %v8401 = vunpack.c.h.b16 %v7036
    %v8402 = vunpack.c.l.b16 %v7037
    %v8403 = vunpack.c.h.b16 %v7037
    %v8404 = vunpack.c.l.b16 %v7038
    %v8405 = vunpack.c.h.b16 %v7038
    %v8406 = vunpack.c.l.b16 %v7039
    %v8407 = vunpack.c.h.b16 %v7039
    %v8408 = vunpack.c.l.b16 %v7040
    %v8409 = vunpack.c.h.b16 %v7040
    %v8410 = vunpack.c.l.b16 %v7041
    %v8411 = vunpack.c.h.b16 %v7041
    %v8412 = vunpack.c.l.b16 %v7042
    %v8413 = vunpack.c.h.b16 %v7042
    %v8414 = vunpack.c.l.b16 %v7043
    %v8415 = vunpack.c.h.b16 %v7043
    %v8416 = vunpack.c.l.b16 %v7044
    %v8417 = vunpack.c.h.b16 %v7044
    %v8418 = vunpack.c.l.b16 %v7045
    %v8419 = vunpack.c.h.b16 %v7045
    %v8420 = vunpack.c.l.b16 %v7046
    %v8421 = vunpack.c.h.b16 %v7046
    %v8422 = vunpack.c.l.b16 %v7047
    %v8423 = vunpack.c.h.b16 %v7047
    %v8424 = vunpack.c.l.b16 %v7048
    %v8425 = vunpack.c.h.b16 %v7048
    %v8426 = vunpack.c.l.b16 %v7049
    %v8427 = vunpack.c.h.b16 %v7049
    %v8428 = vunpack.c.l.b16 %v7050
    %v8429 = vunpack.c.h.b16 %v7050
    %v8430 = vunpack.c.l.b16 %v7051
    %v8431 = vunpack.c.h.b16 %v7051
    %v8432 = vunpack.c.l.b16 %v7052
    %v8433 = vunpack.c.h.b16 %v7052
    %v8434 = vunpack.c.l.b16 %v7053
    %v8435 = vunpack.c.h.b16 %v7053
    %v8436 = vunpack.c.l.b16 %v7054
    %v8437 = vunpack.c.h.b16 %v7054
    %v8438 = vunpack.c.l.b16 %v7055
    %v8439 = vunpack.c.h.b16 %v7055
    %v8440 = vunpack.c.l.b16 %v7056
    %v8441 = vunpack.c.h.b16 %v7056
    %v8442 = vunpack.c.l.b16 %v7057
    %v8443 = vunpack.c.h.b16 %v7057
    %v8444 = vunpack.c.l.b16 %v7058
    %v8445 = vunpack.c.h.b16 %v7058
    %v8446 = vunpack.c.l.b16 %v7059
    %v8447 = vunpack.c.h.b16 %v7059
    %v8448 = vunpack.c.l.b16 %v7060
    %v8449 = vunpack.c.h.b16 %v7060
    %v8450 = vunpack.c.l.b16 %v7061
    %v8451 = vunpack.c.h.b16 %v7061
    %v8452 = vunpack.c.l.b16 %v7062
    %v8453 = vunpack.c.h.b16 %v7062
    %v8454 = vunpack.c.l.b16 %v7063
    %v8455 = vunpack.c.h.b16 %v7063
    %v8456 = vunpack.c.l.b16 %v7064
    %v8457 = vunpack.c.h.b16 %v7064
    %v8458 = vunpack.c.l.b16 %v7065
    %v8459 = vunpack.c.h.b16 %v7065
    %v8460 = vunpack.c.l.b16 %v7066
    %v8461 = vunpack.c.h.b16 %v7066
    %v8462 = vunpack.c.l.b16 %v7067
    %v8463 = vunpack.c.h.b16 %v7067
    %v8464 = vunpack.c.l.b16 %v7068
    %v8465 = vunpack.c.h.b16 %v7068
    %v8466 = vunpack.c.l.b16 %v7069
    %v8467 = vunpack.c.h.b16 %v7069
    %v8468 = vunpack.c.l.b16 %v7070
    %v8469 = vunpack.c.h.b16 %v7070
    %v8470 = vunpack.c.l.b16 %v7071
    %v8471 = vunpack.c.h.b16 %v7071
    %v8472 = vunpack.c.l.b16 %v7072
    %v8473 = vunpack.c.h.b16 %v7072
    %v8474 = vunpack.c.l.b16 %v7073
    %v8475 = vunpack.c.h.b16 %v7073
    %v8476 = vunpack.c.l.b16 %v7074
    %v8477 = vunpack.c.h.b16 %v7074
    %v8478 = vunpack.c.l.b16 %v7075
    %v8479 = vunpack.c.h.b16 %v7075
    %v8480 = vunpack.c.l.b16 %v7076
    %v8481 = vunpack.c.h.b16 %v7076
    %v8482 = vunpack.c.l.b16 %v7077
    %v8483 = vunpack.c.h.b16 %v7077
    %v8484 = vunpack.c.l.b16 %v7078
    %v8485 = vunpack.c.h.b16 %v7078
    %v8486 = vunpack.c.l.b16 %v7079
    %v8487 = vunpack.c.h.b16 %v7079
    %v8488 = vunpack.c.l.b16 %v7080
    %v8489 = vunpack.c.h.b16 %v7080
    %v8490 = vunpack.c.l.b16 %v7081
    %v8491 = vunpack.c.h.b16 %v7081
    %v8492 = vunpack.c.l.b16 %v7082
    %v8493 = vunpack.c.h.b16 %v7082
    %v8494 = vunpack.c.l.b16 %v7083
    %v8495 = vunpack.c.h.b16 %v7083
    %v8496 = vunpack.c.l.b16 %v7084
    %v8497 = vunpack.c.h.b16 %v7084
    %v8498 = vunpack.c.l.b16 %v7085
    %v8499 = vunpack.c.h.b16 %v7085
    %v8500 = vunpack.c.l.b16 %v7086
    %v8501 = vunpack.c.h.b16 %v7086
    %v8502 = vunpack.c.l.b16 %v7087
    %v8503 = vunpack.c.h.b16 %v7087
    %v8504 = vunpack.c.l.b16 %v7088
    %v8505 = vunpack.c.h.b16 %v7088
    %v8506 = vunpack.c.l.b16 %v7089
    %v8507 = vunpack.c.h.b16 %v7089
    %v8508 = vunpack.c.l.b16 %v7090
    %v8509 = vunpack.c.h.b16 %v7090
    %v8510 = vunpack.c.l.b16 %v7091
    %v8511 = vunpack.c.h.b16 %v7091
    %v8512 = vunpack.c.l.b16 %v7092
    %v8513 = vunpack.c.h.b16 %v7092
    %v8514 = vunpack.c.l.b16 %v7093
    %v8515 = vunpack.c.h.b16 %v7093
    %v8516 = vunpack.c.l.b16 %v7094
    %v8517 = vunpack.c.h.b16 %v7094
    %v8518 = vunpack.c.l.b16 %v7095
    %v8519 = vunpack.c.h.b16 %v7095
    %v8520 = vunpack.c.l.b16 %v7096
    %v8521 = vunpack.c.h.b16 %v7096
    %v8522 = vunpack.c.l.b16 %v7097
    %v8523 = vunpack.c.h.b16 %v7097
    %v8524 = vunpack.c.l.b16 %v7098
    %v8525 = vunpack.c.h.b16 %v7098
    %v8526 = vunpack.c.l.b16 %v7099
    %v8527 = vunpack.c.h.b16 %v7099
    %v8528 = vunpack.c.l.b16 %v7100
    %v8529 = vunpack.c.h.b16 %v7100
    %v8530 = vunpack.c.l.b16 %v7101
    %v8531 = vunpack.c.h.b16 %v7101
    %v8532 = vunpack.c.l.b16 %v7102
    %v8533 = vunpack.c.h.b16 %v7102
    %v8534 = vunpack.c.l.b16 %v7103
    %v8535 = vunpack.c.h.b16 %v7103
    %v8536 = vunpack.c.l.b16 %v7104
    %v8537 = vunpack.c.h.b16 %v7104
    %v8538 = vunpack.c.l.b16 %v7105
    %v8539 = vunpack.c.h.b16 %v7105
    %v8540 = vunpack.c.l.b16 %v7106
    %v8541 = vunpack.c.h.b16 %v7106
    %v8542 = vunpack.c.l.b16 %v7107
    %v8543 = vunpack.c.h.b16 %v7107
    %v8544 = vunpack.c.l.b16 %v7108
    %v8545 = vunpack.c.h.b16 %v7108
    %v8546 = vunpack.c.l.b16 %v7109
    %v8547 = vunpack.c.h.b16 %v7109
    %v8548 = vunpack.c.l.b16 %v7110
    %v8549 = vunpack.c.h.b16 %v7110
    %v8550 = vunpack.c.l.b16 %v7111
    %v8551 = vunpack.c.h.b16 %v7111
    %v8552 = vunpack.c.l.b16 %v7112
    %v8553 = vunpack.c.h.b16 %v7112
    %v8554 = vunpack.c.l.b16 %v7113
    %v8555 = vunpack.c.h.b16 %v7113
    %v8556 = vunpack.c.l.b16 %v7114
    %v8557 = vunpack.c.h.b16 %v7114
    %v8558 = vunpack.c.l.b16 %v7115
    %v8559 = vunpack.c.h.b16 %v7115
    %v8560 = vunpack.c.l.b16 %v7116
    %v8561 = vunpack.c.h.b16 %v7116
    %v8562 = vunpack.c.l.b16 %v7117
    %v8563 = vunpack.c.h.b16 %v7117
    %v8564 = vunpack.c.l.b16 %v7118
    %v8565 = vunpack.c.h.b16 %v7118
    %v8566 = vunpack.c.l.b16 %v7119
    %v8567 = vunpack.c.h.b16 %v7119
    %v8568 = vunpack.c.l.b16 %v7120
    %v8569 = vunpack.c.h.b16 %v7120
    %v8570 = vunpack.c.l.b16 %v7121
    %v8571 = vunpack.c.h.b16 %v7121
    %v8572 = vunpack.c.l.b16 %v7122
    %v8573 = vunpack.c.h.b16 %v7122
    %v8574 = vunpack.c.l.b16 %v7123
    %v8575 = vunpack.c.h.b16 %v7123
    %v8576 = vunpack.c.l.b16 %v7124
    %v8577 = vunpack.c.h.b16 %v7124
    %v8578 = vunpack.c.l.b16 %v7125
    %v8579 = vunpack.c.h.b16 %v7125
    %v8580 = vunpack.c.l.b16 %v7126
    %v8581 = vunpack.c.h.b16 %v7126
    %v8582 = vunpack.c.l.b16 %v7127
    %v8583 = vunpack.c.h.b16 %v7127
    %v8584 = vunpack.c.l.b16 %v7128
    %v8585 = vunpack.c.h.b16 %v7128
    %v8586 = vunpack.c.l.b16 %v7129
    %v8587 = vunpack.c.h.b16 %v7129
    %v8588 = vunpack.c.l.b16 %v7130
    %v8589 = vunpack.c.h.b16 %v7130
    %v8590 = vunpack.c.l.b16 %v7131
    %v8591 = vunpack.c.h.b16 %v7131
    %v8592 = vunpack.c.l.b16 %v7132
    %v8593 = vunpack.c.h.b16 %v7132
    %v8594 = vunpack.c.l.b16 %v7133
    %v8595 = vunpack.c.h.b16 %v7133
    %v8596 = vunpack.c.l.b16 %v7134
    %v8597 = vunpack.c.h.b16 %v7134
    %v8598 = vunpack.c.l.b16 %v7135
    %v8599 = vunpack.c.h.b16 %v7135
    %v8600 = vunpack.c.l.b16 %v7136
    %v8601 = vunpack.c.h.b16 %v7136
    %v8602 = vunpack.c.l.b16 %v7137
    %v8603 = vunpack.c.h.b16 %v7137
    %v8604 = vunpack.c.l.b16 %v7138
    %v8605 = vunpack.c.h.b16 %v7138
    %v8606 = vunpack.c.l.b16 %v7139
    %v8607 = vunpack.c.h.b16 %v7139
    %v8608 = vunpack.c.l.b16 %v7140
    %v8609 = vunpack.c.h.b16 %v7140
    %v8610 = vunpack.c.l.b16 %v7141
    %v8611 = vunpack.c.h.b16 %v7141
    %v8612 = vunpack.c.l.b16 %v7142
    %v8613 = vunpack.c.h.b16 %v7142
    %v8614 = vunpack.c.l.b16 %v7143
    %v8615 = vunpack.c.h.b16 %v7143
    %v8616 = vunpack.c.l.b16 %v7144
    %v8617 = vunpack.c.h.b16 %v7144
    %v8618 = vunpack.c.l.b16 %v7145
    %v8619 = vunpack.c.h.b16 %v7145
    %v8620 = vunpack.c.l.b16 %v7146
    %v8621 = vunpack.c.h.b16 %v7146
    %v8622 = vunpack.c.l.b16 %v7147
    %v8623 = vunpack.c.h.b16 %v7147
    %v8624 = vunpack.c.l.b16 %v7148
    %v8625 = vunpack.c.h.b16 %v7148
    %v8626 = vunpack.c.l.b16 %v7149
    %v8627 = vunpack.c.h.b16 %v7149
    %v8628 = vunpack.c.l.b16 %v7150
    %v8629 = vunpack.c.h.b16 %v7150
    %v8630 = vunpack.c.l.b16 %v7151
    %v8631 = vunpack.c.h.b16 %v7151
    %v8632 = vunpack.c.l.b16 %v7152
    %v8633 = vunpack.c.h.b16 %v7152
    %v8634 = vunpack.c.l.b16 %v7153
    %v8635 = vunpack.c.h.b16 %v7153
    %v8636 = vunpack.c.l.b16 %v7154
    %v8637 = vunpack.c.h.b16 %v7154
    %v8638 = vunpack.c.l.b16 %v7155
    %v8639 = vunpack.c.h.b16 %v7155
    %v8640 = vunpack.c.l.b16 %v7156
    %v8641 = vunpack.c.h.b16 %v7156
    %v8642 = vunpack.c.l.b16 %v7157
    %v8643 = vunpack.c.h.b16 %v7157
    %v8644 = vunpack.c.l.b16 %v7158
    %v8645 = vunpack.c.h.b16 %v7158
    %v8646 = vunpack.c.l.b16 %v7159
    %v8647 = vunpack.c.h.b16 %v7159
    %v8648 = vunpack.c.l.b16 %v7160
    %v8649 = vunpack.c.h.b16 %v7160
    %v8650 = vunpack.c.l.b16 %v7161
    %v8651 = vunpack.c.h.b16 %v7161
    %v8652 = vunpack.c.l.b16 %v7162
    %v8653 = vunpack.c.h.b16 %v7162
    %v8654 = vunpack.c.l.b16 %v7163
    %v8655 = vunpack.c.h.b16 %v7163
    %v8656 = vunpack.c.l.b16 %v7164
    %v8657 = vunpack.c.h.b16 %v7164
    %v8658 = vunpack.c.l.b16 %v7165
    %v8659 = vunpack.c.h.b16 %v7165
    %v8660 = vunpack.c.l.b16 %v7166
    %v8661 = vunpack.c.h.b16 %v7166
    %v8662 = vunpack.c.l.b16 %v7167
    %v8663 = vunpack.c.h.b16 %v7167
    %v8664 = vunpack.c.l.b16 %v7168
    %v8665 = vunpack.c.h.b16 %v7168
    %v8666 = vunpack.c.l.b16 %v7169
    %v8667 = vunpack.c.h.b16 %v7169
    %v8668 = vunpack.c.l.b16 %v7170
    %v8669 = vunpack.c.h.b16 %v7170
    %v8670 = vunpack.c.l.b16 %v7171
    %v8671 = vunpack.c.h.b16 %v7171
    %v8672 = vunpack.c.l.b16 %v7172
    %v8673 = vunpack.c.h.b16 %v7172
    %v8674 = vunpack.c.l.b16 %v7173
    %v8675 = vunpack.c.h.b16 %v7173
    %v8676 = vunpack.c.l.b16 %v7174
    %v8677 = vunpack.c.h.b16 %v7174
    %v8678 = vunpack.c.l.b16 %v7175
    %v8679 = vunpack.c.h.b16 %v7175
    %v8680 = vunpack.c.l.b16 %v7176
    %v8681 = vunpack.c.h.b16 %v7176
    %v8682 = vunpack.c.l.b16 %v7177
    %v8683 = vunpack.c.h.b16 %v7177
    %v8684 = vunpack.c.l.b16 %v7178
    %v8685 = vunpack.c.h.b16 %v7178
    %v8686 = vunpack.c.l.b16 %v7179
    %v8687 = vunpack.c.h.b16 %v7179
    %v8688 = vunpack.c.l.b16 %v7180
    %v8689 = vunpack.c.h.b16 %v7180
    %v8690 = vunpack.c.l.b16 %v7181
    %v8691 = vunpack.c.h.b16 %v7181
    %v8692 = vunpack.c.l.b16 %v7182
    %v8693 = vunpack.c.h.b16 %v7182
    %v8694 = vunpack.c.l.b16 %v7183
    %v8695 = vunpack.c.h.b16 %v7183
    %v8696 = vunpack.c.l.b16 %v7184
    %v8697 = vunpack.c.h.b16 %v7184
    %v8698 = vunpack.c.l.b16 %v7185
    %v8699 = vunpack.c.h.b16 %v7185
    %v8700 = vunpack.c.l.b16 %v7186
    %v8701 = vunpack.c.h.b16 %v7186
    %v8702 = vunpack.c.l.b16 %v7187
    %v8703 = vunpack.c.h.b16 %v7187
    %v8704 = vunpack.c.l.b16 %v7188
    %v8705 = vunpack.c.h.b16 %v7188
    %v8706 = vunpack.c.l.b16 %v7189
    %v8707 = vunpack.c.h.b16 %v7189
    %v8708 = vunpack.c.l.b16 %v7190
    %v8709 = vunpack.c.h.b16 %v7190
    %v8710 = vunpack.c.l.b16 %v7191
    %v8711 = vunpack.c.h.b16 %v7191
    %v8712 = vunpack.c.l.b16 %v7192
    %v8713 = vunpack.c.h.b16 %v7192
    %v8714 = vunpack.c.l.b16 %v7193
    %v8715 = vunpack.c.h.b16 %v7193
    %v8716 = vunpack.c.l.b16 %v7194
    %v8717 = vunpack.c.h.b16 %v7194
    %v8718 = vunpack.c.l.b16 %v7195
    %v8719 = vunpack.c.h.b16 %v7195
    %v8720 = vunpack.c.l.b16 %v7196
    %v8721 = vunpack.c.h.b16 %v7196
    %v8722 = vunpack.c.l.b16 %v7197
    %v8723 = vunpack.c.h.b16 %v7197
    %v8724 = vunpack.c.l.b16 %v7198
    %v8725 = vunpack.c.h.b16 %v7198
    %v8726 = vunpack.c.l.b16 %v7199
    %v8727 = vunpack.c.h.b16 %v7199
    %v8728 = vunpack.c.l.b16 %v7200
    %v8729 = vunpack.c.h.b16 %v7200
    %v8730 = vunpack.c.l.b16 %v7201
    %v8731 = vunpack.c.h.b16 %v7201
    %v8732 = vunpack.c.l.b16 %v7202
    %v8733 = vunpack.c.h.b16 %v7202
    %v8734 = vunpack.c.l.b16 %v7203
    %v8735 = vunpack.c.h.b16 %v7203
    %v8736 = vunpack.c.l.b16 %v7204
    %v8737 = vunpack.c.h.b16 %v7204
    %v8738 = vunpack.c.l.b16 %v7205
    %v8739 = vunpack.c.h.b16 %v7205
    %v8740 = vunpack.c.l.b16 %v7206
    %v8741 = vunpack.c.h.b16 %v7206
    %v8742 = vunpack.c.l.b16 %v7207
    %v8743 = vunpack.c.h.b16 %v7207
    %v8744 = vunpack.c.l.b16 %v7208
    %v8745 = vunpack.c.h.b16 %v7208
    %v8746 = vunpack.c.l.b16 %v7209
    %v8747 = vunpack.c.h.b16 %v7209
    %v8748 = vunpack.c.l.b16 %v7210
    %v8749 = vunpack.c.h.b16 %v7210
    %v8750 = vunpack.c.l.b16 %v7211
    %v8751 = vunpack.c.h.b16 %v7211
    %v8752 = vunpack.c.l.b16 %v7212
    %v8753 = vunpack.c.h.b16 %v7212
    %v8754 = vunpack.c.l.b16 %v7213
    %v8755 = vunpack.c.h.b16 %v7213
    %v8756 = vunpack.c.l.b16 %v7214
    %v8757 = vunpack.c.h.b16 %v7214
    %v8758 = vunpack.c.l.b16 %v7215
    %v8759 = vunpack.c.h.b16 %v7215
    %v8760 = vunpack.c.l.b16 %v7216
    %v8761 = vunpack.c.h.b16 %v7216
    %v8762 = vunpack.c.l.b16 %v7217
    %v8763 = vunpack.c.h.b16 %v7217
    %v8764 = vunpack.c.l.b16 %v7218
    %v8765 = vunpack.c.h.b16 %v7218
    %v8766 = vunpack.c.l.b16 %v7219
    %v8767 = vunpack.c.h.b16 %v7219
    %v8768 = vunpack.c.l.b16 %v7220
    %v8769 = vunpack.c.h.b16 %v7220
    %v8770 = vunpack.c.l.b16 %v7221
    %v8771 = vunpack.c.h.b16 %v7221
    %v8772 = vunpack.c.l.b16 %v7222
    %v8773 = vunpack.c.h.b16 %v7222
    %v8774 = vunpack.c.l.b16 %v7223
    %v8775 = vunpack.c.h.b16 %v7223
    %v8776 = vunpack.c.l.b16 %v7224
    %v8777 = vunpack.c.h.b16 %v7224
    %v8778 = vunpack.c.l.b16 %v7225
    %v8779 = vunpack.c.h.b16 %v7225
    %v8780 = vpack.c.b16 %v7764, %v7756
    %v8781 = vpack.c.b16 %v7765, %v7757
    %v8782 = vpack.c.b16 %v7766, %v7758
    %v8783 = vpack.c.b16 %v7767, %v7759
    %v8784 = vpack.c.b16 %v7768, %v7760
    %v8785 = vpack.c.b16 %v7769, %v7761
    %v8786 = vpack.c.b16 %v7770, %v7762
    %v8787 = vpack.c.b16 %v7771, %v7763
    %v8788 = vpack.c.b16 %v7780, %v7772
    %v8789 = vpack.c.b16 %v7781, %v7773
    %v8790 = vpack.c.b16 %v7782, %v7774
    %v8791 = vpack.c.b16 %v7783, %v7775
    %v8792 = vpack.c.b16 %v7784, %v7776
    %v8793 = vpack.c.b16 %v7785, %v7777
    %v8794 = vpack.c.b16 %v7786, %v7778
    %v8795 = vpack.c.b16 %v7787, %v7779
    %v8796 = vpack.c.b16 %v7796, %v7788
    %v8797 = vpack.c.b16 %v7797, %v7789
    %v8798 = vpack.c.b16 %v7798, %v7790
    %v8799 = vpack.c.b16 %v7799, %v7791
    %v8800 = vpack.c.b16 %v7800, %v7792
    %v8801 = vpack.c.b16 %v7801, %v7793
    %v8802 = vpack.c.b16 %v7802, %v7794
    %v8803 = vpack.c.b16 %v7803, %v7795
    %v8804 = vpack.c.b16 %v7812, %v7804
    %v8805 = vpack.c.b16 %v7813, %v7805
    %v8806 = vpack.c.b16 %v7814, %v7806
    %v8807 = vpack.c.b16 %v7815, %v7807
    %v8808 = vpack.c.b16 %v7816, %v7808
    %v8809 = vpack.c.b16 %v7817, %v7809
    %v8810 = vpack.c.b16 %v7818, %v7810
    %v8811 = vpack.c.b16 %v7819, %v7811
    %v8812 = vpack.c.b16 %v7828, %v7820
    %v8813 = vpack.c.b16 %v7829, %v7821
    %v8814 = vpack.c.b16 %v7830, %v7822
    %v8815 = vpack.c.b16 %v7831, %v7823
    %v8816 = vpack.c.b16 %v7832, %v7824
    %v8817 = vpack.c.b16 %v7833, %v7825
    %v8818 = vpack.c.b16 %v7834, %v7826
    %v8819 = vpack.c.b16 %v7835, %v7827
    %v8820 = vpack.c.b16 %v7844, %v7836
    %v8821 = vpack.c.b16 %v7845, %v7837
    %v8822 = vpack.c.b16 %v7846, %v7838
    %v8823 = vpack.c.b16 %v7847, %v7839
    %v8824 = vpack.c.b16 %v7848, %v7840
    %v8825 = vpack.c.b16 %v7849, %v7841
    %v8826 = vpack.c.b16 %v7850, %v7842
    %v8827 = vpack.c.b16 %v7851, %v7843
    %v8828 = vpack.c.b16 %v7860, %v7852
    %v8829 = vpack.c.b16 %v7861, %v7853
    %v8830 = vpack.c.b16 %v7862, %v7854
    %v8831 = vpack.c.b16 %v7863, %v7855
    %v8832 = vpack.c.b16 %v7864, %v7856
    %v8833 = vpack.c.b16 %v7865, %v7857
    %v8834 = vpack.c.b16 %v7866, %v7858
    %v8835 = vpack.c.b16 %v7867, %v7859
    %v8836 = vpack.c.b16 %v7876, %v7868
    %v8837 = vpack.c.b16 %v7877, %v7869
    %v8838 = vpack.c.b16 %v7878, %v7870
    %v8839 = vpack.c.b16 %v7879, %v7871
    %v8840 = vpack.c.b16 %v7880, %v7872
    %v8841 = vpack.c.b16 %v7881, %v7873
    %v8842 = vpack.c.b16 %v7882, %v7874
    %v8843 = vpack.c.b16 %v7883, %v7875
    %v8844 = vpack.c.b16 %v7892, %v7884
    %v8845 = vpack.c.b16 %v7893, %v7885
    %v8846 = vpack.c.b16 %v7894, %v7886
    %v8847 = vpack.c.b16 %v7895, %v7887
    %v8848 = vpack.c.b16 %v7896, %v7888
    %v8849 = vpack.c.b16 %v7897, %v7889
    %v8850 = vpack.c.b16 %v7898, %v7890
    %v8851 = vpack.c.b16 %v7899, %v7891
    %v8852 = vpack.c.b16 %v7908, %v7900
    %v8853 = vpack.c.b16 %v7909, %v7901
    %v8854 = vpack.c.b16 %v7910, %v7902
    %v8855 = vpack.c.b16 %v7911, %v7903
    %v8856 = vpack.c.b16 %v7912, %v7904
    %v8857 = vpack.c.b16 %v7913, %v7905
    %v8858 = vpack.c.b16 %v7914, %v7906
    %v8859 = vpack.c.b16 %v7915, %v7907
    %v8860 = vpack.c.b16 %v7924, %v7916
    %v8861 = vpack.c.b16 %v7925, %v7917
    %v8862 = vpack.c.b16 %v7926, %v7918
    %v8863 = vpack.c.b16 %v7927, %v7919
    %v8864 = vpack.c.b16 %v7928, %v7920
    %v8865 = vpack.c.b16 %v7929, %v7921
    %v8866 = vpack.c.b16 %v7930, %v7922
    %v8867 = vpack.c.b16 %v7931, %v7923
    %v8868 = vpack.c.b16 %v7940, %v7932
    %v8869 = vpack.c.b16 %v7941, %v7933
    %v8870 = vpack.c.b16 %v7942, %v7934
    %v8871 = vpack.c.b16 %v7943, %v7935
    %v8872 = vpack.c.b16 %v7944, %v7936
    %v8873 = vpack.c.b16 %v7945, %v7937
    %v8874 = vpack.c.b16 %v7946, %v7938
    %v8875 = vpack.c.b16 %v7947, %v7939
    %v8876 = vpack.c.b16 %v7956, %v7948
    %v8877 = vpack.c.b16 %v7957, %v7949
    %v8878 = vpack.c.b16 %v7958, %v7950
    %v8879 = vpack.c.b16 %v7959, %v7951
    %v8880 = vpack.c.b16 %v7960, %v7952
    %v8881 = vpack.c.b16 %v7961, %v7953
    %v8882 = vpack.c.b16 %v7962, %v7954
    %v8883 = vpack.c.b16 %v7963, %v7955
    %v8884 = vpack.c.b16 %v7972, %v7964
    %v8885 = vpack.c.b16 %v7973, %v7965
    %v8886 = vpack.c.b16 %v7974, %v7966
    %v8887 = vpack.c.b16 %v7975, %v7967
    %v8888 = vpack.c.b16 %v7976, %v7968
    %v8889 = vpack.c.b16 %v7977, %v7969
    %v8890 = vpack.c.b16 %v7978, %v7970
    %v8891 = vpack.c.b16 %v7979, %v7971
    %v8892 = vpack.c.b16 %v7988, %v7980
    %v8893 = vpack.c.b16 %v7989, %v7981
    %v8894 = vpack.c.b16 %v7990, %v7982
    %v8895 = vpack.c.b16 %v7991, %v7983
    %v8896 = vpack.c.b16 %v7992, %v7984
    %v8897 = vpack.c.b16 %v7993, %v7985
    %v8898 = vpack.c.b16 %v7994, %v7986
    %v8899 = vpack.c.b16 %v7995, %v7987
    %v8900 = vpack.c.b16 %v8004, %v7996
    %v8901 = vpack.c.b16 %v8005, %v7997
    %v8902 = vpack.c.b16 %v8006, %v7998
    %v8903 = vpack.c.b16 %v8007, %v7999
    %v8904 = vpack.c.b16 %v8008, %v8000
    %v8905 = vpack.c.b16 %v8009, %v8001
    %v8906 = vpack.c.b16 %v8010, %v8002
    %v8907 = vpack.c.b16 %v8011, %v8003
    %v8908 = vpack.c.b16 %v8020, %v8012
    %v8909 = vpack.c.b16 %v8021, %v8013
    %v8910 = vpack.c.b16 %v8022, %v8014
    %v8911 = vpack.c.b16 %v8023, %v8015
    %v8912 = vpack.c.b16 %v8024, %v8016
    %v8913 = vpack.c.b16 %v8025, %v8017
    %v8914 = vpack.c.b16 %v8026, %v8018
    %v8915 = vpack.c.b16 %v8027, %v8019
    %v8916 = vpack.c.b16 %v8036, %v8028
    %v8917 = vpack.c.b16 %v8037, %v8029
    %v8918 = vpack.c.b16 %v8038, %v8030
    %v8919 = vpack.c.b16 %v8039, %v8031
    %v8920 = vpack.c.b16 %v8040, %v8032
    %v8921 = vpack.c.b16 %v8041, %v8033
    %v8922 = vpack.c.b16 %v8042, %v8034
    %v8923 = vpack.c.b16 %v8043, %v8035
    %v8924 = vpack.c.b16 %v8052, %v8044
    %v8925 = vpack.c.b16 %v8053, %v8045
    %v8926 = vpack.c.b16 %v8054, %v8046
    %v8927 = vpack.c.b16 %v8055, %v8047
    %v8928 = vpack.c.b16 %v8056, %v8048
    %v8929 = vpack.c.b16 %v8057, %v8049
    %v8930 = vpack.c.b16 %v8058, %v8050
    %v8931 = vpack.c.b16 %v8059, %v8051
    %v8932 = vpack.c.b16 %v8068, %v8060
    %v8933 = vpack.c.b16 %v8069, %v8061
    %v8934 = vpack.c.b16 %v8070, %v8062
    %v8935 = vpack.c.b16 %v8071, %v8063
    %v8936 = vpack.c.b16 %v8072, %v8064
    %v8937 = vpack.c.b16 %v8073, %v8065
    %v8938 = vpack.c.b16 %v8074, %v8066
    %v8939 = vpack.c.b16 %v8075, %v8067
    %v8940 = vpack.c.b16 %v8084, %v8076
    %v8941 = vpack.c.b16 %v8085, %v8077
    %v8942 = vpack.c.b16 %v8086, %v8078
    %v8943 = vpack.c.b16 %v8087, %v8079
    %v8944 = vpack.c.b16 %v8088, %v8080
    %v8945 = vpack.c.b16 %v8089, %v8081
    %v8946 = vpack.c.b16 %v8090, %v8082
    %v8947 = vpack.c.b16 %v8091, %v8083
    %v8948 = vpack.c.b16 %v8100, %v8092
    %v8949 = vpack.c.b16 %v8101, %v8093
    %v8950 = vpack.c.b16 %v8102, %v8094
    %v8951 = vpack.c.b16 %v8103, %v8095
    %v8952 = vpack.c.b16 %v8104, %v8096
    %v8953 = vpack.c.b16 %v8105, %v8097
    %v8954 = vpack.c.b16 %v8106, %v8098
    %v8955 = vpack.c.b16 %v8107, %v8099
    %v8956 = vpack.c.b16 %v8116, %v8108
    %v8957 = vpack.c.b16 %v8117, %v8109
    %v8958 = vpack.c.b16 %v8118, %v8110
    %v8959 = vpack.c.b16 %v8119, %v8111
    %v8960 = vpack.c.b16 %v8120, %v8112
    %v8961 = vpack.c.b16 %v8121, %v8113
    %v8962 = vpack.c.b16 %v8122, %v8114
    %v8963 = vpack.c.b16 %v8123, %v8115
    %v8964 = vpack.c.b16 %v8132, %v8124
    %v8965 = vpack.c.b16 %v8133, %v8125
    %v8966 = vpack.c.b16 %v8134, %v8126
    %v8967 = vpack.c.b16 %v8135, %v8127
    %v8968 = vpack.c.b16 %v8136, %v8128
    %v8969 = vpack.c.b16 %v8137, %v8129
    %v8970 = vpack.c.b16 %v8138, %v8130
    %v8971 = vpack.c.b16 %v8139, %v8131
    %v8972 = vpack.c.b16 %v8148, %v8140
    %v8973 = vpack.c.b16 %v8149, %v8141
    %v8974 = vpack.c.b16 %v8150, %v8142
    %v8975 = vpack.c.b16 %v8151, %v8143
    %v8976 = vpack.c.b16 %v8152, %v8144
    %v8977 = vpack.c.b16 %v8153, %v8145
    %v8978 = vpack.c.b16 %v8154, %v8146
    %v8979 = vpack.c.b16 %v8155, %v8147
    %v8980 = vpack.c.b16 %v8164, %v8156
    %v8981 = vpack.c.b16 %v8165, %v8157
    %v8982 = vpack.c.b16 %v8166, %v8158
    %v8983 = vpack.c.b16 %v8167, %v8159
    %v8984 = vpack.c.b16 %v8168, %v8160
    %v8985 = vpack.c.b16 %v8169, %v8161
    %v8986 = vpack.c.b16 %v8170, %v8162
    %v8987 = vpack.c.b16 %v8171, %v8163
    %v8988 = vpack.c.b16 %v8180, %v8172
    %v8989 = vpack.c.b16 %v8181, %v8173
    %v8990 = vpack.c.b16 %v8182, %v8174
    %v8991 = vpack.c.b16 %v8183, %v8175
    %v8992 = vpack.c.b16 %v8184, %v8176
    %v8993 = vpack.c.b16 %v8185, %v8177
    %v8994 = vpack.c.b16 %v8186, %v8178
    %v8995 = vpack.c.b16 %v8187, %v8179
    %v8996 = vpack.c.b16 %v8196, %v8188
    %v8997 = vpack.c.b16 %v8197, %v8189
    %v8998 = vpack.c.b16 %v8198, %v8190
    %v8999 = vpack.c.b16 %v8199, %v8191
    %v9000 = vpack.c.b16 %v8200, %v8192
    %v9001 = vpack.c.b16 %v8201, %v8193
    %v9002 = vpack.c.b16 %v8202, %v8194
    %v9003 = vpack.c.b16 %v8203, %v8195
    %v9004 = vpack.c.b16 %v8212, %v8204
    %v9005 = vpack.c.b16 %v8213, %v8205
    %v9006 = vpack.c.b16 %v8214, %v8206
    %v9007 = vpack.c.b16 %v8215, %v8207
    %v9008 = vpack.c.b16 %v8216, %v8208
    %v9009 = vpack.c.b16 %v8217, %v8209
    %v9010 = vpack.c.b16 %v8218, %v8210
    %v9011 = vpack.c.b16 %v8219, %v8211
    %v9012 = vpack.c.b16 %v8228, %v8220
    %v9013 = vpack.c.b16 %v8229, %v8221
    %v9014 = vpack.c.b16 %v8230, %v8222
    %v9015 = vpack.c.b16 %v8231, %v8223
    %v9016 = vpack.c.b16 %v8232, %v8224
    %v9017 = vpack.c.b16 %v8233, %v8225
    %v9018 = vpack.c.b16 %v8234, %v8226
    %v9019 = vpack.c.b16 %v8235, %v8227
    %v9020 = vpack.c.b16 %v8244, %v8236
    %v9021 = vpack.c.b16 %v8245, %v8237
    %v9022 = vpack.c.b16 %v8246, %v8238
    %v9023 = vpack.c.b16 %v8247, %v8239
    %v9024 = vpack.c.b16 %v8248, %v8240
    %v9025 = vpack.c.b16 %v8249, %v8241
    %v9026 = vpack.c.b16 %v8250, %v8242
    %v9027 = vpack.c.b16 %v8251, %v8243
    %v9028 = vpack.c.b16 %v8260, %v8252
    %v9029 = vpack.c.b16 %v8261, %v8253
    %v9030 = vpack.c.b16 %v8262, %v8254
    %v9031 = vpack.c.b16 %v8263, %v8255
    %v9032 = vpack.c.b16 %v8264, %v8256
    %v9033 = vpack.c.b16 %v8265, %v8257
    %v9034 = vpack.c.b16 %v8266, %v8258
    %v9035 = vpack.c.b16 %v8267, %v8259
    %v9036 = vpack.c.b16 %v8276, %v8268
    %v9037 = vpack.c.b16 %v8277, %v8269
    %v9038 = vpack.c.b16 %v8278, %v8270
    %v9039 = vpack.c.b16 %v8279, %v8271
    %v9040 = vpack.c.b16 %v8280, %v8272
    %v9041 = vpack.c.b16 %v8281, %v8273
    %v9042 = vpack.c.b16 %v8282, %v8274
    %v9043 = vpack.c.b16 %v8283, %v8275
    %v9044 = vpack.c.b16 %v8292, %v8284
    %v9045 = vpack.c.b16 %v8293, %v8285
    %v9046 = vpack.c.b16 %v8294, %v8286
    %v9047 = vpack.c.b16 %v8295, %v8287
    %v9048 = vpack.c.b16 %v8296, %v8288
    %v9049 = vpack.c.b16 %v8297, %v8289
    %v9050 = vpack.c.b16 %v8298, %v8290
    %v9051 = vpack.c.b16 %v8299, %v8291
    %v9052 = vpack.c.b16 %v8308, %v8300
    %v9053 = vpack.c.b16 %v8309, %v8301
    %v9054 = vpack.c.b16 %v8310, %v8302
    %v9055 = vpack.c.b16 %v8311, %v8303
    %v9056 = vpack.c.b16 %v8312, %v8304
    %v9057 = vpack.c.b16 %v8313, %v8305
    %v9058 = vpack.c.b16 %v8314, %v8306
    %v9059 = vpack.c.b16 %v8315, %v8307
    %v9060 = vpack.c.b16 %v8324, %v8316
    %v9061 = vpack.c.b16 %v8325, %v8317
    %v9062 = vpack.c.b16 %v8326, %v8318
    %v9063 = vpack.c.b16 %v8327, %v8319
    %v9064 = vpack.c.b16 %v8328, %v8320
    %v9065 = vpack.c.b16 %v8329, %v8321
    %v9066 = vpack.c.b16 %v8330, %v8322
    %v9067 = vpack.c.b16 %v8331, %v8323
    %v9068 = vpack.c.b16 %v8340, %v8332
    %v9069 = vpack.c.b16 %v8341, %v8333
    %v9070 = vpack.c.b16 %v8342, %v8334
    %v9071 = vpack.c.b16 %v8343, %v8335
    %v9072 = vpack.c.b16 %v8344, %v8336
    %v9073 = vpack.c.b16 %v8345, %v8337
    %v9074 = vpack.c.b16 %v8346, %v8338
    %v9075 = vpack.c.b16 %v8347, %v8339
    %v9076 = vpack.c.b16 %v8356, %v8348
    %v9077 = vpack.c.b16 %v8357, %v8349
    %v9078 = vpack.c.b16 %v8358, %v8350
    %v9079 = vpack.c.b16 %v8359, %v8351
    %v9080 = vpack.c.b16 %v8360, %v8352
    %v9081 = vpack.c.b16 %v8361, %v8353
    %v9082 = vpack.c.b16 %v8362, %v8354
    %v9083 = vpack.c.b16 %v8363, %v8355
    %v9084 = vpack.c.b16 %v8372, %v8364
    %v9085 = vpack.c.b16 %v8373, %v8365
    %v9086 = vpack.c.b16 %v8374, %v8366
    %v9087 = vpack.c.b16 %v8375, %v8367
    %v9088 = vpack.c.b16 %v8376, %v8368
    %v9089 = vpack.c.b16 %v8377, %v8369
    %v9090 = vpack.c.b16 %v8378, %v8370
    %v9091 = vpack.c.b16 %v8379, %v8371
    %v9092 = vpack.c.b16 %v8388, %v8380
    %v9093 = vpack.c.b16 %v8389, %v8381
    %v9094 = vpack.c.b16 %v8390, %v8382
    %v9095 = vpack.c.b16 %v8391, %v8383
    %v9096 = vpack.c.b16 %v8392, %v8384
    %v9097 = vpack.c.b16 %v8393, %v8385
    %v9098 = vpack.c.b16 %v8394, %v8386
    %v9099 = vpack.c.b16 %v8395, %v8387
    %v9100 = vpack.c.b16 %v8404, %v8396
    %v9101 = vpack.c.b16 %v8405, %v8397
    %v9102 = vpack.c.b16 %v8406, %v8398
    %v9103 = vpack.c.b16 %v8407, %v8399
    %v9104 = vpack.c.b16 %v8408, %v8400
    %v9105 = vpack.c.b16 %v8409, %v8401
    %v9106 = vpack.c.b16 %v8410, %v8402
    %v9107 = vpack.c.b16 %v8411, %v8403
    %v9108 = vpack.c.b16 %v8420, %v8412
    %v9109 = vpack.c.b16 %v8421, %v8413
    %v9110 = vpack.c.b16 %v8422, %v8414
    %v9111 = vpack.c.b16 %v8423, %v8415
    %v9112 = vpack.c.b16 %v8424, %v8416
    %v9113 = vpack.c.b16 %v8425, %v8417
    %v9114 = vpack.c.b16 %v8426, %v8418
    %v9115 = vpack.c.b16 %v8427, %v8419
    %v9116 = vpack.c.b16 %v8436, %v8428
    %v9117 = vpack.c.b16 %v8437, %v8429
    %v9118 = vpack.c.b16 %v8438, %v8430
    %v9119 = vpack.c.b16 %v8439, %v8431
    %v9120 = vpack.c.b16 %v8440, %v8432
    %v9121 = vpack.c.b16 %v8441, %v8433
    %v9122 = vpack.c.b16 %v8442, %v8434
    %v9123 = vpack.c.b16 %v8443, %v8435
    %v9124 = vpack.c.b16 %v8452, %v8444
    %v9125 = vpack.c.b16 %v8453, %v8445
    %v9126 = vpack.c.b16 %v8454, %v8446
    %v9127 = vpack.c.b16 %v8455, %v8447
    %v9128 = vpack.c.b16 %v8456, %v8448
    %v9129 = vpack.c.b16 %v8457, %v8449
    %v9130 = vpack.c.b16 %v8458, %v8450
    %v9131 = vpack.c.b16 %v8459, %v8451
    %v9132 = vpack.c.b16 %v8468, %v8460
    %v9133 = vpack.c.b16 %v8469, %v8461
    %v9134 = vpack.c.b16 %v8470, %v8462
    %v9135 = vpack.c.b16 %v8471, %v8463
    %v9136 = vpack.c.b16 %v8472, %v8464
    %v9137 = vpack.c.b16 %v8473, %v8465
    %v9138 = vpack.c.b16 %v8474, %v8466
    %v9139 = vpack.c.b16 %v8475, %v8467
    %v9140 = vpack.c.b16 %v8484, %v8476
    %v9141 = vpack.c.b16 %v8485, %v8477
    %v9142 = vpack.c.b16 %v8486, %v8478
    %v9143 = vpack.c.b16 %v8487, %v8479
    %v9144 = vpack.c.b16 %v8488, %v8480
    %v9145 = vpack.c.b16 %v8489, %v8481
    %v9146 = vpack.c.b16 %v8490, %v8482
    %v9147 = vpack.c.b16 %v8491, %v8483
    %v9148 = vpack.c.b16 %v8500, %v8492
    %v9149 = vpack.c.b16 %v8501, %v8493
    %v9150 = vpack.c.b16 %v8502, %v8494
    %v9151 = vpack.c.b16 %v8503, %v8495
    %v9152 = vpack.c.b16 %v8504, %v8496
    %v9153 = vpack.c.b16 %v8505, %v8497
    %v9154 = vpack.c.b16 %v8506, %v8498
    %v9155 = vpack.c.b16 %v8507, %v8499
    %v9156 = vpack.c.b16 %v8516, %v8508
    %v9157 = vpack.c.b16 %v8517, %v8509
    %v9158 = vpack.c.b16 %v8518, %v8510
    %v9159 = vpack.c.b16 %v8519, %v8511
    %v9160 = vpack.c.b16 %v8520, %v8512
    %v9161 = vpack.c.b16 %v8521, %v8513
    %v9162 = vpack.c.b16 %v8522, %v8514
    %v9163 = vpack.c.b16 %v8523, %v8515
    %v9164 = vpack.c.b16 %v8532, %v8524
    %v9165 = vpack.c.b16 %v8533, %v8525
    %v9166 = vpack.c.b16 %v8534, %v8526
    %v9167 = vpack.c.b16 %v8535, %v8527
    %v9168 = vpack.c.b16 %v8536, %v8528
    %v9169 = vpack.c.b16 %v8537, %v8529
    %v9170 = vpack.c.b16 %v8538, %v8530
    %v9171 = vpack.c.b16 %v8539, %v8531
    %v9172 = vpack.c.b16 %v8548, %v8540
    %v9173 = vpack.c.b16 %v8549, %v8541
    %v9174 = vpack.c.b16 %v8550, %v8542
    %v9175 = vpack.c.b16 %v8551, %v8543
    %v9176 = vpack.c.b16 %v8552, %v8544
    %v9177 = vpack.c.b16 %v8553, %v8545
    %v9178 = vpack.c.b16 %v8554, %v8546
    %v9179 = vpack.c.b16 %v8555, %v8547
    %v9180 = vpack.c.b16 %v8564, %v8556
    %v9181 = vpack.c.b16 %v8565, %v8557
    %v9182 = vpack.c.b16 %v8566, %v8558
    %v9183 = vpack.c.b16 %v8567, %v8559
    %v9184 = vpack.c.b16 %v8568, %v8560
    %v9185 = vpack.c.b16 %v8569, %v8561
    %v9186 = vpack.c.b16 %v8570, %v8562
    %v9187 = vpack.c.b16 %v8571, %v8563
    %v9188 = vpack.c.b16 %v8580, %v8572
    %v9189 = vpack.c.b16 %v8581, %v8573
    %v9190 = vpack.c.b16 %v8582, %v8574
    %v9191 = vpack.c.b16 %v8583, %v8575
    %v9192 = vpack.c.b16 %v8584, %v8576
    %v9193 = vpack.c.b16 %v8585, %v8577
    %v9194 = vpack.c.b16 %v8586, %v8578
    %v9195 = vpack.c.b16 %v8587, %v8579
    %v9196 = vpack.c.b16 %v8596, %v8588
    %v9197 = vpack.c.b16 %v8597, %v8589
    %v9198 = vpack.c.b16 %v8598, %v8590
    %v9199 = vpack.c.b16 %v8599, %v8591
    %v9200 = vpack.c.b16 %v8600, %v8592
    %v9201 = vpack.c.b16 %v8601, %v8593
    %v9202 = vpack.c.b16 %v8602, %v8594
    %v9203 = vpack.c.b16 %v8603, %v8595
    %v9204 = vpack.c.b16 %v8612, %v8604
    %v9205 = vpack.c.b16 %v8613, %v8605
    %v9206 = vpack.c.b16 %v8614, %v8606
    %v9207 = vpack.c.b16 %v8615, %v8607
    %v9208 = vpack.c.b16 %v8616, %v8608
    %v9209 = vpack.c.b16 %v8617, %v8609
    %v9210 = vpack.c.b16 %v8618, %v8610
    %v9211 = vpack.c.b16 %v8619, %v8611
    %v9212 = vpack.c.b16 %v8628, %v8620
    %v9213 = vpack.c.b16 %v8629, %v8621
    %v9214 = vpack.c.b16 %v8630, %v8622
    %v9215 = vpack.c.b16 %v8631, %v8623
    %v9216 = vpack.c.b16 %v8632, %v8624
    %v9217 = vpack.c.b16 %v8633, %v8625
    %v9218 = vpack.c.b16 %v8634, %v8626
    %v9219 = vpack.c.b16 %v8635, %v8627
    %v9220 = vpack.c.b16 %v8644, %v8636
    %v9221 = vpack.c.b16 %v8645, %v8637
    %v9222 = vpack.c.b16 %v8646, %v8638
    %v9223 = vpack.c.b16 %v8647, %v8639
    %v9224 = vpack.c.b16 %v8648, %v8640
    %v9225 = vpack.c.b16 %v8649, %v8641
    %v9226 = vpack.c.b16 %v8650, %v8642
    %v9227 = vpack.c.b16 %v8651, %v8643
    %v9228 = vpack.c.b16 %v8660, %v8652
    %v9229 = vpack.c.b16 %v8661, %v8653
    %v9230 = vpack.c.b16 %v8662, %v8654
    %v9231 = vpack.c.b16 %v8663, %v8655
    %v9232 = vpack.c.b16 %v8664, %v8656
    %v9233 = vpack.c.b16 %v8665, %v8657
    %v9234 = vpack.c.b16 %v8666, %v8658
    %v9235 = vpack.c.b16 %v8667, %v8659
    %v9236 = vpack.c.b16 %v8676, %v8668
    %v9237 = vpack.c.b16 %v8677, %v8669
    %v9238 = vpack.c.b16 %v8678, %v8670
    %v9239 = vpack.c.b16 %v8679, %v8671
    %v9240 = vpack.c.b16 %v8680, %v8672
    %v9241 = vpack.c.b16 %v8681, %v8673
    %v9242 = vpack.c.b16 %v8682, %v8674
    %v9243 = vpack.c.b16 %v8683, %v8675
    %v9244 = vpack.c.b16 %v8692, %v8684
    %v9245 = vpack.c.b16 %v8693, %v8685
    %v9246 = vpack.c.b16 %v8694, %v8686
    %v9247 = vpack.c.b16 %v8695, %v8687
    %v9248 = vpack.c.b16 %v8696, %v8688
    %v9249 = vpack.c.b16 %v8697, %v8689
    %v9250 = vpack.c.b16 %v8698, %v8690
    %v9251 = vpack.c.b16 %v8699, %v8691
    %v9252 = vpack.c.b16 %v8708, %v8700
    %v9253 = vpack.c.b16 %v8709, %v8701
    %v9254 = vpack.c.b16 %v8710, %v8702
    %v9255 = vpack.c.b16 %v8711, %v8703
    %v9256 = vpack.c.b16 %v8712, %v8704
    %v9257 = vpack.c.b16 %v8713, %v8705
    %v9258 = vpack.c.b16 %v8714, %v8706
    %v9259 = vpack.c.b16 %v8715, %v8707
    %v9260 = vpack.c.b16 %v8724, %v8716
    %v9261 = vpack.c.b16 %v8725, %v8717
    %v9262 = vpack.c.b16 %v8726, %v8718
    %v9263 = vpack.c.b16 %v8727, %v8719
    %v9264 = vpack.c.b16 %v8728, %v8720
    %v9265 = vpack.c.b16 %v8729, %v8721
    %v9266 = vpack.c.b16 %v8730, %v8722
    %v9267 = vpack.c.b16 %v8731, %v8723
    %v9268 = vpack.c.b16 %v8740, %v8732
    %v9269 = vpack.c.b16 %v8741, %v8733
    %v9270 = vpack.c.b16 %v8742, %v8734
    %v9271 = vpack.c.b16 %v8743, %v8735
    %v9272 = vpack.c.b16 %v8744, %v8736
    %v9273 = vpack.c.b16 %v8745, %v8737
    %v9274 = vpack.c.b16 %v8746, %v8738
    %v9275 = vpack.c.b16 %v8747, %v8739
    %v9276 = vpack.c.b16 %v8756, %v8748
    %v9277 = vpack.c.b16 %v8757, %v8749
    %v9278 = vpack.c.b16 %v8758, %v8750
    %v9279 = vpack.c.b16 %v8759, %v8751
    %v9280 = vpack.c.b16 %v8760, %v8752
    %v9281 = vpack.c.b16 %v8761, %v8753
    %v9282 = vpack.c.b16 %v8762, %v8754
    %v9283 = vpack.c.b16 %v8763, %v8755
    %v9284 = vpack.c.b16 %v8772, %v8764
    %v9285 = vpack.c.b16 %v8773, %v8765
    %v9286 = vpack.c.b16 %v8774, %v8766
    %v9287 = vpack.c.b16 %v8775, %v8767
    %v9288 = vpack.c.b16 %v8776, %v8768
    %v9289 = vpack.c.b16 %v8777, %v8769
    %v9290 = vpack.c.b16 %v8778, %v8770
    %v9291 = vpack.c.b16 %v8779, %v8771
    %9804 = vmatpush.bf16.msra.mxu0 %v8836
    %9805 = vmatpush.bf16.msra.mxu0 %v8828
    %9806 = vmatpush.bf16.msra.mxu0 %v8820
    %9807 = vmatpush.bf16.msra.mxu0 %v8812
    %9808 = vmatpush.bf16.msra.mxu0 %v8804
    %9809 = vmatpush.bf16.msra.mxu0 %v8796
    %9810 = vmatpush.bf16.msra.mxu0 %v8788
    %9811 = vmatpush.bf16.msra.mxu0 %v8780
    %9812 = vmatmul.bf16.gmra.mxu0 %v6706
    %v9813 = vpop.f32.mrf.mxu0
    %v9814 = vadd.f32 %v7228, %v9813
    %v9815 = vpop.f32.mrf.mxu0
    %9816 = vdwg.mxu0
    %9817 = vmatpush.bf16.msra.mxu0 %v8900
    %9818 = vmatpush.bf16.msra.mxu0 %v8892
    %9819 = vmatpush.bf16.msra.mxu0 %v8884
    %9820 = vmatpush.bf16.msra.mxu0 %v8876
    %9821 = vmatpush.bf16.msra.mxu0 %v8868
    %9822 = vmatpush.bf16.msra.mxu0 %v8860
    %9823 = vmatpush.bf16.msra.mxu0 %v8852
    %9824 = vmatpush.bf16.msra.mxu0 %v8844
    %9825 = vmatmul.bf16.gmra.mxu0 %v6707
    %v9826 = vpop.f32.mrf.mxu0
    %v9827 = vadd.f32 %v9814, %v9826
    %v9828 = vpop.f32.mrf.mxu0
    %9829 = vdwg.mxu0
    %9830 = vmatpush.bf16.msra.mxu0 %v8964
    %9831 = vmatpush.bf16.msra.mxu0 %v8956
    %9832 = vmatpush.bf16.msra.mxu0 %v8948
    %9833 = vmatpush.bf16.msra.mxu0 %v8940
    %9834 = vmatpush.bf16.msra.mxu0 %v8932
    %9835 = vmatpush.bf16.msra.mxu0 %v8924
    %9836 = vmatpush.bf16.msra.mxu0 %v8916
    %9837 = vmatpush.bf16.msra.mxu0 %v8908
    %9838 = vmatmul.bf16.gmra.mxu0 %v6708
    %v9839 = vpop.f32.mrf.mxu0
    %v9840 = vadd.f32 %v9827, %v9839
    %v9841 = vpop.f32.mrf.mxu0
    %9842 = vdwg.mxu0
    %9843 = vmatpush.bf16.msra.mxu0 %v9028
    %9844 = vmatpush.bf16.msra.mxu0 %v9020
    %9845 = vmatpush.bf16.msra.mxu0 %v9012
    %9846 = vmatpush.bf16.msra.mxu0 %v9004
    %9847 = vmatpush.bf16.msra.mxu0 %v8996
    %9848 = vmatpush.bf16.msra.mxu0 %v8988
    %9849 = vmatpush.bf16.msra.mxu0 %v8980
    %9850 = vmatpush.bf16.msra.mxu0 %v8972
    %9851 = vmatmul.bf16.gmra.mxu0 %v6709
    %v9852 = vpop.f32.mrf.mxu0
    %v9853 = vadd.f32 %v9840, %v9852
    %v9854 = vpop.f32.mrf.mxu0
    %9855 = vdwg.mxu0
    %9856 = vmatpush.bf16.msra.mxu0 %v9092
    %9857 = vmatpush.bf16.msra.mxu0 %v9084
    %9858 = vmatpush.bf16.msra.mxu0 %v9076
    %9859 = vmatpush.bf16.msra.mxu0 %v9068
    %9860 = vmatpush.bf16.msra.mxu0 %v9060
    %9861 = vmatpush.bf16.msra.mxu0 %v9052
    %9862 = vmatpush.bf16.msra.mxu0 %v9044
    %9863 = vmatpush.bf16.msra.mxu0 %v9036
    %9864 = vmatmul.bf16.gmra.mxu0 %v6710
    %v9865 = vpop.f32.mrf.mxu0
    %v9866 = vadd.f32 %v9853, %v9865
    %v9867 = vpop.f32.mrf.mxu0
    %9868 = vdwg.mxu0
    %9869 = vmatpush.bf16.msra.mxu0 %v9156
    %9870 = vmatpush.bf16.msra.mxu0 %v9148
    %9871 = vmatpush.bf16.msra.mxu0 %v9140
    %9872 = vmatpush.bf16.msra.mxu0 %v9132
    %9873 = vmatpush.bf16.msra.mxu0 %v9124
    %9874 = vmatpush.bf16.msra.mxu0 %v9116
    %9875 = vmatpush.bf16.msra.mxu0 %v9108
    %9876 = vmatpush.bf16.msra.mxu0 %v9100
    %9877 = vmatmul.bf16.gmra.mxu0 %v6711
    %v9878 = vpop.f32.mrf.mxu0
    %v9879 = vadd.f32 %v9866, %v9878
    %v9880 = vpop.f32.mrf.mxu0
    %9881 = vdwg.mxu0
    %9882 = vmatpush.bf16.msra.mxu0 %v9220
    %9883 = vmatpush.bf16.msra.mxu0 %v9212
    %9884 = vmatpush.bf16.msra.mxu0 %v9204
    %9885 = vmatpush.bf16.msra.mxu0 %v9196
    %9886 = vmatpush.bf16.msra.mxu0 %v9188
    %9887 = vmatpush.bf16.msra.mxu0 %v9180
    %9888 = vmatpush.bf16.msra.mxu0 %v9172
    %9889 = vmatpush.bf16.msra.mxu0 %v9164
    %9890 = vmatmul.bf16.gmra.mxu0 %v6712
    %v9891 = vpop.f32.mrf.mxu0
    %v9892 = vadd.f32 %v9879, %v9891
    %v9893 = vpop.f32.mrf.mxu0
    %9894 = vdwg.mxu0
    %9895 = vmatpush.bf16.msra.mxu0 %v9284
    %9896 = vmatpush.bf16.msra.mxu0 %v9276
    %9897 = vmatpush.bf16.msra.mxu0 %v9268
    %9898 = vmatpush.bf16.msra.mxu0 %v9260
    %9899 = vmatpush.bf16.msra.mxu0 %v9252
    %9900 = vmatpush.bf16.msra.mxu0 %v9244
    %9901 = vmatpush.bf16.msra.mxu0 %v9236
    %9902 = vmatpush.bf16.msra.mxu0 %v9228
    %9903 = vmatmul.bf16.gmra.mxu0 %v6713
    %v9904 = vpop.f32.mrf.mxu0
    %v9905 = vadd.f32 %v9892, %v9904
    %v9906 = vpop.f32.mrf.mxu0
    %9907 = vdwg.mxu0
    %9908 = vmatpush.bf16.msra.mxu0 %v8837
    %9909 = vmatpush.bf16.msra.mxu0 %v8829
    %9910 = vmatpush.bf16.msra.mxu0 %v8821
    %9911 = vmatpush.bf16.msra.mxu0 %v8813
    %9912 = vmatpush.bf16.msra.mxu0 %v8805
    %9913 = vmatpush.bf16.msra.mxu0 %v8797
    %9914 = vmatpush.bf16.msra.mxu0 %v8789
    %9915 = vmatpush.bf16.msra.mxu0 %v8781
    %9916 = vmatmul.bf16.gmra.mxu0 %v6706
    %v9917 = vpop.f32.mrf.mxu0
    %v9918 = vadd.f32 %v7229, %v9917
    %v9919 = vpop.f32.mrf.mxu0
    %9920 = vdwg.mxu0
    %9921 = vmatpush.bf16.msra.mxu0 %v8901
    %9922 = vmatpush.bf16.msra.mxu0 %v8893
    %9923 = vmatpush.bf16.msra.mxu0 %v8885
    %9924 = vmatpush.bf16.msra.mxu0 %v8877
    %9925 = vmatpush.bf16.msra.mxu0 %v8869
    %9926 = vmatpush.bf16.msra.mxu0 %v8861
    %9927 = vmatpush.bf16.msra.mxu0 %v8853
    %9928 = vmatpush.bf16.msra.mxu0 %v8845
    %9929 = vmatmul.bf16.gmra.mxu0 %v6707
    %v9930 = vpop.f32.mrf.mxu0
    %v9931 = vadd.f32 %v9918, %v9930
    %v9932 = vpop.f32.mrf.mxu0
    %9933 = vdwg.mxu0
    %9934 = vmatpush.bf16.msra.mxu0 %v8965
    %9935 = vmatpush.bf16.msra.mxu0 %v8957
    %9936 = vmatpush.bf16.msra.mxu0 %v8949
    %9937 = vmatpush.bf16.msra.mxu0 %v8941
    %9938 = vmatpush.bf16.msra.mxu0 %v8933
    %9939 = vmatpush.bf16.msra.mxu0 %v8925
    %9940 = vmatpush.bf16.msra.mxu0 %v8917
    %9941 = vmatpush.bf16.msra.mxu0 %v8909
    %9942 = vmatmul.bf16.gmra.mxu0 %v6708
    %v9943 = vpop.f32.mrf.mxu0
    %v9944 = vadd.f32 %v9931, %v9943
    %v9945 = vpop.f32.mrf.mxu0
    %9946 = vdwg.mxu0
    %9947 = vmatpush.bf16.msra.mxu0 %v9029
    %9948 = vmatpush.bf16.msra.mxu0 %v9021
    %9949 = vmatpush.bf16.msra.mxu0 %v9013
    %9950 = vmatpush.bf16.msra.mxu0 %v9005
    %9951 = vmatpush.bf16.msra.mxu0 %v8997
    %9952 = vmatpush.bf16.msra.mxu0 %v8989
    %9953 = vmatpush.bf16.msra.mxu0 %v8981
    %9954 = vmatpush.bf16.msra.mxu0 %v8973
    %9955 = vmatmul.bf16.gmra.mxu0 %v6709
    %v9956 = vpop.f32.mrf.mxu0
    %v9957 = vadd.f32 %v9944, %v9956
    %v9958 = vpop.f32.mrf.mxu0
    %9959 = vdwg.mxu0
    %9960 = vmatpush.bf16.msra.mxu0 %v9093
    %9961 = vmatpush.bf16.msra.mxu0 %v9085
    %9962 = vmatpush.bf16.msra.mxu0 %v9077
    %9963 = vmatpush.bf16.msra.mxu0 %v9069
    %9964 = vmatpush.bf16.msra.mxu0 %v9061
    %9965 = vmatpush.bf16.msra.mxu0 %v9053
    %9966 = vmatpush.bf16.msra.mxu0 %v9045
    %9967 = vmatpush.bf16.msra.mxu0 %v9037
    %9968 = vmatmul.bf16.gmra.mxu0 %v6710
    %v9969 = vpop.f32.mrf.mxu0
    %v9970 = vadd.f32 %v9957, %v9969
    %v9971 = vpop.f32.mrf.mxu0
    %9972 = vdwg.mxu0
    %9973 = vmatpush.bf16.msra.mxu0 %v9157
    %9974 = vmatpush.bf16.msra.mxu0 %v9149
    %9975 = vmatpush.bf16.msra.mxu0 %v9141
    %9976 = vmatpush.bf16.msra.mxu0 %v9133
    %9977 = vmatpush.bf16.msra.mxu0 %v9125
    %9978 = vmatpush.bf16.msra.mxu0 %v9117
    %9979 = vmatpush.bf16.msra.mxu0 %v9109
    %9980 = vmatpush.bf16.msra.mxu0 %v9101
    %9981 = vmatmul.bf16.gmra.mxu0 %v6711
    %v9982 = vpop.f32.mrf.mxu0
    %v9983 = vadd.f32 %v9970, %v9982
    %v9984 = vpop.f32.mrf.mxu0
    %9985 = vdwg.mxu0
    %9986 = vmatpush.bf16.msra.mxu0 %v9221
    %9987 = vmatpush.bf16.msra.mxu0 %v9213
    %9988 = vmatpush.bf16.msra.mxu0 %v9205
    %9989 = vmatpush.bf16.msra.mxu0 %v9197
    %9990 = vmatpush.bf16.msra.mxu0 %v9189
    %9991 = vmatpush.bf16.msra.mxu0 %v9181
    %9992 = vmatpush.bf16.msra.mxu0 %v9173
    %9993 = vmatpush.bf16.msra.mxu0 %v9165
    %9994 = vmatmul.bf16.gmra.mxu0 %v6712
    %v9995 = vpop.f32.mrf.mxu0
    %v9996 = vadd.f32 %v9983, %v9995
    %v9997 = vpop.f32.mrf.mxu0
    %9998 = vdwg.mxu0
    %9999 = vmatpush.bf16.msra.mxu0 %v9285
    %10000 = vmatpush.bf16.msra.mxu0 %v9277
    %10001 = vmatpush.bf16.msra.mxu0 %v9269
    %10002 = vmatpush.bf16.msra.mxu0 %v9261
    %10003 = vmatpush.bf16.msra.mxu0 %v9253
    %10004 = vmatpush.bf16.msra.mxu0 %v9245
    %10005 = vmatpush.bf16.msra.mxu0 %v9237
    %10006 = vmatpush.bf16.msra.mxu0 %v9229
    %10007 = vmatmul.bf16.gmra.mxu0 %v6713
    %v10008 = vpop.f32.mrf.mxu0
    %v10009 = vadd.f32 %v9996, %v10008
    %v10010 = vpop.f32.mrf.mxu0
    %10011 = vdwg.mxu0
    %10012 = vmatpush.bf16.msra.mxu0 %v8838
    %10013 = vmatpush.bf16.msra.mxu0 %v8830
    %10014 = vmatpush.bf16.msra.mxu0 %v8822
    %10015 = vmatpush.bf16.msra.mxu0 %v8814
    %10016 = vmatpush.bf16.msra.mxu0 %v8806
    %10017 = vmatpush.bf16.msra.mxu0 %v8798
    %10018 = vmatpush.bf16.msra.mxu0 %v8790
    %10019 = vmatpush.bf16.msra.mxu0 %v8782
    %10020 = vmatmul.bf16.gmra.mxu0 %v6706
    %v10021 = vpop.f32.mrf.mxu0
    %v10022 = vadd.f32 %v7230, %v10021
    %v10023 = vpop.f32.mrf.mxu0
    %10024 = vdwg.mxu0
    %10025 = vmatpush.bf16.msra.mxu0 %v8902
    %10026 = vmatpush.bf16.msra.mxu0 %v8894
    %10027 = vmatpush.bf16.msra.mxu0 %v8886
    %10028 = vmatpush.bf16.msra.mxu0 %v8878
    %10029 = vmatpush.bf16.msra.mxu0 %v8870
    %10030 = vmatpush.bf16.msra.mxu0 %v8862
    %10031 = vmatpush.bf16.msra.mxu0 %v8854
    %10032 = vmatpush.bf16.msra.mxu0 %v8846
    %10033 = vmatmul.bf16.gmra.mxu0 %v6707
    %v10034 = vpop.f32.mrf.mxu0
    %v10035 = vadd.f32 %v10022, %v10034
    %v10036 = vpop.f32.mrf.mxu0
    %10037 = vdwg.mxu0
    %10038 = vmatpush.bf16.msra.mxu0 %v8966
    %10039 = vmatpush.bf16.msra.mxu0 %v8958
    %10040 = vmatpush.bf16.msra.mxu0 %v8950
    %10041 = vmatpush.bf16.msra.mxu0 %v8942
    %10042 = vmatpush.bf16.msra.mxu0 %v8934
    %10043 = vmatpush.bf16.msra.mxu0 %v8926
    %10044 = vmatpush.bf16.msra.mxu0 %v8918
    %10045 = vmatpush.bf16.msra.mxu0 %v8910
    %10046 = vmatmul.bf16.gmra.mxu0 %v6708
    %v10047 = vpop.f32.mrf.mxu0
    %v10048 = vadd.f32 %v10035, %v10047
    %v10049 = vpop.f32.mrf.mxu0
    %10050 = vdwg.mxu0
    %10051 = vmatpush.bf16.msra.mxu0 %v9030
    %10052 = vmatpush.bf16.msra.mxu0 %v9022
    %10053 = vmatpush.bf16.msra.mxu0 %v9014
    %10054 = vmatpush.bf16.msra.mxu0 %v9006
    %10055 = vmatpush.bf16.msra.mxu0 %v8998
    %10056 = vmatpush.bf16.msra.mxu0 %v8990
    %10057 = vmatpush.bf16.msra.mxu0 %v8982
    %10058 = vmatpush.bf16.msra.mxu0 %v8974
    %10059 = vmatmul.bf16.gmra.mxu0 %v6709
    %v10060 = vpop.f32.mrf.mxu0
    %v10061 = vadd.f32 %v10048, %v10060
    %v10062 = vpop.f32.mrf.mxu0
    %10063 = vdwg.mxu0
    %10064 = vmatpush.bf16.msra.mxu0 %v9094
    %10065 = vmatpush.bf16.msra.mxu0 %v9086
    %10066 = vmatpush.bf16.msra.mxu0 %v9078
    %10067 = vmatpush.bf16.msra.mxu0 %v9070
    %10068 = vmatpush.bf16.msra.mxu0 %v9062
    %10069 = vmatpush.bf16.msra.mxu0 %v9054
    %10070 = vmatpush.bf16.msra.mxu0 %v9046
    %10071 = vmatpush.bf16.msra.mxu0 %v9038
    %10072 = vmatmul.bf16.gmra.mxu0 %v6710
    %v10073 = vpop.f32.mrf.mxu0
    %v10074 = vadd.f32 %v10061, %v10073
    %v10075 = vpop.f32.mrf.mxu0
    %10076 = vdwg.mxu0
    %10077 = vmatpush.bf16.msra.mxu0 %v9158
    %10078 = vmatpush.bf16.msra.mxu0 %v9150
    %10079 = vmatpush.bf16.msra.mxu0 %v9142
    %10080 = vmatpush.bf16.msra.mxu0 %v9134
    %10081 = vmatpush.bf16.msra.mxu0 %v9126
    %10082 = vmatpush.bf16.msra.mxu0 %v9118
    %10083 = vmatpush.bf16.msra.mxu0 %v9110
    %10084 = vmatpush.bf16.msra.mxu0 %v9102
    %10085 = vmatmul.bf16.gmra.mxu0 %v6711
    %v10086 = vpop.f32.mrf.mxu0
    %v10087 = vadd.f32 %v10074, %v10086
    %v10088 = vpop.f32.mrf.mxu0
    %10089 = vdwg.mxu0
    %10090 = vmatpush.bf16.msra.mxu0 %v9222
    %10091 = vmatpush.bf16.msra.mxu0 %v9214
    %10092 = vmatpush.bf16.msra.mxu0 %v9206
    %10093 = vmatpush.bf16.msra.mxu0 %v9198
    %10094 = vmatpush.bf16.msra.mxu0 %v9190
    %10095 = vmatpush.bf16.msra.mxu0 %v9182
    %10096 = vmatpush.bf16.msra.mxu0 %v9174
    %10097 = vmatpush.bf16.msra.mxu0 %v9166
    %10098 = vmatmul.bf16.gmra.mxu0 %v6712
    %v10099 = vpop.f32.mrf.mxu0
    %v10100 = vadd.f32 %v10087, %v10099
    %v10101 = vpop.f32.mrf.mxu0
    %10102 = vdwg.mxu0
    %10103 = vmatpush.bf16.msra.mxu0 %v9286
    %10104 = vmatpush.bf16.msra.mxu0 %v9278
    %10105 = vmatpush.bf16.msra.mxu0 %v9270
    %10106 = vmatpush.bf16.msra.mxu0 %v9262
    %10107 = vmatpush.bf16.msra.mxu0 %v9254
    %10108 = vmatpush.bf16.msra.mxu0 %v9246
    %10109 = vmatpush.bf16.msra.mxu0 %v9238
    %10110 = vmatpush.bf16.msra.mxu0 %v9230
    %10111 = vmatmul.bf16.gmra.mxu0 %v6713
    %v10112 = vpop.f32.mrf.mxu0
    %v10113 = vadd.f32 %v10100, %v10112
    %v10114 = vpop.f32.mrf.mxu0
    %10115 = vdwg.mxu0
    %10116 = vmatpush.bf16.msra.mxu0 %v8839
    %10117 = vmatpush.bf16.msra.mxu0 %v8831
    %10118 = vmatpush.bf16.msra.mxu0 %v8823
    %10119 = vmatpush.bf16.msra.mxu0 %v8815
    %10120 = vmatpush.bf16.msra.mxu0 %v8807
    %10121 = vmatpush.bf16.msra.mxu0 %v8799
    %10122 = vmatpush.bf16.msra.mxu0 %v8791
    %10123 = vmatpush.bf16.msra.mxu0 %v8783
    %10124 = vmatmul.bf16.gmra.mxu0 %v6706
    %v10125 = vpop.f32.mrf.mxu0
    %v10126 = vadd.f32 %v7231, %v10125
    %v10127 = vpop.f32.mrf.mxu0
    %10128 = vdwg.mxu0
    %10129 = vmatpush.bf16.msra.mxu0 %v8903
    %10130 = vmatpush.bf16.msra.mxu0 %v8895
    %10131 = vmatpush.bf16.msra.mxu0 %v8887
    %10132 = vmatpush.bf16.msra.mxu0 %v8879
    %10133 = vmatpush.bf16.msra.mxu0 %v8871
    %10134 = vmatpush.bf16.msra.mxu0 %v8863
    %10135 = vmatpush.bf16.msra.mxu0 %v8855
    %10136 = vmatpush.bf16.msra.mxu0 %v8847
    %10137 = vmatmul.bf16.gmra.mxu0 %v6707
    %v10138 = vpop.f32.mrf.mxu0
    %v10139 = vadd.f32 %v10126, %v10138
    %v10140 = vpop.f32.mrf.mxu0
    %10141 = vdwg.mxu0
    %10142 = vmatpush.bf16.msra.mxu0 %v8967
    %10143 = vmatpush.bf16.msra.mxu0 %v8959
    %10144 = vmatpush.bf16.msra.mxu0 %v8951
    %10145 = vmatpush.bf16.msra.mxu0 %v8943
    %10146 = vmatpush.bf16.msra.mxu0 %v8935
    %10147 = vmatpush.bf16.msra.mxu0 %v8927
    %10148 = vmatpush.bf16.msra.mxu0 %v8919
    %10149 = vmatpush.bf16.msra.mxu0 %v8911
    %10150 = vmatmul.bf16.gmra.mxu0 %v6708
    %v10151 = vpop.f32.mrf.mxu0
    %v10152 = vadd.f32 %v10139, %v10151
    %v10153 = vpop.f32.mrf.mxu0
    %10154 = vdwg.mxu0
    %10155 = vmatpush.bf16.msra.mxu0 %v9031
    %10156 = vmatpush.bf16.msra.mxu0 %v9023
    %10157 = vmatpush.bf16.msra.mxu0 %v9015
    %10158 = vmatpush.bf16.msra.mxu0 %v9007
    %10159 = vmatpush.bf16.msra.mxu0 %v8999
    %10160 = vmatpush.bf16.msra.mxu0 %v8991
    %10161 = vmatpush.bf16.msra.mxu0 %v8983
    %10162 = vmatpush.bf16.msra.mxu0 %v8975
    %10163 = vmatmul.bf16.gmra.mxu0 %v6709
    %v10164 = vpop.f32.mrf.mxu0
    %v10165 = vadd.f32 %v10152, %v10164
    %v10166 = vpop.f32.mrf.mxu0
    %10167 = vdwg.mxu0
    %10168 = vmatpush.bf16.msra.mxu0 %v9095
    %10169 = vmatpush.bf16.msra.mxu0 %v9087
    %10170 = vmatpush.bf16.msra.mxu0 %v9079
    %10171 = vmatpush.bf16.msra.mxu0 %v9071
    %10172 = vmatpush.bf16.msra.mxu0 %v9063
    %10173 = vmatpush.bf16.msra.mxu0 %v9055
    %10174 = vmatpush.bf16.msra.mxu0 %v9047
    %10175 = vmatpush.bf16.msra.mxu0 %v9039
    %10176 = vmatmul.bf16.gmra.mxu0 %v6710
    %v10177 = vpop.f32.mrf.mxu0
    %v10178 = vadd.f32 %v10165, %v10177
    %v10179 = vpop.f32.mrf.mxu0
    %10180 = vdwg.mxu0
    %10181 = vmatpush.bf16.msra.mxu0 %v9159
    %10182 = vmatpush.bf16.msra.mxu0 %v9151
    %10183 = vmatpush.bf16.msra.mxu0 %v9143
    %10184 = vmatpush.bf16.msra.mxu0 %v9135
    %10185 = vmatpush.bf16.msra.mxu0 %v9127
    %10186 = vmatpush.bf16.msra.mxu0 %v9119
    %10187 = vmatpush.bf16.msra.mxu0 %v9111
    %10188 = vmatpush.bf16.msra.mxu0 %v9103
    %10189 = vmatmul.bf16.gmra.mxu0 %v6711
    %v10190 = vpop.f32.mrf.mxu0
    %v10191 = vadd.f32 %v10178, %v10190
    %v10192 = vpop.f32.mrf.mxu0
    %10193 = vdwg.mxu0
    %10194 = vmatpush.bf16.msra.mxu0 %v9223
    %10195 = vmatpush.bf16.msra.mxu0 %v9215
    %10196 = vmatpush.bf16.msra.mxu0 %v9207
    %10197 = vmatpush.bf16.msra.mxu0 %v9199
    %10198 = vmatpush.bf16.msra.mxu0 %v9191
    %10199 = vmatpush.bf16.msra.mxu0 %v9183
    %10200 = vmatpush.bf16.msra.mxu0 %v9175
    %10201 = vmatpush.bf16.msra.mxu0 %v9167
    %10202 = vmatmul.bf16.gmra.mxu0 %v6712
    %v10203 = vpop.f32.mrf.mxu0
    %v10204 = vadd.f32 %v10191, %v10203
    %v10205 = vpop.f32.mrf.mxu0
    %10206 = vdwg.mxu0
    %10207 = vmatpush.bf16.msra.mxu0 %v9287
    %10208 = vmatpush.bf16.msra.mxu0 %v9279
    %10209 = vmatpush.bf16.msra.mxu0 %v9271
    %10210 = vmatpush.bf16.msra.mxu0 %v9263
    %10211 = vmatpush.bf16.msra.mxu0 %v9255
    %10212 = vmatpush.bf16.msra.mxu0 %v9247
    %10213 = vmatpush.bf16.msra.mxu0 %v9239
    %10214 = vmatpush.bf16.msra.mxu0 %v9231
    %10215 = vmatmul.bf16.gmra.mxu0 %v6713
    %v10216 = vpop.f32.mrf.mxu0
    %v10217 = vadd.f32 %v10204, %v10216
    %v10218 = vpop.f32.mrf.mxu0
    %10219 = vdwg.mxu0
    %10220 = vmatpush.bf16.msra.mxu0 %v8840
    %10221 = vmatpush.bf16.msra.mxu0 %v8832
    %10222 = vmatpush.bf16.msra.mxu0 %v8824
    %10223 = vmatpush.bf16.msra.mxu0 %v8816
    %10224 = vmatpush.bf16.msra.mxu0 %v8808
    %10225 = vmatpush.bf16.msra.mxu0 %v8800
    %10226 = vmatpush.bf16.msra.mxu0 %v8792
    %10227 = vmatpush.bf16.msra.mxu0 %v8784
    %10228 = vmatmul.bf16.gmra.mxu0 %v6706
    %v10229 = vpop.f32.mrf.mxu0
    %v10230 = vadd.f32 %v7232, %v10229
    %v10231 = vpop.f32.mrf.mxu0
    %10232 = vdwg.mxu0
    %10233 = vmatpush.bf16.msra.mxu0 %v8904
    %10234 = vmatpush.bf16.msra.mxu0 %v8896
    %10235 = vmatpush.bf16.msra.mxu0 %v8888
    %10236 = vmatpush.bf16.msra.mxu0 %v8880
    %10237 = vmatpush.bf16.msra.mxu0 %v8872
    %10238 = vmatpush.bf16.msra.mxu0 %v8864
    %10239 = vmatpush.bf16.msra.mxu0 %v8856
    %10240 = vmatpush.bf16.msra.mxu0 %v8848
    %10241 = vmatmul.bf16.gmra.mxu0 %v6707
    %v10242 = vpop.f32.mrf.mxu0
    %v10243 = vadd.f32 %v10230, %v10242
    %v10244 = vpop.f32.mrf.mxu0
    %10245 = vdwg.mxu0
    %10246 = vmatpush.bf16.msra.mxu0 %v8968
    %10247 = vmatpush.bf16.msra.mxu0 %v8960
    %10248 = vmatpush.bf16.msra.mxu0 %v8952
    %10249 = vmatpush.bf16.msra.mxu0 %v8944
    %10250 = vmatpush.bf16.msra.mxu0 %v8936
    %10251 = vmatpush.bf16.msra.mxu0 %v8928
    %10252 = vmatpush.bf16.msra.mxu0 %v8920
    %10253 = vmatpush.bf16.msra.mxu0 %v8912
    %10254 = vmatmul.bf16.gmra.mxu0 %v6708
    %v10255 = vpop.f32.mrf.mxu0
    %v10256 = vadd.f32 %v10243, %v10255
    %v10257 = vpop.f32.mrf.mxu0
    %10258 = vdwg.mxu0
    %10259 = vmatpush.bf16.msra.mxu0 %v9032
    %10260 = vmatpush.bf16.msra.mxu0 %v9024
    %10261 = vmatpush.bf16.msra.mxu0 %v9016
    %10262 = vmatpush.bf16.msra.mxu0 %v9008
    %10263 = vmatpush.bf16.msra.mxu0 %v9000
    %10264 = vmatpush.bf16.msra.mxu0 %v8992
    %10265 = vmatpush.bf16.msra.mxu0 %v8984
    %10266 = vmatpush.bf16.msra.mxu0 %v8976
    %10267 = vmatmul.bf16.gmra.mxu0 %v6709
    %v10268 = vpop.f32.mrf.mxu0
    %v10269 = vadd.f32 %v10256, %v10268
    %v10270 = vpop.f32.mrf.mxu0
    %10271 = vdwg.mxu0
    %10272 = vmatpush.bf16.msra.mxu0 %v9096
    %10273 = vmatpush.bf16.msra.mxu0 %v9088
    %10274 = vmatpush.bf16.msra.mxu0 %v9080
    %10275 = vmatpush.bf16.msra.mxu0 %v9072
    %10276 = vmatpush.bf16.msra.mxu0 %v9064
    %10277 = vmatpush.bf16.msra.mxu0 %v9056
    %10278 = vmatpush.bf16.msra.mxu0 %v9048
    %10279 = vmatpush.bf16.msra.mxu0 %v9040
    %10280 = vmatmul.bf16.gmra.mxu0 %v6710
    %v10281 = vpop.f32.mrf.mxu0
    %v10282 = vadd.f32 %v10269, %v10281
    %v10283 = vpop.f32.mrf.mxu0
    %10284 = vdwg.mxu0
    %10285 = vmatpush.bf16.msra.mxu0 %v9160
    %10286 = vmatpush.bf16.msra.mxu0 %v9152
    %10287 = vmatpush.bf16.msra.mxu0 %v9144
    %10288 = vmatpush.bf16.msra.mxu0 %v9136
    %10289 = vmatpush.bf16.msra.mxu0 %v9128
    %10290 = vmatpush.bf16.msra.mxu0 %v9120
    %10291 = vmatpush.bf16.msra.mxu0 %v9112
    %10292 = vmatpush.bf16.msra.mxu0 %v9104
    %10293 = vmatmul.bf16.gmra.mxu0 %v6711
    %v10294 = vpop.f32.mrf.mxu0
    %v10295 = vadd.f32 %v10282, %v10294
    %v10296 = vpop.f32.mrf.mxu0
    %10297 = vdwg.mxu0
    %10298 = vmatpush.bf16.msra.mxu0 %v9224
    %10299 = vmatpush.bf16.msra.mxu0 %v9216
    %10300 = vmatpush.bf16.msra.mxu0 %v9208
    %10301 = vmatpush.bf16.msra.mxu0 %v9200
    %10302 = vmatpush.bf16.msra.mxu0 %v9192
    %10303 = vmatpush.bf16.msra.mxu0 %v9184
    %10304 = vmatpush.bf16.msra.mxu0 %v9176
    %10305 = vmatpush.bf16.msra.mxu0 %v9168
    %10306 = vmatmul.bf16.gmra.mxu0 %v6712
    %v10307 = vpop.f32.mrf.mxu0
    %v10308 = vadd.f32 %v10295, %v10307
    %v10309 = vpop.f32.mrf.mxu0
    %10310 = vdwg.mxu0
    %10311 = vmatpush.bf16.msra.mxu0 %v9288
    %10312 = vmatpush.bf16.msra.mxu0 %v9280
    %10313 = vmatpush.bf16.msra.mxu0 %v9272
    %10314 = vmatpush.bf16.msra.mxu0 %v9264
    %10315 = vmatpush.bf16.msra.mxu0 %v9256
    %10316 = vmatpush.bf16.msra.mxu0 %v9248
    %10317 = vmatpush.bf16.msra.mxu0 %v9240
    %10318 = vmatpush.bf16.msra.mxu0 %v9232
    %10319 = vmatmul.bf16.gmra.mxu0 %v6713
    %v10320 = vpop.f32.mrf.mxu0
    %v10321 = vadd.f32 %v10308, %v10320
    %v10322 = vpop.f32.mrf.mxu0
    %10323 = vdwg.mxu0
    %10324 = vmatpush.bf16.msra.mxu0 %v8841
    %10325 = vmatpush.bf16.msra.mxu0 %v8833
    %10326 = vmatpush.bf16.msra.mxu0 %v8825
    %10327 = vmatpush.bf16.msra.mxu0 %v8817
    %10328 = vmatpush.bf16.msra.mxu0 %v8809
    %10329 = vmatpush.bf16.msra.mxu0 %v8801
    %10330 = vmatpush.bf16.msra.mxu0 %v8793
    %10331 = vmatpush.bf16.msra.mxu0 %v8785
    %10332 = vmatmul.bf16.gmra.mxu0 %v6706
    %v10333 = vpop.f32.mrf.mxu0
    %v10334 = vadd.f32 %v7233, %v10333
    %v10335 = vpop.f32.mrf.mxu0
    %10336 = vdwg.mxu0
    %10337 = vmatpush.bf16.msra.mxu0 %v8905
    %10338 = vmatpush.bf16.msra.mxu0 %v8897
    %10339 = vmatpush.bf16.msra.mxu0 %v8889
    %10340 = vmatpush.bf16.msra.mxu0 %v8881
    %10341 = vmatpush.bf16.msra.mxu0 %v8873
    %10342 = vmatpush.bf16.msra.mxu0 %v8865
    %10343 = vmatpush.bf16.msra.mxu0 %v8857
    %10344 = vmatpush.bf16.msra.mxu0 %v8849
    %10345 = vmatmul.bf16.gmra.mxu0 %v6707
    %v10346 = vpop.f32.mrf.mxu0
    %v10347 = vadd.f32 %v10334, %v10346
    %v10348 = vpop.f32.mrf.mxu0
    %10349 = vdwg.mxu0
    %10350 = vmatpush.bf16.msra.mxu0 %v8969
    %10351 = vmatpush.bf16.msra.mxu0 %v8961
    %10352 = vmatpush.bf16.msra.mxu0 %v8953
    %10353 = vmatpush.bf16.msra.mxu0 %v8945
    %10354 = vmatpush.bf16.msra.mxu0 %v8937
    %10355 = vmatpush.bf16.msra.mxu0 %v8929
    %10356 = vmatpush.bf16.msra.mxu0 %v8921
    %10357 = vmatpush.bf16.msra.mxu0 %v8913
    %10358 = vmatmul.bf16.gmra.mxu0 %v6708
    %v10359 = vpop.f32.mrf.mxu0
    %v10360 = vadd.f32 %v10347, %v10359
    %v10361 = vpop.f32.mrf.mxu0
    %10362 = vdwg.mxu0
    %10363 = vmatpush.bf16.msra.mxu0 %v9033
    %10364 = vmatpush.bf16.msra.mxu0 %v9025
    %10365 = vmatpush.bf16.msra.mxu0 %v9017
    %10366 = vmatpush.bf16.msra.mxu0 %v9009
    %10367 = vmatpush.bf16.msra.mxu0 %v9001
    %10368 = vmatpush.bf16.msra.mxu0 %v8993
    %10369 = vmatpush.bf16.msra.mxu0 %v8985
    %10370 = vmatpush.bf16.msra.mxu0 %v8977
    %10371 = vmatmul.bf16.gmra.mxu0 %v6709
    %v10372 = vpop.f32.mrf.mxu0
    %v10373 = vadd.f32 %v10360, %v10372
    %v10374 = vpop.f32.mrf.mxu0
    %10375 = vdwg.mxu0
    %10376 = vmatpush.bf16.msra.mxu0 %v9097
    %10377 = vmatpush.bf16.msra.mxu0 %v9089
    %10378 = vmatpush.bf16.msra.mxu0 %v9081
    %10379 = vmatpush.bf16.msra.mxu0 %v9073
    %10380 = vmatpush.bf16.msra.mxu0 %v9065
    %10381 = vmatpush.bf16.msra.mxu0 %v9057
    %10382 = vmatpush.bf16.msra.mxu0 %v9049
    %10383 = vmatpush.bf16.msra.mxu0 %v9041
    %10384 = vmatmul.bf16.gmra.mxu0 %v6710
    %v10385 = vpop.f32.mrf.mxu0
    %v10386 = vadd.f32 %v10373, %v10385
    %v10387 = vpop.f32.mrf.mxu0
    %10388 = vdwg.mxu0
    %10389 = vmatpush.bf16.msra.mxu0 %v9161
    %10390 = vmatpush.bf16.msra.mxu0 %v9153
    %10391 = vmatpush.bf16.msra.mxu0 %v9145
    %10392 = vmatpush.bf16.msra.mxu0 %v9137
    %10393 = vmatpush.bf16.msra.mxu0 %v9129
    %10394 = vmatpush.bf16.msra.mxu0 %v9121
    %10395 = vmatpush.bf16.msra.mxu0 %v9113
    %10396 = vmatpush.bf16.msra.mxu0 %v9105
    %10397 = vmatmul.bf16.gmra.mxu0 %v6711
    %v10398 = vpop.f32.mrf.mxu0
    %v10399 = vadd.f32 %v10386, %v10398
    %v10400 = vpop.f32.mrf.mxu0
    %10401 = vdwg.mxu0
    %10402 = vmatpush.bf16.msra.mxu0 %v9225
    %10403 = vmatpush.bf16.msra.mxu0 %v9217
    %10404 = vmatpush.bf16.msra.mxu0 %v9209
    %10405 = vmatpush.bf16.msra.mxu0 %v9201
    %10406 = vmatpush.bf16.msra.mxu0 %v9193
    %10407 = vmatpush.bf16.msra.mxu0 %v9185
    %10408 = vmatpush.bf16.msra.mxu0 %v9177
    %10409 = vmatpush.bf16.msra.mxu0 %v9169
    %10410 = vmatmul.bf16.gmra.mxu0 %v6712
    %v10411 = vpop.f32.mrf.mxu0
    %v10412 = vadd.f32 %v10399, %v10411
    %v10413 = vpop.f32.mrf.mxu0
    %10414 = vdwg.mxu0
    %10415 = vmatpush.bf16.msra.mxu0 %v9289
    %10416 = vmatpush.bf16.msra.mxu0 %v9281
    %10417 = vmatpush.bf16.msra.mxu0 %v9273
    %10418 = vmatpush.bf16.msra.mxu0 %v9265
    %10419 = vmatpush.bf16.msra.mxu0 %v9257
    %10420 = vmatpush.bf16.msra.mxu0 %v9249
    %10421 = vmatpush.bf16.msra.mxu0 %v9241
    %10422 = vmatpush.bf16.msra.mxu0 %v9233
    %10423 = vmatmul.bf16.gmra.mxu0 %v6713
    %v10424 = vpop.f32.mrf.mxu0
    %v10425 = vadd.f32 %v10412, %v10424
    %v10426 = vpop.f32.mrf.mxu0
    %10427 = vdwg.mxu0
    %10428 = vmatpush.bf16.msra.mxu0 %v8842
    %10429 = vmatpush.bf16.msra.mxu0 %v8834
    %10430 = vmatpush.bf16.msra.mxu0 %v8826
    %10431 = vmatpush.bf16.msra.mxu0 %v8818
    %10432 = vmatpush.bf16.msra.mxu0 %v8810
    %10433 = vmatpush.bf16.msra.mxu0 %v8802
    %10434 = vmatpush.bf16.msra.mxu0 %v8794
    %10435 = vmatpush.bf16.msra.mxu0 %v8786
    %10436 = vmatmul.bf16.gmra.mxu0 %v6706
    %v10437 = vpop.f32.mrf.mxu0
    %v10438 = vadd.f32 %v7234, %v10437
    %v10439 = vpop.f32.mrf.mxu0
    %10440 = vdwg.mxu0
    %10441 = vmatpush.bf16.msra.mxu0 %v8906
    %10442 = vmatpush.bf16.msra.mxu0 %v8898
    %10443 = vmatpush.bf16.msra.mxu0 %v8890
    %10444 = vmatpush.bf16.msra.mxu0 %v8882
    %10445 = vmatpush.bf16.msra.mxu0 %v8874
    %10446 = vmatpush.bf16.msra.mxu0 %v8866
    %10447 = vmatpush.bf16.msra.mxu0 %v8858
    %10448 = vmatpush.bf16.msra.mxu0 %v8850
    %10449 = vmatmul.bf16.gmra.mxu0 %v6707
    %v10450 = vpop.f32.mrf.mxu0
    %v10451 = vadd.f32 %v10438, %v10450
    %v10452 = vpop.f32.mrf.mxu0
    %10453 = vdwg.mxu0
    %10454 = vmatpush.bf16.msra.mxu0 %v8970
    %10455 = vmatpush.bf16.msra.mxu0 %v8962
    %10456 = vmatpush.bf16.msra.mxu0 %v8954
    %10457 = vmatpush.bf16.msra.mxu0 %v8946
    %10458 = vmatpush.bf16.msra.mxu0 %v8938
    %10459 = vmatpush.bf16.msra.mxu0 %v8930
    %10460 = vmatpush.bf16.msra.mxu0 %v8922
    %10461 = vmatpush.bf16.msra.mxu0 %v8914
    %10462 = vmatmul.bf16.gmra.mxu0 %v6708
    %v10463 = vpop.f32.mrf.mxu0
    %v10464 = vadd.f32 %v10451, %v10463
    %v10465 = vpop.f32.mrf.mxu0
    %10466 = vdwg.mxu0
    %10467 = vmatpush.bf16.msra.mxu0 %v9034
    %10468 = vmatpush.bf16.msra.mxu0 %v9026
    %10469 = vmatpush.bf16.msra.mxu0 %v9018
    %10470 = vmatpush.bf16.msra.mxu0 %v9010
    %10471 = vmatpush.bf16.msra.mxu0 %v9002
    %10472 = vmatpush.bf16.msra.mxu0 %v8994
    %10473 = vmatpush.bf16.msra.mxu0 %v8986
    %10474 = vmatpush.bf16.msra.mxu0 %v8978
    %10475 = vmatmul.bf16.gmra.mxu0 %v6709
    %v10476 = vpop.f32.mrf.mxu0
    %v10477 = vadd.f32 %v10464, %v10476
    %v10478 = vpop.f32.mrf.mxu0
    %10479 = vdwg.mxu0
    %10480 = vmatpush.bf16.msra.mxu0 %v9098
    %10481 = vmatpush.bf16.msra.mxu0 %v9090
    %10482 = vmatpush.bf16.msra.mxu0 %v9082
    %10483 = vmatpush.bf16.msra.mxu0 %v9074
    %10484 = vmatpush.bf16.msra.mxu0 %v9066
    %10485 = vmatpush.bf16.msra.mxu0 %v9058
    %10486 = vmatpush.bf16.msra.mxu0 %v9050
    %10487 = vmatpush.bf16.msra.mxu0 %v9042
    %10488 = vmatmul.bf16.gmra.mxu0 %v6710
    %v10489 = vpop.f32.mrf.mxu0
    %v10490 = vadd.f32 %v10477, %v10489
    %v10491 = vpop.f32.mrf.mxu0
    %10492 = vdwg.mxu0
    %10493 = vmatpush.bf16.msra.mxu0 %v9162
    %10494 = vmatpush.bf16.msra.mxu0 %v9154
    %10495 = vmatpush.bf16.msra.mxu0 %v9146
    %10496 = vmatpush.bf16.msra.mxu0 %v9138
    %10497 = vmatpush.bf16.msra.mxu0 %v9130
    %10498 = vmatpush.bf16.msra.mxu0 %v9122
    %10499 = vmatpush.bf16.msra.mxu0 %v9114
    %10500 = vmatpush.bf16.msra.mxu0 %v9106
    %10501 = vmatmul.bf16.gmra.mxu0 %v6711
    %v10502 = vpop.f32.mrf.mxu0
    %v10503 = vadd.f32 %v10490, %v10502
    %v10504 = vpop.f32.mrf.mxu0
    %10505 = vdwg.mxu0
    %10506 = vmatpush.bf16.msra.mxu0 %v9226
    %10507 = vmatpush.bf16.msra.mxu0 %v9218
    %10508 = vmatpush.bf16.msra.mxu0 %v9210
    %10509 = vmatpush.bf16.msra.mxu0 %v9202
    %10510 = vmatpush.bf16.msra.mxu0 %v9194
    %10511 = vmatpush.bf16.msra.mxu0 %v9186
    %10512 = vmatpush.bf16.msra.mxu0 %v9178
    %10513 = vmatpush.bf16.msra.mxu0 %v9170
    %10514 = vmatmul.bf16.gmra.mxu0 %v6712
    %v10515 = vpop.f32.mrf.mxu0
    %v10516 = vadd.f32 %v10503, %v10515
    %v10517 = vpop.f32.mrf.mxu0
    %10518 = vdwg.mxu0
    %10519 = vmatpush.bf16.msra.mxu0 %v9290
    %10520 = vmatpush.bf16.msra.mxu0 %v9282
    %10521 = vmatpush.bf16.msra.mxu0 %v9274
    %10522 = vmatpush.bf16.msra.mxu0 %v9266
    %10523 = vmatpush.bf16.msra.mxu0 %v9258
    %10524 = vmatpush.bf16.msra.mxu0 %v9250
    %10525 = vmatpush.bf16.msra.mxu0 %v9242
    %10526 = vmatpush.bf16.msra.mxu0 %v9234
    %10527 = vmatmul.bf16.gmra.mxu0 %v6713
    %v10528 = vpop.f32.mrf.mxu0
    %v10529 = vadd.f32 %v10516, %v10528
    %v10530 = vpop.f32.mrf.mxu0
    %10531 = vdwg.mxu0
    %10532 = vmatpush.bf16.msra.mxu0 %v8843
    %10533 = vmatpush.bf16.msra.mxu0 %v8835
    %10534 = vmatpush.bf16.msra.mxu0 %v8827
    %10535 = vmatpush.bf16.msra.mxu0 %v8819
    %10536 = vmatpush.bf16.msra.mxu0 %v8811
    %10537 = vmatpush.bf16.msra.mxu0 %v8803
    %10538 = vmatpush.bf16.msra.mxu0 %v8795
    %10539 = vmatpush.bf16.msra.mxu0 %v8787
    %10540 = vmatmul.bf16.gmra.mxu0 %v6706
    %v10541 = vpop.f32.mrf.mxu0
    %v10542 = vadd.f32 %v7235, %v10541
    %v10543 = vpop.f32.mrf.mxu0
    %10544 = vdwg.mxu0
    %10545 = vmatpush.bf16.msra.mxu0 %v8907
    %10546 = vmatpush.bf16.msra.mxu0 %v8899
    %10547 = vmatpush.bf16.msra.mxu0 %v8891
    %10548 = vmatpush.bf16.msra.mxu0 %v8883
    %10549 = vmatpush.bf16.msra.mxu0 %v8875
    %10550 = vmatpush.bf16.msra.mxu0 %v8867
    %10551 = vmatpush.bf16.msra.mxu0 %v8859
    %10552 = vmatpush.bf16.msra.mxu0 %v8851
    %10553 = vmatmul.bf16.gmra.mxu0 %v6707
    %v10554 = vpop.f32.mrf.mxu0
    %v10555 = vadd.f32 %v10542, %v10554
    %v10556 = vpop.f32.mrf.mxu0
    %10557 = vdwg.mxu0
    %10558 = vmatpush.bf16.msra.mxu0 %v8971
    %10559 = vmatpush.bf16.msra.mxu0 %v8963
    %10560 = vmatpush.bf16.msra.mxu0 %v8955
    %10561 = vmatpush.bf16.msra.mxu0 %v8947
    %10562 = vmatpush.bf16.msra.mxu0 %v8939
    %10563 = vmatpush.bf16.msra.mxu0 %v8931
    %10564 = vmatpush.bf16.msra.mxu0 %v8923
    %10565 = vmatpush.bf16.msra.mxu0 %v8915
    %10566 = vmatmul.bf16.gmra.mxu0 %v6708
    %v10567 = vpop.f32.mrf.mxu0
    %v10568 = vadd.f32 %v10555, %v10567
    %v10569 = vpop.f32.mrf.mxu0
    %10570 = vdwg.mxu0
    %10571 = vmatpush.bf16.msra.mxu0 %v9035
    %10572 = vmatpush.bf16.msra.mxu0 %v9027
    %10573 = vmatpush.bf16.msra.mxu0 %v9019
    %10574 = vmatpush.bf16.msra.mxu0 %v9011
    %10575 = vmatpush.bf16.msra.mxu0 %v9003
    %10576 = vmatpush.bf16.msra.mxu0 %v8995
    %10577 = vmatpush.bf16.msra.mxu0 %v8987
    %10578 = vmatpush.bf16.msra.mxu0 %v8979
    %10579 = vmatmul.bf16.gmra.mxu0 %v6709
    %v10580 = vpop.f32.mrf.mxu0
    %v10581 = vadd.f32 %v10568, %v10580
    %v10582 = vpop.f32.mrf.mxu0
    %10583 = vdwg.mxu0
    %10584 = vmatpush.bf16.msra.mxu0 %v9099
    %10585 = vmatpush.bf16.msra.mxu0 %v9091
    %10586 = vmatpush.bf16.msra.mxu0 %v9083
    %10587 = vmatpush.bf16.msra.mxu0 %v9075
    %10588 = vmatpush.bf16.msra.mxu0 %v9067
    %10589 = vmatpush.bf16.msra.mxu0 %v9059
    %10590 = vmatpush.bf16.msra.mxu0 %v9051
    %10591 = vmatpush.bf16.msra.mxu0 %v9043
    %10592 = vmatmul.bf16.gmra.mxu0 %v6710
    %v10593 = vpop.f32.mrf.mxu0
    %v10594 = vadd.f32 %v10581, %v10593
    %v10595 = vpop.f32.mrf.mxu0
    %10596 = vdwg.mxu0
    %10597 = vmatpush.bf16.msra.mxu0 %v9163
    %10598 = vmatpush.bf16.msra.mxu0 %v9155
    %10599 = vmatpush.bf16.msra.mxu0 %v9147
    %10600 = vmatpush.bf16.msra.mxu0 %v9139
    %10601 = vmatpush.bf16.msra.mxu0 %v9131
    %10602 = vmatpush.bf16.msra.mxu0 %v9123
    %10603 = vmatpush.bf16.msra.mxu0 %v9115
    %10604 = vmatpush.bf16.msra.mxu0 %v9107
    %10605 = vmatmul.bf16.gmra.mxu0 %v6711
    %v10606 = vpop.f32.mrf.mxu0
    %v10607 = vadd.f32 %v10594, %v10606
    %v10608 = vpop.f32.mrf.mxu0
    %10609 = vdwg.mxu0
    %10610 = vmatpush.bf16.msra.mxu0 %v9227
    %10611 = vmatpush.bf16.msra.mxu0 %v9219
    %10612 = vmatpush.bf16.msra.mxu0 %v9211
    %10613 = vmatpush.bf16.msra.mxu0 %v9203
    %10614 = vmatpush.bf16.msra.mxu0 %v9195
    %10615 = vmatpush.bf16.msra.mxu0 %v9187
    %10616 = vmatpush.bf16.msra.mxu0 %v9179
    %10617 = vmatpush.bf16.msra.mxu0 %v9171
    %10618 = vmatmul.bf16.gmra.mxu0 %v6712
    %v10619 = vpop.f32.mrf.mxu0
    %v10620 = vadd.f32 %v10607, %v10619
    %v10621 = vpop.f32.mrf.mxu0
    %10622 = vdwg.mxu0
    %10623 = vmatpush.bf16.msra.mxu0 %v9291
    %10624 = vmatpush.bf16.msra.mxu0 %v9283
    %10625 = vmatpush.bf16.msra.mxu0 %v9275
    %10626 = vmatpush.bf16.msra.mxu0 %v9267
    %10627 = vmatpush.bf16.msra.mxu0 %v9259
    %10628 = vmatpush.bf16.msra.mxu0 %v9251
    %10629 = vmatpush.bf16.msra.mxu0 %v9243
    %10630 = vmatpush.bf16.msra.mxu0 %v9235
    %10631 = vmatmul.bf16.gmra.mxu0 %v6713
    %v10632 = vpop.f32.mrf.mxu0
    %v10633 = vadd.f32 %v10620, %v10632
    %v10634 = vpop.f32.mrf.mxu0
    %10635 = vdwg.mxu0
    %v10636 = vmax.f32 %v9905, 0.0
    %v10637 = vmax.f32 %v10009, 0.0
    %v10638 = vmax.f32 %v10113, 0.0
    %v10639 = vmax.f32 %v10217, 0.0
    %v10640 = vmax.f32 %v10321, 0.0
    %v10641 = vmax.f32 %v10425, 0.0
    %v10642 = vmax.f32 %v10529, 0.0
    %v10643 = vmax.f32 %v10633, 0.0
    %v10644 = vpack.c.bf16 %v10636, %v10636
    %v10645 = vpack.c.bf16 %v10637, %v10637
    %v10646 = vpack.c.bf16 %v10638, %v10638
    %v10647 = vpack.c.bf16 %v10639, %v10639
    %v10648 = vpack.c.bf16 %v10640, %v10640
    %v10649 = vpack.c.bf16 %v10641, %v10641
    %v10650 = vpack.c.bf16 %v10642, %v10642
    %v10651 = vpack.c.bf16 %v10643, %v10643
    %v10652 = vld [vmem:[#allocation20] sm:$0xff]
    %v10653 = vld [vmem:[#allocation20 + $0x8] sm:$0xf]
    %v10654 = vld [vmem:[#allocation20 + $0xc] sm:$0xff]
    %v10655 = vld [vmem:[#allocation20 + $0x14] sm:$0xf]
    %v10656 = vld [vmem:[#allocation20 + $0x18] sm:$0xff]
    %v10657 = vld [vmem:[#allocation20 + $0x20] sm:$0xf]
    %v10658 = vld [vmem:[#allocation20 + $0x24] sm:$0xff]
    %v10659 = vld [vmem:[#allocation20 + $0x2c] sm:$0xf]
    %v10660 = vld [vmem:[#allocation20 + $0x30] sm:$0xff]
    %v10661 = vld [vmem:[#allocation20 + $0x38] sm:$0xf]
    %v10662 = vld [vmem:[#allocation20 + $0x3c] sm:$0xff]
    %v10663 = vld [vmem:[#allocation20 + $0x44] sm:$0xf]
    %v10664 = vld [vmem:[#allocation20 + $0x48] sm:$0xff]
    %v10665 = vld [vmem:[#allocation20 + $0x50] sm:$0xf]
    %v10666 = vld [vmem:[#allocation20 + $0x54] sm:$0xff]
    %v10667 = vld [vmem:[#allocation20 + $0x5c] sm:$0xf]
    %v10668 = vld [vmem:[#allocation20 + $0x60] sm:$0xff]
    %v10669 = vld [vmem:[#allocation20 + $0x68] sm:$0xf]
    %v10670 = vld [vmem:[#allocation20 + $0x6c] sm:$0xff]
    %v10671 = vld [vmem:[#allocation20 + $0x74] sm:$0xf]
    %v10672 = vld [vmem:[#allocation20 + $0x78] sm:$0xff]
    %v10673 = vld [vmem:[#allocation20 + $0x80] sm:$0xf]
    %v10674 = vld [vmem:[#allocation20 + $0x84] sm:$0xff]
    %v10675 = vld [vmem:[#allocation20 + $0x8c] sm:$0xf]
    %v10676 = vld [vmem:[#allocation20 + $0x90] sm:$0xff]
    %v10677 = vld [vmem:[#allocation20 + $0x98] sm:$0xf]
    %v10678 = vld [vmem:[#allocation20 + $0x9c] sm:$0xff]
    %v10679 = vld [vmem:[#allocation20 + $0xa4] sm:$0xf]
    %v10680 = vld [vmem:[#allocation20 + $0xa8] sm:$0xff]
    %v10681 = vld [vmem:[#allocation20 + $0xb0] sm:$0xf]
    %v10682 = vld [vmem:[#allocation20 + $0xb4] sm:$0xff]
    %v10683 = vld [vmem:[#allocation20 + $0xbc] sm:$0xf]
    %v10684 = vld [vmem:[#allocation20 + $0xc0] sm:$0xff]
    %v10685 = vld [vmem:[#allocation20 + $0xc8] sm:$0xf]
    %v10686 = vld [vmem:[#allocation20 + $0xcc] sm:$0xff]
    %v10687 = vld [vmem:[#allocation20 + $0xd4] sm:$0xf]
    %v10688 = vld [vmem:[#allocation20 + $0xd8] sm:$0xff]
    %v10689 = vld [vmem:[#allocation20 + $0xe0] sm:$0xf]
    %v10690 = vld [vmem:[#allocation20 + $0xe4] sm:$0xff]
    %v10691 = vld [vmem:[#allocation20 + $0xec] sm:$0xf]
    %v10692 = vld [vmem:[#allocation20 + $0xf0] sm:$0xff]
    %v10693 = vld [vmem:[#allocation20 + $0xf8] sm:$0xf]
    %v10694 = vld [vmem:[#allocation20 + $0xfc] sm:$0xff]
    %v10695 = vld [vmem:[#allocation20 + $0x104] sm:$0xf]
    %v10696 = vld [vmem:[#allocation20 + $0x108] sm:$0xff]
    %v10697 = vld [vmem:[#allocation20 + $0x110] sm:$0xf]
    %v10698 = vld [vmem:[#allocation20 + $0x114] sm:$0xff]
    %v10699 = vld [vmem:[#allocation20 + $0x11c] sm:$0xf]
    %v10700 = vld [vmem:[#allocation20 + $0x120] sm:$0xff]
    %v10701 = vld [vmem:[#allocation20 + $0x128] sm:$0xf]
    %v10702 = vld [vmem:[#allocation20 + $0x12c] sm:$0xff]
    %v10703 = vld [vmem:[#allocation20 + $0x134] sm:$0xf]
    %v10704 = vld [vmem:[#allocation20 + $0x138] sm:$0xff]
    %v10705 = vld [vmem:[#allocation20 + $0x140] sm:$0xf]
    %v10706 = vld [vmem:[#allocation20 + $0x144] sm:$0xff]
    %v10707 = vld [vmem:[#allocation20 + $0x14c] sm:$0xf]
    %v10708 = vld [vmem:[#allocation20 + $0x150] sm:$0xff]
    %v10709 = vld [vmem:[#allocation20 + $0x158] sm:$0xf]
    %v10710 = vld [vmem:[#allocation20 + $0x15c] sm:$0xff]
    %v10711 = vld [vmem:[#allocation20 + $0x164] sm:$0xf]
    %v10712 = vld [vmem:[#allocation20 + $0x168] sm:$0xff]
    %v10713 = vld [vmem:[#allocation20 + $0x170] sm:$0xf]
    %v10714 = vld [vmem:[#allocation20 + $0x174] sm:$0xff]
    %v10715 = vld [vmem:[#allocation20 + $0x17c] sm:$0xf]
    %v10716 = vld [vmem:[#allocation20 + $0x180] sm:$0xff]
    %v10717 = vld [vmem:[#allocation20 + $0x188] sm:$0xf]
    %v10718 = vld [vmem:[#allocation20 + $0x18c] sm:$0xff]
    %v10719 = vld [vmem:[#allocation20 + $0x194] sm:$0xf]
    %v10720 = vld [vmem:[#allocation20 + $0x198] sm:$0xff]
    %v10721 = vld [vmem:[#allocation20 + $0x1a0] sm:$0xf]
    %v10722 = vld [vmem:[#allocation20 + $0x1a4] sm:$0xff]
    %v10723 = vld [vmem:[#allocation20 + $0x1ac] sm:$0xf]
    %v10724 = vld [vmem:[#allocation20 + $0x1b0] sm:$0xff]
    %v10725 = vld [vmem:[#allocation20 + $0x1b8] sm:$0xf]
    %v10726 = vld [vmem:[#allocation20 + $0x1bc] sm:$0xff]
    %v10727 = vld [vmem:[#allocation20 + $0x1c4] sm:$0xf]
    %v10728 = vld [vmem:[#allocation20 + $0x1c8] sm:$0xff]
    %v10729 = vld [vmem:[#allocation20 + $0x1d0] sm:$0xf]
    %v10730 = vld [vmem:[#allocation20 + $0x1d4] sm:$0xff]
    %v10731 = vld [vmem:[#allocation20 + $0x1dc] sm:$0xf]
    %v10732 = vld [vmem:[#allocation20 + $0x1e0] sm:$0xff]
    %v10733 = vld [vmem:[#allocation20 + $0x1e8] sm:$0xf]
    %v10734 = vld [vmem:[#allocation20 + $0x1ec] sm:$0xff]
    %v10735 = vld [vmem:[#allocation20 + $0x1f4] sm:$0xf]
    %v10736 = vld [vmem:[#allocation20 + $0x1f8] sm:$0xff]
    %v10737 = vld [vmem:[#allocation20 + $0x200] sm:$0xf]
    %v10738 = vld [vmem:[#allocation20 + $0x204] sm:$0xff]
    %v10739 = vld [vmem:[#allocation20 + $0x20c] sm:$0xf]
    %v10740 = vld [vmem:[#allocation20 + $0x210] sm:$0xff]
    %v10741 = vld [vmem:[#allocation20 + $0x218] sm:$0xf]
    %v10742 = vld [vmem:[#allocation20 + $0x21c] sm:$0xff]
    %v10743 = vld [vmem:[#allocation20 + $0x224] sm:$0xf]
    %v10744 = vld [vmem:[#allocation20 + $0x228] sm:$0xff]
    %v10745 = vld [vmem:[#allocation20 + $0x230] sm:$0xf]
    %v10746 = vld [vmem:[#allocation20 + $0x234] sm:$0xff]
    %v10747 = vld [vmem:[#allocation20 + $0x23c] sm:$0xf]
    %v10748 = vld [vmem:[#allocation20 + $0x240] sm:$0xff]
    %v10749 = vld [vmem:[#allocation20 + $0x248] sm:$0xf]
    %v10750 = vld [vmem:[#allocation20 + $0x24c] sm:$0xff]
    %v10751 = vld [vmem:[#allocation20 + $0x254] sm:$0xf]
    %v10752 = vld [vmem:[#allocation20 + $0x258] sm:$0xff]
    %v10753 = vld [vmem:[#allocation20 + $0x260] sm:$0xf]
    %v10754 = vld [vmem:[#allocation20 + $0x264] sm:$0xff]
    %v10755 = vld [vmem:[#allocation20 + $0x26c] sm:$0xf]
    %v10756 = vld [vmem:[#allocation20 + $0x270] sm:$0xff]
    %v10757 = vld [vmem:[#allocation20 + $0x278] sm:$0xf]
    %v10758 = vld [vmem:[#allocation20 + $0x27c] sm:$0xff]
    %v10759 = vld [vmem:[#allocation20 + $0x284] sm:$0xf]
    %v10760 = vld [vmem:[#allocation20 + $0x288] sm:$0xff]
    %v10761 = vld [vmem:[#allocation20 + $0x290] sm:$0xf]
    %v10762 = vld [vmem:[#allocation20 + $0x294] sm:$0xff]
    %v10763 = vld [vmem:[#allocation20 + $0x29c] sm:$0xf]
    %v10764 = vld [vmem:[#allocation20 + $0x2a0] sm:$0xff]
    %v10765 = vld [vmem:[#allocation20 + $0x2a8] sm:$0xf]
    %v10766 = vld [vmem:[#allocation20 + $0x2ac] sm:$0xff]
    %v10767 = vld [vmem:[#allocation20 + $0x2b4] sm:$0xf]
    %v10768 = vld [vmem:[#allocation20 + $0x2b8] sm:$0xff]
    %v10769 = vld [vmem:[#allocation20 + $0x2c0] sm:$0xf]
    %v10770 = vld [vmem:[#allocation20 + $0x2c4] sm:$0xff]
    %v10771 = vld [vmem:[#allocation20 + $0x2cc] sm:$0xf]
    %v10772 = vld [vmem:[#allocation20 + $0x2d0] sm:$0xff]
    %v10773 = vld [vmem:[#allocation20 + $0x2d8] sm:$0xf]
    %v10774 = vld [vmem:[#allocation20 + $0x2dc] sm:$0xff]
    %v10775 = vld [vmem:[#allocation20 + $0x2e4] sm:$0xf]
    %v10776 = vld [vmem:[#allocation20 + $0x2e8] sm:$0xff]
    %v10777 = vld [vmem:[#allocation20 + $0x2f0] sm:$0xf]
    %v10778 = vld [vmem:[#allocation20 + $0x2f4] sm:$0xff]
    %v10779 = vld [vmem:[#allocation20 + $0x2fc] sm:$0xf]
    %v10780 = vld [vmem:[#allocation20 + $0x300] sm:$0xff]
    %v10781 = vld [vmem:[#allocation20 + $0x308] sm:$0xf]
    %v10782 = vld [vmem:[#allocation20 + $0x30c] sm:$0xff]
    %v10783 = vld [vmem:[#allocation20 + $0x314] sm:$0xf]
    %v10784 = vld [vmem:[#allocation20 + $0x318] sm:$0xff]
    %v10785 = vld [vmem:[#allocation20 + $0x320] sm:$0xf]
    %v10786 = vld [vmem:[#allocation20 + $0x324] sm:$0xff]
    %v10787 = vld [vmem:[#allocation20 + $0x32c] sm:$0xf]
    %v10788 = vld [vmem:[#allocation20 + $0x330] sm:$0xff]
    %v10789 = vld [vmem:[#allocation20 + $0x338] sm:$0xf]
    %v10790 = vld [vmem:[#allocation20 + $0x33c] sm:$0xff]
    %v10791 = vld [vmem:[#allocation20 + $0x344] sm:$0xf]
    %v10792 = vld [vmem:[#allocation20 + $0x348] sm:$0xff]
    %v10793 = vld [vmem:[#allocation20 + $0x350] sm:$0xf]
    %v10794 = vld [vmem:[#allocation20 + $0x354] sm:$0xff]
    %v10795 = vld [vmem:[#allocation20 + $0x35c] sm:$0xf]
    %v10796 = vld [vmem:[#allocation20 + $0x360] sm:$0xff]
    %v10797 = vld [vmem:[#allocation20 + $0x368] sm:$0xf]
    %v10798 = vld [vmem:[#allocation20 + $0x36c] sm:$0xff]
    %v10799 = vld [vmem:[#allocation20 + $0x374] sm:$0xf]
    %v10800 = vld [vmem:[#allocation20 + $0x378] sm:$0xff]
    %v10801 = vld [vmem:[#allocation20 + $0x380] sm:$0xf]
    %v10802 = vld [vmem:[#allocation20 + $0x384] sm:$0xff]
    %v10803 = vld [vmem:[#allocation20 + $0x38c] sm:$0xf]
    %v10804 = vld [vmem:[#allocation20 + $0x390] sm:$0xff]
    %v10805 = vld [vmem:[#allocation20 + $0x398] sm:$0xf]
    %v10806 = vld [vmem:[#allocation20 + $0x39c] sm:$0xff]
    %v10807 = vld [vmem:[#allocation20 + $0x3a4] sm:$0xf]
    %v10808 = vld [vmem:[#allocation20 + $0x3a8] sm:$0xff]
    %v10809 = vld [vmem:[#allocation20 + $0x3b0] sm:$0xf]
    %v10810 = vld [vmem:[#allocation20 + $0x3b4] sm:$0xff]
    %v10811 = vld [vmem:[#allocation20 + $0x3bc] sm:$0xf]
    %v10812 = vld [vmem:[#allocation20 + $0x3c0] sm:$0xff]
    %v10813 = vld [vmem:[#allocation20 + $0x3c8] sm:$0xf]
    %v10814 = vld [vmem:[#allocation20 + $0x3cc] sm:$0xff]
    %v10815 = vld [vmem:[#allocation20 + $0x3d4] sm:$0xf]
    %v10816 = vld [vmem:[#allocation20 + $0x3d8] sm:$0xff]
    %v10817 = vld [vmem:[#allocation20 + $0x3e0] sm:$0xf]
    %v10818 = vld [vmem:[#allocation20 + $0x3e4] sm:$0xff]
    %v10819 = vld [vmem:[#allocation20 + $0x3ec] sm:$0xf]
    %v10820 = vld [vmem:[#allocation20 + $0x3f0] sm:$0xff]
    %v10821 = vld [vmem:[#allocation20 + $0x3f8] sm:$0xf]
    %v10822 = vld [vmem:[#allocation20 + $0x3fc] sm:$0xff]
    %v10823 = vld [vmem:[#allocation20 + $0x404] sm:$0xf]
    %v10824 = vld [vmem:[#allocation20 + $0x408] sm:$0xff]
    %v10825 = vld [vmem:[#allocation20 + $0x410] sm:$0xf]
    %v10826 = vld [vmem:[#allocation20 + $0x414] sm:$0xff]
    %v10827 = vld [vmem:[#allocation20 + $0x41c] sm:$0xf]
    %v10828 = vld [vmem:[#allocation20 + $0x420] sm:$0xff]
    %v10829 = vld [vmem:[#allocation20 + $0x428] sm:$0xf]
    %v10830 = vld [vmem:[#allocation20 + $0x42c] sm:$0xff]
    %v10831 = vld [vmem:[#allocation20 + $0x434] sm:$0xf]
    %v10832 = vld [vmem:[#allocation20 + $0x438] sm:$0xff]
    %v10833 = vld [vmem:[#allocation20 + $0x440] sm:$0xf]
    %v10834 = vld [vmem:[#allocation20 + $0x444] sm:$0xff]
    %v10835 = vld [vmem:[#allocation20 + $0x44c] sm:$0xf]
    %v10836 = vld [vmem:[#allocation20 + $0x450] sm:$0xff]
    %v10837 = vld [vmem:[#allocation20 + $0x458] sm:$0xf]
    %v10838 = vld [vmem:[#allocation20 + $0x45c] sm:$0xff]
    %v10839 = vld [vmem:[#allocation20 + $0x464] sm:$0xf]
    %v10840 = vld [vmem:[#allocation20 + $0x468] sm:$0xff]
    %v10841 = vld [vmem:[#allocation20 + $0x470] sm:$0xf]
    %v10842 = vld [vmem:[#allocation20 + $0x474] sm:$0xff]
    %v10843 = vld [vmem:[#allocation20 + $0x47c] sm:$0xf]
    %v10844 = vld [vmem:[#allocation20 + $0x480] sm:$0xff]
    %v10845 = vld [vmem:[#allocation20 + $0x488] sm:$0xf]
    %v10846 = vld [vmem:[#allocation20 + $0x48c] sm:$0xff]
    %v10847 = vld [vmem:[#allocation20 + $0x494] sm:$0xf]
    %v10848 = vld [vmem:[#allocation20 + $0x498] sm:$0xff]
    %v10849 = vld [vmem:[#allocation20 + $0x4a0] sm:$0xf]
    %v10850 = vld [vmem:[#allocation20 + $0x4a4] sm:$0xff]
    %v10851 = vld [vmem:[#allocation20 + $0x4ac] sm:$0xf]
    %v10852 = vld [vmem:[#allocation20 + $0x4b0] sm:$0xff]
    %v10853 = vld [vmem:[#allocation20 + $0x4b8] sm:$0xf]
    %v10854 = vld [vmem:[#allocation20 + $0x4bc] sm:$0xff]
    %v10855 = vld [vmem:[#allocation20 + $0x4c4] sm:$0xf]
    %v10856 = vld [vmem:[#allocation20 + $0x4c8] sm:$0xff]
    %v10857 = vld [vmem:[#allocation20 + $0x4d0] sm:$0xf]
    %v10858 = vld [vmem:[#allocation20 + $0x4d4] sm:$0xff]
    %v10859 = vld [vmem:[#allocation20 + $0x4dc] sm:$0xf]
    %v10860 = vld [vmem:[#allocation20 + $0x4e0] sm:$0xff]
    %v10861 = vld [vmem:[#allocation20 + $0x4e8] sm:$0xf]
    %v10862 = vld [vmem:[#allocation20 + $0x4ec] sm:$0xff]
    %v10863 = vld [vmem:[#allocation20 + $0x4f4] sm:$0xf]
    %v10864 = vld [vmem:[#allocation20 + $0x4f8] sm:$0xff]
    %v10865 = vld [vmem:[#allocation20 + $0x500] sm:$0xf]
    %v10866 = vld [vmem:[#allocation20 + $0x504] sm:$0xff]
    %v10867 = vld [vmem:[#allocation20 + $0x50c] sm:$0xf]
    %v10868 = vld [vmem:[#allocation20 + $0x510] sm:$0xff]
    %v10869 = vld [vmem:[#allocation20 + $0x518] sm:$0xf]
    %v10870 = vld [vmem:[#allocation20 + $0x51c] sm:$0xff]
    %v10871 = vld [vmem:[#allocation20 + $0x524] sm:$0xf]
    %v10872 = vld [vmem:[#allocation20 + $0x528] sm:$0xff]
    %v10873 = vld [vmem:[#allocation20 + $0x530] sm:$0xf]
    %v10874 = vld [vmem:[#allocation20 + $0x534] sm:$0xff]
    %v10875 = vld [vmem:[#allocation20 + $0x53c] sm:$0xf]
    %v10876 = vld [vmem:[#allocation20 + $0x540] sm:$0xff]
    %v10877 = vld [vmem:[#allocation20 + $0x548] sm:$0xf]
    %v10878 = vld [vmem:[#allocation20 + $0x54c] sm:$0xff]
    %v10879 = vld [vmem:[#allocation20 + $0x554] sm:$0xf]
    %v10880 = vld [vmem:[#allocation20 + $0x558] sm:$0xff]
    %v10881 = vld [vmem:[#allocation20 + $0x560] sm:$0xf]
    %v10882 = vld [vmem:[#allocation20 + $0x564] sm:$0xff]
    %v10883 = vld [vmem:[#allocation20 + $0x56c] sm:$0xf]
    %v10884 = vld [vmem:[#allocation20 + $0x570] sm:$0xff]
    %v10885 = vld [vmem:[#allocation20 + $0x578] sm:$0xf]
    %v10886 = vld [vmem:[#allocation20 + $0x57c] sm:$0xff]
    %v10887 = vld [vmem:[#allocation20 + $0x584] sm:$0xf]
    %v10888 = vld [vmem:[#allocation20 + $0x588] sm:$0xff]
    %v10889 = vld [vmem:[#allocation20 + $0x590] sm:$0xf]
    %v10890 = vld [vmem:[#allocation20 + $0x594] sm:$0xff]
    %v10891 = vld [vmem:[#allocation20 + $0x59c] sm:$0xf]
    %v10892 = vld [vmem:[#allocation20 + $0x5a0] sm:$0xff]
    %v10893 = vld [vmem:[#allocation20 + $0x5a8] sm:$0xf]
    %v10894 = vld [vmem:[#allocation20 + $0x5ac] sm:$0xff]
    %v10895 = vld [vmem:[#allocation20 + $0x5b4] sm:$0xf]
    %v10896 = vld [vmem:[#allocation20 + $0x5b8] sm:$0xff]
    %v10897 = vld [vmem:[#allocation20 + $0x5c0] sm:$0xf]
    %v10898 = vld [vmem:[#allocation20 + $0x5c4] sm:$0xff]
    %v10899 = vld [vmem:[#allocation20 + $0x5cc] sm:$0xf]
    %v10900 = vld [vmem:[#allocation20 + $0x5d0] sm:$0xff]
    %v10901 = vld [vmem:[#allocation20 + $0x5d8] sm:$0xf]
    %v10902 = vld [vmem:[#allocation20 + $0x5dc] sm:$0xff]
    %v10903 = vld [vmem:[#allocation20 + $0x5e4] sm:$0xf]
    %v10904 = vld [vmem:[#allocation20 + $0x5e8] sm:$0xff]
    %v10905 = vld [vmem:[#allocation20 + $0x5f0] sm:$0xf]
    %v10906 = vld [vmem:[#allocation20 + $0x5f4] sm:$0xff]
    %v10907 = vld [vmem:[#allocation20 + $0x5fc] sm:$0xf]
    %v11164 = vunpack.c.l.b16 %v10652
    %v11165 = vunpack.c.h.b16 %v10652
    %v11166 = vunpack.c.l.b16 %v10653
    %v11167 = vunpack.c.l.b16 %v10654
    %v11168 = vunpack.c.h.b16 %v10654
    %v11169 = vunpack.c.l.b16 %v10655
    %v11170 = vunpack.c.l.b16 %v10656
    %v11171 = vunpack.c.h.b16 %v10656
    %v11172 = vunpack.c.l.b16 %v10657
    %v11173 = vunpack.c.l.b16 %v10658
    %v11174 = vunpack.c.h.b16 %v10658
    %v11175 = vunpack.c.l.b16 %v10659
    %v11176 = vunpack.c.l.b16 %v10660
    %v11177 = vunpack.c.h.b16 %v10660
    %v11178 = vunpack.c.l.b16 %v10661
    %v11179 = vunpack.c.l.b16 %v10662
    %v11180 = vunpack.c.h.b16 %v10662
    %v11181 = vunpack.c.l.b16 %v10663
    %v11182 = vunpack.c.l.b16 %v10664
    %v11183 = vunpack.c.h.b16 %v10664
    %v11184 = vunpack.c.l.b16 %v10665
    %v11185 = vunpack.c.l.b16 %v10666
    %v11186 = vunpack.c.h.b16 %v10666
    %v11187 = vunpack.c.l.b16 %v10667
    %v11188 = vunpack.c.l.b16 %v10668
    %v11189 = vunpack.c.h.b16 %v10668
    %v11190 = vunpack.c.l.b16 %v10669
    %v11191 = vunpack.c.l.b16 %v10670
    %v11192 = vunpack.c.h.b16 %v10670
    %v11193 = vunpack.c.l.b16 %v10671
    %v11194 = vunpack.c.l.b16 %v10672
    %v11195 = vunpack.c.h.b16 %v10672
    %v11196 = vunpack.c.l.b16 %v10673
    %v11197 = vunpack.c.l.b16 %v10674
    %v11198 = vunpack.c.h.b16 %v10674
    %v11199 = vunpack.c.l.b16 %v10675
    %v11200 = vunpack.c.l.b16 %v10676
    %v11201 = vunpack.c.h.b16 %v10676
    %v11202 = vunpack.c.l.b16 %v10677
    %v11203 = vunpack.c.l.b16 %v10678
    %v11204 = vunpack.c.h.b16 %v10678
    %v11205 = vunpack.c.l.b16 %v10679
    %v11206 = vunpack.c.l.b16 %v10680
    %v11207 = vunpack.c.h.b16 %v10680
    %v11208 = vunpack.c.l.b16 %v10681
    %v11209 = vunpack.c.l.b16 %v10682
    %v11210 = vunpack.c.h.b16 %v10682
    %v11211 = vunpack.c.l.b16 %v10683
    %v11212 = vunpack.c.l.b16 %v10684
    %v11213 = vunpack.c.h.b16 %v10684
    %v11214 = vunpack.c.l.b16 %v10685
    %v11215 = vunpack.c.l.b16 %v10686
    %v11216 = vunpack.c.h.b16 %v10686
    %v11217 = vunpack.c.l.b16 %v10687
    %v11218 = vunpack.c.l.b16 %v10688
    %v11219 = vunpack.c.h.b16 %v10688
    %v11220 = vunpack.c.l.b16 %v10689
    %v11221 = vunpack.c.l.b16 %v10690
    %v11222 = vunpack.c.h.b16 %v10690
    %v11223 = vunpack.c.l.b16 %v10691
    %v11224 = vunpack.c.l.b16 %v10692
    %v11225 = vunpack.c.h.b16 %v10692
    %v11226 = vunpack.c.l.b16 %v10693
    %v11227 = vunpack.c.l.b16 %v10694
    %v11228 = vunpack.c.h.b16 %v10694
    %v11229 = vunpack.c.l.b16 %v10695
    %v11230 = vunpack.c.l.b16 %v10696
    %v11231 = vunpack.c.h.b16 %v10696
    %v11232 = vunpack.c.l.b16 %v10697
    %v11233 = vunpack.c.l.b16 %v10698
    %v11234 = vunpack.c.h.b16 %v10698
    %v11235 = vunpack.c.l.b16 %v10699
    %v11236 = vunpack.c.l.b16 %v10700
    %v11237 = vunpack.c.h.b16 %v10700
    %v11238 = vunpack.c.l.b16 %v10701
    %v11239 = vunpack.c.l.b16 %v10702
    %v11240 = vunpack.c.h.b16 %v10702
    %v11241 = vunpack.c.l.b16 %v10703
    %v11242 = vunpack.c.l.b16 %v10704
    %v11243 = vunpack.c.h.b16 %v10704
    %v11244 = vunpack.c.l.b16 %v10705
    %v11245 = vunpack.c.l.b16 %v10706
    %v11246 = vunpack.c.h.b16 %v10706
    %v11247 = vunpack.c.l.b16 %v10707
    %v11248 = vunpack.c.l.b16 %v10708
    %v11249 = vunpack.c.h.b16 %v10708
    %v11250 = vunpack.c.l.b16 %v10709
    %v11251 = vunpack.c.l.b16 %v10710
    %v11252 = vunpack.c.h.b16 %v10710
    %v11253 = vunpack.c.l.b16 %v10711
    %v11254 = vunpack.c.l.b16 %v10712
    %v11255 = vunpack.c.h.b16 %v10712
    %v11256 = vunpack.c.l.b16 %v10713
    %v11257 = vunpack.c.l.b16 %v10714
    %v11258 = vunpack.c.h.b16 %v10714
    %v11259 = vunpack.c.l.b16 %v10715
    %v11260 = vunpack.c.l.b16 %v10716
    %v11261 = vunpack.c.h.b16 %v10716
    %v11262 = vunpack.c.l.b16 %v10717
    %v11263 = vunpack.c.l.b16 %v10718
    %v11264 = vunpack.c.h.b16 %v10718
    %v11265 = vunpack.c.l.b16 %v10719
    %v11266 = vunpack.c.l.b16 %v10720
    %v11267 = vunpack.c.h.b16 %v10720
    %v11268 = vunpack.c.l.b16 %v10721
    %v11269 = vunpack.c.l.b16 %v10722
    %v11270 = vunpack.c.h.b16 %v10722
    %v11271 = vunpack.c.l.b16 %v10723
    %v11272 = vunpack.c.l.b16 %v10724
    %v11273 = vunpack.c.h.b16 %v10724
    %v11274 = vunpack.c.l.b16 %v10725
    %v11275 = vunpack.c.l.b16 %v10726
    %v11276 = vunpack.c.h.b16 %v10726
    %v11277 = vunpack.c.l.b16 %v10727
    %v11278 = vunpack.c.l.b16 %v10728
    %v11279 = vunpack.c.h.b16 %v10728
    %v11280 = vunpack.c.l.b16 %v10729
    %v11281 = vunpack.c.l.b16 %v10730
    %v11282 = vunpack.c.h.b16 %v10730
    %v11283 = vunpack.c.l.b16 %v10731
    %v11284 = vunpack.c.l.b16 %v10732
    %v11285 = vunpack.c.h.b16 %v10732
    %v11286 = vunpack.c.l.b16 %v10733
    %v11287 = vunpack.c.l.b16 %v10734
    %v11288 = vunpack.c.h.b16 %v10734
    %v11289 = vunpack.c.l.b16 %v10735
    %v11290 = vunpack.c.l.b16 %v10736
    %v11291 = vunpack.c.h.b16 %v10736
    %v11292 = vunpack.c.l.b16 %v10737
    %v11293 = vunpack.c.l.b16 %v10738
    %v11294 = vunpack.c.h.b16 %v10738
    %v11295 = vunpack.c.l.b16 %v10739
    %v11296 = vunpack.c.l.b16 %v10740
    %v11297 = vunpack.c.h.b16 %v10740
    %v11298 = vunpack.c.l.b16 %v10741
    %v11299 = vunpack.c.l.b16 %v10742
    %v11300 = vunpack.c.h.b16 %v10742
    %v11301 = vunpack.c.l.b16 %v10743
    %v11302 = vunpack.c.l.b16 %v10744
    %v11303 = vunpack.c.h.b16 %v10744
    %v11304 = vunpack.c.l.b16 %v10745
    %v11305 = vunpack.c.l.b16 %v10746
    %v11306 = vunpack.c.h.b16 %v10746
    %v11307 = vunpack.c.l.b16 %v10747
    %v11308 = vunpack.c.l.b16 %v10748
    %v11309 = vunpack.c.h.b16 %v10748
    %v11310 = vunpack.c.l.b16 %v10749
    %v11311 = vunpack.c.l.b16 %v10750
    %v11312 = vunpack.c.h.b16 %v10750
    %v11313 = vunpack.c.l.b16 %v10751
    %v11314 = vunpack.c.l.b16 %v10752
    %v11315 = vunpack.c.h.b16 %v10752
    %v11316 = vunpack.c.l.b16 %v10753
    %v11317 = vunpack.c.l.b16 %v10754
    %v11318 = vunpack.c.h.b16 %v10754
    %v11319 = vunpack.c.l.b16 %v10755
    %v11320 = vunpack.c.l.b16 %v10756
    %v11321 = vunpack.c.h.b16 %v10756
    %v11322 = vunpack.c.l.b16 %v10757
    %v11323 = vunpack.c.l.b16 %v10758
    %v11324 = vunpack.c.h.b16 %v10758
    %v11325 = vunpack.c.l.b16 %v10759
    %v11326 = vunpack.c.l.b16 %v10760
    %v11327 = vunpack.c.h.b16 %v10760
    %v11328 = vunpack.c.l.b16 %v10761
    %v11329 = vunpack.c.l.b16 %v10762
    %v11330 = vunpack.c.h.b16 %v10762
    %v11331 = vunpack.c.l.b16 %v10763
    %v11332 = vunpack.c.l.b16 %v10764
    %v11333 = vunpack.c.h.b16 %v10764
    %v11334 = vunpack.c.l.b16 %v10765
    %v11335 = vunpack.c.l.b16 %v10766
    %v11336 = vunpack.c.h.b16 %v10766
    %v11337 = vunpack.c.l.b16 %v10767
    %v11338 = vunpack.c.l.b16 %v10768
    %v11339 = vunpack.c.h.b16 %v10768
    %v11340 = vunpack.c.l.b16 %v10769
    %v11341 = vunpack.c.l.b16 %v10770
    %v11342 = vunpack.c.h.b16 %v10770
    %v11343 = vunpack.c.l.b16 %v10771
    %v11344 = vunpack.c.l.b16 %v10772
    %v11345 = vunpack.c.h.b16 %v10772
    %v11346 = vunpack.c.l.b16 %v10773
    %v11347 = vunpack.c.l.b16 %v10774
    %v11348 = vunpack.c.h.b16 %v10774
    %v11349 = vunpack.c.l.b16 %v10775
    %v11350 = vunpack.c.l.b16 %v10776
    %v11351 = vunpack.c.h.b16 %v10776
    %v11352 = vunpack.c.l.b16 %v10777
    %v11353 = vunpack.c.l.b16 %v10778
    %v11354 = vunpack.c.h.b16 %v10778
    %v11355 = vunpack.c.l.b16 %v10779
    %v11356 = vunpack.c.l.b16 %v10780
    %v11357 = vunpack.c.h.b16 %v10780
    %v11358 = vunpack.c.l.b16 %v10781
    %v11359 = vunpack.c.l.b16 %v10782
    %v11360 = vunpack.c.h.b16 %v10782
    %v11361 = vunpack.c.l.b16 %v10783
    %v11362 = vunpack.c.l.b16 %v10784
    %v11363 = vunpack.c.h.b16 %v10784
    %v11364 = vunpack.c.l.b16 %v10785
    %v11365 = vunpack.c.l.b16 %v10786
    %v11366 = vunpack.c.h.b16 %v10786
    %v11367 = vunpack.c.l.b16 %v10787
    %v11368 = vunpack.c.l.b16 %v10788
    %v11369 = vunpack.c.h.b16 %v10788
    %v11370 = vunpack.c.l.b16 %v10789
    %v11371 = vunpack.c.l.b16 %v10790
    %v11372 = vunpack.c.h.b16 %v10790
    %v11373 = vunpack.c.l.b16 %v10791
    %v11374 = vunpack.c.l.b16 %v10792
    %v11375 = vunpack.c.h.b16 %v10792
    %v11376 = vunpack.c.l.b16 %v10793
    %v11377 = vunpack.c.l.b16 %v10794
    %v11378 = vunpack.c.h.b16 %v10794
    %v11379 = vunpack.c.l.b16 %v10795
    %v11380 = vunpack.c.l.b16 %v10796
    %v11381 = vunpack.c.h.b16 %v10796
    %v11382 = vunpack.c.l.b16 %v10797
    %v11383 = vunpack.c.l.b16 %v10798
    %v11384 = vunpack.c.h.b16 %v10798
    %v11385 = vunpack.c.l.b16 %v10799
    %v11386 = vunpack.c.l.b16 %v10800
    %v11387 = vunpack.c.h.b16 %v10800
    %v11388 = vunpack.c.l.b16 %v10801
    %v11389 = vunpack.c.l.b16 %v10802
    %v11390 = vunpack.c.h.b16 %v10802
    %v11391 = vunpack.c.l.b16 %v10803
    %v11392 = vunpack.c.l.b16 %v10804
    %v11393 = vunpack.c.h.b16 %v10804
    %v11394 = vunpack.c.l.b16 %v10805
    %v11395 = vunpack.c.l.b16 %v10806
    %v11396 = vunpack.c.h.b16 %v10806
    %v11397 = vunpack.c.l.b16 %v10807
    %v11398 = vunpack.c.l.b16 %v10808
    %v11399 = vunpack.c.h.b16 %v10808
    %v11400 = vunpack.c.l.b16 %v10809
    %v11401 = vunpack.c.l.b16 %v10810
    %v11402 = vunpack.c.h.b16 %v10810
    %v11403 = vunpack.c.l.b16 %v10811
    %v11404 = vunpack.c.l.b16 %v10812
    %v11405 = vunpack.c.h.b16 %v10812
    %v11406 = vunpack.c.l.b16 %v10813
    %v11407 = vunpack.c.l.b16 %v10814
    %v11408 = vunpack.c.h.b16 %v10814
    %v11409 = vunpack.c.l.b16 %v10815
    %v11410 = vunpack.c.l.b16 %v10816
    %v11411 = vunpack.c.h.b16 %v10816
    %v11412 = vunpack.c.l.b16 %v10817
    %v11413 = vunpack.c.l.b16 %v10818
    %v11414 = vunpack.c.h.b16 %v10818
    %v11415 = vunpack.c.l.b16 %v10819
    %v11416 = vunpack.c.l.b16 %v10820
    %v11417 = vunpack.c.h.b16 %v10820
    %v11418 = vunpack.c.l.b16 %v10821
    %v11419 = vunpack.c.l.b16 %v10822
    %v11420 = vunpack.c.h.b16 %v10822
    %v11421 = vunpack.c.l.b16 %v10823
    %v11422 = vunpack.c.l.b16 %v10824
    %v11423 = vunpack.c.h.b16 %v10824
    %v11424 = vunpack.c.l.b16 %v10825
    %v11425 = vunpack.c.l.b16 %v10826
    %v11426 = vunpack.c.h.b16 %v10826
    %v11427 = vunpack.c.l.b16 %v10827
    %v11428 = vunpack.c.l.b16 %v10828
    %v11429 = vunpack.c.h.b16 %v10828
    %v11430 = vunpack.c.l.b16 %v10829
    %v11431 = vunpack.c.l.b16 %v10830
    %v11432 = vunpack.c.h.b16 %v10830
    %v11433 = vunpack.c.l.b16 %v10831
    %v11434 = vunpack.c.l.b16 %v10832
    %v11435 = vunpack.c.h.b16 %v10832
    %v11436 = vunpack.c.l.b16 %v10833
    %v11437 = vunpack.c.l.b16 %v10834
    %v11438 = vunpack.c.h.b16 %v10834
    %v11439 = vunpack.c.l.b16 %v10835
    %v11440 = vunpack.c.l.b16 %v10836
    %v11441 = vunpack.c.h.b16 %v10836
    %v11442 = vunpack.c.l.b16 %v10837
    %v11443 = vunpack.c.l.b16 %v10838
    %v11444 = vunpack.c.h.b16 %v10838
    %v11445 = vunpack.c.l.b16 %v10839
    %v11446 = vunpack.c.l.b16 %v10840
    %v11447 = vunpack.c.h.b16 %v10840
    %v11448 = vunpack.c.l.b16 %v10841
    %v11449 = vunpack.c.l.b16 %v10842
    %v11450 = vunpack.c.h.b16 %v10842
    %v11451 = vunpack.c.l.b16 %v10843
    %v11452 = vunpack.c.l.b16 %v10844
    %v11453 = vunpack.c.h.b16 %v10844
    %v11454 = vunpack.c.l.b16 %v10845
    %v11455 = vunpack.c.l.b16 %v10846
    %v11456 = vunpack.c.h.b16 %v10846
    %v11457 = vunpack.c.l.b16 %v10847
    %v11458 = vunpack.c.l.b16 %v10848
    %v11459 = vunpack.c.h.b16 %v10848
    %v11460 = vunpack.c.l.b16 %v10849
    %v11461 = vunpack.c.l.b16 %v10850
    %v11462 = vunpack.c.h.b16 %v10850
    %v11463 = vunpack.c.l.b16 %v10851
    %v11464 = vunpack.c.l.b16 %v10852
    %v11465 = vunpack.c.h.b16 %v10852
    %v11466 = vunpack.c.l.b16 %v10853
    %v11467 = vunpack.c.l.b16 %v10854
    %v11468 = vunpack.c.h.b16 %v10854
    %v11469 = vunpack.c.l.b16 %v10855
    %v11470 = vunpack.c.l.b16 %v10856
    %v11471 = vunpack.c.h.b16 %v10856
    %v11472 = vunpack.c.l.b16 %v10857
    %v11473 = vunpack.c.l.b16 %v10858
    %v11474 = vunpack.c.h.b16 %v10858
    %v11475 = vunpack.c.l.b16 %v10859
    %v11476 = vunpack.c.l.b16 %v10860
    %v11477 = vunpack.c.h.b16 %v10860
    %v11478 = vunpack.c.l.b16 %v10861
    %v11479 = vunpack.c.l.b16 %v10862
    %v11480 = vunpack.c.h.b16 %v10862
    %v11481 = vunpack.c.l.b16 %v10863
    %v11482 = vunpack.c.l.b16 %v10864
    %v11483 = vunpack.c.h.b16 %v10864
    %v11484 = vunpack.c.l.b16 %v10865
    %v11485 = vunpack.c.l.b16 %v10866
    %v11486 = vunpack.c.h.b16 %v10866
    %v11487 = vunpack.c.l.b16 %v10867
    %v11488 = vunpack.c.l.b16 %v10868
    %v11489 = vunpack.c.h.b16 %v10868
    %v11490 = vunpack.c.l.b16 %v10869
    %v11491 = vunpack.c.l.b16 %v10870
    %v11492 = vunpack.c.h.b16 %v10870
    %v11493 = vunpack.c.l.b16 %v10871
    %v11494 = vunpack.c.l.b16 %v10872
    %v11495 = vunpack.c.h.b16 %v10872
    %v11496 = vunpack.c.l.b16 %v10873
    %v11497 = vunpack.c.l.b16 %v10874
    %v11498 = vunpack.c.h.b16 %v10874
    %v11499 = vunpack.c.l.b16 %v10875
    %v11500 = vunpack.c.l.b16 %v10876
    %v11501 = vunpack.c.h.b16 %v10876
    %v11502 = vunpack.c.l.b16 %v10877
    %v11503 = vunpack.c.l.b16 %v10878
    %v11504 = vunpack.c.h.b16 %v10878
    %v11505 = vunpack.c.l.b16 %v10879
    %v11506 = vunpack.c.l.b16 %v10880
    %v11507 = vunpack.c.h.b16 %v10880
    %v11508 = vunpack.c.l.b16 %v10881
    %v11509 = vunpack.c.l.b16 %v10882
    %v11510 = vunpack.c.h.b16 %v10882
    %v11511 = vunpack.c.l.b16 %v10883
    %v11512 = vunpack.c.l.b16 %v10884
    %v11513 = vunpack.c.h.b16 %v10884
    %v11514 = vunpack.c.l.b16 %v10885
    %v11515 = vunpack.c.l.b16 %v10886
    %v11516 = vunpack.c.h.b16 %v10886
    %v11517 = vunpack.c.l.b16 %v10887
    %v11518 = vunpack.c.l.b16 %v10888
    %v11519 = vunpack.c.h.b16 %v10888
    %v11520 = vunpack.c.l.b16 %v10889
    %v11521 = vunpack.c.l.b16 %v10890
    %v11522 = vunpack.c.h.b16 %v10890
    %v11523 = vunpack.c.l.b16 %v10891
    %v11524 = vunpack.c.l.b16 %v10892
    %v11525 = vunpack.c.h.b16 %v10892
    %v11526 = vunpack.c.l.b16 %v10893
    %v11527 = vunpack.c.l.b16 %v10894
    %v11528 = vunpack.c.h.b16 %v10894
    %v11529 = vunpack.c.l.b16 %v10895
    %v11530 = vunpack.c.l.b16 %v10896
    %v11531 = vunpack.c.h.b16 %v10896
    %v11532 = vunpack.c.l.b16 %v10897
    %v11533 = vunpack.c.l.b16 %v10898
    %v11534 = vunpack.c.h.b16 %v10898
    %v11535 = vunpack.c.l.b16 %v10899
    %v11536 = vunpack.c.l.b16 %v10900
    %v11537 = vunpack.c.h.b16 %v10900
    %v11538 = vunpack.c.l.b16 %v10901
    %v11539 = vunpack.c.l.b16 %v10902
    %v11540 = vunpack.c.h.b16 %v10902
    %v11541 = vunpack.c.l.b16 %v10903
    %v11542 = vunpack.c.l.b16 %v10904
    %v11543 = vunpack.c.h.b16 %v10904
    %v11544 = vunpack.c.l.b16 %v10905
    %v11545 = vunpack.c.l.b16 %v10906
    %v11546 = vunpack.c.h.b16 %v10906
    %v11547 = vunpack.c.l.b16 %v10907
    %v11548 = vpack.c.b16 %v11167, %v11164
    %v11549 = vpack.c.b16 %v11168, %v11165
    %v11550 = vpack.c.b16 %v11169, %v11166
    %v11551 = vpack.c.b16 %v11173, %v11170
    %v11552 = vpack.c.b16 %v11174, %v11171
    %v11553 = vpack.c.b16 %v11175, %v11172
    %v11554 = vpack.c.b16 %v11179, %v11176
    %v11555 = vpack.c.b16 %v11180, %v11177
    %v11556 = vpack.c.b16 %v11181, %v11178
    %v11557 = vpack.c.b16 %v11185, %v11182
    %v11558 = vpack.c.b16 %v11186, %v11183
    %v11559 = vpack.c.b16 %v11187, %v11184
    %v11560 = vpack.c.b16 %v11191, %v11188
    %v11561 = vpack.c.b16 %v11192, %v11189
    %v11562 = vpack.c.b16 %v11193, %v11190
    %v11563 = vpack.c.b16 %v11197, %v11194
    %v11564 = vpack.c.b16 %v11198, %v11195
    %v11565 = vpack.c.b16 %v11199, %v11196
    %v11566 = vpack.c.b16 %v11203, %v11200
    %v11567 = vpack.c.b16 %v11204, %v11201
    %v11568 = vpack.c.b16 %v11205, %v11202
    %v11569 = vpack.c.b16 %v11209, %v11206
    %v11570 = vpack.c.b16 %v11210, %v11207
    %v11571 = vpack.c.b16 %v11211, %v11208
    %v11572 = vpack.c.b16 %v11215, %v11212
    %v11573 = vpack.c.b16 %v11216, %v11213
    %v11574 = vpack.c.b16 %v11217, %v11214
    %v11575 = vpack.c.b16 %v11221, %v11218
    %v11576 = vpack.c.b16 %v11222, %v11219
    %v11577 = vpack.c.b16 %v11223, %v11220
    %v11578 = vpack.c.b16 %v11227, %v11224
    %v11579 = vpack.c.b16 %v11228, %v11225
    %v11580 = vpack.c.b16 %v11229, %v11226
    %v11581 = vpack.c.b16 %v11233, %v11230
    %v11582 = vpack.c.b16 %v11234, %v11231
    %v11583 = vpack.c.b16 %v11235, %v11232
    %v11584 = vpack.c.b16 %v11239, %v11236
    %v11585 = vpack.c.b16 %v11240, %v11237
    %v11586 = vpack.c.b16 %v11241, %v11238
    %v11587 = vpack.c.b16 %v11245, %v11242
    %v11588 = vpack.c.b16 %v11246, %v11243
    %v11589 = vpack.c.b16 %v11247, %v11244
    %v11590 = vpack.c.b16 %v11251, %v11248
    %v11591 = vpack.c.b16 %v11252, %v11249
    %v11592 = vpack.c.b16 %v11253, %v11250
    %v11593 = vpack.c.b16 %v11257, %v11254
    %v11594 = vpack.c.b16 %v11258, %v11255
    %v11595 = vpack.c.b16 %v11259, %v11256
    %v11596 = vpack.c.b16 %v11263, %v11260
    %v11597 = vpack.c.b16 %v11264, %v11261
    %v11598 = vpack.c.b16 %v11265, %v11262
    %v11599 = vpack.c.b16 %v11269, %v11266
    %v11600 = vpack.c.b16 %v11270, %v11267
    %v11601 = vpack.c.b16 %v11271, %v11268
    %v11602 = vpack.c.b16 %v11275, %v11272
    %v11603 = vpack.c.b16 %v11276, %v11273
    %v11604 = vpack.c.b16 %v11277, %v11274
    %v11605 = vpack.c.b16 %v11281, %v11278
    %v11606 = vpack.c.b16 %v11282, %v11279
    %v11607 = vpack.c.b16 %v11283, %v11280
    %v11608 = vpack.c.b16 %v11287, %v11284
    %v11609 = vpack.c.b16 %v11288, %v11285
    %v11610 = vpack.c.b16 %v11289, %v11286
    %v11611 = vpack.c.b16 %v11293, %v11290
    %v11612 = vpack.c.b16 %v11294, %v11291
    %v11613 = vpack.c.b16 %v11295, %v11292
    %v11614 = vpack.c.b16 %v11299, %v11296
    %v11615 = vpack.c.b16 %v11300, %v11297
    %v11616 = vpack.c.b16 %v11301, %v11298
    %v11617 = vpack.c.b16 %v11305, %v11302
    %v11618 = vpack.c.b16 %v11306, %v11303
    %v11619 = vpack.c.b16 %v11307, %v11304
    %v11620 = vpack.c.b16 %v11311, %v11308
    %v11621 = vpack.c.b16 %v11312, %v11309
    %v11622 = vpack.c.b16 %v11313, %v11310
    %v11623 = vpack.c.b16 %v11317, %v11314
    %v11624 = vpack.c.b16 %v11318, %v11315
    %v11625 = vpack.c.b16 %v11319, %v11316
    %v11626 = vpack.c.b16 %v11323, %v11320
    %v11627 = vpack.c.b16 %v11324, %v11321
    %v11628 = vpack.c.b16 %v11325, %v11322
    %v11629 = vpack.c.b16 %v11329, %v11326
    %v11630 = vpack.c.b16 %v11330, %v11327
    %v11631 = vpack.c.b16 %v11331, %v11328
    %v11632 = vpack.c.b16 %v11335, %v11332
    %v11633 = vpack.c.b16 %v11336, %v11333
    %v11634 = vpack.c.b16 %v11337, %v11334
    %v11635 = vpack.c.b16 %v11341, %v11338
    %v11636 = vpack.c.b16 %v11342, %v11339
    %v11637 = vpack.c.b16 %v11343, %v11340
    %v11638 = vpack.c.b16 %v11347, %v11344
    %v11639 = vpack.c.b16 %v11348, %v11345
    %v11640 = vpack.c.b16 %v11349, %v11346
    %v11641 = vpack.c.b16 %v11353, %v11350
    %v11642 = vpack.c.b16 %v11354, %v11351
    %v11643 = vpack.c.b16 %v11355, %v11352
    %v11644 = vpack.c.b16 %v11359, %v11356
    %v11645 = vpack.c.b16 %v11360, %v11357
    %v11646 = vpack.c.b16 %v11361, %v11358
    %v11647 = vpack.c.b16 %v11365, %v11362
    %v11648 = vpack.c.b16 %v11366, %v11363
    %v11649 = vpack.c.b16 %v11367, %v11364
    %v11650 = vpack.c.b16 %v11371, %v11368
    %v11651 = vpack.c.b16 %v11372, %v11369
    %v11652 = vpack.c.b16 %v11373, %v11370
    %v11653 = vpack.c.b16 %v11377, %v11374
    %v11654 = vpack.c.b16 %v11378, %v11375
    %v11655 = vpack.c.b16 %v11379, %v11376
    %v11656 = vpack.c.b16 %v11383, %v11380
    %v11657 = vpack.c.b16 %v11384, %v11381
    %v11658 = vpack.c.b16 %v11385, %v11382
    %v11659 = vpack.c.b16 %v11389, %v11386
    %v11660 = vpack.c.b16 %v11390, %v11387
    %v11661 = vpack.c.b16 %v11391, %v11388
    %v11662 = vpack.c.b16 %v11395, %v11392
    %v11663 = vpack.c.b16 %v11396, %v11393
    %v11664 = vpack.c.b16 %v11397, %v11394
    %v11665 = vpack.c.b16 %v11401, %v11398
    %v11666 = vpack.c.b16 %v11402, %v11399
    %v11667 = vpack.c.b16 %v11403, %v11400
    %v11668 = vpack.c.b16 %v11407, %v11404
    %v11669 = vpack.c.b16 %v11408, %v11405
    %v11670 = vpack.c.b16 %v11409, %v11406
    %v11671 = vpack.c.b16 %v11413, %v11410
    %v11672 = vpack.c.b16 %v11414, %v11411
    %v11673 = vpack.c.b16 %v11415, %v11412
    %v11674 = vpack.c.b16 %v11419, %v11416
    %v11675 = vpack.c.b16 %v11420, %v11417
    %v11676 = vpack.c.b16 %v11421, %v11418
    %v11677 = vpack.c.b16 %v11425, %v11422
    %v11678 = vpack.c.b16 %v11426, %v11423
    %v11679 = vpack.c.b16 %v11427, %v11424
    %v11680 = vpack.c.b16 %v11431, %v11428
    %v11681 = vpack.c.b16 %v11432, %v11429
    %v11682 = vpack.c.b16 %v11433, %v11430
    %v11683 = vpack.c.b16 %v11437, %v11434
    %v11684 = vpack.c.b16 %v11438, %v11435
    %v11685 = vpack.c.b16 %v11439, %v11436
    %v11686 = vpack.c.b16 %v11443, %v11440
    %v11687 = vpack.c.b16 %v11444, %v11441
    %v11688 = vpack.c.b16 %v11445, %v11442
    %v11689 = vpack.c.b16 %v11449, %v11446
    %v11690 = vpack.c.b16 %v11450, %v11447
    %v11691 = vpack.c.b16 %v11451, %v11448
    %v11692 = vpack.c.b16 %v11455, %v11452
    %v11693 = vpack.c.b16 %v11456, %v11453
    %v11694 = vpack.c.b16 %v11457, %v11454
    %v11695 = vpack.c.b16 %v11461, %v11458
    %v11696 = vpack.c.b16 %v11462, %v11459
    %v11697 = vpack.c.b16 %v11463, %v11460
    %v11698 = vpack.c.b16 %v11467, %v11464
    %v11699 = vpack.c.b16 %v11468, %v11465
    %v11700 = vpack.c.b16 %v11469, %v11466
    %v11701 = vpack.c.b16 %v11473, %v11470
    %v11702 = vpack.c.b16 %v11474, %v11471
    %v11703 = vpack.c.b16 %v11475, %v11472
    %v11704 = vpack.c.b16 %v11479, %v11476
    %v11705 = vpack.c.b16 %v11480, %v11477
    %v11706 = vpack.c.b16 %v11481, %v11478
    %v11707 = vpack.c.b16 %v11485, %v11482
    %v11708 = vpack.c.b16 %v11486, %v11483
    %v11709 = vpack.c.b16 %v11487, %v11484
    %v11710 = vpack.c.b16 %v11491, %v11488
    %v11711 = vpack.c.b16 %v11492, %v11489
    %v11712 = vpack.c.b16 %v11493, %v11490
    %v11713 = vpack.c.b16 %v11497, %v11494
    %v11714 = vpack.c.b16 %v11498, %v11495
    %v11715 = vpack.c.b16 %v11499, %v11496
    %v11716 = vpack.c.b16 %v11503, %v11500
    %v11717 = vpack.c.b16 %v11504, %v11501
    %v11718 = vpack.c.b16 %v11505, %v11502
    %v11719 = vpack.c.b16 %v11509, %v11506
    %v11720 = vpack.c.b16 %v11510, %v11507
    %v11721 = vpack.c.b16 %v11511, %v11508
    %v11722 = vpack.c.b16 %v11515, %v11512
    %v11723 = vpack.c.b16 %v11516, %v11513
    %v11724 = vpack.c.b16 %v11517, %v11514
    %v11725 = vpack.c.b16 %v11521, %v11518
    %v11726 = vpack.c.b16 %v11522, %v11519
    %v11727 = vpack.c.b16 %v11523, %v11520
    %v11728 = vpack.c.b16 %v11527, %v11524
    %v11729 = vpack.c.b16 %v11528, %v11525
    %v11730 = vpack.c.b16 %v11529, %v11526
    %v11731 = vpack.c.b16 %v11533, %v11530
    %v11732 = vpack.c.b16 %v11534, %v11531
    %v11733 = vpack.c.b16 %v11535, %v11532
    %v11734 = vpack.c.b16 %v11539, %v11536
    %v11735 = vpack.c.b16 %v11540, %v11537
    %v11736 = vpack.c.b16 %v11541, %v11538
    %v11737 = vpack.c.b16 %v11545, %v11542
    %v11738 = vpack.c.b16 %v11546, %v11543
    %v11739 = vpack.c.b16 %v11547, %v11544
    %11932 = vmatpush.bf16.msra.mxu0 %v11569
    %11933 = vmatpush.bf16.msra.mxu0 %v11566
    %11934 = vmatpush.bf16.msra.mxu0 %v11563
    %11935 = vmatpush.bf16.msra.mxu0 %v11560
    %11936 = vmatpush.bf16.msra.mxu0 %v11557
    %11937 = vmatpush.bf16.msra.mxu0 %v11554
    %11938 = vmatpush.bf16.msra.mxu0 %v11551
    %11939 = vmatpush.bf16.msra.mxu0 %v11548
    %11940 = vmatmul.bf16.gmra.mxu0 %v10644
    %v11941 = vpop.f32.mrf.mxu0
    %v11942 = vadd.f32 0.0, %v11941
    %v11943 = vpop.f32.mrf.mxu0
    %11944 = vdwg.mxu0
    %11945 = vmatpush.bf16.msra.mxu0 %v11593
    %11946 = vmatpush.bf16.msra.mxu0 %v11590
    %11947 = vmatpush.bf16.msra.mxu0 %v11587
    %11948 = vmatpush.bf16.msra.mxu0 %v11584
    %11949 = vmatpush.bf16.msra.mxu0 %v11581
    %11950 = vmatpush.bf16.msra.mxu0 %v11578
    %11951 = vmatpush.bf16.msra.mxu0 %v11575
    %11952 = vmatpush.bf16.msra.mxu0 %v11572
    %11953 = vmatmul.bf16.gmra.mxu0 %v10645
    %v11954 = vpop.f32.mrf.mxu0
    %v11955 = vadd.f32 %v11942, %v11954
    %v11956 = vpop.f32.mrf.mxu0
    %11957 = vdwg.mxu0
    %11958 = vmatpush.bf16.msra.mxu0 %v11617
    %11959 = vmatpush.bf16.msra.mxu0 %v11614
    %11960 = vmatpush.bf16.msra.mxu0 %v11611
    %11961 = vmatpush.bf16.msra.mxu0 %v11608
    %11962 = vmatpush.bf16.msra.mxu0 %v11605
    %11963 = vmatpush.bf16.msra.mxu0 %v11602
    %11964 = vmatpush.bf16.msra.mxu0 %v11599
    %11965 = vmatpush.bf16.msra.mxu0 %v11596
    %11966 = vmatmul.bf16.gmra.mxu0 %v10646
    %v11967 = vpop.f32.mrf.mxu0
    %v11968 = vadd.f32 %v11955, %v11967
    %v11969 = vpop.f32.mrf.mxu0
    %11970 = vdwg.mxu0
    %11971 = vmatpush.bf16.msra.mxu0 %v11641
    %11972 = vmatpush.bf16.msra.mxu0 %v11638
    %11973 = vmatpush.bf16.msra.mxu0 %v11635
    %11974 = vmatpush.bf16.msra.mxu0 %v11632
    %11975 = vmatpush.bf16.msra.mxu0 %v11629
    %11976 = vmatpush.bf16.msra.mxu0 %v11626
    %11977 = vmatpush.bf16.msra.mxu0 %v11623
    %11978 = vmatpush.bf16.msra.mxu0 %v11620
    %11979 = vmatmul.bf16.gmra.mxu0 %v10647
    %v11980 = vpop.f32.mrf.mxu0
    %v11981 = vadd.f32 %v11968, %v11980
    %v11982 = vpop.f32.mrf.mxu0
    %11983 = vdwg.mxu0
    %11984 = vmatpush.bf16.msra.mxu0 %v11665
    %11985 = vmatpush.bf16.msra.mxu0 %v11662
    %11986 = vmatpush.bf16.msra.mxu0 %v11659
    %11987 = vmatpush.bf16.msra.mxu0 %v11656
    %11988 = vmatpush.bf16.msra.mxu0 %v11653
    %11989 = vmatpush.bf16.msra.mxu0 %v11650
    %11990 = vmatpush.bf16.msra.mxu0 %v11647
    %11991 = vmatpush.bf16.msra.mxu0 %v11644
    %11992 = vmatmul.bf16.gmra.mxu0 %v10648
    %v11993 = vpop.f32.mrf.mxu0
    %v11994 = vadd.f32 %v11981, %v11993
    %v11995 = vpop.f32.mrf.mxu0
    %11996 = vdwg.mxu0
    %11997 = vmatpush.bf16.msra.mxu0 %v11689
    %11998 = vmatpush.bf16.msra.mxu0 %v11686
    %11999 = vmatpush.bf16.msra.mxu0 %v11683
    %12000 = vmatpush.bf16.msra.mxu0 %v11680
    %12001 = vmatpush.bf16.msra.mxu0 %v11677
    %12002 = vmatpush.bf16.msra.mxu0 %v11674
    %12003 = vmatpush.bf16.msra.mxu0 %v11671
    %12004 = vmatpush.bf16.msra.mxu0 %v11668
    %12005 = vmatmul.bf16.gmra.mxu0 %v10649
    %v12006 = vpop.f32.mrf.mxu0
    %v12007 = vadd.f32 %v11994, %v12006
    %v12008 = vpop.f32.mrf.mxu0
    %12009 = vdwg.mxu0
    %12010 = vmatpush.bf16.msra.mxu0 %v11713
    %12011 = vmatpush.bf16.msra.mxu0 %v11710
    %12012 = vmatpush.bf16.msra.mxu0 %v11707
    %12013 = vmatpush.bf16.msra.mxu0 %v11704
    %12014 = vmatpush.bf16.msra.mxu0 %v11701
    %12015 = vmatpush.bf16.msra.mxu0 %v11698
    %12016 = vmatpush.bf16.msra.mxu0 %v11695
    %12017 = vmatpush.bf16.msra.mxu0 %v11692
    %12018 = vmatmul.bf16.gmra.mxu0 %v10650
    %v12019 = vpop.f32.mrf.mxu0
    %v12020 = vadd.f32 %v12007, %v12019
    %v12021 = vpop.f32.mrf.mxu0
    %12022 = vdwg.mxu0
    %12023 = vmatpush.bf16.msra.mxu0 %v11737
    %12024 = vmatpush.bf16.msra.mxu0 %v11734
    %12025 = vmatpush.bf16.msra.mxu0 %v11731
    %12026 = vmatpush.bf16.msra.mxu0 %v11728
    %12027 = vmatpush.bf16.msra.mxu0 %v11725
    %12028 = vmatpush.bf16.msra.mxu0 %v11722
    %12029 = vmatpush.bf16.msra.mxu0 %v11719
    %12030 = vmatpush.bf16.msra.mxu0 %v11716
    %12031 = vmatmul.bf16.gmra.mxu0 %v10651
    %v12032 = vpop.f32.mrf.mxu0
    %v12033 = vadd.f32 %v12020, %v12032
    %v12034 = vpop.f32.mrf.mxu0
    %12035 = vdwg.mxu0
    %12036 = vmatpush.bf16.msra.mxu0 %v11570
    %12037 = vmatpush.bf16.msra.mxu0 %v11567
    %12038 = vmatpush.bf16.msra.mxu0 %v11564
    %12039 = vmatpush.bf16.msra.mxu0 %v11561
    %12040 = vmatpush.bf16.msra.mxu0 %v11558
    %12041 = vmatpush.bf16.msra.mxu0 %v11555
    %12042 = vmatpush.bf16.msra.mxu0 %v11552
    %12043 = vmatpush.bf16.msra.mxu0 %v11549
    %12044 = vmatmul.bf16.gmra.mxu0 %v10644
    %v12045 = vpop.f32.mrf.mxu0
    %v12046 = vadd.f32 0.0, %v12045
    %v12047 = vpop.f32.mrf.mxu0
    %12048 = vdwg.mxu0
    %12049 = vmatpush.bf16.msra.mxu0 %v11594
    %12050 = vmatpush.bf16.msra.mxu0 %v11591
    %12051 = vmatpush.bf16.msra.mxu0 %v11588
    %12052 = vmatpush.bf16.msra.mxu0 %v11585
    %12053 = vmatpush.bf16.msra.mxu0 %v11582
    %12054 = vmatpush.bf16.msra.mxu0 %v11579
    %12055 = vmatpush.bf16.msra.mxu0 %v11576
    %12056 = vmatpush.bf16.msra.mxu0 %v11573
    %12057 = vmatmul.bf16.gmra.mxu0 %v10645
    %v12058 = vpop.f32.mrf.mxu0
    %v12059 = vadd.f32 %v12046, %v12058
    %v12060 = vpop.f32.mrf.mxu0
    %12061 = vdwg.mxu0
    %12062 = vmatpush.bf16.msra.mxu0 %v11618
    %12063 = vmatpush.bf16.msra.mxu0 %v11615
    %12064 = vmatpush.bf16.msra.mxu0 %v11612
    %12065 = vmatpush.bf16.msra.mxu0 %v11609
    %12066 = vmatpush.bf16.msra.mxu0 %v11606
    %12067 = vmatpush.bf16.msra.mxu0 %v11603
    %12068 = vmatpush.bf16.msra.mxu0 %v11600
    %12069 = vmatpush.bf16.msra.mxu0 %v11597
    %12070 = vmatmul.bf16.gmra.mxu0 %v10646
    %v12071 = vpop.f32.mrf.mxu0
    %v12072 = vadd.f32 %v12059, %v12071
    %v12073 = vpop.f32.mrf.mxu0
    %12074 = vdwg.mxu0
    %12075 = vmatpush.bf16.msra.mxu0 %v11642
    %12076 = vmatpush.bf16.msra.mxu0 %v11639
    %12077 = vmatpush.bf16.msra.mxu0 %v11636
    %12078 = vmatpush.bf16.msra.mxu0 %v11633
    %12079 = vmatpush.bf16.msra.mxu0 %v11630
    %12080 = vmatpush.bf16.msra.mxu0 %v11627
    %12081 = vmatpush.bf16.msra.mxu0 %v11624
    %12082 = vmatpush.bf16.msra.mxu0 %v11621
    %12083 = vmatmul.bf16.gmra.mxu0 %v10647
    %v12084 = vpop.f32.mrf.mxu0
    %v12085 = vadd.f32 %v12072, %v12084
    %v12086 = vpop.f32.mrf.mxu0
    %12087 = vdwg.mxu0
    %12088 = vmatpush.bf16.msra.mxu0 %v11666
    %12089 = vmatpush.bf16.msra.mxu0 %v11663
    %12090 = vmatpush.bf16.msra.mxu0 %v11660
    %12091 = vmatpush.bf16.msra.mxu0 %v11657
    %12092 = vmatpush.bf16.msra.mxu0 %v11654
    %12093 = vmatpush.bf16.msra.mxu0 %v11651
    %12094 = vmatpush.bf16.msra.mxu0 %v11648
    %12095 = vmatpush.bf16.msra.mxu0 %v11645
    %12096 = vmatmul.bf16.gmra.mxu0 %v10648
    %v12097 = vpop.f32.mrf.mxu0
    %v12098 = vadd.f32 %v12085, %v12097
    %v12099 = vpop.f32.mrf.mxu0
    %12100 = vdwg.mxu0
    %12101 = vmatpush.bf16.msra.mxu0 %v11690
    %12102 = vmatpush.bf16.msra.mxu0 %v11687
    %12103 = vmatpush.bf16.msra.mxu0 %v11684
    %12104 = vmatpush.bf16.msra.mxu0 %v11681
    %12105 = vmatpush.bf16.msra.mxu0 %v11678
    %12106 = vmatpush.bf16.msra.mxu0 %v11675
    %12107 = vmatpush.bf16.msra.mxu0 %v11672
    %12108 = vmatpush.bf16.msra.mxu0 %v11669
    %12109 = vmatmul.bf16.gmra.mxu0 %v10649
    %v12110 = vpop.f32.mrf.mxu0
    %v12111 = vadd.f32 %v12098, %v12110
    %v12112 = vpop.f32.mrf.mxu0
    %12113 = vdwg.mxu0
    %12114 = vmatpush.bf16.msra.mxu0 %v11714
    %12115 = vmatpush.bf16.msra.mxu0 %v11711
    %12116 = vmatpush.bf16.msra.mxu0 %v11708
    %12117 = vmatpush.bf16.msra.mxu0 %v11705
    %12118 = vmatpush.bf16.msra.mxu0 %v11702
    %12119 = vmatpush.bf16.msra.mxu0 %v11699
    %12120 = vmatpush.bf16.msra.mxu0 %v11696
    %12121 = vmatpush.bf16.msra.mxu0 %v11693
    %12122 = vmatmul.bf16.gmra.mxu0 %v10650
    %v12123 = vpop.f32.mrf.mxu0
    %v12124 = vadd.f32 %v12111, %v12123
    %v12125 = vpop.f32.mrf.mxu0
    %12126 = vdwg.mxu0
    %12127 = vmatpush.bf16.msra.mxu0 %v11738
    %12128 = vmatpush.bf16.msra.mxu0 %v11735
    %12129 = vmatpush.bf16.msra.mxu0 %v11732
    %12130 = vmatpush.bf16.msra.mxu0 %v11729
    %12131 = vmatpush.bf16.msra.mxu0 %v11726
    %12132 = vmatpush.bf16.msra.mxu0 %v11723
    %12133 = vmatpush.bf16.msra.mxu0 %v11720
    %12134 = vmatpush.bf16.msra.mxu0 %v11717
    %12135 = vmatmul.bf16.gmra.mxu0 %v10651
    %v12136 = vpop.f32.mrf.mxu0
    %v12137 = vadd.f32 %v12124, %v12136
    %v12138 = vpop.f32.mrf.mxu0
    %12139 = vdwg.mxu0
    %12140 = vmatpush.bf16.msra.mxu0 %v11571
    %12141 = vmatpush.bf16.msra.mxu0 %v11568
    %12142 = vmatpush.bf16.msra.mxu0 %v11565
    %12143 = vmatpush.bf16.msra.mxu0 %v11562
    %12144 = vmatpush.bf16.msra.mxu0 %v11559
    %12145 = vmatpush.bf16.msra.mxu0 %v11556
    %12146 = vmatpush.bf16.msra.mxu0 %v11553
    %12147 = vmatpush.bf16.msra.mxu0 %v11550
    %12148 = vmatmul.bf16.gmra.mxu0 %v10644
    %v12149 = vpop.f32.mrf.mxu0
    %v12150 = vadd.f32 0.0, %v12149
    %v12151 = vpop.f32.mrf.mxu0
    %12152 = vdwg.mxu0
    %12153 = vmatpush.bf16.msra.mxu0 %v11595
    %12154 = vmatpush.bf16.msra.mxu0 %v11592
    %12155 = vmatpush.bf16.msra.mxu0 %v11589
    %12156 = vmatpush.bf16.msra.mxu0 %v11586
    %12157 = vmatpush.bf16.msra.mxu0 %v11583
    %12158 = vmatpush.bf16.msra.mxu0 %v11580
    %12159 = vmatpush.bf16.msra.mxu0 %v11577
    %12160 = vmatpush.bf16.msra.mxu0 %v11574
    %12161 = vmatmul.bf16.gmra.mxu0 %v10645
    %v12162 = vpop.f32.mrf.mxu0
    %v12163 = vadd.f32 %v12150, %v12162
    %v12164 = vpop.f32.mrf.mxu0
    %12165 = vdwg.mxu0
    %12166 = vmatpush.bf16.msra.mxu0 %v11619
    %12167 = vmatpush.bf16.msra.mxu0 %v11616
    %12168 = vmatpush.bf16.msra.mxu0 %v11613
    %12169 = vmatpush.bf16.msra.mxu0 %v11610
    %12170 = vmatpush.bf16.msra.mxu0 %v11607
    %12171 = vmatpush.bf16.msra.mxu0 %v11604
    %12172 = vmatpush.bf16.msra.mxu0 %v11601
    %12173 = vmatpush.bf16.msra.mxu0 %v11598
    %12174 = vmatmul.bf16.gmra.mxu0 %v10646
    %v12175 = vpop.f32.mrf.mxu0
    %v12176 = vadd.f32 %v12163, %v12175
    %v12177 = vpop.f32.mrf.mxu0
    %12178 = vdwg.mxu0
    %12179 = vmatpush.bf16.msra.mxu0 %v11643
    %12180 = vmatpush.bf16.msra.mxu0 %v11640
    %12181 = vmatpush.bf16.msra.mxu0 %v11637
    %12182 = vmatpush.bf16.msra.mxu0 %v11634
    %12183 = vmatpush.bf16.msra.mxu0 %v11631
    %12184 = vmatpush.bf16.msra.mxu0 %v11628
    %12185 = vmatpush.bf16.msra.mxu0 %v11625
    %12186 = vmatpush.bf16.msra.mxu0 %v11622
    %12187 = vmatmul.bf16.gmra.mxu0 %v10647
    %v12188 = vpop.f32.mrf.mxu0
    %v12189 = vadd.f32 %v12176, %v12188
    %v12190 = vpop.f32.mrf.mxu0
    %12191 = vdwg.mxu0
    %12192 = vmatpush.bf16.msra.mxu0 %v11667
    %12193 = vmatpush.bf16.msra.mxu0 %v11664
    %12194 = vmatpush.bf16.msra.mxu0 %v11661
    %12195 = vmatpush.bf16.msra.mxu0 %v11658
    %12196 = vmatpush.bf16.msra.mxu0 %v11655
    %12197 = vmatpush.bf16.msra.mxu0 %v11652
    %12198 = vmatpush.bf16.msra.mxu0 %v11649
    %12199 = vmatpush.bf16.msra.mxu0 %v11646
    %12200 = vmatmul.bf16.gmra.mxu0 %v10648
    %v12201 = vpop.f32.mrf.mxu0
    %v12202 = vadd.f32 %v12189, %v12201
    %v12203 = vpop.f32.mrf.mxu0
    %12204 = vdwg.mxu0
    %12205 = vmatpush.bf16.msra.mxu0 %v11691
    %12206 = vmatpush.bf16.msra.mxu0 %v11688
    %12207 = vmatpush.bf16.msra.mxu0 %v11685
    %12208 = vmatpush.bf16.msra.mxu0 %v11682
    %12209 = vmatpush.bf16.msra.mxu0 %v11679
    %12210 = vmatpush.bf16.msra.mxu0 %v11676
    %12211 = vmatpush.bf16.msra.mxu0 %v11673
    %12212 = vmatpush.bf16.msra.mxu0 %v11670
    %12213 = vmatmul.bf16.gmra.mxu0 %v10649
    %v12214 = vpop.f32.mrf.mxu0
    %v12215 = vadd.f32 %v12202, %v12214
    %v12216 = vpop.f32.mrf.mxu0
    %12217 = vdwg.mxu0
    %12218 = vmatpush.bf16.msra.mxu0 %v11715
    %12219 = vmatpush.bf16.msra.mxu0 %v11712
    %12220 = vmatpush.bf16.msra.mxu0 %v11709
    %12221 = vmatpush.bf16.msra.mxu0 %v11706
    %12222 = vmatpush.bf16.msra.mxu0 %v11703
    %12223 = vmatpush.bf16.msra.mxu0 %v11700
    %12224 = vmatpush.bf16.msra.mxu0 %v11697
    %12225 = vmatpush.bf16.msra.mxu0 %v11694
    %12226 = vmatmul.bf16.gmra.mxu0 %v10650
    %v12227 = vpop.f32.mrf.mxu0
    %v12228 = vadd.f32 %v12215, %v12227
    %v12229 = vpop.f32.mrf.mxu0
    %12230 = vdwg.mxu0
    %12231 = vmatpush.bf16.msra.mxu0 %v11739
    %12232 = vmatpush.bf16.msra.mxu0 %v11736
    %12233 = vmatpush.bf16.msra.mxu0 %v11733
    %12234 = vmatpush.bf16.msra.mxu0 %v11730
    %12235 = vmatpush.bf16.msra.mxu0 %v11727
    %12236 = vmatpush.bf16.msra.mxu0 %v11724
    %12237 = vmatpush.bf16.msra.mxu0 %v11721
    %12238 = vmatpush.bf16.msra.mxu0 %v11718
    %12239 = vmatmul.bf16.gmra.mxu0 %v10651
    %v12240 = vpop.f32.mrf.mxu0
    %v12241 = vadd.f32 %v12228, %v12240
    %v12242 = vpop.f32.mrf.mxu0
    %12243 = vdwg.mxu0
    %12244 = vst [vmem:[#allocation22] sm:$0xff] %v12033
    %12245 = vst [vmem:[#allocation22 + $0x8] sm:$0xff] %v12137
    %12246 = vst [vmem:[#allocation22 + $0x10] sm:$0xff] %v12241
    // Predicated region
    $region98: #{tpu_custom_call.1} parent=1 // pred_check
      _
    $region99: #{tpu_custom_call.1} parent=1 // pred_check_branch
      %12248 = sbr.rel (0) target = $region101
    $region100: #{tpu_custom_call.1} parent=1 // pred_region
      %12250 = vsyncadd [#allocation4], 0
      %s12252 = sshll.u32 [#allocation22], 4
      %s12253 = int_to_ptr.vmem [resolvable:$true] %s12252
      %s12254 = sshll.u32 %s12, 4
      %s12255 = int_to_ptr.hbm [resolvable:$true] %s12254
      %12257 = dma.vmem_to_hbm [thread:$0]  %s12253, 384, %s12255, [#allocation4]
    $region101: #{tpu_custom_call.1} parent=1 // pred_fallthru
      _
    // Predicated region
    $region102: #{tpu_custom_call.1} parent=1 // pred_check
      _
    $region103: #{tpu_custom_call.1} parent=1 // pred_check_branch
      %12259 = sbr.rel (0) target = $region105
    $region104: #{tpu_custom_call.1} parent=1 // pred_region
      %12261 = dma.done [#allocation4], 384
    $region105: #{tpu_custom_call.1} parent=1 // pred_fallthru
      _
    %12262 = vsyncpa [#allocation3], 1
    %12263 = vsyncpa [#allocation6], 1
    %12264 = vsyncpa [#allocation9], 1
    %12265 = vsyncpa [#allocation12], 1
    %12266 = vsyncpa [#allocation15], 1
    %12267 = vsyncpa [#allocation18], 1
    %12268 = vsyncpa [#allocation21], 1
    %12269 = vsyncpa [#allocation4], 1

</llo_original>
